<compile_context>
chip_gen: v7x
topology: tpu7x:2x2x1
jax: 0.10.0
libtpu: 0.0.40
codegen_flags: <defaults>
</compile_context>

<pallas_src>
import functools

import jax
import jax.numpy as jnp
from jax.experimental import pallas as pl
from jax.experimental.pallas import tpu as pltpu


# ----------------------------------------------------------------------------
# Fused EBlock kernel: num_res ResBlocks, activation resident in VMEM scratch
# ----------------------------------------------------------------------------
def _eblock_kernel(x_ref, w_ref, b_ref, out_ref, cur_ref, tmp_ref, *, num_res):
    # x_ref  : (1, H, W, C)        one image of the batch (NHWC)
    # w_ref  : (2*num_res, 9C, C)  im2col-packed 3x3 weights, tap order (dy,dx,ci)
    # b_ref  : (2*num_res, 1, C)   biases
    # out_ref: (1, H, W, C)
    # cur_ref, tmp_ref : VMEM scratch (H+2, W+2, C) f32 with a zero halo
    Hp, Wp, C = cur_ref.shape
    H, W = Hp - 2, Wp - 2

    # Zero both padded scratch buffers (VMEM-only, cheap). The 1-pixel halo
    # stays zero for the whole kernel -> SAME padding for free. Re-done every
    # grid step so it is safe under megacore 'parallel' batch splitting.
    cur_ref[...] = jnp.zeros_like(cur_ref)
    tmp_ref[...] = jnp.zeros_like(tmp_ref)
    cur_ref[1:1 + H, 1:1 + W, :] = x_ref[0].astype(jnp.float32)

    def conv3x3(buf, w, b, relu):
        # buf: (Hp, Wp, C) f32 value. Build the im2col patch (H, W, 9C) and
        # issue ONE MXU matmul with K = 9*C instead of nine K=C slivers.
        pieces = []
        for dy in range(3):
            for dx in range(3):
                pieces.append(buf[dy:dy + H, dx:dx + W, :])
        patch = jnp.concatenate(pieces, axis=-1)                     # (H, W, 9C)
        y = jax.lax.dot_general(
            patch, w,
            dimension_numbers=(((2,), (0,)), ((), ())),
            preferred_element_type=jnp.float32)                      # (H, W, C)
        y = y + b                                                    # (1,C) bcast
        if relu:
            y = jnp.maximum(y, 0.0)
        return y

    for r in range(num_res):
        x0 = cur_ref[...]                                            # (Hp,Wp,C)
        # conv1 + bias + relu -> tmp interior (halo stays zero)
        h = conv3x3(x0, w_ref[2 * r], b_ref[2 * r], relu=True)
        tmp_ref[1:1 + H, 1:1 + W, :] = h
        # conv2 + bias + residual add -> cur interior
        h2 = conv3x3(tmp_ref[...], w_ref[2 * r + 1], b_ref[2 * r + 1],
                     relu=False)
        cur_ref[1:1 + H, 1:1 + W, :] = h2 + x0[1:1 + H, 1:1 + W, :]

    out_ref[0] = cur_ref[1:1 + H, 1:1 + W, :].astype(out_ref.dtype)


def eblock_forward(params, x_nhwc):
    """Whole EBlock in one pallas_call. x is NHWC, weights are HWIO per layer."""
    N, H, W, C = x_nhwc.shape
    num_res = len(params)

    # Pack all conv weights/biases once: HWIO (3,3,Cin,Cout) -> (9*Cin, Cout)
    # flattened row-major over (dy, dx, ci), matching the in-kernel patch order.
    ws, bs = [], []
    for (w1, b1, w2, b2) in params:
        ws.append(w1.reshape(9 * C, C))
        bs.append(b1.reshape(1, C))
        ws.append(w2.reshape(9 * C, C))
        bs.append(b2.reshape(1, C))
    w_all = jnp.stack(ws).astype(jnp.float32)       # (2R, 9C, C)
    b_all = jnp.stack(bs).astype(jnp.float32)       # (2R, 1, C)

    kernel = functools.partial(_eblock_kernel, num_res=num_res)

    # Advisory cost estimate: 2*num_res convs, each (H*W, 9C) x (9C, C).
    flops = 2 * N * (2 * num_res) * H * W * (9 * C) * C
    bytes_accessed = (2 * N * H * W * C + w_all.size + b_all.size) * 4

    return pl.pallas_call(
        kernel,
        out_shape=jax.ShapeDtypeStruct((N, H, W, C), x_nhwc.dtype),
        grid_spec=pltpu.PrefetchScalarGridSpec(
            num_scalar_prefetch=0,
            grid=(N,),
            in_specs=[
                pl.BlockSpec((1, H, W, C), lambda n: (n, 0, 0, 0)),
                # Weights / biases: constant block index -> fetched once.
                pl.BlockSpec((2 * num_res, 9 * C, C), lambda n: (0, 0, 0)),
                pl.BlockSpec((2 * num_res, 1, C), lambda n: (0, 0, 0)),
            ],
            out_specs=pl.BlockSpec((1, H, W, C), lambda n: (n, 0, 0, 0)),
            scratch_shapes=[
                pltpu.VMEM((H + 2, W + 2, C), jnp.float32),   # resident act.
                pltpu.VMEM((H + 2, W + 2, C), jnp.float32),   # conv1 output
            ]),
        compiler_params=pltpu.CompilerParams(
            # Batch axis is independent -> let both v7x TensorCores split it.
            dimension_semantics=("parallel",),
            # Within v7x's 32 MiB default-scoped / 64 MiB physical VMEM.
            vmem_limit_bytes=32 * 1024 * 1024),
        cost_estimate=pl.CostEstimate(
            flops=int(flops), transcendentals=0,
            bytes_accessed=int(bytes_accessed)),
    )(x_nhwc, w_all, b_all)


def twro_eblock(params, x_nchw):
    """PyTorch-layout wrapper: NCHW in, NCHW out (layout glue only)."""
    x_nhwc = jnp.transpose(x_nchw, (0, 2, 3, 1))
    y_nhwc = eblock_forward(params, x_nhwc)
    return jnp.transpose(y_nhwc, (0, 3, 1, 2))


# ----------------------------------------------------------------------------
# Parameters (deterministic synthetic) and a pure-JAX reference for checking
# ----------------------------------------------------------------------------
def init_eblock_params(key, channels, num_res):
    """Each ResBlock has two conv3x3 layers; weights stored HWIO (3,3,Cin,Cout)."""
    params = []
    fan_in = 3 * 3 * channels
    scale = (2.0 / fan_in) ** 0.5
    for _ in range(num_res):
        key, k1, k2, k3, k4 = jax.random.split(key, 5)
        w1 = scale * jax.random.normal(k1, (3, 3, channels, channels), jnp.float32)
        b1 = 0.1 * jax.random.normal(k3, (channels,), jnp.float32)
        w2 = scale * jax.random.normal(k2, (3, 3, channels, channels), jnp.float32)
        b2 = 0.1 * jax.random.normal(k4, (channels,), jnp.float32)
        params.append((w1, b1, w2, b2))
    return params


def _ref_conv(x_nhwc, w_hwio, b, relu):
    y = jax.lax.conv_general_dilated(
        x_nhwc, w_hwio, window_strides=(1, 1), padding="SAME",
        dimension_numbers=("NHWC", "HWIO", "NHWC"))
    y = y + b.reshape(1, 1, 1, -1)
    return jnp.maximum(y, 0.0) if relu else y


def eblock_ref(params, x_nhwc):
    y = x_nhwc
    for (w1, b1, w2, b2) in params:
        h = _ref_conv(y, w1, b1, relu=True)
        y = _ref_conv(h, w2, b2, relu=False) + y
    return y


if __name__ == "__main__":
    # Small shapes consistent with EBlock(out_channel=4); num_res kept small
    # (module default is 8; the implementation is parameterized).
    N, C, H, W = 2, 4, 16, 16
    num_res = 2

    key = jax.random.PRNGKey(0)
    kx, kp = jax.random.split(key)
    x_nchw = jax.random.normal(kx, (N, C, H, W), jnp.float32)   # PyTorch layout
    params = init_eblock_params(kp, C, num_res)

    fwd = jax.jit(twro_eblock)
    y_nchw = fwd(params, x_nchw)
    jax.block_until_ready(y_nchw)

    # Verify against the pure-JAX reference.
    x_nhwc = jnp.transpose(x_nchw, (0, 2, 3, 1))
    y_ref_nhwc = eblock_ref(params, x_nhwc)
    y_ref_nchw = jnp.transpose(y_ref_nhwc, (0, 3, 1, 2))

    assert y_nchw.shape == (N, C, H, W)
    assert jnp.allclose(y_nchw, y_ref_nchw, atol=1e-4, rtol=1e-4), \
        "mismatch vs reference"

    print("KERNEL_OK")
</pallas_src>

<mosaic_0001>
module attributes {stable_mosaic.version = 11 : i64} {
  func.func @_eblock_kernel(%arg0: i32, %arg1: memref<1x16x16x4xf32, #tpu.memory_space<vmem>>, %arg2: memref<4x36x4xf32, #tpu.memory_space<vmem>>, %arg3: memref<4x1x4xf32, #tpu.memory_space<vmem>>, %arg4: memref<1x16x16x4xf32, #tpu.memory_space<vmem>>, %arg5: memref<18x18x4xf32, #tpu.memory_space<vmem>>, %arg6: memref<18x18x4xf32, #tpu.memory_space<vmem>>) attributes {dimension_semantics = [#tpu.dimension_semantics<parallel>], iteration_bounds = array<i64: 2>, scalar_prefetch = 0 : i64, scratch_operands = 2 : i64, tpu.core_type = #tpu.core_type<tc>, window_params = [{transform_indices = @transform_0, window_bounds = array<i64: 1, 16, 16, 4>}, {pipeline_mode = #tpu.pipeline_mode<synchronous>, transform_indices = @transform_1, window_bounds = array<i64: 4, 36, 4>}, {pipeline_mode = #tpu.pipeline_mode<synchronous>, transform_indices = @transform_2, window_bounds = array<i64: 4, 1, 4>}, {transform_indices = @transform_3, window_bounds = array<i64: 1, 16, 16, 4>}]} {
    %cst = arith.constant 0.000000e+00 : f32
    %0 = vector.broadcast %cst : f32 to vector<18x18x4xf32>
    %c0 = arith.constant 0 : index
    %c0_0 = arith.constant 0 : index
    %c0_1 = arith.constant 0 : index
    %1 = vector.load %arg5[%c0, %c0_0, %c0_1] : memref<18x18x4xf32, #tpu.memory_space<vmem>>, vector<18x18x4xf32>
    tpu.vector_store %arg5[%c0, %c0_0, %c0_1], %0 {strides = array<i32>} : memref<18x18x4xf32, #tpu.memory_space<vmem>>, vector<18x18x4xf32>,
    %cst_2 = arith.constant 0.000000e+00 : f32
    %2 = vector.broadcast %cst_2 : f32 to vector<18x18x4xf32>
    %c0_3 = arith.constant 0 : index
    %c0_4 = arith.constant 0 : index
    %c0_5 = arith.constant 0 : index
    %3 = vector.load %arg6[%c0_3, %c0_4, %c0_5] : memref<18x18x4xf32, #tpu.memory_space<vmem>>, vector<18x18x4xf32>
    tpu.vector_store %arg6[%c0_3, %c0_4, %c0_5], %2 {strides = array<i32>} : memref<18x18x4xf32, #tpu.memory_space<vmem>>, vector<18x18x4xf32>,
    %c0_6 = arith.constant 0 : index
    %c0_7 = arith.constant 0 : index
    %c0_8 = arith.constant 0 : index
    %c0_9 = arith.constant 0 : index
    %4 = vector.load %arg1[%c0_6, %c0_7, %c0_8, %c0_9] : memref<1x16x16x4xf32, #tpu.memory_space<vmem>>, vector<1x16x16x4xf32>
    %5 = vector.shape_cast %4 : vector<1x16x16x4xf32> to vector<16x16x4xf32>
    %c1 = arith.constant 1 : index
    %c1_10 = arith.constant 1 : index
    %c0_11 = arith.constant 0 : index
    %6 = vector.load %arg5[%c1, %c1_10, %c0_11] : memref<18x18x4xf32, #tpu.memory_space<vmem>>, vector<16x16x4xf32>
    tpu.vector_store %arg5[%c1, %c1_10, %c0_11], %5 {strides = array<i32>} : memref<18x18x4xf32, #tpu.memory_space<vmem>>, vector<16x16x4xf32>,
    %c0_12 = arith.constant 0 : index
    %c0_13 = arith.constant 0 : index
    %c0_14 = arith.constant 0 : index
    %7 = vector.load %arg5[%c0_12, %c0_13, %c0_14] : memref<18x18x4xf32, #tpu.memory_space<vmem>>, vector<18x18x4xf32>
    %c0_15 = arith.constant 0 : index
    %c0_16 = arith.constant 0 : index
    %c0_17 = arith.constant 0 : index
    %8 = vector.load %arg2[%c0_15, %c0_16, %c0_17] : memref<4x36x4xf32, #tpu.memory_space<vmem>>, vector<1x36x4xf32>
    %9 = vector.shape_cast %8 : vector<1x36x4xf32> to vector<36x4xf32>
    %c0_18 = arith.constant 0 : index
    %c0_19 = arith.constant 0 : index
    %c0_20 = arith.constant 0 : index
    %10 = vector.load %arg3[%c0_18, %c0_19, %c0_20] : memref<4x1x4xf32, #tpu.memory_space<vmem>>, vector<1x1x4xf32>
    %11 = vector.shape_cast %10 : vector<1x1x4xf32> to vector<1x4xf32>
    %12 = vector.extract_strided_slice %7 {offsets = [0, 0, 0], sizes = [16, 16, 4], strides = [1, 1, 1]} : vector<18x18x4xf32> to vector<16x16x4xf32>
    %13 = vector.extract_strided_slice %7 {offsets = [0, 1, 0], sizes = [16, 16, 4], strides = [1, 1, 1]} : vector<18x18x4xf32> to vector<16x16x4xf32>
    %14 = vector.extract_strided_slice %7 {offsets = [0, 2, 0], sizes = [16, 16, 4], strides = [1, 1, 1]} : vector<18x18x4xf32> to vector<16x16x4xf32>
    %15 = vector.extract_strided_slice %7 {offsets = [1, 0, 0], sizes = [16, 16, 4], strides = [1, 1, 1]} : vector<18x18x4xf32> to vector<16x16x4xf32>
    %16 = vector.extract_strided_slice %7 {offsets = [1, 1, 0], sizes = [16, 16, 4], strides = [1, 1, 1]} : vector<18x18x4xf32> to vector<16x16x4xf32>
    %17 = vector.extract_strided_slice %7 {offsets = [1, 2, 0], sizes = [16, 16, 4], strides = [1, 1, 1]} : vector<18x18x4xf32> to vector<16x16x4xf32>
    %18 = vector.extract_strided_slice %7 {offsets = [2, 0, 0], sizes = [16, 16, 4], strides = [1, 1, 1]} : vector<18x18x4xf32> to vector<16x16x4xf32>
    %19 = vector.extract_strided_slice %7 {offsets = [2, 1, 0], sizes = [16, 16, 4], strides = [1, 1, 1]} : vector<18x18x4xf32> to vector<16x16x4xf32>
    %20 = vector.extract_strided_slice %7 {offsets = [2, 2, 0], sizes = [16, 16, 4], strides = [1, 1, 1]} : vector<18x18x4xf32> to vector<16x16x4xf32>
    %21 = tpu.concatenate %12, %13, %14, %15, %16, %17, %18, %19, %20 in 2 : vector<16x16x4xf32>, vector<16x16x4xf32>, vector<16x16x4xf32>, vector<16x16x4xf32>, vector<16x16x4xf32>, vector<16x16x4xf32>, vector<16x16x4xf32>, vector<16x16x4xf32>, vector<16x16x4xf32> -> vector<16x16x36xf32>
    %cst_21 = arith.constant dense<0.000000e+00> : vector<16x16x4xf32>
    %22 = tpu.matmul %21, %9, %cst_21 {dimension_numbers = #tpu.dot_dimension_numbers<[2], [0], [0, 1], [1], [0, 0, 0, 1, 1, 1], [], []>} : vector<16x16x36xf32>, vector<36x4xf32>, vector<16x16x4xf32> -> vector<16x16x4xf32>
    %23 = vector.shape_cast %11 : vector<1x4xf32> to vector<1x1x4xf32>
    %24 = vector.broadcast %23 : vector<1x1x4xf32> to vector<16x16x4xf32>
    %25 = arith.addf %22, %24 : vector<16x16x4xf32>
    %cst_22 = arith.constant 0.000000e+00 : f32
    %26 = vector.broadcast %cst_22 : f32 to vector<16x16x4xf32>
    %27 = arith.maximumf %25, %26 : vector<16x16x4xf32>
    %c1_23 = arith.constant 1 : index
    %c1_24 = arith.constant 1 : index
    %c0_25 = arith.constant 0 : index
    %28 = vector.load %arg6[%c1_23, %c1_24, %c0_25] : memref<18x18x4xf32, #tpu.memory_space<vmem>>, vector<16x16x4xf32>
    tpu.vector_store %arg6[%c1_23, %c1_24, %c0_25], %27 {strides = array<i32>} : memref<18x18x4xf32, #tpu.memory_space<vmem>>, vector<16x16x4xf32>,
    %c0_26 = arith.constant 0 : index
    %c0_27 = arith.constant 0 : index
    %c0_28 = arith.constant 0 : index
    %29 = vector.load %arg6[%c0_26, %c0_27, %c0_28] : memref<18x18x4xf32, #tpu.memory_space<vmem>>, vector<18x18x4xf32>
    %c1_29 = arith.constant 1 : index
    %c0_30 = arith.constant 0 : index
    %c0_31 = arith.constant 0 : index
    %30 = vector.load %arg2[%c1_29, %c0_30, %c0_31] : memref<4x36x4xf32, #tpu.memory_space<vmem>>, vector<1x36x4xf32>
    %31 = vector.shape_cast %30 : vector<1x36x4xf32> to vector<36x4xf32>
    %c1_32 = arith.constant 1 : index
    %c0_33 = arith.constant 0 : index
    %c0_34 = arith.constant 0 : index
    %32 = vector.load %arg3[%c1_32, %c0_33, %c0_34] : memref<4x1x4xf32, #tpu.memory_space<vmem>>, vector<1x1x4xf32>
    %33 = vector.shape_cast %32 : vector<1x1x4xf32> to vector<1x4xf32>
    %34 = vector.extract_strided_slice %29 {offsets = [0, 0, 0], sizes = [16, 16, 4], strides = [1, 1, 1]} : vector<18x18x4xf32> to vector<16x16x4xf32>
    %35 = vector.extract_strided_slice %29 {offsets = [0, 1, 0], sizes = [16, 16, 4], strides = [1, 1, 1]} : vector<18x18x4xf32> to vector<16x16x4xf32>
    %36 = vector.extract_strided_slice %29 {offsets = [0, 2, 0], sizes = [16, 16, 4], strides = [1, 1, 1]} : vector<18x18x4xf32> to vector<16x16x4xf32>
    %37 = vector.extract_strided_slice %29 {offsets = [1, 0, 0], sizes = [16, 16, 4], strides = [1, 1, 1]} : vector<18x18x4xf32> to vector<16x16x4xf32>
    %38 = vector.extract_strided_slice %29 {offsets = [1, 1, 0], sizes = [16, 16, 4], strides = [1, 1, 1]} : vector<18x18x4xf32> to vector<16x16x4xf32>
    %39 = vector.extract_strided_slice %29 {offsets = [1, 2, 0], sizes = [16, 16, 4], strides = [1, 1, 1]} : vector<18x18x4xf32> to vector<16x16x4xf32>
    %40 = vector.extract_strided_slice %29 {offsets = [2, 0, 0], sizes = [16, 16, 4], strides = [1, 1, 1]} : vector<18x18x4xf32> to vector<16x16x4xf32>
    %41 = vector.extract_strided_slice %29 {offsets = [2, 1, 0], sizes = [16, 16, 4], strides = [1, 1, 1]} : vector<18x18x4xf32> to vector<16x16x4xf32>
    %42 = vector.extract_strided_slice %29 {offsets = [2, 2, 0], sizes = [16, 16, 4], strides = [1, 1, 1]} : vector<18x18x4xf32> to vector<16x16x4xf32>
    %43 = tpu.concatenate %34, %35, %36, %37, %38, %39, %40, %41, %42 in 2 : vector<16x16x4xf32>, vector<16x16x4xf32>, vector<16x16x4xf32>, vector<16x16x4xf32>, vector<16x16x4xf32>, vector<16x16x4xf32>, vector<16x16x4xf32>, vector<16x16x4xf32>, vector<16x16x4xf32> -> vector<16x16x36xf32>
    %cst_35 = arith.constant dense<0.000000e+00> : vector<16x16x4xf32>
    %44 = tpu.matmul %43, %31, %cst_35 {dimension_numbers = #tpu.dot_dimension_numbers<[2], [0], [0, 1], [1], [0, 0, 0, 1, 1, 1], [], []>} : vector<16x16x36xf32>, vector<36x4xf32>, vector<16x16x4xf32> -> vector<16x16x4xf32>
    %45 = vector.shape_cast %33 : vector<1x4xf32> to vector<1x1x4xf32>
    %46 = vector.broadcast %45 : vector<1x1x4xf32> to vector<16x16x4xf32>
    %47 = arith.addf %44, %46 : vector<16x16x4xf32>
    %48 = vector.extract_strided_slice %7 {offsets = [1, 1, 0], sizes = [16, 16, 4], strides = [1, 1, 1]} : vector<18x18x4xf32> to vector<16x16x4xf32>
    %49 = arith.addf %47, %48 : vector<16x16x4xf32>
    %c1_36 = arith.constant 1 : index
    %c1_37 = arith.constant 1 : index
    %c0_38 = arith.constant 0 : index
    %50 = vector.load %arg5[%c1_36, %c1_37, %c0_38] : memref<18x18x4xf32, #tpu.memory_space<vmem>>, vector<16x16x4xf32>
    tpu.vector_store %arg5[%c1_36, %c1_37, %c0_38], %49 {strides = array<i32>} : memref<18x18x4xf32, #tpu.memory_space<vmem>>, vector<16x16x4xf32>,
    %c0_39 = arith.constant 0 : index
    %c0_40 = arith.constant 0 : index
    %c0_41 = arith.constant 0 : index
    %51 = vector.load %arg5[%c0_39, %c0_40, %c0_41] : memref<18x18x4xf32, #tpu.memory_space<vmem>>, vector<18x18x4xf32>
    %c2 = arith.constant 2 : index
    %c0_42 = arith.constant 0 : index
    %c0_43 = arith.constant 0 : index
    %52 = vector.load %arg2[%c2, %c0_42, %c0_43] : memref<4x36x4xf32, #tpu.memory_space<vmem>>, vector<1x36x4xf32>
    %53 = vector.shape_cast %52 : vector<1x36x4xf32> to vector<36x4xf32>
    %c2_44 = arith.constant 2 : index
    %c0_45 = arith.constant 0 : index
    %c0_46 = arith.constant 0 : index
    %54 = vector.load %arg3[%c2_44, %c0_45, %c0_46] : memref<4x1x4xf32, #tpu.memory_space<vmem>>, vector<1x1x4xf32>
    %55 = vector.shape_cast %54 : vector<1x1x4xf32> to vector<1x4xf32>
    %56 = vector.extract_strided_slice %51 {offsets = [0, 0, 0], sizes = [16, 16, 4], strides = [1, 1, 1]} : vector<18x18x4xf32> to vector<16x16x4xf32>
    %57 = vector.extract_strided_slice %51 {offsets = [0, 1, 0], sizes = [16, 16, 4], strides = [1, 1, 1]} : vector<18x18x4xf32> to vector<16x16x4xf32>
    %58 = vector.extract_strided_slice %51 {offsets = [0, 2, 0], sizes = [16, 16, 4], strides = [1, 1, 1]} : vector<18x18x4xf32> to vector<16x16x4xf32>
    %59 = vector.extract_strided_slice %51 {offsets = [1, 0, 0], sizes = [16, 16, 4], strides = [1, 1, 1]} : vector<18x18x4xf32> to vector<16x16x4xf32>
    %60 = vector.extract_strided_slice %51 {offsets = [1, 1, 0], sizes = [16, 16, 4], strides = [1, 1, 1]} : vector<18x18x4xf32> to vector<16x16x4xf32>
    %61 = vector.extract_strided_slice %51 {offsets = [1, 2, 0], sizes = [16, 16, 4], strides = [1, 1, 1]} : vector<18x18x4xf32> to vector<16x16x4xf32>
    %62 = vector.extract_strided_slice %51 {offsets = [2, 0, 0], sizes = [16, 16, 4], strides = [1, 1, 1]} : vector<18x18x4xf32> to vector<16x16x4xf32>
    %63 = vector.extract_strided_slice %51 {offsets = [2, 1, 0], sizes = [16, 16, 4], strides = [1, 1, 1]} : vector<18x18x4xf32> to vector<16x16x4xf32>
    %64 = vector.extract_strided_slice %51 {offsets = [2, 2, 0], sizes = [16, 16, 4], strides = [1, 1, 1]} : vector<18x18x4xf32> to vector<16x16x4xf32>
    %65 = tpu.concatenate %56, %57, %58, %59, %60, %61, %62, %63, %64 in 2 : vector<16x16x4xf32>, vector<16x16x4xf32>, vector<16x16x4xf32>, vector<16x16x4xf32>, vector<16x16x4xf32>, vector<16x16x4xf32>, vector<16x16x4xf32>, vector<16x16x4xf32>, vector<16x16x4xf32> -> vector<16x16x36xf32>
    %cst_47 = arith.constant dense<0.000000e+00> : vector<16x16x4xf32>
    %66 = tpu.matmul %65, %53, %cst_47 {dimension_numbers = #tpu.dot_dimension_numbers<[2], [0], [0, 1], [1], [0, 0, 0, 1, 1, 1], [], []>} : vector<16x16x36xf32>, vector<36x4xf32>, vector<16x16x4xf32> -> vector<16x16x4xf32>
    %67 = vector.shape_cast %55 : vector<1x4xf32> to vector<1x1x4xf32>
    %68 = vector.broadcast %67 : vector<1x1x4xf32> to vector<16x16x4xf32>
    %69 = arith.addf %66, %68 : vector<16x16x4xf32>
    %cst_48 = arith.constant 0.000000e+00 : f32
    %70 = vector.broadcast %cst_48 : f32 to vector<16x16x4xf32>
    %71 = arith.maximumf %69, %70 : vector<16x16x4xf32>
    %c1_49 = arith.constant 1 : index
    %c1_50 = arith.constant 1 : index
    %c0_51 = arith.constant 0 : index
    %72 = vector.load %arg6[%c1_49, %c1_50, %c0_51] : memref<18x18x4xf32, #tpu.memory_space<vmem>>, vector<16x16x4xf32>
    tpu.vector_store %arg6[%c1_49, %c1_50, %c0_51], %71 {strides = array<i32>} : memref<18x18x4xf32, #tpu.memory_space<vmem>>, vector<16x16x4xf32>,
    %c0_52 = arith.constant 0 : index
    %c0_53 = arith.constant 0 : index
    %c0_54 = arith.constant 0 : index
    %73 = vector.load %arg6[%c0_52, %c0_53, %c0_54] : memref<18x18x4xf32, #tpu.memory_space<vmem>>, vector<18x18x4xf32>
    %c3 = arith.constant 3 : index
    %c0_55 = arith.constant 0 : index
    %c0_56 = arith.constant 0 : index
    %74 = vector.load %arg2[%c3, %c0_55, %c0_56] : memref<4x36x4xf32, #tpu.memory_space<vmem>>, vector<1x36x4xf32>
    %75 = vector.shape_cast %74 : vector<1x36x4xf32> to vector<36x4xf32>
    %c3_57 = arith.constant 3 : index
    %c0_58 = arith.constant 0 : index
    %c0_59 = arith.constant 0 : index
    %76 = vector.load %arg3[%c3_57, %c0_58, %c0_59] : memref<4x1x4xf32, #tpu.memory_space<vmem>>, vector<1x1x4xf32>
    %77 = vector.shape_cast %76 : vector<1x1x4xf32> to vector<1x4xf32>
    %78 = vector.extract_strided_slice %73 {offsets = [0, 0, 0], sizes = [16, 16, 4], strides = [1, 1, 1]} : vector<18x18x4xf32> to vector<16x16x4xf32>
    %79 = vector.extract_strided_slice %73 {offsets = [0, 1, 0], sizes = [16, 16, 4], strides = [1, 1, 1]} : vector<18x18x4xf32> to vector<16x16x4xf32>
    %80 = vector.extract_strided_slice %73 {offsets = [0, 2, 0], sizes = [16, 16, 4], strides = [1, 1, 1]} : vector<18x18x4xf32> to vector<16x16x4xf32>
    %81 = vector.extract_strided_slice %73 {offsets = [1, 0, 0], sizes = [16, 16, 4], strides = [1, 1, 1]} : vector<18x18x4xf32> to vector<16x16x4xf32>
    %82 = vector.extract_strided_slice %73 {offsets = [1, 1, 0], sizes = [16, 16, 4], strides = [1, 1, 1]} : vector<18x18x4xf32> to vector<16x16x4xf32>
    %83 = vector.extract_strided_slice %73 {offsets = [1, 2, 0], sizes = [16, 16, 4], strides = [1, 1, 1]} : vector<18x18x4xf32> to vector<16x16x4xf32>
    %84 = vector.extract_strided_slice %73 {offsets = [2, 0, 0], sizes = [16, 16, 4], strides = [1, 1, 1]} : vector<18x18x4xf32> to vector<16x16x4xf32>
    %85 = vector.extract_strided_slice %73 {offsets = [2, 1, 0], sizes = [16, 16, 4], strides = [1, 1, 1]} : vector<18x18x4xf32> to vector<16x16x4xf32>
    %86 = vector.extract_strided_slice %73 {offsets = [2, 2, 0], sizes = [16, 16, 4], strides = [1, 1, 1]} : vector<18x18x4xf32> to vector<16x16x4xf32>
    %87 = tpu.concatenate %78, %79, %80, %81, %82, %83, %84, %85, %86 in 2 : vector<16x16x4xf32>, vector<16x16x4xf32>, vector<16x16x4xf32>, vector<16x16x4xf32>, vector<16x16x4xf32>, vector<16x16x4xf32>, vector<16x16x4xf32>, vector<16x16x4xf32>, vector<16x16x4xf32> -> vector<16x16x36xf32>
    %cst_60 = arith.constant dense<0.000000e+00> : vector<16x16x4xf32>
    %88 = tpu.matmul %87, %75, %cst_60 {dimension_numbers = #tpu.dot_dimension_numbers<[2], [0], [0, 1], [1], [0, 0, 0, 1, 1, 1], [], []>} : vector<16x16x36xf32>, vector<36x4xf32>, vector<16x16x4xf32> -> vector<16x16x4xf32>
    %89 = vector.shape_cast %77 : vector<1x4xf32> to vector<1x1x4xf32>
    %90 = vector.broadcast %89 : vector<1x1x4xf32> to vector<16x16x4xf32>
    %91 = arith.addf %88, %90 : vector<16x16x4xf32>
    %92 = vector.extract_strided_slice %51 {offsets = [1, 1, 0], sizes = [16, 16, 4], strides = [1, 1, 1]} : vector<18x18x4xf32> to vector<16x16x4xf32>
    %93 = arith.addf %91, %92 : vector<16x16x4xf32>
    %c1_61 = arith.constant 1 : index
    %c1_62 = arith.constant 1 : index
    %c0_63 = arith.constant 0 : index
    %94 = vector.load %arg5[%c1_61, %c1_62, %c0_63] : memref<18x18x4xf32, #tpu.memory_space<vmem>>, vector<16x16x4xf32>
    tpu.vector_store %arg5[%c1_61, %c1_62, %c0_63], %93 {strides = array<i32>} : memref<18x18x4xf32, #tpu.memory_space<vmem>>, vector<16x16x4xf32>,
    %c1_64 = arith.constant 1 : index
    %c1_65 = arith.constant 1 : index
    %c0_66 = arith.constant 0 : index
    %95 = vector.load %arg5[%c1_64, %c1_65, %c0_66] : memref<18x18x4xf32, #tpu.memory_space<vmem>>, vector<16x16x4xf32>
    %c0_67 = arith.constant 0 : index
    %c0_68 = arith.constant 0 : index
    %c0_69 = arith.constant 0 : index
    %c0_70 = arith.constant 0 : index
    %96 = vector.load %arg4[%c0_67, %c0_68, %c0_69, %c0_70] : memref<1x16x16x4xf32, #tpu.memory_space<vmem>>, vector<1x16x16x4xf32>
    %97 = vector.shape_cast %96 : vector<1x16x16x4xf32> to vector<16x16x4xf32>
    %98 = vector.shape_cast %95 : vector<16x16x4xf32> to vector<1x16x16x4xf32>
    tpu.vector_store %arg4[%c0_67, %c0_68, %c0_69, %c0_70], %98 {strides = array<i32>} : memref<1x16x16x4xf32, #tpu.memory_space<vmem>>, vector<1x16x16x4xf32>,
    return
  }
  func.func @transform_0(%arg0: i32) -> (i32, i32, i32, i32) {
    %c0_i32 = arith.constant 0 : i32
    %c0_i32_0 = arith.constant 0 : i32
    %c0_i32_1 = arith.constant 0 : i32
    %c0_i32_2 = arith.constant 0 : i32
    return %arg0, %c0_i32, %c0_i32_0, %c0_i32_1 : i32, i32, i32, i32
  }
  func.func @transform_1(%arg0: i32) -> (i32, i32, i32) {
    %c0_i32 = arith.constant 0 : i32
    %c0_i32_0 = arith.constant 0 : i32
    %c0_i32_1 = arith.constant 0 : i32
    %c0_i32_2 = arith.constant 0 : i32
    return %c0_i32, %c0_i32_0, %c0_i32_1 : i32, i32, i32
  }
  func.func @transform_2(%arg0: i32) -> (i32, i32, i32) {
    %c0_i32 = arith.constant 0 : i32
    %c0_i32_0 = arith.constant 0 : i32
    %c0_i32_1 = arith.constant 0 : i32
    %c0_i32_2 = arith.constant 0 : i32
    return %c0_i32, %c0_i32_0, %c0_i32_1 : i32, i32, i32
  }
  func.func @transform_3(%arg0: i32) -> (i32, i32, i32, i32) {
    %c0_i32 = arith.constant 0 : i32
    %c0_i32_0 = arith.constant 0 : i32
    %c0_i32_1 = arith.constant 0 : i32
    %c0_i32_2 = arith.constant 0 : i32
    return %arg0, %c0_i32, %c0_i32_0, %c0_i32_1 : i32, i32, i32, i32
  }
}

</mosaic_0001>

<llo_original>
// kernel: twro_eblock.1
$region0: #{twro_eblock.1}
  #allocation0 [shape = 'u32[]', space=smem, size = 0x4, offset = 0x4, fixed_abs, tag = 'smem constant byte address 0x4 - core index']
  #allocation1 [shape = 'u32[144,128]{1,0:T(1,128)}', space=vmem, size = 0x12000, scoped, tag = 'internal scratch']
  #allocation2 [shape = 'f32[18,18,4]{2,1,0:T(8,128)}', space=vmem, size = 0x36000, scoped, tag = 'scratch operand']
  #allocation3 [shape = 'f32[18,18,4]{2,1,0:T(8,128)}', space=vmem, size = 0x36000, scoped, tag = 'scratch operand']
  %s0 = inlined_call_operand.vmem [shape: f32[2,16,16,4], index: 0, kind: input, shape index: {}]
  %s1 = inlined_call_operand.vmem [shape: f32[4,36,4], index: 1, kind: input, shape index: {}]
  %s2 = inlined_call_operand.vmem [shape: f32[4,1,4], index: 2, kind: input, shape index: {}]
  %s3 = inlined_call_operand.vmem [shape: f32[2,16,16,4], index: 3, kind: output, shape index: {}]
  %s4 = sld [smem:[#allocation0]]
  $region45: #{twro_eblock.1} parent=0
    _
  %s6 = ssub.s32 1, %s4
  %s7 = scalar_select 0, %s6, %s4
  loop: start=0, step=1, limit=4
  $region2: #{twro_eblock.1} parent=0 // loop_pre_header
    _
  $region3: #{twro_eblock.1} parent=0 // loop_header
    %s9 = sphi 0, %s13
    %p10 = scmp.ge.s32.totalorder %s9, 4
    %s19 = sphi 0, %s21
    %s22 = sphi 0, %s19
    %s23 = sphi 0, %s22
    %s39 = sphi 0, %s23
    %s43 = sphi 0, %s43
    %s45 = sphi 0, %s43
    %s46 = sphi 0, %s45
    %s60 = sphi 0, %s46
    %s64 = sphi 0, %s64
    %s66 = sphi 0, %s64
    %s67 = sphi 0, %s66
    %s81 = sphi 0, %s67
    %s87 = sphi 0, %s89
    %s90 = sphi 0, %s87
    %s91 = sphi 0, %s90
    %s107 = sphi 0, %s91
  $region4: #{twro_eblock.1} parent=0 // loop_header_branch
    %12 = sbr.rel (%p10) target = $region8
  $region5: #{twro_eblock.1} parent=0 // loop_body
    %s14 = ssub.s32 %s9, 1
    %s15 = ssub.s32 %s9, 2
    %s16 = sadd.s32 %s9, 1
    %s17 = ssub.s32 %s9, %s16
    %p18 = scmp.eq.s32.totalorder %s17, 0
    %s20 = sadd.s32 %s19, 1
    %s21 = scalar_select %p18, %s19, %s20
    %p24 = pneg %p18
    %p25 = scmp.eq.s32.totalorder %s9, 1
    %p26 = por %p24, %p25
    %p27 = scmp.ne.s32.totalorder %s19, %s22
    %p28 = scmp.eq.s32.totalorder %s9, 0
    %p29 = por %p27, %p28
    %p30 = scmp.ne.s32.totalorder %s19, %s22
    %p31 = scmp.eq.s32.totalorder %s14, 1
    %p32 = por %p30, %p31
    %p33 = scmp.ne.s32.totalorder %s22, %s23
    %p34 = scmp.eq.s32.totalorder %s14, 0
    %p35 = por %p33, %p34
    %p36 = scmp.ne.s32.totalorder %s22, %s23
    %p37 = scmp.eq.s32.totalorder %s15, 1
    %p38 = por %p36, %p37
    %p40 = scmp.ne.s32.totalorder %s23, %s39
    %p41 = scmp.eq.s32.totalorder %s15, 0
    %p42 = por %p40, %p41
    %s44 = sadd.s32 %s43, 1
    %p47 = scmp.eq.s32.totalorder %s9, 1
    %p48 = scmp.ne.s32.totalorder %s43, %s45
    %p49 = scmp.eq.s32.totalorder %s9, 0
    %p50 = por %p48, %p49
    %p51 = scmp.ne.s32.totalorder %s43, %s45
    %p52 = scmp.eq.s32.totalorder %s14, 1
    %p53 = por %p51, %p52
    %p54 = scmp.ne.s32.totalorder %s45, %s46
    %p55 = scmp.eq.s32.totalorder %s14, 0
    %p56 = por %p54, %p55
    %p57 = scmp.ne.s32.totalorder %s45, %s46
    %p58 = scmp.eq.s32.totalorder %s15, 1
    %p59 = por %p57, %p58
    %p61 = scmp.ne.s32.totalorder %s46, %s60
    %p62 = scmp.eq.s32.totalorder %s15, 0
    %p63 = por %p61, %p62
    %s65 = sadd.s32 %s64, 1
    %p68 = scmp.eq.s32.totalorder %s9, 1
    %p69 = scmp.ne.s32.totalorder %s64, %s66
    %p70 = scmp.eq.s32.totalorder %s9, 0
    %p71 = por %p69, %p70
    %p72 = scmp.ne.s32.totalorder %s64, %s66
    %p73 = scmp.eq.s32.totalorder %s14, 1
    %p74 = por %p72, %p73
    %p75 = scmp.ne.s32.totalorder %s66, %s67
    %p76 = scmp.eq.s32.totalorder %s14, 0
    %p77 = por %p75, %p76
    %p78 = scmp.ne.s32.totalorder %s66, %s67
    %p79 = scmp.eq.s32.totalorder %s15, 1
    %p80 = por %p78, %p79
    %p82 = scmp.ne.s32.totalorder %s67, %s81
    %p83 = scmp.eq.s32.totalorder %s15, 0
    %p84 = por %p82, %p83
    %s85 = ssub.s32 %s9, %s16
    %p86 = scmp.eq.s32.totalorder %s85, 0
    %s88 = sadd.s32 %s87, 1
    %s89 = scalar_select %p86, %s87, %s88
    %p92 = pneg %p86
    %p93 = scmp.eq.s32.totalorder %s9, 1
    %p94 = por %p92, %p93
    %p95 = scmp.ne.s32.totalorder %s87, %s90
    %p96 = scmp.eq.s32.totalorder %s9, 0
    %p97 = por %p95, %p96
    %p98 = scmp.ne.s32.totalorder %s87, %s90
    %p99 = scmp.eq.s32.totalorder %s14, 1
    %p100 = por %p98, %p99
    %p101 = scmp.ne.s32.totalorder %s90, %s91
    %p102 = scmp.eq.s32.totalorder %s14, 0
    %p103 = por %p101, %p102
    %p104 = scmp.ne.s32.totalorder %s90, %s91
    %p105 = scmp.eq.s32.totalorder %s15, 1
    %p106 = por %p104, %p105
    %p108 = scmp.ne.s32.totalorder %s91, %s107
    %p109 = scmp.eq.s32.totalorder %s15, 0
    %p110 = por %p108, %p109
    %p111 = scmp.le.s32.totalorder 1, %s9
    %p112 = scmp.lt.s32.totalorder %s9, 3
    %p113 = pnand %p111, %p112
    %p114 = pneg %p113
    // Predicated region
    $region9: #{twro_eblock.1} parent=5 // pred_check
      _
    $region10: #{twro_eblock.1} parent=5 // pred_check_branch
      %116 = sbr.rel (%p113) target = $region12
    $region11: #{twro_eblock.1} parent=5 // pred_region
      %s117 = ssub.s32 %s9, 1
      // Predicated region
      $region13: #{twro_eblock.1} parent=11 // pred_check
        %p118 = pneg %p56
      $region14: #{twro_eblock.1} parent=11 // pred_check_branch
        %120 = sbr.rel (%p118) target = $region16
      $region15: #{twro_eblock.1} parent=11 // pred_region
        _
      $region16: #{twro_eblock.1} parent=11 // pred_fallthru
        _
      // Predicated region
      $region17: #{twro_eblock.1} parent=11 // pred_check
        %p121 = pneg %p77
      $region18: #{twro_eblock.1} parent=11 // pred_check_branch
        %123 = sbr.rel (%p121) target = $region20
      $region19: #{twro_eblock.1} parent=11 // pred_region
        _
      $region20: #{twro_eblock.1} parent=11 // pred_fallthru
        _
    $region12: #{twro_eblock.1} parent=5 // pred_fallthru
      _
    %p124 = scmp.lt.s32.totalorder %s9, 2
    // Predicated region
    $region21: #{twro_eblock.1} parent=5 // pred_check
      %p125 = pneg %p124
    $region22: #{twro_eblock.1} parent=5 // pred_check_branch
      %127 = sbr.rel (%p125) target = $region24
    $region23: #{twro_eblock.1} parent=5 // pred_region
      // Predicated region
      $region25: #{twro_eblock.1} parent=23 // pred_check
        %p128 = pneg %p29
      $region26: #{twro_eblock.1} parent=23 // pred_check_branch
        %130 = sbr.rel (%p128) target = $region28
      $region27: #{twro_eblock.1} parent=23 // pred_region
        %p131 = scmp.lt.s32.totalorder %s9, 1
        %s132 = scalar_select %p131, %s9, 1
        %s133 = smul.addr %s132, 32
        %s134 = smul.addr %s133, 8
        %s135 = scalar_lea.vmem %s0, %s134
      $region28: #{twro_eblock.1} parent=23 // pred_fallthru
        _
    $region24: #{twro_eblock.1} parent=5 // pred_fallthru
      _
    %p136 = scmp.le.s32.totalorder 1, %s9
    %p137 = scmp.lt.s32.totalorder %s9, 3
    %p138 = pnand %p136, %p137
    %p139 = pneg %p138
    // Predicated region
    $region29: #{twro_eblock.1} parent=5 // pred_check
      _
    $region30: #{twro_eblock.1} parent=5 // pred_check_branch
      %141 = sbr.rel (%p138) target = $region32
    $region31: #{twro_eblock.1} parent=5 // pred_region
      %s142 = ssub.s32 %s9, 1
      %p143 = scmp.lt.s32.totalorder %s14, 1
      %s144 = scalar_select %p143, %s14, 1
      %s145 = smul.addr %s144, 32
      %s146 = smul.addr %s145, 8
      %s147 = scalar_lea.vmem %s0, %s146
      %p148 = pneg %p35
      %p149 = pneg %p32
      %p150 = pneg %p56
      %p151 = pneg %p53
      %p152 = pneg %p77
      %p153 = pneg %p74
      %p154 = pneg %p103
      %p155 = pneg %p100
      %p156 = scmp.lt.s32.totalorder %s14, 1
      %s157 = scalar_select %p156, %s14, 1
      %s158 = smul.addr %s157, 32
      %s159 = smul.addr %s158, 8
      %s160 = scalar_lea.vmem %s3, %s159
      %p161 = scmp.lt.s32.totalorder %s14, 1
      %s162 = scalar_select %p161, %s14, 1
      %s163 = smul.addr %s162, 32
      %s164 = smul.addr %s163, 8
      %s165 = scalar_lea.vmem %s0, %s164
      %p166 = scmp.lt.s32.totalorder %s14, 1
      %s167 = scalar_select %p166, %s14, 1
      %s168 = smul.addr %s167, 32
      %s169 = smul.addr %s168, 8
      %s170 = scalar_lea.vmem %s3, %s169
      %vm171 = vcmask 31744
      %172 = vst.msk [vmem:[#allocation2] sm:$0xff] %vm171, 0.0
      %173 = vst.msk [vmem:[#allocation2 + $0x8] sm:$0xff] %vm171, 0.0
      %vm174 = vcmask 25600
      %175 = vst.msk [vmem:[#allocation2 + $0x10] sm:$0x3] %vm174, 0.0
      %176 = vst.msk [vmem:[#allocation2 + $0x18] sm:$0xff] %vm171, 0.0
      %177 = vst.msk [vmem:[#allocation2 + $0x20] sm:$0xff] %vm171, 0.0
      %178 = vst.msk [vmem:[#allocation2 + $0x28] sm:$0x3] %vm174, 0.0
      %179 = vst.msk [vmem:[#allocation2 + $0x30] sm:$0xff] %vm171, 0.0
      %180 = vst.msk [vmem:[#allocation2 + $0x38] sm:$0xff] %vm171, 0.0
      %181 = vst.msk [vmem:[#allocation2 + $0x40] sm:$0x3] %vm174, 0.0
      %182 = vst.msk [vmem:[#allocation2 + $0x48] sm:$0xff] %vm171, 0.0
      %183 = vst.msk [vmem:[#allocation2 + $0x50] sm:$0xff] %vm171, 0.0
      %184 = vst.msk [vmem:[#allocation2 + $0x58] sm:$0x3] %vm174, 0.0
      %185 = vst.msk [vmem:[#allocation2 + $0x60] sm:$0xff] %vm171, 0.0
      %186 = vst.msk [vmem:[#allocation2 + $0x68] sm:$0xff] %vm171, 0.0
      %187 = vst.msk [vmem:[#allocation2 + $0x70] sm:$0x3] %vm174, 0.0
      %188 = vst.msk [vmem:[#allocation2 + $0x78] sm:$0xff] %vm171, 0.0
      %189 = vst.msk [vmem:[#allocation2 + $0x80] sm:$0xff] %vm171, 0.0
      %190 = vst.msk [vmem:[#allocation2 + $0x88] sm:$0x3] %vm174, 0.0
      %191 = vst.msk [vmem:[#allocation2 + $0x90] sm:$0xff] %vm171, 0.0
      %192 = vst.msk [vmem:[#allocation2 + $0x98] sm:$0xff] %vm171, 0.0
      %193 = vst.msk [vmem:[#allocation2 + $0xa0] sm:$0x3] %vm174, 0.0
      %194 = vst.msk [vmem:[#allocation2 + $0xa8] sm:$0xff] %vm171, 0.0
      %195 = vst.msk [vmem:[#allocation2 + $0xb0] sm:$0xff] %vm171, 0.0
      %196 = vst.msk [vmem:[#allocation2 + $0xb8] sm:$0x3] %vm174, 0.0
      %197 = vst.msk [vmem:[#allocation2 + $0xc0] sm:$0xff] %vm171, 0.0
      %198 = vst.msk [vmem:[#allocation2 + $0xc8] sm:$0xff] %vm171, 0.0
      %199 = vst.msk [vmem:[#allocation2 + $0xd0] sm:$0x3] %vm174, 0.0
      %200 = vst.msk [vmem:[#allocation2 + $0xd8] sm:$0xff] %vm171, 0.0
      %201 = vst.msk [vmem:[#allocation2 + $0xe0] sm:$0xff] %vm171, 0.0
      %202 = vst.msk [vmem:[#allocation2 + $0xe8] sm:$0x3] %vm174, 0.0
      %203 = vst.msk [vmem:[#allocation2 + $0xf0] sm:$0xff] %vm171, 0.0
      %204 = vst.msk [vmem:[#allocation2 + $0xf8] sm:$0xff] %vm171, 0.0
      %205 = vst.msk [vmem:[#allocation2 + $0x100] sm:$0x3] %vm174, 0.0
      %206 = vst.msk [vmem:[#allocation2 + $0x108] sm:$0xff] %vm171, 0.0
      %207 = vst.msk [vmem:[#allocation2 + $0x110] sm:$0xff] %vm171, 0.0
      %208 = vst.msk [vmem:[#allocation2 + $0x118] sm:$0x3] %vm174, 0.0
      %209 = vst.msk [vmem:[#allocation2 + $0x120] sm:$0xff] %vm171, 0.0
      %210 = vst.msk [vmem:[#allocation2 + $0x128] sm:$0xff] %vm171, 0.0
      %211 = vst.msk [vmem:[#allocation2 + $0x130] sm:$0x3] %vm174, 0.0
      %212 = vst.msk [vmem:[#allocation2 + $0x138] sm:$0xff] %vm171, 0.0
      %213 = vst.msk [vmem:[#allocation2 + $0x140] sm:$0xff] %vm171, 0.0
      %214 = vst.msk [vmem:[#allocation2 + $0x148] sm:$0x3] %vm174, 0.0
      %215 = vst.msk [vmem:[#allocation2 + $0x150] sm:$0xff] %vm171, 0.0
      %216 = vst.msk [vmem:[#allocation2 + $0x158] sm:$0xff] %vm171, 0.0
      %217 = vst.msk [vmem:[#allocation2 + $0x160] sm:$0x3] %vm174, 0.0
      %218 = vst.msk [vmem:[#allocation2 + $0x168] sm:$0xff] %vm171, 0.0
      %219 = vst.msk [vmem:[#allocation2 + $0x170] sm:$0xff] %vm171, 0.0
      %220 = vst.msk [vmem:[#allocation2 + $0x178] sm:$0x3] %vm174, 0.0
      %221 = vst.msk [vmem:[#allocation2 + $0x180] sm:$0xff] %vm171, 0.0
      %222 = vst.msk [vmem:[#allocation2 + $0x188] sm:$0xff] %vm171, 0.0
      %223 = vst.msk [vmem:[#allocation2 + $0x190] sm:$0x3] %vm174, 0.0
      %224 = vst.msk [vmem:[#allocation2 + $0x198] sm:$0xff] %vm171, 0.0
      %225 = vst.msk [vmem:[#allocation2 + $0x1a0] sm:$0xff] %vm171, 0.0
      %226 = vst.msk [vmem:[#allocation2 + $0x1a8] sm:$0x3] %vm174, 0.0
      %227 = vst.msk [vmem:[#allocation3] sm:$0xff] %vm171, 0.0
      %228 = vst.msk [vmem:[#allocation3 + $0x8] sm:$0xff] %vm171, 0.0
      %229 = vst.msk [vmem:[#allocation3 + $0x10] sm:$0x3] %vm174, 0.0
      %230 = vst.msk [vmem:[#allocation3 + $0x18] sm:$0xff] %vm171, 0.0
      %231 = vst.msk [vmem:[#allocation3 + $0x20] sm:$0xff] %vm171, 0.0
      %232 = vst.msk [vmem:[#allocation3 + $0x28] sm:$0x3] %vm174, 0.0
      %233 = vst.msk [vmem:[#allocation3 + $0x30] sm:$0xff] %vm171, 0.0
      %234 = vst.msk [vmem:[#allocation3 + $0x38] sm:$0xff] %vm171, 0.0
      %235 = vst.msk [vmem:[#allocation3 + $0x40] sm:$0x3] %vm174, 0.0
      %236 = vst.msk [vmem:[#allocation3 + $0x48] sm:$0xff] %vm171, 0.0
      %237 = vst.msk [vmem:[#allocation3 + $0x50] sm:$0xff] %vm171, 0.0
      %238 = vst.msk [vmem:[#allocation3 + $0x58] sm:$0x3] %vm174, 0.0
      %239 = vst.msk [vmem:[#allocation3 + $0x60] sm:$0xff] %vm171, 0.0
      %240 = vst.msk [vmem:[#allocation3 + $0x68] sm:$0xff] %vm171, 0.0
      %241 = vst.msk [vmem:[#allocation3 + $0x70] sm:$0x3] %vm174, 0.0
      %242 = vst.msk [vmem:[#allocation3 + $0x78] sm:$0xff] %vm171, 0.0
      %243 = vst.msk [vmem:[#allocation3 + $0x80] sm:$0xff] %vm171, 0.0
      %244 = vst.msk [vmem:[#allocation3 + $0x88] sm:$0x3] %vm174, 0.0
      %245 = vst.msk [vmem:[#allocation3 + $0x90] sm:$0xff] %vm171, 0.0
      %246 = vst.msk [vmem:[#allocation3 + $0x98] sm:$0xff] %vm171, 0.0
      %247 = vst.msk [vmem:[#allocation3 + $0xa0] sm:$0x3] %vm174, 0.0
      %248 = vst.msk [vmem:[#allocation3 + $0xa8] sm:$0xff] %vm171, 0.0
      %249 = vst.msk [vmem:[#allocation3 + $0xb0] sm:$0xff] %vm171, 0.0
      %250 = vst.msk [vmem:[#allocation3 + $0xb8] sm:$0x3] %vm174, 0.0
      %251 = vst.msk [vmem:[#allocation3 + $0xc0] sm:$0xff] %vm171, 0.0
      %252 = vst.msk [vmem:[#allocation3 + $0xc8] sm:$0xff] %vm171, 0.0
      %253 = vst.msk [vmem:[#allocation3 + $0xd0] sm:$0x3] %vm174, 0.0
      %254 = vst.msk [vmem:[#allocation3 + $0xd8] sm:$0xff] %vm171, 0.0
      %255 = vst.msk [vmem:[#allocation3 + $0xe0] sm:$0xff] %vm171, 0.0
      %256 = vst.msk [vmem:[#allocation3 + $0xe8] sm:$0x3] %vm174, 0.0
      %257 = vst.msk [vmem:[#allocation3 + $0xf0] sm:$0xff] %vm171, 0.0
      %258 = vst.msk [vmem:[#allocation3 + $0xf8] sm:$0xff] %vm171, 0.0
      %259 = vst.msk [vmem:[#allocation3 + $0x100] sm:$0x3] %vm174, 0.0
      %260 = vst.msk [vmem:[#allocation3 + $0x108] sm:$0xff] %vm171, 0.0
      %261 = vst.msk [vmem:[#allocation3 + $0x110] sm:$0xff] %vm171, 0.0
      %262 = vst.msk [vmem:[#allocation3 + $0x118] sm:$0x3] %vm174, 0.0
      %263 = vst.msk [vmem:[#allocation3 + $0x120] sm:$0xff] %vm171, 0.0
      %264 = vst.msk [vmem:[#allocation3 + $0x128] sm:$0xff] %vm171, 0.0
      %265 = vst.msk [vmem:[#allocation3 + $0x130] sm:$0x3] %vm174, 0.0
      %266 = vst.msk [vmem:[#allocation3 + $0x138] sm:$0xff] %vm171, 0.0
      %267 = vst.msk [vmem:[#allocation3 + $0x140] sm:$0xff] %vm171, 0.0
      %268 = vst.msk [vmem:[#allocation3 + $0x148] sm:$0x3] %vm174, 0.0
      %269 = vst.msk [vmem:[#allocation3 + $0x150] sm:$0xff] %vm171, 0.0
      %270 = vst.msk [vmem:[#allocation3 + $0x158] sm:$0xff] %vm171, 0.0
      %271 = vst.msk [vmem:[#allocation3 + $0x160] sm:$0x3] %vm174, 0.0
      %272 = vst.msk [vmem:[#allocation3 + $0x168] sm:$0xff] %vm171, 0.0
      %273 = vst.msk [vmem:[#allocation3 + $0x170] sm:$0xff] %vm171, 0.0
      %274 = vst.msk [vmem:[#allocation3 + $0x178] sm:$0x3] %vm174, 0.0
      %275 = vst.msk [vmem:[#allocation3 + $0x180] sm:$0xff] %vm171, 0.0
      %276 = vst.msk [vmem:[#allocation3 + $0x188] sm:$0xff] %vm171, 0.0
      %277 = vst.msk [vmem:[#allocation3 + $0x190] sm:$0x3] %vm174, 0.0
      %278 = vst.msk [vmem:[#allocation3 + $0x198] sm:$0xff] %vm171, 0.0
      %279 = vst.msk [vmem:[#allocation3 + $0x1a0] sm:$0xff] %vm171, 0.0
      %280 = vst.msk [vmem:[#allocation3 + $0x1a8] sm:$0x3] %vm174, 0.0
      %v281 = vld [vmem:[%s165] sm:$0xff]
      %v282 = vld [vmem:[%s165 + $0x8] sm:$0xff]
      %v283 = vld [vmem:[%s165 + $0x10] sm:$0xff]
      %v284 = vld [vmem:[%s165 + $0x18] sm:$0xff]
      %v285 = vld [vmem:[%s165 + $0x20] sm:$0xff]
      %v286 = vld [vmem:[%s165 + $0x28] sm:$0xff]
      %v287 = vld [vmem:[%s165 + $0x30] sm:$0xff]
      %v288 = vld [vmem:[%s165 + $0x38] sm:$0xff]
      %v289 = vld [vmem:[%s165 + $0x40] sm:$0xff]
      %v290 = vld [vmem:[%s165 + $0x48] sm:$0xff]
      %v291 = vld [vmem:[%s165 + $0x50] sm:$0xff]
      %v292 = vld [vmem:[%s165 + $0x58] sm:$0xff]
      %v293 = vld [vmem:[%s165 + $0x60] sm:$0xff]
      %v294 = vld [vmem:[%s165 + $0x68] sm:$0xff]
      %v295 = vld [vmem:[%s165 + $0x70] sm:$0xff]
      %v296 = vld [vmem:[%s165 + $0x78] sm:$0xff]
      %v297 = vld [vmem:[%s165 + $0x80] sm:$0xff]
      %v298 = vld [vmem:[%s165 + $0x88] sm:$0xff]
      %v299 = vld [vmem:[%s165 + $0x90] sm:$0xff]
      %v300 = vld [vmem:[%s165 + $0x98] sm:$0xff]
      %v301 = vld [vmem:[%s165 + $0xa0] sm:$0xff]
      %v302 = vld [vmem:[%s165 + $0xa8] sm:$0xff]
      %v303 = vld [vmem:[%s165 + $0xb0] sm:$0xff]
      %v304 = vld [vmem:[%s165 + $0xb8] sm:$0xff]
      %v305 = vld [vmem:[%s165 + $0xc0] sm:$0xff]
      %v306 = vld [vmem:[%s165 + $0xc8] sm:$0xff]
      %v307 = vld [vmem:[%s165 + $0xd0] sm:$0xff]
      %v308 = vld [vmem:[%s165 + $0xd8] sm:$0xff]
      %v309 = vld [vmem:[%s165 + $0xe0] sm:$0xff]
      %v310 = vld [vmem:[%s165 + $0xe8] sm:$0xff]
      %v311 = vld [vmem:[%s165 + $0xf0] sm:$0xff]
      %v312 = vld [vmem:[%s165 + $0xf8] sm:$0xff]
      %s313 = scalar_lea.vmem [#allocation2], 24
      %314 = vst.msk [vmem:[%s313 + $0x1] sm:$0xff] %vm171, %v281
      %315 = vst.msk [vmem:[%s313 + $0x9] sm:$0xff] %vm171, %v282
      %316 = vst.msk [vmem:[%s313 + $0x19] sm:$0xff] %vm171, %v283
      %317 = vst.msk [vmem:[%s313 + $0x21] sm:$0xff] %vm171, %v284
      %318 = vst.msk [vmem:[%s313 + $0x31] sm:$0xff] %vm171, %v285
      %319 = vst.msk [vmem:[%s313 + $0x39] sm:$0xff] %vm171, %v286
      %320 = vst.msk [vmem:[%s313 + $0x49] sm:$0xff] %vm171, %v287
      %321 = vst.msk [vmem:[%s313 + $0x51] sm:$0xff] %vm171, %v288
      %322 = vst.msk [vmem:[%s313 + $0x61] sm:$0xff] %vm171, %v289
      %323 = vst.msk [vmem:[%s313 + $0x69] sm:$0xff] %vm171, %v290
      %324 = vst.msk [vmem:[%s313 + $0x79] sm:$0xff] %vm171, %v291
      %325 = vst.msk [vmem:[%s313 + $0x81] sm:$0xff] %vm171, %v292
      %326 = vst.msk [vmem:[%s313 + $0x91] sm:$0xff] %vm171, %v293
      %327 = vst.msk [vmem:[%s313 + $0x99] sm:$0xff] %vm171, %v294
      %328 = vst.msk [vmem:[%s313 + $0xa9] sm:$0xff] %vm171, %v295
      %329 = vst.msk [vmem:[%s313 + $0xb1] sm:$0xff] %vm171, %v296
      %330 = vst.msk [vmem:[%s313 + $0xc1] sm:$0xff] %vm171, %v297
      %331 = vst.msk [vmem:[%s313 + $0xc9] sm:$0xff] %vm171, %v298
      %332 = vst.msk [vmem:[%s313 + $0xd9] sm:$0xff] %vm171, %v299
      %333 = vst.msk [vmem:[%s313 + $0xe1] sm:$0xff] %vm171, %v300
      %334 = vst.msk [vmem:[%s313 + $0xf1] sm:$0xff] %vm171, %v301
      %335 = vst.msk [vmem:[%s313 + $0xf9] sm:$0xff] %vm171, %v302
      %336 = vst.msk [vmem:[%s313 + $0x109] sm:$0xff] %vm171, %v303
      %337 = vst.msk [vmem:[%s313 + $0x111] sm:$0xff] %vm171, %v304
      %338 = vst.msk [vmem:[%s313 + $0x121] sm:$0xff] %vm171, %v305
      %339 = vst.msk [vmem:[%s313 + $0x129] sm:$0xff] %vm171, %v306
      %340 = vst.msk [vmem:[%s313 + $0x139] sm:$0xff] %vm171, %v307
      %341 = vst.msk [vmem:[%s313 + $0x141] sm:$0xff] %vm171, %v308
      %342 = vst.msk [vmem:[%s313 + $0x151] sm:$0xff] %vm171, %v309
      %343 = vst.msk [vmem:[%s313 + $0x159] sm:$0xff] %vm171, %v310
      %344 = vst.msk [vmem:[%s313 + $0x169] sm:$0xff] %vm171, %v311
      %345 = vst.msk [vmem:[%s313 + $0x171] sm:$0xff] %vm171, %v312
      %v346 = vld [vmem:[#allocation2] sm:$0xff]
      %v347 = vld [vmem:[#allocation2 + $0x8] sm:$0xff]
      %v348 = vld [vmem:[#allocation2 + $0x10] sm:$0x3]
      %v349 = vld [vmem:[#allocation2 + $0x18] sm:$0xff]
      %v350 = vld [vmem:[#allocation2 + $0x20] sm:$0xff]
      %v351 = vld [vmem:[#allocation2 + $0x28] sm:$0x3]
      %v352 = vld [vmem:[#allocation2 + $0x30] sm:$0xff]
      %v353 = vld [vmem:[#allocation2 + $0x38] sm:$0xff]
      %v354 = vld [vmem:[#allocation2 + $0x40] sm:$0x3]
      %v355 = vld [vmem:[#allocation2 + $0x48] sm:$0xff]
      %v356 = vld [vmem:[#allocation2 + $0x50] sm:$0xff]
      %v357 = vld [vmem:[#allocation2 + $0x58] sm:$0x3]
      %v358 = vld [vmem:[#allocation2 + $0x60] sm:$0xff]
      %v359 = vld [vmem:[#allocation2 + $0x68] sm:$0xff]
      %v360 = vld [vmem:[#allocation2 + $0x70] sm:$0x3]
      %v361 = vld [vmem:[#allocation2 + $0x78] sm:$0xff]
      %v362 = vld [vmem:[#allocation2 + $0x80] sm:$0xff]
      %v363 = vld [vmem:[#allocation2 + $0x88] sm:$0x3]
      %v364 = vld [vmem:[#allocation2 + $0x90] sm:$0xff]
      %v365 = vld [vmem:[#allocation2 + $0x98] sm:$0xff]
      %v366 = vld [vmem:[#allocation2 + $0xa0] sm:$0x3]
      %v367 = vld [vmem:[#allocation2 + $0xa8] sm:$0xff]
      %v368 = vld [vmem:[#allocation2 + $0xb0] sm:$0xff]
      %v369 = vld [vmem:[#allocation2 + $0xb8] sm:$0x3]
      %v370 = vld [vmem:[#allocation2 + $0xc0] sm:$0xff]
      %v371 = vld [vmem:[#allocation2 + $0xc8] sm:$0xff]
      %v372 = vld [vmem:[#allocation2 + $0xd0] sm:$0x3]
      %v373 = vld [vmem:[#allocation2 + $0xd8] sm:$0xff]
      %v374 = vld [vmem:[#allocation2 + $0xe0] sm:$0xff]
      %v375 = vld [vmem:[#allocation2 + $0xe8] sm:$0x3]
      %v376 = vld [vmem:[#allocation2 + $0xf0] sm:$0xff]
      %v377 = vld [vmem:[#allocation2 + $0xf8] sm:$0xff]
      %v378 = vld [vmem:[#allocation2 + $0x100] sm:$0x3]
      %v379 = vld [vmem:[#allocation2 + $0x108] sm:$0xff]
      %v380 = vld [vmem:[#allocation2 + $0x110] sm:$0xff]
      %v381 = vld [vmem:[#allocation2 + $0x118] sm:$0x3]
      %v382 = vld [vmem:[#allocation2 + $0x120] sm:$0xff]
      %v383 = vld [vmem:[#allocation2 + $0x128] sm:$0xff]
      %v384 = vld [vmem:[#allocation2 + $0x130] sm:$0x3]
      %v385 = vld [vmem:[#allocation2 + $0x138] sm:$0xff]
      %v386 = vld [vmem:[#allocation2 + $0x140] sm:$0xff]
      %v387 = vld [vmem:[#allocation2 + $0x148] sm:$0x3]
      %v388 = vld [vmem:[#allocation2 + $0x150] sm:$0xff]
      %v389 = vld [vmem:[#allocation2 + $0x158] sm:$0xff]
      %v390 = vld [vmem:[#allocation2 + $0x160] sm:$0x3]
      %v391 = vld [vmem:[#allocation2 + $0x168] sm:$0xff]
      %v392 = vld [vmem:[#allocation2 + $0x170] sm:$0xff]
      %v393 = vld [vmem:[#allocation2 + $0x178] sm:$0x3]
      %v394 = vld [vmem:[#allocation2 + $0x180] sm:$0xff]
      %v395 = vld [vmem:[#allocation2 + $0x188] sm:$0xff]
      %v396 = vld [vmem:[#allocation2 + $0x190] sm:$0x3]
      %v397 = vld [vmem:[#allocation2 + $0x198] sm:$0xff]
      %v398 = vld [vmem:[#allocation2 + $0x1a0] sm:$0xff]
      %v399 = vld [vmem:[#allocation2 + $0x1a8] sm:$0x3]
      %v400 = vld [vmem:[%s1] sm:$0xff]
      %v401 = vld [vmem:[%s1 + $0x8] sm:$0xff]
      %v402 = vld [vmem:[%s1 + $0x10] sm:$0xff]
      %v403 = vld [vmem:[%s1 + $0x18] sm:$0xff]
      %v404 = vld [vmem:[%s1 + $0x20] sm:$0xf]
      %v405 = vld [vmem:[%s2] sm:$0x1]
      %vm454 = vcmask 1046528
      %v455 = vrot.slane %v346, 1
      %v456 = vrot.slane %v347, 1
      %v457 = vsel %vm454, %v455, %v456
      %v458 = vrot.slane %v348, 1
      %v459 = vsel %vm454, %v456, %v458
      %v460 = vrot.slane %v349, 1
      %v461 = vrot.slane %v350, 1
      %v462 = vsel %vm454, %v460, %v461
      %v463 = vrot.slane %v351, 1
      %v464 = vsel %vm454, %v461, %v463
      %v465 = vrot.slane %v352, 1
      %v466 = vrot.slane %v353, 1
      %v467 = vsel %vm454, %v465, %v466
      %v468 = vrot.slane %v354, 1
      %v469 = vsel %vm454, %v466, %v468
      %v470 = vrot.slane %v355, 1
      %v471 = vrot.slane %v356, 1
      %v472 = vsel %vm454, %v470, %v471
      %v473 = vrot.slane %v357, 1
      %v474 = vsel %vm454, %v471, %v473
      %v475 = vrot.slane %v358, 1
      %v476 = vrot.slane %v359, 1
      %v477 = vsel %vm454, %v475, %v476
      %v478 = vrot.slane %v360, 1
      %v479 = vsel %vm454, %v476, %v478
      %v480 = vrot.slane %v361, 1
      %v481 = vrot.slane %v362, 1
      %v482 = vsel %vm454, %v480, %v481
      %v483 = vrot.slane %v363, 1
      %v484 = vsel %vm454, %v481, %v483
      %v485 = vrot.slane %v364, 1
      %v486 = vrot.slane %v365, 1
      %v487 = vsel %vm454, %v485, %v486
      %v488 = vrot.slane %v366, 1
      %v489 = vsel %vm454, %v486, %v488
      %v490 = vrot.slane %v367, 1
      %v491 = vrot.slane %v368, 1
      %v492 = vsel %vm454, %v490, %v491
      %v493 = vrot.slane %v369, 1
      %v494 = vsel %vm454, %v491, %v493
      %v495 = vrot.slane %v370, 1
      %v496 = vrot.slane %v371, 1
      %v497 = vsel %vm454, %v495, %v496
      %v498 = vrot.slane %v372, 1
      %v499 = vsel %vm454, %v496, %v498
      %v500 = vrot.slane %v373, 1
      %v501 = vrot.slane %v374, 1
      %v502 = vsel %vm454, %v500, %v501
      %v503 = vrot.slane %v375, 1
      %v504 = vsel %vm454, %v501, %v503
      %v505 = vrot.slane %v376, 1
      %v506 = vrot.slane %v377, 1
      %v507 = vsel %vm454, %v505, %v506
      %v508 = vrot.slane %v378, 1
      %v509 = vsel %vm454, %v506, %v508
      %v510 = vrot.slane %v379, 1
      %v511 = vrot.slane %v380, 1
      %v512 = vsel %vm454, %v510, %v511
      %v513 = vrot.slane %v381, 1
      %v514 = vsel %vm454, %v511, %v513
      %v515 = vrot.slane %v382, 1
      %v516 = vrot.slane %v383, 1
      %v517 = vsel %vm454, %v515, %v516
      %v518 = vrot.slane %v384, 1
      %v519 = vsel %vm454, %v516, %v518
      %v520 = vrot.slane %v385, 1
      %v521 = vrot.slane %v386, 1
      %v522 = vsel %vm454, %v520, %v521
      %v523 = vrot.slane %v387, 1
      %v524 = vsel %vm454, %v521, %v523
      %v525 = vrot.slane %v388, 1
      %v526 = vrot.slane %v389, 1
      %v527 = vsel %vm454, %v525, %v526
      %v528 = vrot.slane %v390, 1
      %v529 = vsel %vm454, %v526, %v528
      %v530 = vrot.slane %v391, 1
      %v531 = vrot.slane %v392, 1
      %v532 = vsel %vm454, %v530, %v531
      %v533 = vrot.slane %v393, 1
      %v534 = vsel %vm454, %v531, %v533
      %535 = vrot.lane.b32.xlu0 %v457, 4
      %v536 = vpop.permute.xlu0 %535
      %537 = vrot.lane.b32.xlu0 %v459, 4
      %v538 = vpop.permute.xlu0 %537
      %539 = vrot.lane.b32.xlu0 %v462, 4
      %v540 = vpop.permute.xlu0 %539
      %541 = vrot.lane.b32.xlu0 %v464, 4
      %v542 = vpop.permute.xlu0 %541
      %543 = vrot.lane.b32.xlu0 %v467, 4
      %v544 = vpop.permute.xlu0 %543
      %545 = vrot.lane.b32.xlu0 %v469, 4
      %v546 = vpop.permute.xlu0 %545
      %547 = vrot.lane.b32.xlu0 %v472, 4
      %v548 = vpop.permute.xlu0 %547
      %549 = vrot.lane.b32.xlu0 %v474, 4
      %v550 = vpop.permute.xlu0 %549
      %551 = vrot.lane.b32.xlu0 %v477, 4
      %v552 = vpop.permute.xlu0 %551
      %553 = vrot.lane.b32.xlu0 %v479, 4
      %v554 = vpop.permute.xlu0 %553
      %555 = vrot.lane.b32.xlu0 %v482, 4
      %v556 = vpop.permute.xlu0 %555
      %557 = vrot.lane.b32.xlu0 %v484, 4
      %v558 = vpop.permute.xlu0 %557
      %559 = vrot.lane.b32.xlu0 %v487, 4
      %v560 = vpop.permute.xlu0 %559
      %561 = vrot.lane.b32.xlu0 %v489, 4
      %v562 = vpop.permute.xlu0 %561
      %563 = vrot.lane.b32.xlu0 %v492, 4
      %v564 = vpop.permute.xlu0 %563
      %565 = vrot.lane.b32.xlu0 %v494, 4
      %v566 = vpop.permute.xlu0 %565
      %567 = vrot.lane.b32.xlu0 %v497, 4
      %v568 = vpop.permute.xlu0 %567
      %569 = vrot.lane.b32.xlu0 %v499, 4
      %v570 = vpop.permute.xlu0 %569
      %571 = vrot.lane.b32.xlu0 %v502, 4
      %v572 = vpop.permute.xlu0 %571
      %573 = vrot.lane.b32.xlu0 %v504, 4
      %v574 = vpop.permute.xlu0 %573
      %575 = vrot.lane.b32.xlu0 %v507, 4
      %v576 = vpop.permute.xlu0 %575
      %577 = vrot.lane.b32.xlu0 %v509, 4
      %v578 = vpop.permute.xlu0 %577
      %579 = vrot.lane.b32.xlu0 %v512, 4
      %v580 = vpop.permute.xlu0 %579
      %581 = vrot.lane.b32.xlu0 %v514, 4
      %v582 = vpop.permute.xlu0 %581
      %583 = vrot.lane.b32.xlu0 %v517, 4
      %v584 = vpop.permute.xlu0 %583
      %585 = vrot.lane.b32.xlu0 %v519, 4
      %v586 = vpop.permute.xlu0 %585
      %587 = vrot.lane.b32.xlu0 %v522, 4
      %v588 = vpop.permute.xlu0 %587
      %589 = vrot.lane.b32.xlu0 %v524, 4
      %v590 = vpop.permute.xlu0 %589
      %591 = vrot.lane.b32.xlu0 %v527, 4
      %v592 = vpop.permute.xlu0 %591
      %593 = vrot.lane.b32.xlu0 %v529, 4
      %v594 = vpop.permute.xlu0 %593
      %595 = vrot.lane.b32.xlu0 %v532, 4
      %v596 = vpop.permute.xlu0 %595
      %597 = vrot.lane.b32.xlu0 %v534, 4
      %v598 = vpop.permute.xlu0 %597
      %vm631 = vcmask 1045504
      %v632 = vrot.slane %v346, 2
      %v633 = vrot.slane %v347, 2
      %v634 = vsel %vm631, %v632, %v633
      %v635 = vrot.slane %v348, 2
      %v636 = vsel %vm631, %v633, %v635
      %v637 = vrot.slane %v349, 2
      %v638 = vrot.slane %v350, 2
      %v639 = vsel %vm631, %v637, %v638
      %v640 = vrot.slane %v351, 2
      %v641 = vsel %vm631, %v638, %v640
      %v642 = vrot.slane %v352, 2
      %v643 = vrot.slane %v353, 2
      %v644 = vsel %vm631, %v642, %v643
      %v645 = vrot.slane %v354, 2
      %v646 = vsel %vm631, %v643, %v645
      %v647 = vrot.slane %v355, 2
      %v648 = vrot.slane %v356, 2
      %v649 = vsel %vm631, %v647, %v648
      %v650 = vrot.slane %v357, 2
      %v651 = vsel %vm631, %v648, %v650
      %v652 = vrot.slane %v358, 2
      %v653 = vrot.slane %v359, 2
      %v654 = vsel %vm631, %v652, %v653
      %v655 = vrot.slane %v360, 2
      %v656 = vsel %vm631, %v653, %v655
      %v657 = vrot.slane %v361, 2
      %v658 = vrot.slane %v362, 2
      %v659 = vsel %vm631, %v657, %v658
      %v660 = vrot.slane %v363, 2
      %v661 = vsel %vm631, %v658, %v660
      %v662 = vrot.slane %v364, 2
      %v663 = vrot.slane %v365, 2
      %v664 = vsel %vm631, %v662, %v663
      %v665 = vrot.slane %v366, 2
      %v666 = vsel %vm631, %v663, %v665
      %v667 = vrot.slane %v367, 2
      %v668 = vrot.slane %v368, 2
      %v669 = vsel %vm631, %v667, %v668
      %v670 = vrot.slane %v369, 2
      %v671 = vsel %vm631, %v668, %v670
      %v672 = vrot.slane %v370, 2
      %v673 = vrot.slane %v371, 2
      %v674 = vsel %vm631, %v672, %v673
      %v675 = vrot.slane %v372, 2
      %v676 = vsel %vm631, %v673, %v675
      %v677 = vrot.slane %v373, 2
      %v678 = vrot.slane %v374, 2
      %v679 = vsel %vm631, %v677, %v678
      %v680 = vrot.slane %v375, 2
      %v681 = vsel %vm631, %v678, %v680
      %v682 = vrot.slane %v376, 2
      %v683 = vrot.slane %v377, 2
      %v684 = vsel %vm631, %v682, %v683
      %v685 = vrot.slane %v378, 2
      %v686 = vsel %vm631, %v683, %v685
      %v687 = vrot.slane %v379, 2
      %v688 = vrot.slane %v380, 2
      %v689 = vsel %vm631, %v687, %v688
      %v690 = vrot.slane %v381, 2
      %v691 = vsel %vm631, %v688, %v690
      %v692 = vrot.slane %v382, 2
      %v693 = vrot.slane %v383, 2
      %v694 = vsel %vm631, %v692, %v693
      %v695 = vrot.slane %v384, 2
      %v696 = vsel %vm631, %v693, %v695
      %v697 = vrot.slane %v385, 2
      %v698 = vrot.slane %v386, 2
      %v699 = vsel %vm631, %v697, %v698
      %v700 = vrot.slane %v387, 2
      %v701 = vsel %vm631, %v698, %v700
      %v702 = vrot.slane %v388, 2
      %v703 = vrot.slane %v389, 2
      %v704 = vsel %vm631, %v702, %v703
      %v705 = vrot.slane %v390, 2
      %v706 = vsel %vm631, %v703, %v705
      %v707 = vrot.slane %v391, 2
      %v708 = vrot.slane %v392, 2
      %v709 = vsel %vm631, %v707, %v708
      %v710 = vrot.slane %v393, 2
      %v711 = vsel %vm631, %v708, %v710
      %712 = vrot.lane.b32.xlu0 %v634, 8
      %v713 = vpop.permute.xlu0 %712
      %714 = vrot.lane.b32.xlu0 %v636, 8
      %v715 = vpop.permute.xlu0 %714
      %716 = vrot.lane.b32.xlu0 %v639, 8
      %v717 = vpop.permute.xlu0 %716
      %718 = vrot.lane.b32.xlu0 %v641, 8
      %v719 = vpop.permute.xlu0 %718
      %720 = vrot.lane.b32.xlu0 %v644, 8
      %v721 = vpop.permute.xlu0 %720
      %722 = vrot.lane.b32.xlu0 %v646, 8
      %v723 = vpop.permute.xlu0 %722
      %724 = vrot.lane.b32.xlu0 %v649, 8
      %v725 = vpop.permute.xlu0 %724
      %726 = vrot.lane.b32.xlu0 %v651, 8
      %v727 = vpop.permute.xlu0 %726
      %728 = vrot.lane.b32.xlu0 %v654, 8
      %v729 = vpop.permute.xlu0 %728
      %730 = vrot.lane.b32.xlu0 %v656, 8
      %v731 = vpop.permute.xlu0 %730
      %732 = vrot.lane.b32.xlu0 %v659, 8
      %v733 = vpop.permute.xlu0 %732
      %734 = vrot.lane.b32.xlu0 %v661, 8
      %v735 = vpop.permute.xlu0 %734
      %736 = vrot.lane.b32.xlu0 %v664, 8
      %v737 = vpop.permute.xlu0 %736
      %738 = vrot.lane.b32.xlu0 %v666, 8
      %v739 = vpop.permute.xlu0 %738
      %740 = vrot.lane.b32.xlu0 %v669, 8
      %v741 = vpop.permute.xlu0 %740
      %742 = vrot.lane.b32.xlu0 %v671, 8
      %v743 = vpop.permute.xlu0 %742
      %744 = vrot.lane.b32.xlu0 %v674, 8
      %v745 = vpop.permute.xlu0 %744
      %746 = vrot.lane.b32.xlu0 %v676, 8
      %v747 = vpop.permute.xlu0 %746
      %748 = vrot.lane.b32.xlu0 %v679, 8
      %v749 = vpop.permute.xlu0 %748
      %750 = vrot.lane.b32.xlu0 %v681, 8
      %v751 = vpop.permute.xlu0 %750
      %752 = vrot.lane.b32.xlu0 %v684, 8
      %v753 = vpop.permute.xlu0 %752
      %754 = vrot.lane.b32.xlu0 %v686, 8
      %v755 = vpop.permute.xlu0 %754
      %756 = vrot.lane.b32.xlu0 %v689, 8
      %v757 = vpop.permute.xlu0 %756
      %758 = vrot.lane.b32.xlu0 %v691, 8
      %v759 = vpop.permute.xlu0 %758
      %760 = vrot.lane.b32.xlu0 %v694, 8
      %v761 = vpop.permute.xlu0 %760
      %762 = vrot.lane.b32.xlu0 %v696, 8
      %v763 = vpop.permute.xlu0 %762
      %764 = vrot.lane.b32.xlu0 %v699, 8
      %v765 = vpop.permute.xlu0 %764
      %766 = vrot.lane.b32.xlu0 %v701, 8
      %v767 = vpop.permute.xlu0 %766
      %768 = vrot.lane.b32.xlu0 %v704, 8
      %v769 = vpop.permute.xlu0 %768
      %770 = vrot.lane.b32.xlu0 %v706, 8
      %v771 = vpop.permute.xlu0 %770
      %772 = vrot.lane.b32.xlu0 %v709, 8
      %v773 = vpop.permute.xlu0 %772
      %774 = vrot.lane.b32.xlu0 %v711, 8
      %v775 = vpop.permute.xlu0 %774
      %810 = vrot.lane.b32.xlu0 %v349, 12
      %v811 = vpop.permute.xlu0 %810
      %812 = vrot.lane.b32.xlu0 %v350, 12
      %v813 = vpop.permute.xlu0 %812
      %814 = vrot.lane.b32.xlu0 %v352, 12
      %v815 = vpop.permute.xlu0 %814
      %816 = vrot.lane.b32.xlu0 %v353, 12
      %v817 = vpop.permute.xlu0 %816
      %818 = vrot.lane.b32.xlu0 %v355, 12
      %v819 = vpop.permute.xlu0 %818
      %820 = vrot.lane.b32.xlu0 %v356, 12
      %v821 = vpop.permute.xlu0 %820
      %822 = vrot.lane.b32.xlu0 %v358, 12
      %v823 = vpop.permute.xlu0 %822
      %824 = vrot.lane.b32.xlu0 %v359, 12
      %v825 = vpop.permute.xlu0 %824
      %826 = vrot.lane.b32.xlu0 %v361, 12
      %v827 = vpop.permute.xlu0 %826
      %828 = vrot.lane.b32.xlu0 %v362, 12
      %v829 = vpop.permute.xlu0 %828
      %830 = vrot.lane.b32.xlu0 %v364, 12
      %v831 = vpop.permute.xlu0 %830
      %832 = vrot.lane.b32.xlu0 %v365, 12
      %v833 = vpop.permute.xlu0 %832
      %834 = vrot.lane.b32.xlu0 %v367, 12
      %v835 = vpop.permute.xlu0 %834
      %836 = vrot.lane.b32.xlu0 %v368, 12
      %v837 = vpop.permute.xlu0 %836
      %838 = vrot.lane.b32.xlu0 %v370, 12
      %v839 = vpop.permute.xlu0 %838
      %840 = vrot.lane.b32.xlu0 %v371, 12
      %v841 = vpop.permute.xlu0 %840
      %842 = vrot.lane.b32.xlu0 %v373, 12
      %v843 = vpop.permute.xlu0 %842
      %844 = vrot.lane.b32.xlu0 %v374, 12
      %v845 = vpop.permute.xlu0 %844
      %846 = vrot.lane.b32.xlu0 %v376, 12
      %v847 = vpop.permute.xlu0 %846
      %848 = vrot.lane.b32.xlu0 %v377, 12
      %v849 = vpop.permute.xlu0 %848
      %850 = vrot.lane.b32.xlu0 %v379, 12
      %v851 = vpop.permute.xlu0 %850
      %852 = vrot.lane.b32.xlu0 %v380, 12
      %v853 = vpop.permute.xlu0 %852
      %854 = vrot.lane.b32.xlu0 %v382, 12
      %v855 = vpop.permute.xlu0 %854
      %856 = vrot.lane.b32.xlu0 %v383, 12
      %v857 = vpop.permute.xlu0 %856
      %858 = vrot.lane.b32.xlu0 %v385, 12
      %v859 = vpop.permute.xlu0 %858
      %860 = vrot.lane.b32.xlu0 %v386, 12
      %v861 = vpop.permute.xlu0 %860
      %862 = vrot.lane.b32.xlu0 %v388, 12
      %v863 = vpop.permute.xlu0 %862
      %864 = vrot.lane.b32.xlu0 %v389, 12
      %v865 = vpop.permute.xlu0 %864
      %866 = vrot.lane.b32.xlu0 %v391, 12
      %v867 = vpop.permute.xlu0 %866
      %868 = vrot.lane.b32.xlu0 %v392, 12
      %v869 = vpop.permute.xlu0 %868
      %870 = vrot.lane.b32.xlu0 %v394, 12
      %v871 = vpop.permute.xlu0 %870
      %872 = vrot.lane.b32.xlu0 %v395, 12
      %v873 = vpop.permute.xlu0 %872
      %v907 = vrot.slane %v394, 1
      %v908 = vrot.slane %v395, 1
      %v909 = vsel %vm454, %v907, %v908
      %v910 = vrot.slane %v396, 1
      %v911 = vsel %vm454, %v908, %v910
      %912 = vrot.lane.b32.xlu0 %v462, 16
      %v913 = vpop.permute.xlu0 %912
      %914 = vrot.lane.b32.xlu0 %v464, 16
      %v915 = vpop.permute.xlu0 %914
      %916 = vrot.lane.b32.xlu0 %v467, 16
      %v917 = vpop.permute.xlu0 %916
      %918 = vrot.lane.b32.xlu0 %v469, 16
      %v919 = vpop.permute.xlu0 %918
      %920 = vrot.lane.b32.xlu0 %v472, 16
      %v921 = vpop.permute.xlu0 %920
      %922 = vrot.lane.b32.xlu0 %v474, 16
      %v923 = vpop.permute.xlu0 %922
      %924 = vrot.lane.b32.xlu0 %v477, 16
      %v925 = vpop.permute.xlu0 %924
      %926 = vrot.lane.b32.xlu0 %v479, 16
      %v927 = vpop.permute.xlu0 %926
      %928 = vrot.lane.b32.xlu0 %v482, 16
      %v929 = vpop.permute.xlu0 %928
      %930 = vrot.lane.b32.xlu0 %v484, 16
      %v931 = vpop.permute.xlu0 %930
      %932 = vrot.lane.b32.xlu0 %v487, 16
      %v933 = vpop.permute.xlu0 %932
      %934 = vrot.lane.b32.xlu0 %v489, 16
      %v935 = vpop.permute.xlu0 %934
      %936 = vrot.lane.b32.xlu0 %v492, 16
      %v937 = vpop.permute.xlu0 %936
      %938 = vrot.lane.b32.xlu0 %v494, 16
      %v939 = vpop.permute.xlu0 %938
      %940 = vrot.lane.b32.xlu0 %v497, 16
      %v941 = vpop.permute.xlu0 %940
      %942 = vrot.lane.b32.xlu0 %v499, 16
      %v943 = vpop.permute.xlu0 %942
      %944 = vrot.lane.b32.xlu0 %v502, 16
      %v945 = vpop.permute.xlu0 %944
      %946 = vrot.lane.b32.xlu0 %v504, 16
      %v947 = vpop.permute.xlu0 %946
      %948 = vrot.lane.b32.xlu0 %v507, 16
      %v949 = vpop.permute.xlu0 %948
      %950 = vrot.lane.b32.xlu0 %v509, 16
      %v951 = vpop.permute.xlu0 %950
      %952 = vrot.lane.b32.xlu0 %v512, 16
      %v953 = vpop.permute.xlu0 %952
      %954 = vrot.lane.b32.xlu0 %v514, 16
      %v955 = vpop.permute.xlu0 %954
      %956 = vrot.lane.b32.xlu0 %v517, 16
      %v957 = vpop.permute.xlu0 %956
      %958 = vrot.lane.b32.xlu0 %v519, 16
      %v959 = vpop.permute.xlu0 %958
      %960 = vrot.lane.b32.xlu0 %v522, 16
      %v961 = vpop.permute.xlu0 %960
      %962 = vrot.lane.b32.xlu0 %v524, 16
      %v963 = vpop.permute.xlu0 %962
      %964 = vrot.lane.b32.xlu0 %v527, 16
      %v965 = vpop.permute.xlu0 %964
      %966 = vrot.lane.b32.xlu0 %v529, 16
      %v967 = vpop.permute.xlu0 %966
      %968 = vrot.lane.b32.xlu0 %v532, 16
      %v969 = vpop.permute.xlu0 %968
      %970 = vrot.lane.b32.xlu0 %v534, 16
      %v971 = vpop.permute.xlu0 %970
      %972 = vrot.lane.b32.xlu0 %v909, 16
      %v973 = vpop.permute.xlu0 %972
      %974 = vrot.lane.b32.xlu0 %v911, 16
      %v975 = vpop.permute.xlu0 %974
      %v1008 = vrot.slane %v394, 2
      %v1009 = vrot.slane %v395, 2
      %v1010 = vsel %vm631, %v1008, %v1009
      %v1011 = vrot.slane %v396, 2
      %v1012 = vsel %vm631, %v1009, %v1011
      %1013 = vrot.lane.b32.xlu0 %v639, 20
      %v1014 = vpop.permute.xlu0 %1013
      %1015 = vrot.lane.b32.xlu0 %v641, 20
      %v1016 = vpop.permute.xlu0 %1015
      %1017 = vrot.lane.b32.xlu0 %v644, 20
      %v1018 = vpop.permute.xlu0 %1017
      %1019 = vrot.lane.b32.xlu0 %v646, 20
      %v1020 = vpop.permute.xlu0 %1019
      %1021 = vrot.lane.b32.xlu0 %v649, 20
      %v1022 = vpop.permute.xlu0 %1021
      %1023 = vrot.lane.b32.xlu0 %v651, 20
      %v1024 = vpop.permute.xlu0 %1023
      %1025 = vrot.lane.b32.xlu0 %v654, 20
      %v1026 = vpop.permute.xlu0 %1025
      %1027 = vrot.lane.b32.xlu0 %v656, 20
      %v1028 = vpop.permute.xlu0 %1027
      %1029 = vrot.lane.b32.xlu0 %v659, 20
      %v1030 = vpop.permute.xlu0 %1029
      %1031 = vrot.lane.b32.xlu0 %v661, 20
      %v1032 = vpop.permute.xlu0 %1031
      %1033 = vrot.lane.b32.xlu0 %v664, 20
      %v1034 = vpop.permute.xlu0 %1033
      %1035 = vrot.lane.b32.xlu0 %v666, 20
      %v1036 = vpop.permute.xlu0 %1035
      %1037 = vrot.lane.b32.xlu0 %v669, 20
      %v1038 = vpop.permute.xlu0 %1037
      %1039 = vrot.lane.b32.xlu0 %v671, 20
      %v1040 = vpop.permute.xlu0 %1039
      %1041 = vrot.lane.b32.xlu0 %v674, 20
      %v1042 = vpop.permute.xlu0 %1041
      %1043 = vrot.lane.b32.xlu0 %v676, 20
      %v1044 = vpop.permute.xlu0 %1043
      %1045 = vrot.lane.b32.xlu0 %v679, 20
      %v1046 = vpop.permute.xlu0 %1045
      %1047 = vrot.lane.b32.xlu0 %v681, 20
      %v1048 = vpop.permute.xlu0 %1047
      %1049 = vrot.lane.b32.xlu0 %v684, 20
      %v1050 = vpop.permute.xlu0 %1049
      %1051 = vrot.lane.b32.xlu0 %v686, 20
      %v1052 = vpop.permute.xlu0 %1051
      %1053 = vrot.lane.b32.xlu0 %v689, 20
      %v1054 = vpop.permute.xlu0 %1053
      %1055 = vrot.lane.b32.xlu0 %v691, 20
      %v1056 = vpop.permute.xlu0 %1055
      %1057 = vrot.lane.b32.xlu0 %v694, 20
      %v1058 = vpop.permute.xlu0 %1057
      %1059 = vrot.lane.b32.xlu0 %v696, 20
      %v1060 = vpop.permute.xlu0 %1059
      %1061 = vrot.lane.b32.xlu0 %v699, 20
      %v1062 = vpop.permute.xlu0 %1061
      %1063 = vrot.lane.b32.xlu0 %v701, 20
      %v1064 = vpop.permute.xlu0 %1063
      %1065 = vrot.lane.b32.xlu0 %v704, 20
      %v1066 = vpop.permute.xlu0 %1065
      %1067 = vrot.lane.b32.xlu0 %v706, 20
      %v1068 = vpop.permute.xlu0 %1067
      %1069 = vrot.lane.b32.xlu0 %v709, 20
      %v1070 = vpop.permute.xlu0 %1069
      %1071 = vrot.lane.b32.xlu0 %v711, 20
      %v1072 = vpop.permute.xlu0 %1071
      %1073 = vrot.lane.b32.xlu0 %v1010, 20
      %v1074 = vpop.permute.xlu0 %1073
      %1075 = vrot.lane.b32.xlu0 %v1012, 20
      %v1076 = vpop.permute.xlu0 %1075
      %1111 = vrot.lane.b32.xlu0 %v352, 24
      %v1112 = vpop.permute.xlu0 %1111
      %1113 = vrot.lane.b32.xlu0 %v353, 24
      %v1114 = vpop.permute.xlu0 %1113
      %1115 = vrot.lane.b32.xlu0 %v355, 24
      %v1116 = vpop.permute.xlu0 %1115
      %1117 = vrot.lane.b32.xlu0 %v356, 24
      %v1118 = vpop.permute.xlu0 %1117
      %1119 = vrot.lane.b32.xlu0 %v358, 24
      %v1120 = vpop.permute.xlu0 %1119
      %1121 = vrot.lane.b32.xlu0 %v359, 24
      %v1122 = vpop.permute.xlu0 %1121
      %1123 = vrot.lane.b32.xlu0 %v361, 24
      %v1124 = vpop.permute.xlu0 %1123
      %1125 = vrot.lane.b32.xlu0 %v362, 24
      %v1126 = vpop.permute.xlu0 %1125
      %1127 = vrot.lane.b32.xlu0 %v364, 24
      %v1128 = vpop.permute.xlu0 %1127
      %1129 = vrot.lane.b32.xlu0 %v365, 24
      %v1130 = vpop.permute.xlu0 %1129
      %1131 = vrot.lane.b32.xlu0 %v367, 24
      %v1132 = vpop.permute.xlu0 %1131
      %1133 = vrot.lane.b32.xlu0 %v368, 24
      %v1134 = vpop.permute.xlu0 %1133
      %1135 = vrot.lane.b32.xlu0 %v370, 24
      %v1136 = vpop.permute.xlu0 %1135
      %1137 = vrot.lane.b32.xlu0 %v371, 24
      %v1138 = vpop.permute.xlu0 %1137
      %1139 = vrot.lane.b32.xlu0 %v373, 24
      %v1140 = vpop.permute.xlu0 %1139
      %1141 = vrot.lane.b32.xlu0 %v374, 24
      %v1142 = vpop.permute.xlu0 %1141
      %1143 = vrot.lane.b32.xlu0 %v376, 24
      %v1144 = vpop.permute.xlu0 %1143
      %1145 = vrot.lane.b32.xlu0 %v377, 24
      %v1146 = vpop.permute.xlu0 %1145
      %1147 = vrot.lane.b32.xlu0 %v379, 24
      %v1148 = vpop.permute.xlu0 %1147
      %1149 = vrot.lane.b32.xlu0 %v380, 24
      %v1150 = vpop.permute.xlu0 %1149
      %1151 = vrot.lane.b32.xlu0 %v382, 24
      %v1152 = vpop.permute.xlu0 %1151
      %1153 = vrot.lane.b32.xlu0 %v383, 24
      %v1154 = vpop.permute.xlu0 %1153
      %1155 = vrot.lane.b32.xlu0 %v385, 24
      %v1156 = vpop.permute.xlu0 %1155
      %1157 = vrot.lane.b32.xlu0 %v386, 24
      %v1158 = vpop.permute.xlu0 %1157
      %1159 = vrot.lane.b32.xlu0 %v388, 24
      %v1160 = vpop.permute.xlu0 %1159
      %1161 = vrot.lane.b32.xlu0 %v389, 24
      %v1162 = vpop.permute.xlu0 %1161
      %1163 = vrot.lane.b32.xlu0 %v391, 24
      %v1164 = vpop.permute.xlu0 %1163
      %1165 = vrot.lane.b32.xlu0 %v392, 24
      %v1166 = vpop.permute.xlu0 %1165
      %1167 = vrot.lane.b32.xlu0 %v394, 24
      %v1168 = vpop.permute.xlu0 %1167
      %1169 = vrot.lane.b32.xlu0 %v395, 24
      %v1170 = vpop.permute.xlu0 %1169
      %1171 = vrot.lane.b32.xlu0 %v397, 24
      %v1172 = vpop.permute.xlu0 %1171
      %1173 = vrot.lane.b32.xlu0 %v398, 24
      %v1174 = vpop.permute.xlu0 %1173
      %v1208 = vrot.slane %v397, 1
      %v1209 = vrot.slane %v398, 1
      %v1210 = vsel %vm454, %v1208, %v1209
      %v1211 = vrot.slane %v399, 1
      %v1212 = vsel %vm454, %v1209, %v1211
      %1213 = vrot.lane.b32.xlu0 %v467, 28
      %v1214 = vpop.permute.xlu0 %1213
      %1215 = vrot.lane.b32.xlu0 %v469, 28
      %v1216 = vpop.permute.xlu0 %1215
      %1217 = vrot.lane.b32.xlu0 %v472, 28
      %v1218 = vpop.permute.xlu0 %1217
      %1219 = vrot.lane.b32.xlu0 %v474, 28
      %v1220 = vpop.permute.xlu0 %1219
      %1221 = vrot.lane.b32.xlu0 %v477, 28
      %v1222 = vpop.permute.xlu0 %1221
      %1223 = vrot.lane.b32.xlu0 %v479, 28
      %v1224 = vpop.permute.xlu0 %1223
      %1225 = vrot.lane.b32.xlu0 %v482, 28
      %v1226 = vpop.permute.xlu0 %1225
      %1227 = vrot.lane.b32.xlu0 %v484, 28
      %v1228 = vpop.permute.xlu0 %1227
      %1229 = vrot.lane.b32.xlu0 %v487, 28
      %v1230 = vpop.permute.xlu0 %1229
      %1231 = vrot.lane.b32.xlu0 %v489, 28
      %v1232 = vpop.permute.xlu0 %1231
      %1233 = vrot.lane.b32.xlu0 %v492, 28
      %v1234 = vpop.permute.xlu0 %1233
      %1235 = vrot.lane.b32.xlu0 %v494, 28
      %v1236 = vpop.permute.xlu0 %1235
      %1237 = vrot.lane.b32.xlu0 %v497, 28
      %v1238 = vpop.permute.xlu0 %1237
      %1239 = vrot.lane.b32.xlu0 %v499, 28
      %v1240 = vpop.permute.xlu0 %1239
      %1241 = vrot.lane.b32.xlu0 %v502, 28
      %v1242 = vpop.permute.xlu0 %1241
      %1243 = vrot.lane.b32.xlu0 %v504, 28
      %v1244 = vpop.permute.xlu0 %1243
      %1245 = vrot.lane.b32.xlu0 %v507, 28
      %v1246 = vpop.permute.xlu0 %1245
      %1247 = vrot.lane.b32.xlu0 %v509, 28
      %v1248 = vpop.permute.xlu0 %1247
      %1249 = vrot.lane.b32.xlu0 %v512, 28
      %v1250 = vpop.permute.xlu0 %1249
      %1251 = vrot.lane.b32.xlu0 %v514, 28
      %v1252 = vpop.permute.xlu0 %1251
      %1253 = vrot.lane.b32.xlu0 %v517, 28
      %v1254 = vpop.permute.xlu0 %1253
      %1255 = vrot.lane.b32.xlu0 %v519, 28
      %v1256 = vpop.permute.xlu0 %1255
      %1257 = vrot.lane.b32.xlu0 %v522, 28
      %v1258 = vpop.permute.xlu0 %1257
      %1259 = vrot.lane.b32.xlu0 %v524, 28
      %v1260 = vpop.permute.xlu0 %1259
      %1261 = vrot.lane.b32.xlu0 %v527, 28
      %v1262 = vpop.permute.xlu0 %1261
      %1263 = vrot.lane.b32.xlu0 %v529, 28
      %v1264 = vpop.permute.xlu0 %1263
      %1265 = vrot.lane.b32.xlu0 %v532, 28
      %v1266 = vpop.permute.xlu0 %1265
      %1267 = vrot.lane.b32.xlu0 %v534, 28
      %v1268 = vpop.permute.xlu0 %1267
      %1269 = vrot.lane.b32.xlu0 %v909, 28
      %v1270 = vpop.permute.xlu0 %1269
      %1271 = vrot.lane.b32.xlu0 %v911, 28
      %v1272 = vpop.permute.xlu0 %1271
      %1273 = vrot.lane.b32.xlu0 %v1210, 28
      %v1274 = vpop.permute.xlu0 %1273
      %1275 = vrot.lane.b32.xlu0 %v1212, 28
      %v1276 = vpop.permute.xlu0 %1275
      %v1309 = vrot.slane %v397, 2
      %v1310 = vrot.slane %v398, 2
      %v1311 = vsel %vm631, %v1309, %v1310
      %v1312 = vrot.slane %v399, 2
      %v1313 = vsel %vm631, %v1310, %v1312
      %1314 = vrot.lane.b32.xlu0 %v644, 32
      %v1315 = vpop.permute.xlu0 %1314
      %1316 = vrot.lane.b32.xlu0 %v646, 32
      %v1317 = vpop.permute.xlu0 %1316
      %1318 = vrot.lane.b32.xlu0 %v649, 32
      %v1319 = vpop.permute.xlu0 %1318
      %1320 = vrot.lane.b32.xlu0 %v651, 32
      %v1321 = vpop.permute.xlu0 %1320
      %1322 = vrot.lane.b32.xlu0 %v654, 32
      %v1323 = vpop.permute.xlu0 %1322
      %1324 = vrot.lane.b32.xlu0 %v656, 32
      %v1325 = vpop.permute.xlu0 %1324
      %1326 = vrot.lane.b32.xlu0 %v659, 32
      %v1327 = vpop.permute.xlu0 %1326
      %1328 = vrot.lane.b32.xlu0 %v661, 32
      %v1329 = vpop.permute.xlu0 %1328
      %1330 = vrot.lane.b32.xlu0 %v664, 32
      %v1331 = vpop.permute.xlu0 %1330
      %1332 = vrot.lane.b32.xlu0 %v666, 32
      %v1333 = vpop.permute.xlu0 %1332
      %1334 = vrot.lane.b32.xlu0 %v669, 32
      %v1335 = vpop.permute.xlu0 %1334
      %1336 = vrot.lane.b32.xlu0 %v671, 32
      %v1337 = vpop.permute.xlu0 %1336
      %1338 = vrot.lane.b32.xlu0 %v674, 32
      %v1339 = vpop.permute.xlu0 %1338
      %1340 = vrot.lane.b32.xlu0 %v676, 32
      %v1341 = vpop.permute.xlu0 %1340
      %1342 = vrot.lane.b32.xlu0 %v679, 32
      %v1343 = vpop.permute.xlu0 %1342
      %1344 = vrot.lane.b32.xlu0 %v681, 32
      %v1345 = vpop.permute.xlu0 %1344
      %1346 = vrot.lane.b32.xlu0 %v684, 32
      %v1347 = vpop.permute.xlu0 %1346
      %1348 = vrot.lane.b32.xlu0 %v686, 32
      %v1349 = vpop.permute.xlu0 %1348
      %1350 = vrot.lane.b32.xlu0 %v689, 32
      %v1351 = vpop.permute.xlu0 %1350
      %1352 = vrot.lane.b32.xlu0 %v691, 32
      %v1353 = vpop.permute.xlu0 %1352
      %1354 = vrot.lane.b32.xlu0 %v694, 32
      %v1355 = vpop.permute.xlu0 %1354
      %1356 = vrot.lane.b32.xlu0 %v696, 32
      %v1357 = vpop.permute.xlu0 %1356
      %1358 = vrot.lane.b32.xlu0 %v699, 32
      %v1359 = vpop.permute.xlu0 %1358
      %1360 = vrot.lane.b32.xlu0 %v701, 32
      %v1361 = vpop.permute.xlu0 %1360
      %1362 = vrot.lane.b32.xlu0 %v704, 32
      %v1363 = vpop.permute.xlu0 %1362
      %1364 = vrot.lane.b32.xlu0 %v706, 32
      %v1365 = vpop.permute.xlu0 %1364
      %1366 = vrot.lane.b32.xlu0 %v709, 32
      %v1367 = vpop.permute.xlu0 %1366
      %1368 = vrot.lane.b32.xlu0 %v711, 32
      %v1369 = vpop.permute.xlu0 %1368
      %1370 = vrot.lane.b32.xlu0 %v1010, 32
      %v1371 = vpop.permute.xlu0 %1370
      %1372 = vrot.lane.b32.xlu0 %v1012, 32
      %v1373 = vpop.permute.xlu0 %1372
      %1374 = vrot.lane.b32.xlu0 %v1311, 32
      %v1375 = vpop.permute.xlu0 %1374
      %1376 = vrot.lane.b32.xlu0 %v1313, 32
      %v1377 = vpop.permute.xlu0 %1376
      %v1410 = vsel %vm171, %v346, %v536
      %v1411 = vsel %vm171, %v347, %v538
      %v1412 = vsel %vm171, %v349, %v540
      %v1413 = vsel %vm171, %v350, %v542
      %v1414 = vsel %vm171, %v352, %v544
      %v1415 = vsel %vm171, %v353, %v546
      %v1416 = vsel %vm171, %v355, %v548
      %v1417 = vsel %vm171, %v356, %v550
      %v1418 = vsel %vm171, %v358, %v552
      %v1419 = vsel %vm171, %v359, %v554
      %v1420 = vsel %vm171, %v361, %v556
      %v1421 = vsel %vm171, %v362, %v558
      %v1422 = vsel %vm171, %v364, %v560
      %v1423 = vsel %vm171, %v365, %v562
      %v1424 = vsel %vm171, %v367, %v564
      %v1425 = vsel %vm171, %v368, %v566
      %v1426 = vsel %vm171, %v370, %v568
      %v1427 = vsel %vm171, %v371, %v570
      %v1428 = vsel %vm171, %v373, %v572
      %v1429 = vsel %vm171, %v374, %v574
      %v1430 = vsel %vm171, %v376, %v576
      %v1431 = vsel %vm171, %v377, %v578
      %v1432 = vsel %vm171, %v379, %v580
      %v1433 = vsel %vm171, %v380, %v582
      %v1434 = vsel %vm171, %v382, %v584
      %v1435 = vsel %vm171, %v383, %v586
      %v1436 = vsel %vm171, %v385, %v588
      %v1437 = vsel %vm171, %v386, %v590
      %v1438 = vsel %vm171, %v388, %v592
      %v1439 = vsel %vm171, %v389, %v594
      %v1440 = vsel %vm171, %v391, %v596
      %v1441 = vsel %vm171, %v392, %v598
      %vm1442 = vcmask 64512
      %v1443 = vsel %vm1442, %v1410, %v713
      %v1444 = vsel %vm1442, %v1411, %v715
      %v1445 = vsel %vm1442, %v1412, %v717
      %v1446 = vsel %vm1442, %v1413, %v719
      %v1447 = vsel %vm1442, %v1414, %v721
      %v1448 = vsel %vm1442, %v1415, %v723
      %v1449 = vsel %vm1442, %v1416, %v725
      %v1450 = vsel %vm1442, %v1417, %v727
      %v1451 = vsel %vm1442, %v1418, %v729
      %v1452 = vsel %vm1442, %v1419, %v731
      %v1453 = vsel %vm1442, %v1420, %v733
      %v1454 = vsel %vm1442, %v1421, %v735
      %v1455 = vsel %vm1442, %v1422, %v737
      %v1456 = vsel %vm1442, %v1423, %v739
      %v1457 = vsel %vm1442, %v1424, %v741
      %v1458 = vsel %vm1442, %v1425, %v743
      %v1459 = vsel %vm1442, %v1426, %v745
      %v1460 = vsel %vm1442, %v1427, %v747
      %v1461 = vsel %vm1442, %v1428, %v749
      %v1462 = vsel %vm1442, %v1429, %v751
      %v1463 = vsel %vm1442, %v1430, %v753
      %v1464 = vsel %vm1442, %v1431, %v755
      %v1465 = vsel %vm1442, %v1432, %v757
      %v1466 = vsel %vm1442, %v1433, %v759
      %v1467 = vsel %vm1442, %v1434, %v761
      %v1468 = vsel %vm1442, %v1435, %v763
      %v1469 = vsel %vm1442, %v1436, %v765
      %v1470 = vsel %vm1442, %v1437, %v767
      %v1471 = vsel %vm1442, %v1438, %v769
      %v1472 = vsel %vm1442, %v1439, %v771
      %v1473 = vsel %vm1442, %v1440, %v773
      %v1474 = vsel %vm1442, %v1441, %v775
      %vm1475 = vcmask 97280
      %v1476 = vsel %vm1475, %v1443, %v811
      %v1477 = vsel %vm1475, %v1444, %v813
      %v1478 = vsel %vm1475, %v1445, %v815
      %v1479 = vsel %vm1475, %v1446, %v817
      %v1480 = vsel %vm1475, %v1447, %v819
      %v1481 = vsel %vm1475, %v1448, %v821
      %v1482 = vsel %vm1475, %v1449, %v823
      %v1483 = vsel %vm1475, %v1450, %v825
      %v1484 = vsel %vm1475, %v1451, %v827
      %v1485 = vsel %vm1475, %v1452, %v829
      %v1486 = vsel %vm1475, %v1453, %v831
      %v1487 = vsel %vm1475, %v1454, %v833
      %v1488 = vsel %vm1475, %v1455, %v835
      %v1489 = vsel %vm1475, %v1456, %v837
      %v1490 = vsel %vm1475, %v1457, %v839
      %v1491 = vsel %vm1475, %v1458, %v841
      %v1492 = vsel %vm1475, %v1459, %v843
      %v1493 = vsel %vm1475, %v1460, %v845
      %v1494 = vsel %vm1475, %v1461, %v847
      %v1495 = vsel %vm1475, %v1462, %v849
      %v1496 = vsel %vm1475, %v1463, %v851
      %v1497 = vsel %vm1475, %v1464, %v853
      %v1498 = vsel %vm1475, %v1465, %v855
      %v1499 = vsel %vm1475, %v1466, %v857
      %v1500 = vsel %vm1475, %v1467, %v859
      %v1501 = vsel %vm1475, %v1468, %v861
      %v1502 = vsel %vm1475, %v1469, %v863
      %v1503 = vsel %vm1475, %v1470, %v865
      %v1504 = vsel %vm1475, %v1471, %v867
      %v1505 = vsel %vm1475, %v1472, %v869
      %v1506 = vsel %vm1475, %v1473, %v871
      %v1507 = vsel %vm1475, %v1474, %v873
      %vm1508 = vcmask 130048
      %v1509 = vsel %vm1508, %v1476, %v913
      %v1510 = vsel %vm1508, %v1477, %v915
      %v1511 = vsel %vm1508, %v1478, %v917
      %v1512 = vsel %vm1508, %v1479, %v919
      %v1513 = vsel %vm1508, %v1480, %v921
      %v1514 = vsel %vm1508, %v1481, %v923
      %v1515 = vsel %vm1508, %v1482, %v925
      %v1516 = vsel %vm1508, %v1483, %v927
      %v1517 = vsel %vm1508, %v1484, %v929
      %v1518 = vsel %vm1508, %v1485, %v931
      %v1519 = vsel %vm1508, %v1486, %v933
      %v1520 = vsel %vm1508, %v1487, %v935
      %v1521 = vsel %vm1508, %v1488, %v937
      %v1522 = vsel %vm1508, %v1489, %v939
      %v1523 = vsel %vm1508, %v1490, %v941
      %v1524 = vsel %vm1508, %v1491, %v943
      %v1525 = vsel %vm1508, %v1492, %v945
      %v1526 = vsel %vm1508, %v1493, %v947
      %v1527 = vsel %vm1508, %v1494, %v949
      %v1528 = vsel %vm1508, %v1495, %v951
      %v1529 = vsel %vm1508, %v1496, %v953
      %v1530 = vsel %vm1508, %v1497, %v955
      %v1531 = vsel %vm1508, %v1498, %v957
      %v1532 = vsel %vm1508, %v1499, %v959
      %v1533 = vsel %vm1508, %v1500, %v961
      %v1534 = vsel %vm1508, %v1501, %v963
      %v1535 = vsel %vm1508, %v1502, %v965
      %v1536 = vsel %vm1508, %v1503, %v967
      %v1537 = vsel %vm1508, %v1504, %v969
      %v1538 = vsel %vm1508, %v1505, %v971
      %v1539 = vsel %vm1508, %v1506, %v973
      %v1540 = vsel %vm1508, %v1507, %v975
      %vm1541 = vcmask 162816
      %v1542 = vsel %vm1541, %v1509, %v1014
      %v1543 = vsel %vm1541, %v1510, %v1016
      %v1544 = vsel %vm1541, %v1511, %v1018
      %v1545 = vsel %vm1541, %v1512, %v1020
      %v1546 = vsel %vm1541, %v1513, %v1022
      %v1547 = vsel %vm1541, %v1514, %v1024
      %v1548 = vsel %vm1541, %v1515, %v1026
      %v1549 = vsel %vm1541, %v1516, %v1028
      %v1550 = vsel %vm1541, %v1517, %v1030
      %v1551 = vsel %vm1541, %v1518, %v1032
      %v1552 = vsel %vm1541, %v1519, %v1034
      %v1553 = vsel %vm1541, %v1520, %v1036
      %v1554 = vsel %vm1541, %v1521, %v1038
      %v1555 = vsel %vm1541, %v1522, %v1040
      %v1556 = vsel %vm1541, %v1523, %v1042
      %v1557 = vsel %vm1541, %v1524, %v1044
      %v1558 = vsel %vm1541, %v1525, %v1046
      %v1559 = vsel %vm1541, %v1526, %v1048
      %v1560 = vsel %vm1541, %v1527, %v1050
      %v1561 = vsel %vm1541, %v1528, %v1052
      %v1562 = vsel %vm1541, %v1529, %v1054
      %v1563 = vsel %vm1541, %v1530, %v1056
      %v1564 = vsel %vm1541, %v1531, %v1058
      %v1565 = vsel %vm1541, %v1532, %v1060
      %v1566 = vsel %vm1541, %v1533, %v1062
      %v1567 = vsel %vm1541, %v1534, %v1064
      %v1568 = vsel %vm1541, %v1535, %v1066
      %v1569 = vsel %vm1541, %v1536, %v1068
      %v1570 = vsel %vm1541, %v1537, %v1070
      %v1571 = vsel %vm1541, %v1538, %v1072
      %v1572 = vsel %vm1541, %v1539, %v1074
      %v1573 = vsel %vm1541, %v1540, %v1076
      %vm1574 = vcmask 195584
      %v1575 = vsel %vm1574, %v1542, %v1112
      %v1576 = vsel %vm1574, %v1543, %v1114
      %v1577 = vsel %vm1574, %v1544, %v1116
      %v1578 = vsel %vm1574, %v1545, %v1118
      %v1579 = vsel %vm1574, %v1546, %v1120
      %v1580 = vsel %vm1574, %v1547, %v1122
      %v1581 = vsel %vm1574, %v1548, %v1124
      %v1582 = vsel %vm1574, %v1549, %v1126
      %v1583 = vsel %vm1574, %v1550, %v1128
      %v1584 = vsel %vm1574, %v1551, %v1130
      %v1585 = vsel %vm1574, %v1552, %v1132
      %v1586 = vsel %vm1574, %v1553, %v1134
      %v1587 = vsel %vm1574, %v1554, %v1136
      %v1588 = vsel %vm1574, %v1555, %v1138
      %v1589 = vsel %vm1574, %v1556, %v1140
      %v1590 = vsel %vm1574, %v1557, %v1142
      %v1591 = vsel %vm1574, %v1558, %v1144
      %v1592 = vsel %vm1574, %v1559, %v1146
      %v1593 = vsel %vm1574, %v1560, %v1148
      %v1594 = vsel %vm1574, %v1561, %v1150
      %v1595 = vsel %vm1574, %v1562, %v1152
      %v1596 = vsel %vm1574, %v1563, %v1154
      %v1597 = vsel %vm1574, %v1564, %v1156
      %v1598 = vsel %vm1574, %v1565, %v1158
      %v1599 = vsel %vm1574, %v1566, %v1160
      %v1600 = vsel %vm1574, %v1567, %v1162
      %v1601 = vsel %vm1574, %v1568, %v1164
      %v1602 = vsel %vm1574, %v1569, %v1166
      %v1603 = vsel %vm1574, %v1570, %v1168
      %v1604 = vsel %vm1574, %v1571, %v1170
      %v1605 = vsel %vm1574, %v1572, %v1172
      %v1606 = vsel %vm1574, %v1573, %v1174
      %vm1607 = vcmask 228352
      %v1608 = vsel %vm1607, %v1575, %v1214
      %v1609 = vsel %vm1607, %v1576, %v1216
      %v1610 = vsel %vm1607, %v1577, %v1218
      %v1611 = vsel %vm1607, %v1578, %v1220
      %v1612 = vsel %vm1607, %v1579, %v1222
      %v1613 = vsel %vm1607, %v1580, %v1224
      %v1614 = vsel %vm1607, %v1581, %v1226
      %v1615 = vsel %vm1607, %v1582, %v1228
      %v1616 = vsel %vm1607, %v1583, %v1230
      %v1617 = vsel %vm1607, %v1584, %v1232
      %v1618 = vsel %vm1607, %v1585, %v1234
      %v1619 = vsel %vm1607, %v1586, %v1236
      %v1620 = vsel %vm1607, %v1587, %v1238
      %v1621 = vsel %vm1607, %v1588, %v1240
      %v1622 = vsel %vm1607, %v1589, %v1242
      %v1623 = vsel %vm1607, %v1590, %v1244
      %v1624 = vsel %vm1607, %v1591, %v1246
      %v1625 = vsel %vm1607, %v1592, %v1248
      %v1626 = vsel %vm1607, %v1593, %v1250
      %v1627 = vsel %vm1607, %v1594, %v1252
      %v1628 = vsel %vm1607, %v1595, %v1254
      %v1629 = vsel %vm1607, %v1596, %v1256
      %v1630 = vsel %vm1607, %v1597, %v1258
      %v1631 = vsel %vm1607, %v1598, %v1260
      %v1632 = vsel %vm1607, %v1599, %v1262
      %v1633 = vsel %vm1607, %v1600, %v1264
      %v1634 = vsel %vm1607, %v1601, %v1266
      %v1635 = vsel %vm1607, %v1602, %v1268
      %v1636 = vsel %vm1607, %v1603, %v1270
      %v1637 = vsel %vm1607, %v1604, %v1272
      %v1638 = vsel %vm1607, %v1605, %v1274
      %v1639 = vsel %vm1607, %v1606, %v1276
      %vm1640 = vcmask 261120
      %v1641 = vsel %vm1640, %v1608, %v1315
      %v1642 = vsel %vm1640, %v1609, %v1317
      %v1643 = vsel %vm1640, %v1610, %v1319
      %v1644 = vsel %vm1640, %v1611, %v1321
      %v1645 = vsel %vm1640, %v1612, %v1323
      %v1646 = vsel %vm1640, %v1613, %v1325
      %v1647 = vsel %vm1640, %v1614, %v1327
      %v1648 = vsel %vm1640, %v1615, %v1329
      %v1649 = vsel %vm1640, %v1616, %v1331
      %v1650 = vsel %vm1640, %v1617, %v1333
      %v1651 = vsel %vm1640, %v1618, %v1335
      %v1652 = vsel %vm1640, %v1619, %v1337
      %v1653 = vsel %vm1640, %v1620, %v1339
      %v1654 = vsel %vm1640, %v1621, %v1341
      %v1655 = vsel %vm1640, %v1622, %v1343
      %v1656 = vsel %vm1640, %v1623, %v1345
      %v1657 = vsel %vm1640, %v1624, %v1347
      %v1658 = vsel %vm1640, %v1625, %v1349
      %v1659 = vsel %vm1640, %v1626, %v1351
      %v1660 = vsel %vm1640, %v1627, %v1353
      %v1661 = vsel %vm1640, %v1628, %v1355
      %v1662 = vsel %vm1640, %v1629, %v1357
      %v1663 = vsel %vm1640, %v1630, %v1359
      %v1664 = vsel %vm1640, %v1631, %v1361
      %v1665 = vsel %vm1640, %v1632, %v1363
      %v1666 = vsel %vm1640, %v1633, %v1365
      %v1667 = vsel %vm1640, %v1634, %v1367
      %v1668 = vsel %vm1640, %v1635, %v1369
      %v1669 = vsel %vm1640, %v1636, %v1371
      %v1670 = vsel %vm1640, %v1637, %v1373
      %v1671 = vsel %vm1640, %v1638, %v1375
      %v1672 = vsel %vm1640, %v1639, %v1377
      %v1674 = vlaneseq
      %v1675 = vshrl.u32 %v1674, 7
      %v1676 = vsub.s32 0, %v1675
      %v1677 = vrot.slane %v405, %v1676
      %vm1679 = vcmask 293888
      %v1681 = vsel %vm1679, %v1641, 0
      %v1684 = vsel %vm1679, %v1642, 0
      %v1687 = vsel %vm1679, %v1643, 0
      %v1690 = vsel %vm1679, %v1644, 0
      %v1693 = vsel %vm1679, %v1645, 0
      %v1696 = vsel %vm1679, %v1646, 0
      %v1699 = vsel %vm1679, %v1647, 0
      %v1702 = vsel %vm1679, %v1648, 0
      %v1705 = vsel %vm1679, %v1649, 0
      %v1708 = vsel %vm1679, %v1650, 0
      %v1711 = vsel %vm1679, %v1651, 0
      %v1714 = vsel %vm1679, %v1652, 0
      %v1717 = vsel %vm1679, %v1653, 0
      %v1720 = vsel %vm1679, %v1654, 0
      %v1723 = vsel %vm1679, %v1655, 0
      %v1726 = vsel %vm1679, %v1656, 0
      %v1729 = vsel %vm1679, %v1657, 0
      %v1732 = vsel %vm1679, %v1658, 0
      %v1735 = vsel %vm1679, %v1659, 0
      %v1738 = vsel %vm1679, %v1660, 0
      %v1741 = vsel %vm1679, %v1661, 0
      %v1744 = vsel %vm1679, %v1662, 0
      %v1747 = vsel %vm1679, %v1663, 0
      %v1750 = vsel %vm1679, %v1664, 0
      %v1753 = vsel %vm1679, %v1665, 0
      %v1756 = vsel %vm1679, %v1666, 0
      %v1759 = vsel %vm1679, %v1667, 0
      %v1762 = vsel %vm1679, %v1668, 0
      %v1765 = vsel %vm1679, %v1669, 0
      %v1768 = vsel %vm1679, %v1670, 0
      %v1771 = vsel %vm1679, %v1671, 0
      %v1774 = vsel %vm1679, %v1672, 0
      %vm1776 = vcmask 1043456
      %v1778 = vsel %vm1776, %v404, 0
      %1780 = vmatprep.subr.mxu0 0.0
      %1781 = vmatpush1.msra.mxu0 %v400
      %1782 = vmatprep.subr.mxu0 0.0
      %1783 = vmatpush1.msra.mxu0 %v401
      %1784 = vmatprep.subr.mxu0 0.0
      %1785 = vmatpush1.msra.mxu0 %v402
      %1786 = vmatprep.subr.mxu0 0.0
      %1787 = vmatpush1.msra.mxu0 %v403
      %1788 = vmatprep.subr.mxu0 0.0
      %1789 = vmatpush1.msra.mxu0 %v1778
      %1790 = vmatprep.subr.mxu0 0.0
      %1791 = vmatpush1.msra.mxu0 0.0
      %1792 = vmatprep.subr.mxu0 0.0
      %1793 = vmatpush1.msra.mxu0 0.0
      %1794 = vmatprep.subr.mxu0 0.0
      %1795 = vmatpush1.msra.mxu0 0.0
      %1796 = vmatprep.subr.mxu0 0.0
      %1797 = vmatpush1.msra.mxu0 0.0
      %1798 = vmatprep.subr.mxu0 0.0
      %1799 = vmatpush1.msra.mxu0 0.0
      %1800 = vmatprep.subr.mxu0 0.0
      %1801 = vmatpush1.msra.mxu0 0.0
      %1802 = vmatprep.subr.mxu0 0.0
      %1803 = vmatpush1.msra.mxu0 0.0
      %1804 = vmatprep.subr.mxu0 0.0
      %1805 = vmatpush1.msra.mxu0 0.0
      %1806 = vmatprep.subr.mxu0 0.0
      %1807 = vmatpush1.msra.mxu0 0.0
      %1808 = vmatprep.subr.mxu0 0.0
      %1809 = vmatpush1.msra.mxu0 0.0
      %1810 = vmatprep.subr.mxu0 0.0
      %1811 = vmatpush1.msra.mxu0 0.0
      %1812 = vmatprep.subr.mxu0 0.0
      %1813 = vmatpush1.msra.mxu0 0.0
      %1814 = vmatprep.subr.mxu0 0.0
      %1815 = vmatpush1.msra.mxu0 0.0
      %1816 = vmatprep.subr.mxu0 0.0
      %1817 = vmatpush1.msra.mxu0 0.0
      %1818 = vmatprep.subr.mxu0 0.0
      %1819 = vmatpush1.msra.mxu0 0.0
      %1820 = vmatprep.subr.mxu0 0.0
      %1821 = vmatpush1.msra.mxu0 0.0
      %1822 = vmatprep.subr.mxu0 0.0
      %1823 = vmatpush1.msra.mxu0 0.0
      %1824 = vmatprep.subr.mxu0 0.0
      %1825 = vmatpush1.msra.mxu0 0.0
      %1826 = vmatprep.subr.mxu0 0.0
      %1827 = vmatpush1.msra.mxu0 0.0
      %1828 = vmatprep.subr.mxu0 0.0
      %1829 = vmatpush1.msra.mxu0 0.0
      %1830 = vmatprep.subr.mxu0 0.0
      %1831 = vmatpush1.msra.mxu0 0.0
      %1832 = vmatprep.subr.mxu0 0.0
      %1833 = vmatpush1.msra.mxu0 0.0
      %1834 = vmatprep.subr.mxu0 0.0
      %1835 = vmatpush1.msra.mxu0 0.0
      %1836 = vmatprep.subr.mxu0 0.0
      %1837 = vmatpush1.msra.mxu0 0.0
      %1838 = vmatprep.subr.mxu0 0.0
      %1839 = vmatpush1.msra.mxu0 0.0
      %1840 = vmatprep.subr.mxu0 0.0
      %1841 = vmatpush1.msra.mxu0 0.0
      %1842 = vmatprep.subr.mxu0 0.0
      %1843 = vmatpush1.msra.mxu0 0.0
      %1844 = vmatprep.mubr.f32.mxu0 0.0
      %1845 = vmatmul.mubr.f32.gmra.mrb[0].mxu0 %v1681
      %v1846 = vpop.f32.mrb[0].mxu0
      %v1847 = vadd.f32 %v1677, %v1846
      %v1848 = vpop.f32.mrb[0].mxu0
      %1849 = vmatprep.mubr.f32.mxu0 0.0
      %1850 = vmatmul.mubr.f32.gmra.mrb[0].mxu0 %v1684
      %v1851 = vpop.f32.mrb[0].mxu0
      %v1852 = vadd.f32 %v1677, %v1851
      %v1853 = vpop.f32.mrb[0].mxu0
      %1854 = vmatprep.mubr.f32.mxu0 0.0
      %1855 = vmatmul.mubr.f32.gmra.mrb[0].mxu0 %v1687
      %v1856 = vpop.f32.mrb[0].mxu0
      %v1857 = vadd.f32 %v1677, %v1856
      %v1858 = vpop.f32.mrb[0].mxu0
      %1859 = vmatprep.mubr.f32.mxu0 0.0
      %1860 = vmatmul.mubr.f32.gmra.mrb[0].mxu0 %v1690
      %v1861 = vpop.f32.mrb[0].mxu0
      %v1862 = vadd.f32 %v1677, %v1861
      %v1863 = vpop.f32.mrb[0].mxu0
      %1864 = vmatprep.mubr.f32.mxu0 0.0
      %1865 = vmatmul.mubr.f32.gmra.mrb[0].mxu0 %v1693
      %v1866 = vpop.f32.mrb[0].mxu0
      %v1867 = vadd.f32 %v1677, %v1866
      %v1868 = vpop.f32.mrb[0].mxu0
      %1869 = vmatprep.mubr.f32.mxu0 0.0
      %1870 = vmatmul.mubr.f32.gmra.mrb[0].mxu0 %v1696
      %v1871 = vpop.f32.mrb[0].mxu0
      %v1872 = vadd.f32 %v1677, %v1871
      %v1873 = vpop.f32.mrb[0].mxu0
      %1874 = vmatprep.mubr.f32.mxu0 0.0
      %1875 = vmatmul.mubr.f32.gmra.mrb[0].mxu0 %v1699
      %v1876 = vpop.f32.mrb[0].mxu0
      %v1877 = vadd.f32 %v1677, %v1876
      %v1878 = vpop.f32.mrb[0].mxu0
      %1879 = vmatprep.mubr.f32.mxu0 0.0
      %1880 = vmatmul.mubr.f32.gmra.mrb[0].mxu0 %v1702
      %v1881 = vpop.f32.mrb[0].mxu0
      %v1882 = vadd.f32 %v1677, %v1881
      %v1883 = vpop.f32.mrb[0].mxu0
      %1884 = vmatprep.mubr.f32.mxu0 0.0
      %1885 = vmatmul.mubr.f32.gmra.mrb[0].mxu0 %v1705
      %v1886 = vpop.f32.mrb[0].mxu0
      %v1887 = vadd.f32 %v1677, %v1886
      %v1888 = vpop.f32.mrb[0].mxu0
      %1889 = vmatprep.mubr.f32.mxu0 0.0
      %1890 = vmatmul.mubr.f32.gmra.mrb[0].mxu0 %v1708
      %v1891 = vpop.f32.mrb[0].mxu0
      %v1892 = vadd.f32 %v1677, %v1891
      %v1893 = vpop.f32.mrb[0].mxu0
      %1894 = vmatprep.mubr.f32.mxu0 0.0
      %1895 = vmatmul.mubr.f32.gmra.mrb[0].mxu0 %v1711
      %v1896 = vpop.f32.mrb[0].mxu0
      %v1897 = vadd.f32 %v1677, %v1896
      %v1898 = vpop.f32.mrb[0].mxu0
      %1899 = vmatprep.mubr.f32.mxu0 0.0
      %1900 = vmatmul.mubr.f32.gmra.mrb[0].mxu0 %v1714
      %v1901 = vpop.f32.mrb[0].mxu0
      %v1902 = vadd.f32 %v1677, %v1901
      %v1903 = vpop.f32.mrb[0].mxu0
      %1904 = vmatprep.mubr.f32.mxu0 0.0
      %1905 = vmatmul.mubr.f32.gmra.mrb[0].mxu0 %v1717
      %v1906 = vpop.f32.mrb[0].mxu0
      %v1907 = vadd.f32 %v1677, %v1906
      %v1908 = vpop.f32.mrb[0].mxu0
      %1909 = vmatprep.mubr.f32.mxu0 0.0
      %1910 = vmatmul.mubr.f32.gmra.mrb[0].mxu0 %v1720
      %v1911 = vpop.f32.mrb[0].mxu0
      %v1912 = vadd.f32 %v1677, %v1911
      %v1913 = vpop.f32.mrb[0].mxu0
      %1914 = vmatprep.mubr.f32.mxu0 0.0
      %1915 = vmatmul.mubr.f32.gmra.mrb[0].mxu0 %v1723
      %v1916 = vpop.f32.mrb[0].mxu0
      %v1917 = vadd.f32 %v1677, %v1916
      %v1918 = vpop.f32.mrb[0].mxu0
      %1919 = vmatprep.mubr.f32.mxu0 0.0
      %1920 = vmatmul.mubr.f32.gmra.mrb[0].mxu0 %v1726
      %v1921 = vpop.f32.mrb[0].mxu0
      %v1922 = vadd.f32 %v1677, %v1921
      %v1923 = vpop.f32.mrb[0].mxu0
      %1924 = vmatprep.mubr.f32.mxu0 0.0
      %1925 = vmatmul.mubr.f32.gmra.mrb[0].mxu0 %v1729
      %v1926 = vpop.f32.mrb[0].mxu0
      %v1927 = vadd.f32 %v1677, %v1926
      %v1928 = vpop.f32.mrb[0].mxu0
      %1929 = vmatprep.mubr.f32.mxu0 0.0
      %1930 = vmatmul.mubr.f32.gmra.mrb[0].mxu0 %v1732
      %v1931 = vpop.f32.mrb[0].mxu0
      %v1932 = vadd.f32 %v1677, %v1931
      %v1933 = vpop.f32.mrb[0].mxu0
      %1934 = vmatprep.mubr.f32.mxu0 0.0
      %1935 = vmatmul.mubr.f32.gmra.mrb[0].mxu0 %v1735
      %v1936 = vpop.f32.mrb[0].mxu0
      %v1937 = vadd.f32 %v1677, %v1936
      %v1938 = vpop.f32.mrb[0].mxu0
      %1939 = vmatprep.mubr.f32.mxu0 0.0
      %1940 = vmatmul.mubr.f32.gmra.mrb[0].mxu0 %v1738
      %v1941 = vpop.f32.mrb[0].mxu0
      %v1942 = vadd.f32 %v1677, %v1941
      %v1943 = vpop.f32.mrb[0].mxu0
      %1944 = vmatprep.mubr.f32.mxu0 0.0
      %1945 = vmatmul.mubr.f32.gmra.mrb[0].mxu0 %v1741
      %v1946 = vpop.f32.mrb[0].mxu0
      %v1947 = vadd.f32 %v1677, %v1946
      %v1948 = vpop.f32.mrb[0].mxu0
      %1949 = vmatprep.mubr.f32.mxu0 0.0
      %1950 = vmatmul.mubr.f32.gmra.mrb[0].mxu0 %v1744
      %v1951 = vpop.f32.mrb[0].mxu0
      %v1952 = vadd.f32 %v1677, %v1951
      %v1953 = vpop.f32.mrb[0].mxu0
      %1954 = vmatprep.mubr.f32.mxu0 0.0
      %1955 = vmatmul.mubr.f32.gmra.mrb[0].mxu0 %v1747
      %v1956 = vpop.f32.mrb[0].mxu0
      %v1957 = vadd.f32 %v1677, %v1956
      %v1958 = vpop.f32.mrb[0].mxu0
      %1959 = vmatprep.mubr.f32.mxu0 0.0
      %1960 = vmatmul.mubr.f32.gmra.mrb[0].mxu0 %v1750
      %v1961 = vpop.f32.mrb[0].mxu0
      %v1962 = vadd.f32 %v1677, %v1961
      %v1963 = vpop.f32.mrb[0].mxu0
      %1964 = vmatprep.mubr.f32.mxu0 0.0
      %1965 = vmatmul.mubr.f32.gmra.mrb[0].mxu0 %v1753
      %v1966 = vpop.f32.mrb[0].mxu0
      %v1967 = vadd.f32 %v1677, %v1966
      %v1968 = vpop.f32.mrb[0].mxu0
      %1969 = vmatprep.mubr.f32.mxu0 0.0
      %1970 = vmatmul.mubr.f32.gmra.mrb[0].mxu0 %v1756
      %v1971 = vpop.f32.mrb[0].mxu0
      %v1972 = vadd.f32 %v1677, %v1971
      %v1973 = vpop.f32.mrb[0].mxu0
      %1974 = vmatprep.mubr.f32.mxu0 0.0
      %1975 = vmatmul.mubr.f32.gmra.mrb[0].mxu0 %v1759
      %v1976 = vpop.f32.mrb[0].mxu0
      %v1977 = vadd.f32 %v1677, %v1976
      %v1978 = vpop.f32.mrb[0].mxu0
      %1979 = vmatprep.mubr.f32.mxu0 0.0
      %1980 = vmatmul.mubr.f32.gmra.mrb[0].mxu0 %v1762
      %v1981 = vpop.f32.mrb[0].mxu0
      %v1982 = vadd.f32 %v1677, %v1981
      %v1983 = vpop.f32.mrb[0].mxu0
      %1984 = vmatprep.mubr.f32.mxu0 0.0
      %1985 = vmatmul.mubr.f32.gmra.mrb[0].mxu0 %v1765
      %v1986 = vpop.f32.mrb[0].mxu0
      %v1987 = vadd.f32 %v1677, %v1986
      %v1988 = vpop.f32.mrb[0].mxu0
      %1989 = vmatprep.mubr.f32.mxu0 0.0
      %1990 = vmatmul.mubr.f32.gmra.mrb[0].mxu0 %v1768
      %v1991 = vpop.f32.mrb[0].mxu0
      %v1992 = vadd.f32 %v1677, %v1991
      %v1993 = vpop.f32.mrb[0].mxu0
      %1994 = vmatprep.mubr.f32.mxu0 0.0
      %1995 = vmatmul.mubr.f32.gmra.mrb[0].mxu0 %v1771
      %v1996 = vpop.f32.mrb[0].mxu0
      %v1997 = vadd.f32 %v1677, %v1996
      %v1998 = vpop.f32.mrb[0].mxu0
      %1999 = vmatprep.mubr.f32.mxu0 0.0
      %2000 = vmatmul.mubr.f32.gmra.mrb[0].mxu0 %v1774
      %v2001 = vpop.f32.mrb[0].mxu0
      %v2002 = vadd.f32 %v1677, %v2001
      %v2003 = vpop.f32.mrb[0].mxu0
      %2004 = vdwg.mxu0
      %v2005 = vmax.f32 %v1847, 0.0
      %v2006 = vmax.f32 %v1852, 0.0
      %v2007 = vmax.f32 %v1857, 0.0
      %v2008 = vmax.f32 %v1862, 0.0
      %v2009 = vmax.f32 %v1867, 0.0
      %v2010 = vmax.f32 %v1872, 0.0
      %v2011 = vmax.f32 %v1877, 0.0
      %v2012 = vmax.f32 %v1882, 0.0
      %v2013 = vmax.f32 %v1887, 0.0
      %v2014 = vmax.f32 %v1892, 0.0
      %v2015 = vmax.f32 %v1897, 0.0
      %v2016 = vmax.f32 %v1902, 0.0
      %v2017 = vmax.f32 %v1907, 0.0
      %v2018 = vmax.f32 %v1912, 0.0
      %v2019 = vmax.f32 %v1917, 0.0
      %v2020 = vmax.f32 %v1922, 0.0
      %v2021 = vmax.f32 %v1927, 0.0
      %v2022 = vmax.f32 %v1932, 0.0
      %v2023 = vmax.f32 %v1937, 0.0
      %v2024 = vmax.f32 %v1942, 0.0
      %v2025 = vmax.f32 %v1947, 0.0
      %v2026 = vmax.f32 %v1952, 0.0
      %v2027 = vmax.f32 %v1957, 0.0
      %v2028 = vmax.f32 %v1962, 0.0
      %v2029 = vmax.f32 %v1967, 0.0
      %v2030 = vmax.f32 %v1972, 0.0
      %v2031 = vmax.f32 %v1977, 0.0
      %v2032 = vmax.f32 %v1982, 0.0
      %v2033 = vmax.f32 %v1987, 0.0
      %v2034 = vmax.f32 %v1992, 0.0
      %v2035 = vmax.f32 %v1997, 0.0
      %v2036 = vmax.f32 %v2002, 0.0
      %s2037 = scalar_lea.vmem [#allocation3], 24
      %2038 = vst.msk [vmem:[%s2037 + $0x1] sm:$0xff] %vm171, %v2005
      %2039 = vst.msk [vmem:[%s2037 + $0x9] sm:$0xff] %vm171, %v2006
      %2040 = vst.msk [vmem:[%s2037 + $0x19] sm:$0xff] %vm171, %v2007
      %2041 = vst.msk [vmem:[%s2037 + $0x21] sm:$0xff] %vm171, %v2008
      %2042 = vst.msk [vmem:[%s2037 + $0x31] sm:$0xff] %vm171, %v2009
      %2043 = vst.msk [vmem:[%s2037 + $0x39] sm:$0xff] %vm171, %v2010
      %2044 = vst.msk [vmem:[%s2037 + $0x49] sm:$0xff] %vm171, %v2011
      %2045 = vst.msk [vmem:[%s2037 + $0x51] sm:$0xff] %vm171, %v2012
      %2046 = vst.msk [vmem:[%s2037 + $0x61] sm:$0xff] %vm171, %v2013
      %2047 = vst.msk [vmem:[%s2037 + $0x69] sm:$0xff] %vm171, %v2014
      %2048 = vst.msk [vmem:[%s2037 + $0x79] sm:$0xff] %vm171, %v2015
      %2049 = vst.msk [vmem:[%s2037 + $0x81] sm:$0xff] %vm171, %v2016
      %2050 = vst.msk [vmem:[%s2037 + $0x91] sm:$0xff] %vm171, %v2017
      %2051 = vst.msk [vmem:[%s2037 + $0x99] sm:$0xff] %vm171, %v2018
      %2052 = vst.msk [vmem:[%s2037 + $0xa9] sm:$0xff] %vm171, %v2019
      %2053 = vst.msk [vmem:[%s2037 + $0xb1] sm:$0xff] %vm171, %v2020
      %2054 = vst.msk [vmem:[%s2037 + $0xc1] sm:$0xff] %vm171, %v2021
      %2055 = vst.msk [vmem:[%s2037 + $0xc9] sm:$0xff] %vm171, %v2022
      %2056 = vst.msk [vmem:[%s2037 + $0xd9] sm:$0xff] %vm171, %v2023
      %2057 = vst.msk [vmem:[%s2037 + $0xe1] sm:$0xff] %vm171, %v2024
      %2058 = vst.msk [vmem:[%s2037 + $0xf1] sm:$0xff] %vm171, %v2025
      %2059 = vst.msk [vmem:[%s2037 + $0xf9] sm:$0xff] %vm171, %v2026
      %2060 = vst.msk [vmem:[%s2037 + $0x109] sm:$0xff] %vm171, %v2027
      %2061 = vst.msk [vmem:[%s2037 + $0x111] sm:$0xff] %vm171, %v2028
      %2062 = vst.msk [vmem:[%s2037 + $0x121] sm:$0xff] %vm171, %v2029
      %2063 = vst.msk [vmem:[%s2037 + $0x129] sm:$0xff] %vm171, %v2030
      %2064 = vst.msk [vmem:[%s2037 + $0x139] sm:$0xff] %vm171, %v2031
      %2065 = vst.msk [vmem:[%s2037 + $0x141] sm:$0xff] %vm171, %v2032
      %2066 = vst.msk [vmem:[%s2037 + $0x151] sm:$0xff] %vm171, %v2033
      %2067 = vst.msk [vmem:[%s2037 + $0x159] sm:$0xff] %vm171, %v2034
      %2068 = vst.msk [vmem:[%s2037 + $0x169] sm:$0xff] %vm171, %v2035
      %2069 = vst.msk [vmem:[%s2037 + $0x171] sm:$0xff] %vm171, %v2036
      %v2070 = vld [vmem:[#allocation3] sm:$0xff]
      %v2071 = vld [vmem:[#allocation3 + $0x8] sm:$0xff]
      %v2072 = vld [vmem:[#allocation3 + $0x10] sm:$0x3]
      %v2073 = vld [vmem:[#allocation3 + $0x18] sm:$0xff]
      %v2074 = vld [vmem:[#allocation3 + $0x20] sm:$0xff]
      %v2075 = vld [vmem:[#allocation3 + $0x28] sm:$0x3]
      %v2076 = vld [vmem:[#allocation3 + $0x30] sm:$0xff]
      %v2077 = vld [vmem:[#allocation3 + $0x38] sm:$0xff]
      %v2078 = vld [vmem:[#allocation3 + $0x40] sm:$0x3]
      %v2079 = vld [vmem:[#allocation3 + $0x48] sm:$0xff]
      %v2080 = vld [vmem:[#allocation3 + $0x50] sm:$0xff]
      %v2081 = vld [vmem:[#allocation3 + $0x58] sm:$0x3]
      %v2082 = vld [vmem:[#allocation3 + $0x60] sm:$0xff]
      %v2083 = vld [vmem:[#allocation3 + $0x68] sm:$0xff]
      %v2084 = vld [vmem:[#allocation3 + $0x70] sm:$0x3]
      %v2085 = vld [vmem:[#allocation3 + $0x78] sm:$0xff]
      %v2086 = vld [vmem:[#allocation3 + $0x80] sm:$0xff]
      %v2087 = vld [vmem:[#allocation3 + $0x88] sm:$0x3]
      %v2088 = vld [vmem:[#allocation3 + $0x90] sm:$0xff]
      %v2089 = vld [vmem:[#allocation3 + $0x98] sm:$0xff]
      %v2090 = vld [vmem:[#allocation3 + $0xa0] sm:$0x3]
      %v2091 = vld [vmem:[#allocation3 + $0xa8] sm:$0xff]
      %v2092 = vld [vmem:[#allocation3 + $0xb0] sm:$0xff]
      %v2093 = vld [vmem:[#allocation3 + $0xb8] sm:$0x3]
      %v2094 = vld [vmem:[#allocation3 + $0xc0] sm:$0xff]
      %v2095 = vld [vmem:[#allocation3 + $0xc8] sm:$0xff]
      %v2096 = vld [vmem:[#allocation3 + $0xd0] sm:$0x3]
      %v2097 = vld [vmem:[#allocation3 + $0xd8] sm:$0xff]
      %v2098 = vld [vmem:[#allocation3 + $0xe0] sm:$0xff]
      %v2099 = vld [vmem:[#allocation3 + $0xe8] sm:$0x3]
      %v2100 = vld [vmem:[#allocation3 + $0xf0] sm:$0xff]
      %v2101 = vld [vmem:[#allocation3 + $0xf8] sm:$0xff]
      %v2102 = vld [vmem:[#allocation3 + $0x100] sm:$0x3]
      %v2103 = vld [vmem:[#allocation3 + $0x108] sm:$0xff]
      %v2104 = vld [vmem:[#allocation3 + $0x110] sm:$0xff]
      %v2105 = vld [vmem:[#allocation3 + $0x118] sm:$0x3]
      %v2106 = vld [vmem:[#allocation3 + $0x120] sm:$0xff]
      %v2107 = vld [vmem:[#allocation3 + $0x128] sm:$0xff]
      %v2108 = vld [vmem:[#allocation3 + $0x130] sm:$0x3]
      %v2109 = vld [vmem:[#allocation3 + $0x138] sm:$0xff]
      %v2110 = vld [vmem:[#allocation3 + $0x140] sm:$0xff]
      %v2111 = vld [vmem:[#allocation3 + $0x148] sm:$0x3]
      %v2112 = vld [vmem:[#allocation3 + $0x150] sm:$0xff]
      %v2113 = vld [vmem:[#allocation3 + $0x158] sm:$0xff]
      %v2114 = vld [vmem:[#allocation3 + $0x160] sm:$0x3]
      %v2115 = vld [vmem:[#allocation3 + $0x168] sm:$0xff]
      %v2116 = vld [vmem:[#allocation3 + $0x170] sm:$0xff]
      %v2117 = vld [vmem:[#allocation3 + $0x178] sm:$0x3]
      %v2118 = vld [vmem:[#allocation3 + $0x180] sm:$0xff]
      %v2119 = vld [vmem:[#allocation3 + $0x188] sm:$0xff]
      %v2120 = vld [vmem:[#allocation3 + $0x190] sm:$0x3]
      %v2121 = vld [vmem:[#allocation3 + $0x198] sm:$0xff]
      %v2122 = vld [vmem:[#allocation3 + $0x1a0] sm:$0xff]
      %v2123 = vld [vmem:[#allocation3 + $0x1a8] sm:$0x3]
      %s2124 = scalar_lea.vmem %s1, 40
      %v2125 = vld [vmem:[%s2124] sm:$0xff]
      %v2126 = vld [vmem:[%s2124 + $0x8] sm:$0xff]
      %v2127 = vld [vmem:[%s2124 + $0x10] sm:$0xff]
      %v2128 = vld [vmem:[%s2124 + $0x18] sm:$0xff]
      %v2129 = vld [vmem:[%s2124 + $0x20] sm:$0xf]
      %s2130 = scalar_lea.vmem %s2, 1
      %v2131 = vld [vmem:[%s2130] sm:$0x1]
      %v2180 = vrot.slane %v2070, 1
      %v2181 = vrot.slane %v2071, 1
      %v2182 = vsel %vm454, %v2180, %v2181
      %v2183 = vrot.slane %v2072, 1
      %v2184 = vsel %vm454, %v2181, %v2183
      %v2185 = vrot.slane %v2073, 1
      %v2186 = vrot.slane %v2074, 1
      %v2187 = vsel %vm454, %v2185, %v2186
      %v2188 = vrot.slane %v2075, 1
      %v2189 = vsel %vm454, %v2186, %v2188
      %v2190 = vrot.slane %v2076, 1
      %v2191 = vrot.slane %v2077, 1
      %v2192 = vsel %vm454, %v2190, %v2191
      %v2193 = vrot.slane %v2078, 1
      %v2194 = vsel %vm454, %v2191, %v2193
      %v2195 = vrot.slane %v2079, 1
      %v2196 = vrot.slane %v2080, 1
      %v2197 = vsel %vm454, %v2195, %v2196
      %v2198 = vrot.slane %v2081, 1
      %v2199 = vsel %vm454, %v2196, %v2198
      %v2200 = vrot.slane %v2082, 1
      %v2201 = vrot.slane %v2083, 1
      %v2202 = vsel %vm454, %v2200, %v2201
      %v2203 = vrot.slane %v2084, 1
      %v2204 = vsel %vm454, %v2201, %v2203
      %v2205 = vrot.slane %v2085, 1
      %v2206 = vrot.slane %v2086, 1
      %v2207 = vsel %vm454, %v2205, %v2206
      %v2208 = vrot.slane %v2087, 1
      %v2209 = vsel %vm454, %v2206, %v2208
      %v2210 = vrot.slane %v2088, 1
      %v2211 = vrot.slane %v2089, 1
      %v2212 = vsel %vm454, %v2210, %v2211
      %v2213 = vrot.slane %v2090, 1
      %v2214 = vsel %vm454, %v2211, %v2213
      %v2215 = vrot.slane %v2091, 1
      %v2216 = vrot.slane %v2092, 1
      %v2217 = vsel %vm454, %v2215, %v2216
      %v2218 = vrot.slane %v2093, 1
      %v2219 = vsel %vm454, %v2216, %v2218
      %v2220 = vrot.slane %v2094, 1
      %v2221 = vrot.slane %v2095, 1
      %v2222 = vsel %vm454, %v2220, %v2221
      %v2223 = vrot.slane %v2096, 1
      %v2224 = vsel %vm454, %v2221, %v2223
      %v2225 = vrot.slane %v2097, 1
      %v2226 = vrot.slane %v2098, 1
      %v2227 = vsel %vm454, %v2225, %v2226
      %v2228 = vrot.slane %v2099, 1
      %v2229 = vsel %vm454, %v2226, %v2228
      %v2230 = vrot.slane %v2100, 1
      %v2231 = vrot.slane %v2101, 1
      %v2232 = vsel %vm454, %v2230, %v2231
      %v2233 = vrot.slane %v2102, 1
      %v2234 = vsel %vm454, %v2231, %v2233
      %v2235 = vrot.slane %v2103, 1
      %v2236 = vrot.slane %v2104, 1
      %v2237 = vsel %vm454, %v2235, %v2236
      %v2238 = vrot.slane %v2105, 1
      %v2239 = vsel %vm454, %v2236, %v2238
      %v2240 = vrot.slane %v2106, 1
      %v2241 = vrot.slane %v2107, 1
      %v2242 = vsel %vm454, %v2240, %v2241
      %v2243 = vrot.slane %v2108, 1
      %v2244 = vsel %vm454, %v2241, %v2243
      %v2245 = vrot.slane %v2109, 1
      %v2246 = vrot.slane %v2110, 1
      %v2247 = vsel %vm454, %v2245, %v2246
      %v2248 = vrot.slane %v2111, 1
      %v2249 = vsel %vm454, %v2246, %v2248
      %v2250 = vrot.slane %v2112, 1
      %v2251 = vrot.slane %v2113, 1
      %v2252 = vsel %vm454, %v2250, %v2251
      %v2253 = vrot.slane %v2114, 1
      %v2254 = vsel %vm454, %v2251, %v2253
      %v2255 = vrot.slane %v2115, 1
      %v2256 = vrot.slane %v2116, 1
      %v2257 = vsel %vm454, %v2255, %v2256
      %v2258 = vrot.slane %v2117, 1
      %v2259 = vsel %vm454, %v2256, %v2258
      %2260 = vrot.lane.b32.xlu0 %v2182, 4
      %v2261 = vpop.permute.xlu0 %2260
      %2262 = vrot.lane.b32.xlu0 %v2184, 4
      %v2263 = vpop.permute.xlu0 %2262
      %2264 = vrot.lane.b32.xlu0 %v2187, 4
      %v2265 = vpop.permute.xlu0 %2264
      %2266 = vrot.lane.b32.xlu0 %v2189, 4
      %v2267 = vpop.permute.xlu0 %2266
      %2268 = vrot.lane.b32.xlu0 %v2192, 4
      %v2269 = vpop.permute.xlu0 %2268
      %2270 = vrot.lane.b32.xlu0 %v2194, 4
      %v2271 = vpop.permute.xlu0 %2270
      %2272 = vrot.lane.b32.xlu0 %v2197, 4
      %v2273 = vpop.permute.xlu0 %2272
      %2274 = vrot.lane.b32.xlu0 %v2199, 4
      %v2275 = vpop.permute.xlu0 %2274
      %2276 = vrot.lane.b32.xlu0 %v2202, 4
      %v2277 = vpop.permute.xlu0 %2276
      %2278 = vrot.lane.b32.xlu0 %v2204, 4
      %v2279 = vpop.permute.xlu0 %2278
      %2280 = vrot.lane.b32.xlu0 %v2207, 4
      %v2281 = vpop.permute.xlu0 %2280
      %2282 = vrot.lane.b32.xlu0 %v2209, 4
      %v2283 = vpop.permute.xlu0 %2282
      %2284 = vrot.lane.b32.xlu0 %v2212, 4
      %v2285 = vpop.permute.xlu0 %2284
      %2286 = vrot.lane.b32.xlu0 %v2214, 4
      %v2287 = vpop.permute.xlu0 %2286
      %2288 = vrot.lane.b32.xlu0 %v2217, 4
      %v2289 = vpop.permute.xlu0 %2288
      %2290 = vrot.lane.b32.xlu0 %v2219, 4
      %v2291 = vpop.permute.xlu0 %2290
      %2292 = vrot.lane.b32.xlu0 %v2222, 4
      %v2293 = vpop.permute.xlu0 %2292
      %2294 = vrot.lane.b32.xlu0 %v2224, 4
      %v2295 = vpop.permute.xlu0 %2294
      %2296 = vrot.lane.b32.xlu0 %v2227, 4
      %v2297 = vpop.permute.xlu0 %2296
      %2298 = vrot.lane.b32.xlu0 %v2229, 4
      %v2299 = vpop.permute.xlu0 %2298
      %2300 = vrot.lane.b32.xlu0 %v2232, 4
      %v2301 = vpop.permute.xlu0 %2300
      %2302 = vrot.lane.b32.xlu0 %v2234, 4
      %v2303 = vpop.permute.xlu0 %2302
      %2304 = vrot.lane.b32.xlu0 %v2237, 4
      %v2305 = vpop.permute.xlu0 %2304
      %2306 = vrot.lane.b32.xlu0 %v2239, 4
      %v2307 = vpop.permute.xlu0 %2306
      %2308 = vrot.lane.b32.xlu0 %v2242, 4
      %v2309 = vpop.permute.xlu0 %2308
      %2310 = vrot.lane.b32.xlu0 %v2244, 4
      %v2311 = vpop.permute.xlu0 %2310
      %2312 = vrot.lane.b32.xlu0 %v2247, 4
      %v2313 = vpop.permute.xlu0 %2312
      %2314 = vrot.lane.b32.xlu0 %v2249, 4
      %v2315 = vpop.permute.xlu0 %2314
      %2316 = vrot.lane.b32.xlu0 %v2252, 4
      %v2317 = vpop.permute.xlu0 %2316
      %2318 = vrot.lane.b32.xlu0 %v2254, 4
      %v2319 = vpop.permute.xlu0 %2318
      %2320 = vrot.lane.b32.xlu0 %v2257, 4
      %v2321 = vpop.permute.xlu0 %2320
      %2322 = vrot.lane.b32.xlu0 %v2259, 4
      %v2323 = vpop.permute.xlu0 %2322
      %v2356 = vrot.slane %v2070, 2
      %v2357 = vrot.slane %v2071, 2
      %v2358 = vsel %vm631, %v2356, %v2357
      %v2359 = vrot.slane %v2072, 2
      %v2360 = vsel %vm631, %v2357, %v2359
      %v2361 = vrot.slane %v2073, 2
      %v2362 = vrot.slane %v2074, 2
      %v2363 = vsel %vm631, %v2361, %v2362
      %v2364 = vrot.slane %v2075, 2
      %v2365 = vsel %vm631, %v2362, %v2364
      %v2366 = vrot.slane %v2076, 2
      %v2367 = vrot.slane %v2077, 2
      %v2368 = vsel %vm631, %v2366, %v2367
      %v2369 = vrot.slane %v2078, 2
      %v2370 = vsel %vm631, %v2367, %v2369
      %v2371 = vrot.slane %v2079, 2
      %v2372 = vrot.slane %v2080, 2
      %v2373 = vsel %vm631, %v2371, %v2372
      %v2374 = vrot.slane %v2081, 2
      %v2375 = vsel %vm631, %v2372, %v2374
      %v2376 = vrot.slane %v2082, 2
      %v2377 = vrot.slane %v2083, 2
      %v2378 = vsel %vm631, %v2376, %v2377
      %v2379 = vrot.slane %v2084, 2
      %v2380 = vsel %vm631, %v2377, %v2379
      %v2381 = vrot.slane %v2085, 2
      %v2382 = vrot.slane %v2086, 2
      %v2383 = vsel %vm631, %v2381, %v2382
      %v2384 = vrot.slane %v2087, 2
      %v2385 = vsel %vm631, %v2382, %v2384
      %v2386 = vrot.slane %v2088, 2
      %v2387 = vrot.slane %v2089, 2
      %v2388 = vsel %vm631, %v2386, %v2387
      %v2389 = vrot.slane %v2090, 2
      %v2390 = vsel %vm631, %v2387, %v2389
      %v2391 = vrot.slane %v2091, 2
      %v2392 = vrot.slane %v2092, 2
      %v2393 = vsel %vm631, %v2391, %v2392
      %v2394 = vrot.slane %v2093, 2
      %v2395 = vsel %vm631, %v2392, %v2394
      %v2396 = vrot.slane %v2094, 2
      %v2397 = vrot.slane %v2095, 2
      %v2398 = vsel %vm631, %v2396, %v2397
      %v2399 = vrot.slane %v2096, 2
      %v2400 = vsel %vm631, %v2397, %v2399
      %v2401 = vrot.slane %v2097, 2
      %v2402 = vrot.slane %v2098, 2
      %v2403 = vsel %vm631, %v2401, %v2402
      %v2404 = vrot.slane %v2099, 2
      %v2405 = vsel %vm631, %v2402, %v2404
      %v2406 = vrot.slane %v2100, 2
      %v2407 = vrot.slane %v2101, 2
      %v2408 = vsel %vm631, %v2406, %v2407
      %v2409 = vrot.slane %v2102, 2
      %v2410 = vsel %vm631, %v2407, %v2409
      %v2411 = vrot.slane %v2103, 2
      %v2412 = vrot.slane %v2104, 2
      %v2413 = vsel %vm631, %v2411, %v2412
      %v2414 = vrot.slane %v2105, 2
      %v2415 = vsel %vm631, %v2412, %v2414
      %v2416 = vrot.slane %v2106, 2
      %v2417 = vrot.slane %v2107, 2
      %v2418 = vsel %vm631, %v2416, %v2417
      %v2419 = vrot.slane %v2108, 2
      %v2420 = vsel %vm631, %v2417, %v2419
      %v2421 = vrot.slane %v2109, 2
      %v2422 = vrot.slane %v2110, 2
      %v2423 = vsel %vm631, %v2421, %v2422
      %v2424 = vrot.slane %v2111, 2
      %v2425 = vsel %vm631, %v2422, %v2424
      %v2426 = vrot.slane %v2112, 2
      %v2427 = vrot.slane %v2113, 2
      %v2428 = vsel %vm631, %v2426, %v2427
      %v2429 = vrot.slane %v2114, 2
      %v2430 = vsel %vm631, %v2427, %v2429
      %v2431 = vrot.slane %v2115, 2
      %v2432 = vrot.slane %v2116, 2
      %v2433 = vsel %vm631, %v2431, %v2432
      %v2434 = vrot.slane %v2117, 2
      %v2435 = vsel %vm631, %v2432, %v2434
      %2436 = vrot.lane.b32.xlu0 %v2358, 8
      %v2437 = vpop.permute.xlu0 %2436
      %2438 = vrot.lane.b32.xlu0 %v2360, 8
      %v2439 = vpop.permute.xlu0 %2438
      %2440 = vrot.lane.b32.xlu0 %v2363, 8
      %v2441 = vpop.permute.xlu0 %2440
      %2442 = vrot.lane.b32.xlu0 %v2365, 8
      %v2443 = vpop.permute.xlu0 %2442
      %2444 = vrot.lane.b32.xlu0 %v2368, 8
      %v2445 = vpop.permute.xlu0 %2444
      %2446 = vrot.lane.b32.xlu0 %v2370, 8
      %v2447 = vpop.permute.xlu0 %2446
      %2448 = vrot.lane.b32.xlu0 %v2373, 8
      %v2449 = vpop.permute.xlu0 %2448
      %2450 = vrot.lane.b32.xlu0 %v2375, 8
      %v2451 = vpop.permute.xlu0 %2450
      %2452 = vrot.lane.b32.xlu0 %v2378, 8
      %v2453 = vpop.permute.xlu0 %2452
      %2454 = vrot.lane.b32.xlu0 %v2380, 8
      %v2455 = vpop.permute.xlu0 %2454
      %2456 = vrot.lane.b32.xlu0 %v2383, 8
      %v2457 = vpop.permute.xlu0 %2456
      %2458 = vrot.lane.b32.xlu0 %v2385, 8
      %v2459 = vpop.permute.xlu0 %2458
      %2460 = vrot.lane.b32.xlu0 %v2388, 8
      %v2461 = vpop.permute.xlu0 %2460
      %2462 = vrot.lane.b32.xlu0 %v2390, 8
      %v2463 = vpop.permute.xlu0 %2462
      %2464 = vrot.lane.b32.xlu0 %v2393, 8
      %v2465 = vpop.permute.xlu0 %2464
      %2466 = vrot.lane.b32.xlu0 %v2395, 8
      %v2467 = vpop.permute.xlu0 %2466
      %2468 = vrot.lane.b32.xlu0 %v2398, 8
      %v2469 = vpop.permute.xlu0 %2468
      %2470 = vrot.lane.b32.xlu0 %v2400, 8
      %v2471 = vpop.permute.xlu0 %2470
      %2472 = vrot.lane.b32.xlu0 %v2403, 8
      %v2473 = vpop.permute.xlu0 %2472
      %2474 = vrot.lane.b32.xlu0 %v2405, 8
      %v2475 = vpop.permute.xlu0 %2474
      %2476 = vrot.lane.b32.xlu0 %v2408, 8
      %v2477 = vpop.permute.xlu0 %2476
      %2478 = vrot.lane.b32.xlu0 %v2410, 8
      %v2479 = vpop.permute.xlu0 %2478
      %2480 = vrot.lane.b32.xlu0 %v2413, 8
      %v2481 = vpop.permute.xlu0 %2480
      %2482 = vrot.lane.b32.xlu0 %v2415, 8
      %v2483 = vpop.permute.xlu0 %2482
      %2484 = vrot.lane.b32.xlu0 %v2418, 8
      %v2485 = vpop.permute.xlu0 %2484
      %2486 = vrot.lane.b32.xlu0 %v2420, 8
      %v2487 = vpop.permute.xlu0 %2486
      %2488 = vrot.lane.b32.xlu0 %v2423, 8
      %v2489 = vpop.permute.xlu0 %2488
      %2490 = vrot.lane.b32.xlu0 %v2425, 8
      %v2491 = vpop.permute.xlu0 %2490
      %2492 = vrot.lane.b32.xlu0 %v2428, 8
      %v2493 = vpop.permute.xlu0 %2492
      %2494 = vrot.lane.b32.xlu0 %v2430, 8
      %v2495 = vpop.permute.xlu0 %2494
      %2496 = vrot.lane.b32.xlu0 %v2433, 8
      %v2497 = vpop.permute.xlu0 %2496
      %2498 = vrot.lane.b32.xlu0 %v2435, 8
      %v2499 = vpop.permute.xlu0 %2498
      %2534 = vrot.lane.b32.xlu0 %v2073, 12
      %v2535 = vpop.permute.xlu0 %2534
      %2536 = vrot.lane.b32.xlu0 %v2074, 12
      %v2537 = vpop.permute.xlu0 %2536
      %2538 = vrot.lane.b32.xlu0 %v2076, 12
      %v2539 = vpop.permute.xlu0 %2538
      %2540 = vrot.lane.b32.xlu0 %v2077, 12
      %v2541 = vpop.permute.xlu0 %2540
      %2542 = vrot.lane.b32.xlu0 %v2079, 12
      %v2543 = vpop.permute.xlu0 %2542
      %2544 = vrot.lane.b32.xlu0 %v2080, 12
      %v2545 = vpop.permute.xlu0 %2544
      %2546 = vrot.lane.b32.xlu0 %v2082, 12
      %v2547 = vpop.permute.xlu0 %2546
      %2548 = vrot.lane.b32.xlu0 %v2083, 12
      %v2549 = vpop.permute.xlu0 %2548
      %2550 = vrot.lane.b32.xlu0 %v2085, 12
      %v2551 = vpop.permute.xlu0 %2550
      %2552 = vrot.lane.b32.xlu0 %v2086, 12
      %v2553 = vpop.permute.xlu0 %2552
      %2554 = vrot.lane.b32.xlu0 %v2088, 12
      %v2555 = vpop.permute.xlu0 %2554
      %2556 = vrot.lane.b32.xlu0 %v2089, 12
      %v2557 = vpop.permute.xlu0 %2556
      %2558 = vrot.lane.b32.xlu0 %v2091, 12
      %v2559 = vpop.permute.xlu0 %2558
      %2560 = vrot.lane.b32.xlu0 %v2092, 12
      %v2561 = vpop.permute.xlu0 %2560
      %2562 = vrot.lane.b32.xlu0 %v2094, 12
      %v2563 = vpop.permute.xlu0 %2562
      %2564 = vrot.lane.b32.xlu0 %v2095, 12
      %v2565 = vpop.permute.xlu0 %2564
      %2566 = vrot.lane.b32.xlu0 %v2097, 12
      %v2567 = vpop.permute.xlu0 %2566
      %2568 = vrot.lane.b32.xlu0 %v2098, 12
      %v2569 = vpop.permute.xlu0 %2568
      %2570 = vrot.lane.b32.xlu0 %v2100, 12
      %v2571 = vpop.permute.xlu0 %2570
      %2572 = vrot.lane.b32.xlu0 %v2101, 12
      %v2573 = vpop.permute.xlu0 %2572
      %2574 = vrot.lane.b32.xlu0 %v2103, 12
      %v2575 = vpop.permute.xlu0 %2574
      %2576 = vrot.lane.b32.xlu0 %v2104, 12
      %v2577 = vpop.permute.xlu0 %2576
      %2578 = vrot.lane.b32.xlu0 %v2106, 12
      %v2579 = vpop.permute.xlu0 %2578
      %2580 = vrot.lane.b32.xlu0 %v2107, 12
      %v2581 = vpop.permute.xlu0 %2580
      %2582 = vrot.lane.b32.xlu0 %v2109, 12
      %v2583 = vpop.permute.xlu0 %2582
      %2584 = vrot.lane.b32.xlu0 %v2110, 12
      %v2585 = vpop.permute.xlu0 %2584
      %2586 = vrot.lane.b32.xlu0 %v2112, 12
      %v2587 = vpop.permute.xlu0 %2586
      %2588 = vrot.lane.b32.xlu0 %v2113, 12
      %v2589 = vpop.permute.xlu0 %2588
      %2590 = vrot.lane.b32.xlu0 %v2115, 12
      %v2591 = vpop.permute.xlu0 %2590
      %2592 = vrot.lane.b32.xlu0 %v2116, 12
      %v2593 = vpop.permute.xlu0 %2592
      %2594 = vrot.lane.b32.xlu0 %v2118, 12
      %v2595 = vpop.permute.xlu0 %2594
      %2596 = vrot.lane.b32.xlu0 %v2119, 12
      %v2597 = vpop.permute.xlu0 %2596
      %v2631 = vrot.slane %v2118, 1
      %v2632 = vrot.slane %v2119, 1
      %v2633 = vsel %vm454, %v2631, %v2632
      %v2634 = vrot.slane %v2120, 1
      %v2635 = vsel %vm454, %v2632, %v2634
      %2636 = vrot.lane.b32.xlu0 %v2187, 16
      %v2637 = vpop.permute.xlu0 %2636
      %2638 = vrot.lane.b32.xlu0 %v2189, 16
      %v2639 = vpop.permute.xlu0 %2638
      %2640 = vrot.lane.b32.xlu0 %v2192, 16
      %v2641 = vpop.permute.xlu0 %2640
      %2642 = vrot.lane.b32.xlu0 %v2194, 16
      %v2643 = vpop.permute.xlu0 %2642
      %2644 = vrot.lane.b32.xlu0 %v2197, 16
      %v2645 = vpop.permute.xlu0 %2644
      %2646 = vrot.lane.b32.xlu0 %v2199, 16
      %v2647 = vpop.permute.xlu0 %2646
      %2648 = vrot.lane.b32.xlu0 %v2202, 16
      %v2649 = vpop.permute.xlu0 %2648
      %2650 = vrot.lane.b32.xlu0 %v2204, 16
      %v2651 = vpop.permute.xlu0 %2650
      %2652 = vrot.lane.b32.xlu0 %v2207, 16
      %v2653 = vpop.permute.xlu0 %2652
      %2654 = vrot.lane.b32.xlu0 %v2209, 16
      %v2655 = vpop.permute.xlu0 %2654
      %2656 = vrot.lane.b32.xlu0 %v2212, 16
      %v2657 = vpop.permute.xlu0 %2656
      %2658 = vrot.lane.b32.xlu0 %v2214, 16
      %v2659 = vpop.permute.xlu0 %2658
      %2660 = vrot.lane.b32.xlu0 %v2217, 16
      %v2661 = vpop.permute.xlu0 %2660
      %2662 = vrot.lane.b32.xlu0 %v2219, 16
      %v2663 = vpop.permute.xlu0 %2662
      %2664 = vrot.lane.b32.xlu0 %v2222, 16
      %v2665 = vpop.permute.xlu0 %2664
      %2666 = vrot.lane.b32.xlu0 %v2224, 16
      %v2667 = vpop.permute.xlu0 %2666
      %2668 = vrot.lane.b32.xlu0 %v2227, 16
      %v2669 = vpop.permute.xlu0 %2668
      %2670 = vrot.lane.b32.xlu0 %v2229, 16
      %v2671 = vpop.permute.xlu0 %2670
      %2672 = vrot.lane.b32.xlu0 %v2232, 16
      %v2673 = vpop.permute.xlu0 %2672
      %2674 = vrot.lane.b32.xlu0 %v2234, 16
      %v2675 = vpop.permute.xlu0 %2674
      %2676 = vrot.lane.b32.xlu0 %v2237, 16
      %v2677 = vpop.permute.xlu0 %2676
      %2678 = vrot.lane.b32.xlu0 %v2239, 16
      %v2679 = vpop.permute.xlu0 %2678
      %2680 = vrot.lane.b32.xlu0 %v2242, 16
      %v2681 = vpop.permute.xlu0 %2680
      %2682 = vrot.lane.b32.xlu0 %v2244, 16
      %v2683 = vpop.permute.xlu0 %2682
      %2684 = vrot.lane.b32.xlu0 %v2247, 16
      %v2685 = vpop.permute.xlu0 %2684
      %2686 = vrot.lane.b32.xlu0 %v2249, 16
      %v2687 = vpop.permute.xlu0 %2686
      %2688 = vrot.lane.b32.xlu0 %v2252, 16
      %v2689 = vpop.permute.xlu0 %2688
      %2690 = vrot.lane.b32.xlu0 %v2254, 16
      %v2691 = vpop.permute.xlu0 %2690
      %2692 = vrot.lane.b32.xlu0 %v2257, 16
      %v2693 = vpop.permute.xlu0 %2692
      %2694 = vrot.lane.b32.xlu0 %v2259, 16
      %v2695 = vpop.permute.xlu0 %2694
      %2696 = vrot.lane.b32.xlu0 %v2633, 16
      %v2697 = vpop.permute.xlu0 %2696
      %2698 = vrot.lane.b32.xlu0 %v2635, 16
      %v2699 = vpop.permute.xlu0 %2698
      %v2732 = vrot.slane %v2118, 2
      %v2733 = vrot.slane %v2119, 2
      %v2734 = vsel %vm631, %v2732, %v2733
      %v2735 = vrot.slane %v2120, 2
      %v2736 = vsel %vm631, %v2733, %v2735
      %2737 = vrot.lane.b32.xlu0 %v2363, 20
      %v2738 = vpop.permute.xlu0 %2737
      %2739 = vrot.lane.b32.xlu0 %v2365, 20
      %v2740 = vpop.permute.xlu0 %2739
      %2741 = vrot.lane.b32.xlu0 %v2368, 20
      %v2742 = vpop.permute.xlu0 %2741
      %2743 = vrot.lane.b32.xlu0 %v2370, 20
      %v2744 = vpop.permute.xlu0 %2743
      %2745 = vrot.lane.b32.xlu0 %v2373, 20
      %v2746 = vpop.permute.xlu0 %2745
      %2747 = vrot.lane.b32.xlu0 %v2375, 20
      %v2748 = vpop.permute.xlu0 %2747
      %2749 = vrot.lane.b32.xlu0 %v2378, 20
      %v2750 = vpop.permute.xlu0 %2749
      %2751 = vrot.lane.b32.xlu0 %v2380, 20
      %v2752 = vpop.permute.xlu0 %2751
      %2753 = vrot.lane.b32.xlu0 %v2383, 20
      %v2754 = vpop.permute.xlu0 %2753
      %2755 = vrot.lane.b32.xlu0 %v2385, 20
      %v2756 = vpop.permute.xlu0 %2755
      %2757 = vrot.lane.b32.xlu0 %v2388, 20
      %v2758 = vpop.permute.xlu0 %2757
      %2759 = vrot.lane.b32.xlu0 %v2390, 20
      %v2760 = vpop.permute.xlu0 %2759
      %2761 = vrot.lane.b32.xlu0 %v2393, 20
      %v2762 = vpop.permute.xlu0 %2761
      %2763 = vrot.lane.b32.xlu0 %v2395, 20
      %v2764 = vpop.permute.xlu0 %2763
      %2765 = vrot.lane.b32.xlu0 %v2398, 20
      %v2766 = vpop.permute.xlu0 %2765
      %2767 = vrot.lane.b32.xlu0 %v2400, 20
      %v2768 = vpop.permute.xlu0 %2767
      %2769 = vrot.lane.b32.xlu0 %v2403, 20
      %v2770 = vpop.permute.xlu0 %2769
      %2771 = vrot.lane.b32.xlu0 %v2405, 20
      %v2772 = vpop.permute.xlu0 %2771
      %2773 = vrot.lane.b32.xlu0 %v2408, 20
      %v2774 = vpop.permute.xlu0 %2773
      %2775 = vrot.lane.b32.xlu0 %v2410, 20
      %v2776 = vpop.permute.xlu0 %2775
      %2777 = vrot.lane.b32.xlu0 %v2413, 20
      %v2778 = vpop.permute.xlu0 %2777
      %2779 = vrot.lane.b32.xlu0 %v2415, 20
      %v2780 = vpop.permute.xlu0 %2779
      %2781 = vrot.lane.b32.xlu0 %v2418, 20
      %v2782 = vpop.permute.xlu0 %2781
      %2783 = vrot.lane.b32.xlu0 %v2420, 20
      %v2784 = vpop.permute.xlu0 %2783
      %2785 = vrot.lane.b32.xlu0 %v2423, 20
      %v2786 = vpop.permute.xlu0 %2785
      %2787 = vrot.lane.b32.xlu0 %v2425, 20
      %v2788 = vpop.permute.xlu0 %2787
      %2789 = vrot.lane.b32.xlu0 %v2428, 20
      %v2790 = vpop.permute.xlu0 %2789
      %2791 = vrot.lane.b32.xlu0 %v2430, 20
      %v2792 = vpop.permute.xlu0 %2791
      %2793 = vrot.lane.b32.xlu0 %v2433, 20
      %v2794 = vpop.permute.xlu0 %2793
      %2795 = vrot.lane.b32.xlu0 %v2435, 20
      %v2796 = vpop.permute.xlu0 %2795
      %2797 = vrot.lane.b32.xlu0 %v2734, 20
      %v2798 = vpop.permute.xlu0 %2797
      %2799 = vrot.lane.b32.xlu0 %v2736, 20
      %v2800 = vpop.permute.xlu0 %2799
      %2835 = vrot.lane.b32.xlu0 %v2076, 24
      %v2836 = vpop.permute.xlu0 %2835
      %2837 = vrot.lane.b32.xlu0 %v2077, 24
      %v2838 = vpop.permute.xlu0 %2837
      %2839 = vrot.lane.b32.xlu0 %v2079, 24
      %v2840 = vpop.permute.xlu0 %2839
      %2841 = vrot.lane.b32.xlu0 %v2080, 24
      %v2842 = vpop.permute.xlu0 %2841
      %2843 = vrot.lane.b32.xlu0 %v2082, 24
      %v2844 = vpop.permute.xlu0 %2843
      %2845 = vrot.lane.b32.xlu0 %v2083, 24
      %v2846 = vpop.permute.xlu0 %2845
      %2847 = vrot.lane.b32.xlu0 %v2085, 24
      %v2848 = vpop.permute.xlu0 %2847
      %2849 = vrot.lane.b32.xlu0 %v2086, 24
      %v2850 = vpop.permute.xlu0 %2849
      %2851 = vrot.lane.b32.xlu0 %v2088, 24
      %v2852 = vpop.permute.xlu0 %2851
      %2853 = vrot.lane.b32.xlu0 %v2089, 24
      %v2854 = vpop.permute.xlu0 %2853
      %2855 = vrot.lane.b32.xlu0 %v2091, 24
      %v2856 = vpop.permute.xlu0 %2855
      %2857 = vrot.lane.b32.xlu0 %v2092, 24
      %v2858 = vpop.permute.xlu0 %2857
      %2859 = vrot.lane.b32.xlu0 %v2094, 24
      %v2860 = vpop.permute.xlu0 %2859
      %2861 = vrot.lane.b32.xlu0 %v2095, 24
      %v2862 = vpop.permute.xlu0 %2861
      %2863 = vrot.lane.b32.xlu0 %v2097, 24
      %v2864 = vpop.permute.xlu0 %2863
      %2865 = vrot.lane.b32.xlu0 %v2098, 24
      %v2866 = vpop.permute.xlu0 %2865
      %2867 = vrot.lane.b32.xlu0 %v2100, 24
      %v2868 = vpop.permute.xlu0 %2867
      %2869 = vrot.lane.b32.xlu0 %v2101, 24
      %v2870 = vpop.permute.xlu0 %2869
      %2871 = vrot.lane.b32.xlu0 %v2103, 24
      %v2872 = vpop.permute.xlu0 %2871
      %2873 = vrot.lane.b32.xlu0 %v2104, 24
      %v2874 = vpop.permute.xlu0 %2873
      %2875 = vrot.lane.b32.xlu0 %v2106, 24
      %v2876 = vpop.permute.xlu0 %2875
      %2877 = vrot.lane.b32.xlu0 %v2107, 24
      %v2878 = vpop.permute.xlu0 %2877
      %2879 = vrot.lane.b32.xlu0 %v2109, 24
      %v2880 = vpop.permute.xlu0 %2879
      %2881 = vrot.lane.b32.xlu0 %v2110, 24
      %v2882 = vpop.permute.xlu0 %2881
      %2883 = vrot.lane.b32.xlu0 %v2112, 24
      %v2884 = vpop.permute.xlu0 %2883
      %2885 = vrot.lane.b32.xlu0 %v2113, 24
      %v2886 = vpop.permute.xlu0 %2885
      %2887 = vrot.lane.b32.xlu0 %v2115, 24
      %v2888 = vpop.permute.xlu0 %2887
      %2889 = vrot.lane.b32.xlu0 %v2116, 24
      %v2890 = vpop.permute.xlu0 %2889
      %2891 = vrot.lane.b32.xlu0 %v2118, 24
      %v2892 = vpop.permute.xlu0 %2891
      %2893 = vrot.lane.b32.xlu0 %v2119, 24
      %v2894 = vpop.permute.xlu0 %2893
      %2895 = vrot.lane.b32.xlu0 %v2121, 24
      %v2896 = vpop.permute.xlu0 %2895
      %2897 = vrot.lane.b32.xlu0 %v2122, 24
      %v2898 = vpop.permute.xlu0 %2897
      %v2932 = vrot.slane %v2121, 1
      %v2933 = vrot.slane %v2122, 1
      %v2934 = vsel %vm454, %v2932, %v2933
      %v2935 = vrot.slane %v2123, 1
      %v2936 = vsel %vm454, %v2933, %v2935
      %2937 = vrot.lane.b32.xlu0 %v2192, 28
      %v2938 = vpop.permute.xlu0 %2937
      %2939 = vrot.lane.b32.xlu0 %v2194, 28
      %v2940 = vpop.permute.xlu0 %2939
      %2941 = vrot.lane.b32.xlu0 %v2197, 28
      %v2942 = vpop.permute.xlu0 %2941
      %2943 = vrot.lane.b32.xlu0 %v2199, 28
      %v2944 = vpop.permute.xlu0 %2943
      %2945 = vrot.lane.b32.xlu0 %v2202, 28
      %v2946 = vpop.permute.xlu0 %2945
      %2947 = vrot.lane.b32.xlu0 %v2204, 28
      %v2948 = vpop.permute.xlu0 %2947
      %2949 = vrot.lane.b32.xlu0 %v2207, 28
      %v2950 = vpop.permute.xlu0 %2949
      %2951 = vrot.lane.b32.xlu0 %v2209, 28
      %v2952 = vpop.permute.xlu0 %2951
      %2953 = vrot.lane.b32.xlu0 %v2212, 28
      %v2954 = vpop.permute.xlu0 %2953
      %2955 = vrot.lane.b32.xlu0 %v2214, 28
      %v2956 = vpop.permute.xlu0 %2955
      %2957 = vrot.lane.b32.xlu0 %v2217, 28
      %v2958 = vpop.permute.xlu0 %2957
      %2959 = vrot.lane.b32.xlu0 %v2219, 28
      %v2960 = vpop.permute.xlu0 %2959
      %2961 = vrot.lane.b32.xlu0 %v2222, 28
      %v2962 = vpop.permute.xlu0 %2961
      %2963 = vrot.lane.b32.xlu0 %v2224, 28
      %v2964 = vpop.permute.xlu0 %2963
      %2965 = vrot.lane.b32.xlu0 %v2227, 28
      %v2966 = vpop.permute.xlu0 %2965
      %2967 = vrot.lane.b32.xlu0 %v2229, 28
      %v2968 = vpop.permute.xlu0 %2967
      %2969 = vrot.lane.b32.xlu0 %v2232, 28
      %v2970 = vpop.permute.xlu0 %2969
      %2971 = vrot.lane.b32.xlu0 %v2234, 28
      %v2972 = vpop.permute.xlu0 %2971
      %2973 = vrot.lane.b32.xlu0 %v2237, 28
      %v2974 = vpop.permute.xlu0 %2973
      %2975 = vrot.lane.b32.xlu0 %v2239, 28
      %v2976 = vpop.permute.xlu0 %2975
      %2977 = vrot.lane.b32.xlu0 %v2242, 28
      %v2978 = vpop.permute.xlu0 %2977
      %2979 = vrot.lane.b32.xlu0 %v2244, 28
      %v2980 = vpop.permute.xlu0 %2979
      %2981 = vrot.lane.b32.xlu0 %v2247, 28
      %v2982 = vpop.permute.xlu0 %2981
      %2983 = vrot.lane.b32.xlu0 %v2249, 28
      %v2984 = vpop.permute.xlu0 %2983
      %2985 = vrot.lane.b32.xlu0 %v2252, 28
      %v2986 = vpop.permute.xlu0 %2985
      %2987 = vrot.lane.b32.xlu0 %v2254, 28
      %v2988 = vpop.permute.xlu0 %2987
      %2989 = vrot.lane.b32.xlu0 %v2257, 28
      %v2990 = vpop.permute.xlu0 %2989
      %2991 = vrot.lane.b32.xlu0 %v2259, 28
      %v2992 = vpop.permute.xlu0 %2991
      %2993 = vrot.lane.b32.xlu0 %v2633, 28
      %v2994 = vpop.permute.xlu0 %2993
      %2995 = vrot.lane.b32.xlu0 %v2635, 28
      %v2996 = vpop.permute.xlu0 %2995
      %2997 = vrot.lane.b32.xlu0 %v2934, 28
      %v2998 = vpop.permute.xlu0 %2997
      %2999 = vrot.lane.b32.xlu0 %v2936, 28
      %v3000 = vpop.permute.xlu0 %2999
      %v3033 = vrot.slane %v2121, 2
      %v3034 = vrot.slane %v2122, 2
      %v3035 = vsel %vm631, %v3033, %v3034
      %v3036 = vrot.slane %v2123, 2
      %v3037 = vsel %vm631, %v3034, %v3036
      %3038 = vrot.lane.b32.xlu0 %v2368, 32
      %v3039 = vpop.permute.xlu0 %3038
      %3040 = vrot.lane.b32.xlu0 %v2370, 32
      %v3041 = vpop.permute.xlu0 %3040
      %3042 = vrot.lane.b32.xlu0 %v2373, 32
      %v3043 = vpop.permute.xlu0 %3042
      %3044 = vrot.lane.b32.xlu0 %v2375, 32
      %v3045 = vpop.permute.xlu0 %3044
      %3046 = vrot.lane.b32.xlu0 %v2378, 32
      %v3047 = vpop.permute.xlu0 %3046
      %3048 = vrot.lane.b32.xlu0 %v2380, 32
      %v3049 = vpop.permute.xlu0 %3048
      %3050 = vrot.lane.b32.xlu0 %v2383, 32
      %v3051 = vpop.permute.xlu0 %3050
      %3052 = vrot.lane.b32.xlu0 %v2385, 32
      %v3053 = vpop.permute.xlu0 %3052
      %3054 = vrot.lane.b32.xlu0 %v2388, 32
      %v3055 = vpop.permute.xlu0 %3054
      %3056 = vrot.lane.b32.xlu0 %v2390, 32
      %v3057 = vpop.permute.xlu0 %3056
      %3058 = vrot.lane.b32.xlu0 %v2393, 32
      %v3059 = vpop.permute.xlu0 %3058
      %3060 = vrot.lane.b32.xlu0 %v2395, 32
      %v3061 = vpop.permute.xlu0 %3060
      %3062 = vrot.lane.b32.xlu0 %v2398, 32
      %v3063 = vpop.permute.xlu0 %3062
      %3064 = vrot.lane.b32.xlu0 %v2400, 32
      %v3065 = vpop.permute.xlu0 %3064
      %3066 = vrot.lane.b32.xlu0 %v2403, 32
      %v3067 = vpop.permute.xlu0 %3066
      %3068 = vrot.lane.b32.xlu0 %v2405, 32
      %v3069 = vpop.permute.xlu0 %3068
      %3070 = vrot.lane.b32.xlu0 %v2408, 32
      %v3071 = vpop.permute.xlu0 %3070
      %3072 = vrot.lane.b32.xlu0 %v2410, 32
      %v3073 = vpop.permute.xlu0 %3072
      %3074 = vrot.lane.b32.xlu0 %v2413, 32
      %v3075 = vpop.permute.xlu0 %3074
      %3076 = vrot.lane.b32.xlu0 %v2415, 32
      %v3077 = vpop.permute.xlu0 %3076
      %3078 = vrot.lane.b32.xlu0 %v2418, 32
      %v3079 = vpop.permute.xlu0 %3078
      %3080 = vrot.lane.b32.xlu0 %v2420, 32
      %v3081 = vpop.permute.xlu0 %3080
      %3082 = vrot.lane.b32.xlu0 %v2423, 32
      %v3083 = vpop.permute.xlu0 %3082
      %3084 = vrot.lane.b32.xlu0 %v2425, 32
      %v3085 = vpop.permute.xlu0 %3084
      %3086 = vrot.lane.b32.xlu0 %v2428, 32
      %v3087 = vpop.permute.xlu0 %3086
      %3088 = vrot.lane.b32.xlu0 %v2430, 32
      %v3089 = vpop.permute.xlu0 %3088
      %3090 = vrot.lane.b32.xlu0 %v2433, 32
      %v3091 = vpop.permute.xlu0 %3090
      %3092 = vrot.lane.b32.xlu0 %v2435, 32
      %v3093 = vpop.permute.xlu0 %3092
      %3094 = vrot.lane.b32.xlu0 %v2734, 32
      %v3095 = vpop.permute.xlu0 %3094
      %3096 = vrot.lane.b32.xlu0 %v2736, 32
      %v3097 = vpop.permute.xlu0 %3096
      %3098 = vrot.lane.b32.xlu0 %v3035, 32
      %v3099 = vpop.permute.xlu0 %3098
      %3100 = vrot.lane.b32.xlu0 %v3037, 32
      %v3101 = vpop.permute.xlu0 %3100
      %v3134 = vsel %vm171, %v2070, %v2261
      %v3135 = vsel %vm171, %v2071, %v2263
      %v3136 = vsel %vm171, %v2073, %v2265
      %v3137 = vsel %vm171, %v2074, %v2267
      %v3138 = vsel %vm171, %v2076, %v2269
      %v3139 = vsel %vm171, %v2077, %v2271
      %v3140 = vsel %vm171, %v2079, %v2273
      %v3141 = vsel %vm171, %v2080, %v2275
      %v3142 = vsel %vm171, %v2082, %v2277
      %v3143 = vsel %vm171, %v2083, %v2279
      %v3144 = vsel %vm171, %v2085, %v2281
      %v3145 = vsel %vm171, %v2086, %v2283
      %v3146 = vsel %vm171, %v2088, %v2285
      %v3147 = vsel %vm171, %v2089, %v2287
      %v3148 = vsel %vm171, %v2091, %v2289
      %v3149 = vsel %vm171, %v2092, %v2291
      %v3150 = vsel %vm171, %v2094, %v2293
      %v3151 = vsel %vm171, %v2095, %v2295
      %v3152 = vsel %vm171, %v2097, %v2297
      %v3153 = vsel %vm171, %v2098, %v2299
      %v3154 = vsel %vm171, %v2100, %v2301
      %v3155 = vsel %vm171, %v2101, %v2303
      %v3156 = vsel %vm171, %v2103, %v2305
      %v3157 = vsel %vm171, %v2104, %v2307
      %v3158 = vsel %vm171, %v2106, %v2309
      %v3159 = vsel %vm171, %v2107, %v2311
      %v3160 = vsel %vm171, %v2109, %v2313
      %v3161 = vsel %vm171, %v2110, %v2315
      %v3162 = vsel %vm171, %v2112, %v2317
      %v3163 = vsel %vm171, %v2113, %v2319
      %v3164 = vsel %vm171, %v2115, %v2321
      %v3165 = vsel %vm171, %v2116, %v2323
      %v3166 = vsel %vm1442, %v3134, %v2437
      %v3167 = vsel %vm1442, %v3135, %v2439
      %v3168 = vsel %vm1442, %v3136, %v2441
      %v3169 = vsel %vm1442, %v3137, %v2443
      %v3170 = vsel %vm1442, %v3138, %v2445
      %v3171 = vsel %vm1442, %v3139, %v2447
      %v3172 = vsel %vm1442, %v3140, %v2449
      %v3173 = vsel %vm1442, %v3141, %v2451
      %v3174 = vsel %vm1442, %v3142, %v2453
      %v3175 = vsel %vm1442, %v3143, %v2455
      %v3176 = vsel %vm1442, %v3144, %v2457
      %v3177 = vsel %vm1442, %v3145, %v2459
      %v3178 = vsel %vm1442, %v3146, %v2461
      %v3179 = vsel %vm1442, %v3147, %v2463
      %v3180 = vsel %vm1442, %v3148, %v2465
      %v3181 = vsel %vm1442, %v3149, %v2467
      %v3182 = vsel %vm1442, %v3150, %v2469
      %v3183 = vsel %vm1442, %v3151, %v2471
      %v3184 = vsel %vm1442, %v3152, %v2473
      %v3185 = vsel %vm1442, %v3153, %v2475
      %v3186 = vsel %vm1442, %v3154, %v2477
      %v3187 = vsel %vm1442, %v3155, %v2479
      %v3188 = vsel %vm1442, %v3156, %v2481
      %v3189 = vsel %vm1442, %v3157, %v2483
      %v3190 = vsel %vm1442, %v3158, %v2485
      %v3191 = vsel %vm1442, %v3159, %v2487
      %v3192 = vsel %vm1442, %v3160, %v2489
      %v3193 = vsel %vm1442, %v3161, %v2491
      %v3194 = vsel %vm1442, %v3162, %v2493
      %v3195 = vsel %vm1442, %v3163, %v2495
      %v3196 = vsel %vm1442, %v3164, %v2497
      %v3197 = vsel %vm1442, %v3165, %v2499
      %v3198 = vsel %vm1475, %v3166, %v2535
      %v3199 = vsel %vm1475, %v3167, %v2537
      %v3200 = vsel %vm1475, %v3168, %v2539
      %v3201 = vsel %vm1475, %v3169, %v2541
      %v3202 = vsel %vm1475, %v3170, %v2543
      %v3203 = vsel %vm1475, %v3171, %v2545
      %v3204 = vsel %vm1475, %v3172, %v2547
      %v3205 = vsel %vm1475, %v3173, %v2549
      %v3206 = vsel %vm1475, %v3174, %v2551
      %v3207 = vsel %vm1475, %v3175, %v2553
      %v3208 = vsel %vm1475, %v3176, %v2555
      %v3209 = vsel %vm1475, %v3177, %v2557
      %v3210 = vsel %vm1475, %v3178, %v2559
      %v3211 = vsel %vm1475, %v3179, %v2561
      %v3212 = vsel %vm1475, %v3180, %v2563
      %v3213 = vsel %vm1475, %v3181, %v2565
      %v3214 = vsel %vm1475, %v3182, %v2567
      %v3215 = vsel %vm1475, %v3183, %v2569
      %v3216 = vsel %vm1475, %v3184, %v2571
      %v3217 = vsel %vm1475, %v3185, %v2573
      %v3218 = vsel %vm1475, %v3186, %v2575
      %v3219 = vsel %vm1475, %v3187, %v2577
      %v3220 = vsel %vm1475, %v3188, %v2579
      %v3221 = vsel %vm1475, %v3189, %v2581
      %v3222 = vsel %vm1475, %v3190, %v2583
      %v3223 = vsel %vm1475, %v3191, %v2585
      %v3224 = vsel %vm1475, %v3192, %v2587
      %v3225 = vsel %vm1475, %v3193, %v2589
      %v3226 = vsel %vm1475, %v3194, %v2591
      %v3227 = vsel %vm1475, %v3195, %v2593
      %v3228 = vsel %vm1475, %v3196, %v2595
      %v3229 = vsel %vm1475, %v3197, %v2597
      %v3230 = vsel %vm1508, %v3198, %v2637
      %v3231 = vsel %vm1508, %v3199, %v2639
      %v3232 = vsel %vm1508, %v3200, %v2641
      %v3233 = vsel %vm1508, %v3201, %v2643
      %v3234 = vsel %vm1508, %v3202, %v2645
      %v3235 = vsel %vm1508, %v3203, %v2647
      %v3236 = vsel %vm1508, %v3204, %v2649
      %v3237 = vsel %vm1508, %v3205, %v2651
      %v3238 = vsel %vm1508, %v3206, %v2653
      %v3239 = vsel %vm1508, %v3207, %v2655
      %v3240 = vsel %vm1508, %v3208, %v2657
      %v3241 = vsel %vm1508, %v3209, %v2659
      %v3242 = vsel %vm1508, %v3210, %v2661
      %v3243 = vsel %vm1508, %v3211, %v2663
      %v3244 = vsel %vm1508, %v3212, %v2665
      %v3245 = vsel %vm1508, %v3213, %v2667
      %v3246 = vsel %vm1508, %v3214, %v2669
      %v3247 = vsel %vm1508, %v3215, %v2671
      %v3248 = vsel %vm1508, %v3216, %v2673
      %v3249 = vsel %vm1508, %v3217, %v2675
      %v3250 = vsel %vm1508, %v3218, %v2677
      %v3251 = vsel %vm1508, %v3219, %v2679
      %v3252 = vsel %vm1508, %v3220, %v2681
      %v3253 = vsel %vm1508, %v3221, %v2683
      %v3254 = vsel %vm1508, %v3222, %v2685
      %v3255 = vsel %vm1508, %v3223, %v2687
      %v3256 = vsel %vm1508, %v3224, %v2689
      %v3257 = vsel %vm1508, %v3225, %v2691
      %v3258 = vsel %vm1508, %v3226, %v2693
      %v3259 = vsel %vm1508, %v3227, %v2695
      %v3260 = vsel %vm1508, %v3228, %v2697
      %v3261 = vsel %vm1508, %v3229, %v2699
      %v3262 = vsel %vm1541, %v3230, %v2738
      %v3263 = vsel %vm1541, %v3231, %v2740
      %v3264 = vsel %vm1541, %v3232, %v2742
      %v3265 = vsel %vm1541, %v3233, %v2744
      %v3266 = vsel %vm1541, %v3234, %v2746
      %v3267 = vsel %vm1541, %v3235, %v2748
      %v3268 = vsel %vm1541, %v3236, %v2750
      %v3269 = vsel %vm1541, %v3237, %v2752
      %v3270 = vsel %vm1541, %v3238, %v2754
      %v3271 = vsel %vm1541, %v3239, %v2756
      %v3272 = vsel %vm1541, %v3240, %v2758
      %v3273 = vsel %vm1541, %v3241, %v2760
      %v3274 = vsel %vm1541, %v3242, %v2762
      %v3275 = vsel %vm1541, %v3243, %v2764
      %v3276 = vsel %vm1541, %v3244, %v2766
      %v3277 = vsel %vm1541, %v3245, %v2768
      %v3278 = vsel %vm1541, %v3246, %v2770
      %v3279 = vsel %vm1541, %v3247, %v2772
      %v3280 = vsel %vm1541, %v3248, %v2774
      %v3281 = vsel %vm1541, %v3249, %v2776
      %v3282 = vsel %vm1541, %v3250, %v2778
      %v3283 = vsel %vm1541, %v3251, %v2780
      %v3284 = vsel %vm1541, %v3252, %v2782
      %v3285 = vsel %vm1541, %v3253, %v2784
      %v3286 = vsel %vm1541, %v3254, %v2786
      %v3287 = vsel %vm1541, %v3255, %v2788
      %v3288 = vsel %vm1541, %v3256, %v2790
      %v3289 = vsel %vm1541, %v3257, %v2792
      %v3290 = vsel %vm1541, %v3258, %v2794
      %v3291 = vsel %vm1541, %v3259, %v2796
      %v3292 = vsel %vm1541, %v3260, %v2798
      %v3293 = vsel %vm1541, %v3261, %v2800
      %v3294 = vsel %vm1574, %v3262, %v2836
      %v3295 = vsel %vm1574, %v3263, %v2838
      %v3296 = vsel %vm1574, %v3264, %v2840
      %v3297 = vsel %vm1574, %v3265, %v2842
      %v3298 = vsel %vm1574, %v3266, %v2844
      %v3299 = vsel %vm1574, %v3267, %v2846
      %v3300 = vsel %vm1574, %v3268, %v2848
      %v3301 = vsel %vm1574, %v3269, %v2850
      %v3302 = vsel %vm1574, %v3270, %v2852
      %v3303 = vsel %vm1574, %v3271, %v2854
      %v3304 = vsel %vm1574, %v3272, %v2856
      %v3305 = vsel %vm1574, %v3273, %v2858
      %v3306 = vsel %vm1574, %v3274, %v2860
      %v3307 = vsel %vm1574, %v3275, %v2862
      %v3308 = vsel %vm1574, %v3276, %v2864
      %v3309 = vsel %vm1574, %v3277, %v2866
      %v3310 = vsel %vm1574, %v3278, %v2868
      %v3311 = vsel %vm1574, %v3279, %v2870
      %v3312 = vsel %vm1574, %v3280, %v2872
      %v3313 = vsel %vm1574, %v3281, %v2874
      %v3314 = vsel %vm1574, %v3282, %v2876
      %v3315 = vsel %vm1574, %v3283, %v2878
      %v3316 = vsel %vm1574, %v3284, %v2880
      %v3317 = vsel %vm1574, %v3285, %v2882
      %v3318 = vsel %vm1574, %v3286, %v2884
      %v3319 = vsel %vm1574, %v3287, %v2886
      %v3320 = vsel %vm1574, %v3288, %v2888
      %v3321 = vsel %vm1574, %v3289, %v2890
      %v3322 = vsel %vm1574, %v3290, %v2892
      %v3323 = vsel %vm1574, %v3291, %v2894
      %v3324 = vsel %vm1574, %v3292, %v2896
      %v3325 = vsel %vm1574, %v3293, %v2898
      %v3326 = vsel %vm1607, %v3294, %v2938
      %v3327 = vsel %vm1607, %v3295, %v2940
      %v3328 = vsel %vm1607, %v3296, %v2942
      %v3329 = vsel %vm1607, %v3297, %v2944
      %v3330 = vsel %vm1607, %v3298, %v2946
      %v3331 = vsel %vm1607, %v3299, %v2948
      %v3332 = vsel %vm1607, %v3300, %v2950
      %v3333 = vsel %vm1607, %v3301, %v2952
      %v3334 = vsel %vm1607, %v3302, %v2954
      %v3335 = vsel %vm1607, %v3303, %v2956
      %v3336 = vsel %vm1607, %v3304, %v2958
      %v3337 = vsel %vm1607, %v3305, %v2960
      %v3338 = vsel %vm1607, %v3306, %v2962
      %v3339 = vsel %vm1607, %v3307, %v2964
      %v3340 = vsel %vm1607, %v3308, %v2966
      %v3341 = vsel %vm1607, %v3309, %v2968
      %v3342 = vsel %vm1607, %v3310, %v2970
      %v3343 = vsel %vm1607, %v3311, %v2972
      %v3344 = vsel %vm1607, %v3312, %v2974
      %v3345 = vsel %vm1607, %v3313, %v2976
      %v3346 = vsel %vm1607, %v3314, %v2978
      %v3347 = vsel %vm1607, %v3315, %v2980
      %v3348 = vsel %vm1607, %v3316, %v2982
      %v3349 = vsel %vm1607, %v3317, %v2984
      %v3350 = vsel %vm1607, %v3318, %v2986
      %v3351 = vsel %vm1607, %v3319, %v2988
      %v3352 = vsel %vm1607, %v3320, %v2990
      %v3353 = vsel %vm1607, %v3321, %v2992
      %v3354 = vsel %vm1607, %v3322, %v2994
      %v3355 = vsel %vm1607, %v3323, %v2996
      %v3356 = vsel %vm1607, %v3324, %v2998
      %v3357 = vsel %vm1607, %v3325, %v3000
      %v3358 = vsel %vm1640, %v3326, %v3039
      %v3359 = vsel %vm1640, %v3327, %v3041
      %v3360 = vsel %vm1640, %v3328, %v3043
      %v3361 = vsel %vm1640, %v3329, %v3045
      %v3362 = vsel %vm1640, %v3330, %v3047
      %v3363 = vsel %vm1640, %v3331, %v3049
      %v3364 = vsel %vm1640, %v3332, %v3051
      %v3365 = vsel %vm1640, %v3333, %v3053
      %v3366 = vsel %vm1640, %v3334, %v3055
      %v3367 = vsel %vm1640, %v3335, %v3057
      %v3368 = vsel %vm1640, %v3336, %v3059
      %v3369 = vsel %vm1640, %v3337, %v3061
      %v3370 = vsel %vm1640, %v3338, %v3063
      %v3371 = vsel %vm1640, %v3339, %v3065
      %v3372 = vsel %vm1640, %v3340, %v3067
      %v3373 = vsel %vm1640, %v3341, %v3069
      %v3374 = vsel %vm1640, %v3342, %v3071
      %v3375 = vsel %vm1640, %v3343, %v3073
      %v3376 = vsel %vm1640, %v3344, %v3075
      %v3377 = vsel %vm1640, %v3345, %v3077
      %v3378 = vsel %vm1640, %v3346, %v3079
      %v3379 = vsel %vm1640, %v3347, %v3081
      %v3380 = vsel %vm1640, %v3348, %v3083
      %v3381 = vsel %vm1640, %v3349, %v3085
      %v3382 = vsel %vm1640, %v3350, %v3087
      %v3383 = vsel %vm1640, %v3351, %v3089
      %v3384 = vsel %vm1640, %v3352, %v3091
      %v3385 = vsel %vm1640, %v3353, %v3093
      %v3386 = vsel %vm1640, %v3354, %v3095
      %v3387 = vsel %vm1640, %v3355, %v3097
      %v3388 = vsel %vm1640, %v3356, %v3099
      %v3389 = vsel %vm1640, %v3357, %v3101
      %v3391 = vlaneseq
      %v3392 = vshrl.u32 %v3391, 7
      %v3393 = vsub.s32 0, %v3392
      %v3394 = vrot.slane %v2131, %v3393
      %v3397 = vsel %vm1679, %v3358, 0
      %v3400 = vsel %vm1679, %v3359, 0
      %v3403 = vsel %vm1679, %v3360, 0
      %v3406 = vsel %vm1679, %v3361, 0
      %v3409 = vsel %vm1679, %v3362, 0
      %v3412 = vsel %vm1679, %v3363, 0
      %v3415 = vsel %vm1679, %v3364, 0
      %v3418 = vsel %vm1679, %v3365, 0
      %v3421 = vsel %vm1679, %v3366, 0
      %v3424 = vsel %vm1679, %v3367, 0
      %v3427 = vsel %vm1679, %v3368, 0
      %v3430 = vsel %vm1679, %v3369, 0
      %v3433 = vsel %vm1679, %v3370, 0
      %v3436 = vsel %vm1679, %v3371, 0
      %v3439 = vsel %vm1679, %v3372, 0
      %v3442 = vsel %vm1679, %v3373, 0
      %v3445 = vsel %vm1679, %v3374, 0
      %v3448 = vsel %vm1679, %v3375, 0
      %v3451 = vsel %vm1679, %v3376, 0
      %v3454 = vsel %vm1679, %v3377, 0
      %v3457 = vsel %vm1679, %v3378, 0
      %v3460 = vsel %vm1679, %v3379, 0
      %v3463 = vsel %vm1679, %v3380, 0
      %v3466 = vsel %vm1679, %v3381, 0
      %v3469 = vsel %vm1679, %v3382, 0
      %v3472 = vsel %vm1679, %v3383, 0
      %v3475 = vsel %vm1679, %v3384, 0
      %v3478 = vsel %vm1679, %v3385, 0
      %v3481 = vsel %vm1679, %v3386, 0
      %v3484 = vsel %vm1679, %v3387, 0
      %v3487 = vsel %vm1679, %v3388, 0
      %v3490 = vsel %vm1679, %v3389, 0
      %v3493 = vsel %vm1776, %v2129, 0
      %3495 = vmatprep.subr.mxu0 0.0
      %3496 = vmatpush1.msra.mxu0 %v2125
      %3497 = vmatprep.subr.mxu0 0.0
      %3498 = vmatpush1.msra.mxu0 %v2126
      %3499 = vmatprep.subr.mxu0 0.0
      %3500 = vmatpush1.msra.mxu0 %v2127
      %3501 = vmatprep.subr.mxu0 0.0
      %3502 = vmatpush1.msra.mxu0 %v2128
      %3503 = vmatprep.subr.mxu0 0.0
      %3504 = vmatpush1.msra.mxu0 %v3493
      %3505 = vmatprep.subr.mxu0 0.0
      %3506 = vmatpush1.msra.mxu0 0.0
      %3507 = vmatprep.subr.mxu0 0.0
      %3508 = vmatpush1.msra.mxu0 0.0
      %3509 = vmatprep.subr.mxu0 0.0
      %3510 = vmatpush1.msra.mxu0 0.0
      %3511 = vmatprep.subr.mxu0 0.0
      %3512 = vmatpush1.msra.mxu0 0.0
      %3513 = vmatprep.subr.mxu0 0.0
      %3514 = vmatpush1.msra.mxu0 0.0
      %3515 = vmatprep.subr.mxu0 0.0
      %3516 = vmatpush1.msra.mxu0 0.0
      %3517 = vmatprep.subr.mxu0 0.0
      %3518 = vmatpush1.msra.mxu0 0.0
      %3519 = vmatprep.subr.mxu0 0.0
      %3520 = vmatpush1.msra.mxu0 0.0
      %3521 = vmatprep.subr.mxu0 0.0
      %3522 = vmatpush1.msra.mxu0 0.0
      %3523 = vmatprep.subr.mxu0 0.0
      %3524 = vmatpush1.msra.mxu0 0.0
      %3525 = vmatprep.subr.mxu0 0.0
      %3526 = vmatpush1.msra.mxu0 0.0
      %3527 = vmatprep.subr.mxu0 0.0
      %3528 = vmatpush1.msra.mxu0 0.0
      %3529 = vmatprep.subr.mxu0 0.0
      %3530 = vmatpush1.msra.mxu0 0.0
      %3531 = vmatprep.subr.mxu0 0.0
      %3532 = vmatpush1.msra.mxu0 0.0
      %3533 = vmatprep.subr.mxu0 0.0
      %3534 = vmatpush1.msra.mxu0 0.0
      %3535 = vmatprep.subr.mxu0 0.0
      %3536 = vmatpush1.msra.mxu0 0.0
      %3537 = vmatprep.subr.mxu0 0.0
      %3538 = vmatpush1.msra.mxu0 0.0
      %3539 = vmatprep.subr.mxu0 0.0
      %3540 = vmatpush1.msra.mxu0 0.0
      %3541 = vmatprep.subr.mxu0 0.0
      %3542 = vmatpush1.msra.mxu0 0.0
      %3543 = vmatprep.subr.mxu0 0.0
      %3544 = vmatpush1.msra.mxu0 0.0
      %3545 = vmatprep.subr.mxu0 0.0
      %3546 = vmatpush1.msra.mxu0 0.0
      %3547 = vmatprep.subr.mxu0 0.0
      %3548 = vmatpush1.msra.mxu0 0.0
      %3549 = vmatprep.subr.mxu0 0.0
      %3550 = vmatpush1.msra.mxu0 0.0
      %3551 = vmatprep.subr.mxu0 0.0
      %3552 = vmatpush1.msra.mxu0 0.0
      %3553 = vmatprep.subr.mxu0 0.0
      %3554 = vmatpush1.msra.mxu0 0.0
      %3555 = vmatprep.subr.mxu0 0.0
      %3556 = vmatpush1.msra.mxu0 0.0
      %3557 = vmatprep.subr.mxu0 0.0
      %3558 = vmatpush1.msra.mxu0 0.0
      %3559 = vmatprep.mubr.f32.mxu0 0.0
      %3560 = vmatmul.mubr.f32.gmra.mrb[0].mxu0 %v3397
      %v3561 = vpop.f32.mrb[0].mxu0
      %v3562 = vadd.f32 %v3394, %v3561
      %v3563 = vpop.f32.mrb[0].mxu0
      %3564 = vmatprep.mubr.f32.mxu0 0.0
      %3565 = vmatmul.mubr.f32.gmra.mrb[0].mxu0 %v3400
      %v3566 = vpop.f32.mrb[0].mxu0
      %v3567 = vadd.f32 %v3394, %v3566
      %v3568 = vpop.f32.mrb[0].mxu0
      %3569 = vmatprep.mubr.f32.mxu0 0.0
      %3570 = vmatmul.mubr.f32.gmra.mrb[0].mxu0 %v3403
      %v3571 = vpop.f32.mrb[0].mxu0
      %v3572 = vadd.f32 %v3394, %v3571
      %v3573 = vpop.f32.mrb[0].mxu0
      %3574 = vmatprep.mubr.f32.mxu0 0.0
      %3575 = vmatmul.mubr.f32.gmra.mrb[0].mxu0 %v3406
      %v3576 = vpop.f32.mrb[0].mxu0
      %v3577 = vadd.f32 %v3394, %v3576
      %v3578 = vpop.f32.mrb[0].mxu0
      %3579 = vmatprep.mubr.f32.mxu0 0.0
      %3580 = vmatmul.mubr.f32.gmra.mrb[0].mxu0 %v3409
      %v3581 = vpop.f32.mrb[0].mxu0
      %v3582 = vadd.f32 %v3394, %v3581
      %v3583 = vpop.f32.mrb[0].mxu0
      %3584 = vmatprep.mubr.f32.mxu0 0.0
      %3585 = vmatmul.mubr.f32.gmra.mrb[0].mxu0 %v3412
      %v3586 = vpop.f32.mrb[0].mxu0
      %v3587 = vadd.f32 %v3394, %v3586
      %v3588 = vpop.f32.mrb[0].mxu0
      %3589 = vmatprep.mubr.f32.mxu0 0.0
      %3590 = vmatmul.mubr.f32.gmra.mrb[0].mxu0 %v3415
      %v3591 = vpop.f32.mrb[0].mxu0
      %v3592 = vadd.f32 %v3394, %v3591
      %v3593 = vpop.f32.mrb[0].mxu0
      %3594 = vmatprep.mubr.f32.mxu0 0.0
      %3595 = vmatmul.mubr.f32.gmra.mrb[0].mxu0 %v3418
      %v3596 = vpop.f32.mrb[0].mxu0
      %v3597 = vadd.f32 %v3394, %v3596
      %v3598 = vpop.f32.mrb[0].mxu0
      %3599 = vmatprep.mubr.f32.mxu0 0.0
      %3600 = vmatmul.mubr.f32.gmra.mrb[0].mxu0 %v3421
      %v3601 = vpop.f32.mrb[0].mxu0
      %v3602 = vadd.f32 %v3394, %v3601
      %v3603 = vpop.f32.mrb[0].mxu0
      %3604 = vmatprep.mubr.f32.mxu0 0.0
      %3605 = vmatmul.mubr.f32.gmra.mrb[0].mxu0 %v3424
      %v3606 = vpop.f32.mrb[0].mxu0
      %v3607 = vadd.f32 %v3394, %v3606
      %v3608 = vpop.f32.mrb[0].mxu0
      %3609 = vmatprep.mubr.f32.mxu0 0.0
      %3610 = vmatmul.mubr.f32.gmra.mrb[0].mxu0 %v3427
      %v3611 = vpop.f32.mrb[0].mxu0
      %v3612 = vadd.f32 %v3394, %v3611
      %v3613 = vpop.f32.mrb[0].mxu0
      %3614 = vmatprep.mubr.f32.mxu0 0.0
      %3615 = vmatmul.mubr.f32.gmra.mrb[0].mxu0 %v3430
      %v3616 = vpop.f32.mrb[0].mxu0
      %v3617 = vadd.f32 %v3394, %v3616
      %v3618 = vpop.f32.mrb[0].mxu0
      %3619 = vmatprep.mubr.f32.mxu0 0.0
      %3620 = vmatmul.mubr.f32.gmra.mrb[0].mxu0 %v3433
      %v3621 = vpop.f32.mrb[0].mxu0
      %v3622 = vadd.f32 %v3394, %v3621
      %v3623 = vpop.f32.mrb[0].mxu0
      %3624 = vmatprep.mubr.f32.mxu0 0.0
      %3625 = vmatmul.mubr.f32.gmra.mrb[0].mxu0 %v3436
      %v3626 = vpop.f32.mrb[0].mxu0
      %v3627 = vadd.f32 %v3394, %v3626
      %v3628 = vpop.f32.mrb[0].mxu0
      %3629 = vmatprep.mubr.f32.mxu0 0.0
      %3630 = vmatmul.mubr.f32.gmra.mrb[0].mxu0 %v3439
      %v3631 = vpop.f32.mrb[0].mxu0
      %v3632 = vadd.f32 %v3394, %v3631
      %v3633 = vpop.f32.mrb[0].mxu0
      %3634 = vmatprep.mubr.f32.mxu0 0.0
      %3635 = vmatmul.mubr.f32.gmra.mrb[0].mxu0 %v3442
      %v3636 = vpop.f32.mrb[0].mxu0
      %v3637 = vadd.f32 %v3394, %v3636
      %v3638 = vpop.f32.mrb[0].mxu0
      %3639 = vmatprep.mubr.f32.mxu0 0.0
      %3640 = vmatmul.mubr.f32.gmra.mrb[0].mxu0 %v3445
      %v3641 = vpop.f32.mrb[0].mxu0
      %v3642 = vadd.f32 %v3394, %v3641
      %v3643 = vpop.f32.mrb[0].mxu0
      %3644 = vmatprep.mubr.f32.mxu0 0.0
      %3645 = vmatmul.mubr.f32.gmra.mrb[0].mxu0 %v3448
      %v3646 = vpop.f32.mrb[0].mxu0
      %v3647 = vadd.f32 %v3394, %v3646
      %v3648 = vpop.f32.mrb[0].mxu0
      %3649 = vmatprep.mubr.f32.mxu0 0.0
      %3650 = vmatmul.mubr.f32.gmra.mrb[0].mxu0 %v3451
      %v3651 = vpop.f32.mrb[0].mxu0
      %v3652 = vadd.f32 %v3394, %v3651
      %v3653 = vpop.f32.mrb[0].mxu0
      %3654 = vmatprep.mubr.f32.mxu0 0.0
      %3655 = vmatmul.mubr.f32.gmra.mrb[0].mxu0 %v3454
      %v3656 = vpop.f32.mrb[0].mxu0
      %v3657 = vadd.f32 %v3394, %v3656
      %v3658 = vpop.f32.mrb[0].mxu0
      %3659 = vmatprep.mubr.f32.mxu0 0.0
      %3660 = vmatmul.mubr.f32.gmra.mrb[0].mxu0 %v3457
      %v3661 = vpop.f32.mrb[0].mxu0
      %v3662 = vadd.f32 %v3394, %v3661
      %v3663 = vpop.f32.mrb[0].mxu0
      %3664 = vmatprep.mubr.f32.mxu0 0.0
      %3665 = vmatmul.mubr.f32.gmra.mrb[0].mxu0 %v3460
      %v3666 = vpop.f32.mrb[0].mxu0
      %v3667 = vadd.f32 %v3394, %v3666
      %v3668 = vpop.f32.mrb[0].mxu0
      %3669 = vmatprep.mubr.f32.mxu0 0.0
      %3670 = vmatmul.mubr.f32.gmra.mrb[0].mxu0 %v3463
      %v3671 = vpop.f32.mrb[0].mxu0
      %v3672 = vadd.f32 %v3394, %v3671
      %v3673 = vpop.f32.mrb[0].mxu0
      %3674 = vmatprep.mubr.f32.mxu0 0.0
      %3675 = vmatmul.mubr.f32.gmra.mrb[0].mxu0 %v3466
      %v3676 = vpop.f32.mrb[0].mxu0
      %v3677 = vadd.f32 %v3394, %v3676
      %v3678 = vpop.f32.mrb[0].mxu0
      %3679 = vmatprep.mubr.f32.mxu0 0.0
      %3680 = vmatmul.mubr.f32.gmra.mrb[0].mxu0 %v3469
      %v3681 = vpop.f32.mrb[0].mxu0
      %v3682 = vadd.f32 %v3394, %v3681
      %v3683 = vpop.f32.mrb[0].mxu0
      %3684 = vmatprep.mubr.f32.mxu0 0.0
      %3685 = vmatmul.mubr.f32.gmra.mrb[0].mxu0 %v3472
      %v3686 = vpop.f32.mrb[0].mxu0
      %v3687 = vadd.f32 %v3394, %v3686
      %v3688 = vpop.f32.mrb[0].mxu0
      %3689 = vmatprep.mubr.f32.mxu0 0.0
      %3690 = vmatmul.mubr.f32.gmra.mrb[0].mxu0 %v3475
      %v3691 = vpop.f32.mrb[0].mxu0
      %v3692 = vadd.f32 %v3394, %v3691
      %v3693 = vpop.f32.mrb[0].mxu0
      %3694 = vmatprep.mubr.f32.mxu0 0.0
      %3695 = vmatmul.mubr.f32.gmra.mrb[0].mxu0 %v3478
      %v3696 = vpop.f32.mrb[0].mxu0
      %v3697 = vadd.f32 %v3394, %v3696
      %v3698 = vpop.f32.mrb[0].mxu0
      %3699 = vmatprep.mubr.f32.mxu0 0.0
      %3700 = vmatmul.mubr.f32.gmra.mrb[0].mxu0 %v3481
      %v3701 = vpop.f32.mrb[0].mxu0
      %v3702 = vadd.f32 %v3394, %v3701
      %v3703 = vpop.f32.mrb[0].mxu0
      %3704 = vmatprep.mubr.f32.mxu0 0.0
      %3705 = vmatmul.mubr.f32.gmra.mrb[0].mxu0 %v3484
      %v3706 = vpop.f32.mrb[0].mxu0
      %v3707 = vadd.f32 %v3394, %v3706
      %v3708 = vpop.f32.mrb[0].mxu0
      %3709 = vmatprep.mubr.f32.mxu0 0.0
      %3710 = vmatmul.mubr.f32.gmra.mrb[0].mxu0 %v3487
      %v3711 = vpop.f32.mrb[0].mxu0
      %v3712 = vadd.f32 %v3394, %v3711
      %v3713 = vpop.f32.mrb[0].mxu0
      %3714 = vmatprep.mubr.f32.mxu0 0.0
      %3715 = vmatmul.mubr.f32.gmra.mrb[0].mxu0 %v3490
      %v3716 = vpop.f32.mrb[0].mxu0
      %v3717 = vadd.f32 %v3394, %v3716
      %v3718 = vpop.f32.mrb[0].mxu0
      %3719 = vdwg.mxu0
      %v3752 = vadd.f32 %v3562, %v462
      %v3753 = vadd.f32 %v3567, %v464
      %v3754 = vadd.f32 %v3572, %v467
      %v3755 = vadd.f32 %v3577, %v469
      %v3756 = vadd.f32 %v3582, %v472
      %v3757 = vadd.f32 %v3587, %v474
      %v3758 = vadd.f32 %v3592, %v477
      %v3759 = vadd.f32 %v3597, %v479
      %v3760 = vadd.f32 %v3602, %v482
      %v3761 = vadd.f32 %v3607, %v484
      %v3762 = vadd.f32 %v3612, %v487
      %v3763 = vadd.f32 %v3617, %v489
      %v3764 = vadd.f32 %v3622, %v492
      %v3765 = vadd.f32 %v3627, %v494
      %v3766 = vadd.f32 %v3632, %v497
      %v3767 = vadd.f32 %v3637, %v499
      %v3768 = vadd.f32 %v3642, %v502
      %v3769 = vadd.f32 %v3647, %v504
      %v3770 = vadd.f32 %v3652, %v507
      %v3771 = vadd.f32 %v3657, %v509
      %v3772 = vadd.f32 %v3662, %v512
      %v3773 = vadd.f32 %v3667, %v514
      %v3774 = vadd.f32 %v3672, %v517
      %v3775 = vadd.f32 %v3677, %v519
      %v3776 = vadd.f32 %v3682, %v522
      %v3777 = vadd.f32 %v3687, %v524
      %v3778 = vadd.f32 %v3692, %v527
      %v3779 = vadd.f32 %v3697, %v529
      %v3780 = vadd.f32 %v3702, %v532
      %v3781 = vadd.f32 %v3707, %v534
      %v3782 = vadd.f32 %v3712, %v909
      %v3783 = vadd.f32 %v3717, %v911
      %3784 = vst.msk [vmem:[%s313 + $0x1] sm:$0xff] %vm171, %v3752
      %3785 = vst.msk [vmem:[%s313 + $0x9] sm:$0xff] %vm171, %v3753
      %3786 = vst.msk [vmem:[%s313 + $0x19] sm:$0xff] %vm171, %v3754
      %3787 = vst.msk [vmem:[%s313 + $0x21] sm:$0xff] %vm171, %v3755
      %3788 = vst.msk [vmem:[%s313 + $0x31] sm:$0xff] %vm171, %v3756
      %3789 = vst.msk [vmem:[%s313 + $0x39] sm:$0xff] %vm171, %v3757
      %3790 = vst.msk [vmem:[%s313 + $0x49] sm:$0xff] %vm171, %v3758
      %3791 = vst.msk [vmem:[%s313 + $0x51] sm:$0xff] %vm171, %v3759
      %3792 = vst.msk [vmem:[%s313 + $0x61] sm:$0xff] %vm171, %v3760
      %3793 = vst.msk [vmem:[%s313 + $0x69] sm:$0xff] %vm171, %v3761
      %3794 = vst.msk [vmem:[%s313 + $0x79] sm:$0xff] %vm171, %v3762
      %3795 = vst.msk [vmem:[%s313 + $0x81] sm:$0xff] %vm171, %v3763
      %3796 = vst.msk [vmem:[%s313 + $0x91] sm:$0xff] %vm171, %v3764
      %3797 = vst.msk [vmem:[%s313 + $0x99] sm:$0xff] %vm171, %v3765
      %3798 = vst.msk [vmem:[%s313 + $0xa9] sm:$0xff] %vm171, %v3766
      %3799 = vst.msk [vmem:[%s313 + $0xb1] sm:$0xff] %vm171, %v3767
      %3800 = vst.msk [vmem:[%s313 + $0xc1] sm:$0xff] %vm171, %v3768
      %3801 = vst.msk [vmem:[%s313 + $0xc9] sm:$0xff] %vm171, %v3769
      %3802 = vst.msk [vmem:[%s313 + $0xd9] sm:$0xff] %vm171, %v3770
      %3803 = vst.msk [vmem:[%s313 + $0xe1] sm:$0xff] %vm171, %v3771
      %3804 = vst.msk [vmem:[%s313 + $0xf1] sm:$0xff] %vm171, %v3772
      %3805 = vst.msk [vmem:[%s313 + $0xf9] sm:$0xff] %vm171, %v3773
      %3806 = vst.msk [vmem:[%s313 + $0x109] sm:$0xff] %vm171, %v3774
      %3807 = vst.msk [vmem:[%s313 + $0x111] sm:$0xff] %vm171, %v3775
      %3808 = vst.msk [vmem:[%s313 + $0x121] sm:$0xff] %vm171, %v3776
      %3809 = vst.msk [vmem:[%s313 + $0x129] sm:$0xff] %vm171, %v3777
      %3810 = vst.msk [vmem:[%s313 + $0x139] sm:$0xff] %vm171, %v3778
      %3811 = vst.msk [vmem:[%s313 + $0x141] sm:$0xff] %vm171, %v3779
      %3812 = vst.msk [vmem:[%s313 + $0x151] sm:$0xff] %vm171, %v3780
      %3813 = vst.msk [vmem:[%s313 + $0x159] sm:$0xff] %vm171, %v3781
      %3814 = vst.msk [vmem:[%s313 + $0x169] sm:$0xff] %vm171, %v3782
      %3815 = vst.msk [vmem:[%s313 + $0x171] sm:$0xff] %vm171, %v3783
      %v3816 = vld [vmem:[#allocation2] sm:$0xff]
      %v3817 = vld [vmem:[#allocation2 + $0x8] sm:$0xff]
      %v3818 = vld [vmem:[#allocation2 + $0x10] sm:$0x3]
      %v3819 = vld [vmem:[#allocation2 + $0x18] sm:$0xff]
      %v3820 = vld [vmem:[#allocation2 + $0x20] sm:$0xff]
      %v3821 = vld [vmem:[#allocation2 + $0x28] sm:$0x3]
      %v3822 = vld [vmem:[#allocation2 + $0x30] sm:$0xff]
      %v3823 = vld [vmem:[#allocation2 + $0x38] sm:$0xff]
      %v3824 = vld [vmem:[#allocation2 + $0x40] sm:$0x3]
      %v3825 = vld [vmem:[#allocation2 + $0x48] sm:$0xff]
      %v3826 = vld [vmem:[#allocation2 + $0x50] sm:$0xff]
      %v3827 = vld [vmem:[#allocation2 + $0x58] sm:$0x3]
      %v3828 = vld [vmem:[#allocation2 + $0x60] sm:$0xff]
      %v3829 = vld [vmem:[#allocation2 + $0x68] sm:$0xff]
      %v3830 = vld [vmem:[#allocation2 + $0x70] sm:$0x3]
      %v3831 = vld [vmem:[#allocation2 + $0x78] sm:$0xff]
      %v3832 = vld [vmem:[#allocation2 + $0x80] sm:$0xff]
      %v3833 = vld [vmem:[#allocation2 + $0x88] sm:$0x3]
      %v3834 = vld [vmem:[#allocation2 + $0x90] sm:$0xff]
      %v3835 = vld [vmem:[#allocation2 + $0x98] sm:$0xff]
      %v3836 = vld [vmem:[#allocation2 + $0xa0] sm:$0x3]
      %v3837 = vld [vmem:[#allocation2 + $0xa8] sm:$0xff]
      %v3838 = vld [vmem:[#allocation2 + $0xb0] sm:$0xff]
      %v3839 = vld [vmem:[#allocation2 + $0xb8] sm:$0x3]
      %v3840 = vld [vmem:[#allocation2 + $0xc0] sm:$0xff]
      %v3841 = vld [vmem:[#allocation2 + $0xc8] sm:$0xff]
      %v3842 = vld [vmem:[#allocation2 + $0xd0] sm:$0x3]
      %v3843 = vld [vmem:[#allocation2 + $0xd8] sm:$0xff]
      %v3844 = vld [vmem:[#allocation2 + $0xe0] sm:$0xff]
      %v3845 = vld [vmem:[#allocation2 + $0xe8] sm:$0x3]
      %v3846 = vld [vmem:[#allocation2 + $0xf0] sm:$0xff]
      %v3847 = vld [vmem:[#allocation2 + $0xf8] sm:$0xff]
      %v3848 = vld [vmem:[#allocation2 + $0x100] sm:$0x3]
      %v3849 = vld [vmem:[#allocation2 + $0x108] sm:$0xff]
      %v3850 = vld [vmem:[#allocation2 + $0x110] sm:$0xff]
      %v3851 = vld [vmem:[#allocation2 + $0x118] sm:$0x3]
      %v3852 = vld [vmem:[#allocation2 + $0x120] sm:$0xff]
      %v3853 = vld [vmem:[#allocation2 + $0x128] sm:$0xff]
      %v3854 = vld [vmem:[#allocation2 + $0x130] sm:$0x3]
      %v3855 = vld [vmem:[#allocation2 + $0x138] sm:$0xff]
      %v3856 = vld [vmem:[#allocation2 + $0x140] sm:$0xff]
      %v3857 = vld [vmem:[#allocation2 + $0x148] sm:$0x3]
      %v3858 = vld [vmem:[#allocation2 + $0x150] sm:$0xff]
      %v3859 = vld [vmem:[#allocation2 + $0x158] sm:$0xff]
      %v3860 = vld [vmem:[#allocation2 + $0x160] sm:$0x3]
      %v3861 = vld [vmem:[#allocation2 + $0x168] sm:$0xff]
      %v3862 = vld [vmem:[#allocation2 + $0x170] sm:$0xff]
      %v3863 = vld [vmem:[#allocation2 + $0x178] sm:$0x3]
      %v3864 = vld [vmem:[#allocation2 + $0x180] sm:$0xff]
      %v3865 = vld [vmem:[#allocation2 + $0x188] sm:$0xff]
      %v3866 = vld [vmem:[#allocation2 + $0x190] sm:$0x3]
      %v3867 = vld [vmem:[#allocation2 + $0x198] sm:$0xff]
      %v3868 = vld [vmem:[#allocation2 + $0x1a0] sm:$0xff]
      %v3869 = vld [vmem:[#allocation2 + $0x1a8] sm:$0x3]
      %s3870 = scalar_lea.vmem %s1, 80
      %v3871 = vld [vmem:[%s3870] sm:$0xff]
      %v3872 = vld [vmem:[%s3870 + $0x8] sm:$0xff]
      %v3873 = vld [vmem:[%s3870 + $0x10] sm:$0xff]
      %v3874 = vld [vmem:[%s3870 + $0x18] sm:$0xff]
      %v3875 = vld [vmem:[%s3870 + $0x20] sm:$0xf]
      %s3876 = scalar_lea.vmem %s2, 2
      %v3877 = vld [vmem:[%s3876] sm:$0x1]
      %v3926 = vrot.slane %v3816, 1
      %v3927 = vrot.slane %v3817, 1
      %v3928 = vsel %vm454, %v3926, %v3927
      %v3929 = vrot.slane %v3818, 1
      %v3930 = vsel %vm454, %v3927, %v3929
      %v3931 = vrot.slane %v3819, 1
      %v3932 = vrot.slane %v3820, 1
      %v3933 = vsel %vm454, %v3931, %v3932
      %v3934 = vrot.slane %v3821, 1
      %v3935 = vsel %vm454, %v3932, %v3934
      %v3936 = vrot.slane %v3822, 1
      %v3937 = vrot.slane %v3823, 1
      %v3938 = vsel %vm454, %v3936, %v3937
      %v3939 = vrot.slane %v3824, 1
      %v3940 = vsel %vm454, %v3937, %v3939
      %v3941 = vrot.slane %v3825, 1
      %v3942 = vrot.slane %v3826, 1
      %v3943 = vsel %vm454, %v3941, %v3942
      %v3944 = vrot.slane %v3827, 1
      %v3945 = vsel %vm454, %v3942, %v3944
      %v3946 = vrot.slane %v3828, 1
      %v3947 = vrot.slane %v3829, 1
      %v3948 = vsel %vm454, %v3946, %v3947
      %v3949 = vrot.slane %v3830, 1
      %v3950 = vsel %vm454, %v3947, %v3949
      %v3951 = vrot.slane %v3831, 1
      %v3952 = vrot.slane %v3832, 1
      %v3953 = vsel %vm454, %v3951, %v3952
      %v3954 = vrot.slane %v3833, 1
      %v3955 = vsel %vm454, %v3952, %v3954
      %v3956 = vrot.slane %v3834, 1
      %v3957 = vrot.slane %v3835, 1
      %v3958 = vsel %vm454, %v3956, %v3957
      %v3959 = vrot.slane %v3836, 1
      %v3960 = vsel %vm454, %v3957, %v3959
      %v3961 = vrot.slane %v3837, 1
      %v3962 = vrot.slane %v3838, 1
      %v3963 = vsel %vm454, %v3961, %v3962
      %v3964 = vrot.slane %v3839, 1
      %v3965 = vsel %vm454, %v3962, %v3964
      %v3966 = vrot.slane %v3840, 1
      %v3967 = vrot.slane %v3841, 1
      %v3968 = vsel %vm454, %v3966, %v3967
      %v3969 = vrot.slane %v3842, 1
      %v3970 = vsel %vm454, %v3967, %v3969
      %v3971 = vrot.slane %v3843, 1
      %v3972 = vrot.slane %v3844, 1
      %v3973 = vsel %vm454, %v3971, %v3972
      %v3974 = vrot.slane %v3845, 1
      %v3975 = vsel %vm454, %v3972, %v3974
      %v3976 = vrot.slane %v3846, 1
      %v3977 = vrot.slane %v3847, 1
      %v3978 = vsel %vm454, %v3976, %v3977
      %v3979 = vrot.slane %v3848, 1
      %v3980 = vsel %vm454, %v3977, %v3979
      %v3981 = vrot.slane %v3849, 1
      %v3982 = vrot.slane %v3850, 1
      %v3983 = vsel %vm454, %v3981, %v3982
      %v3984 = vrot.slane %v3851, 1
      %v3985 = vsel %vm454, %v3982, %v3984
      %v3986 = vrot.slane %v3852, 1
      %v3987 = vrot.slane %v3853, 1
      %v3988 = vsel %vm454, %v3986, %v3987
      %v3989 = vrot.slane %v3854, 1
      %v3990 = vsel %vm454, %v3987, %v3989
      %v3991 = vrot.slane %v3855, 1
      %v3992 = vrot.slane %v3856, 1
      %v3993 = vsel %vm454, %v3991, %v3992
      %v3994 = vrot.slane %v3857, 1
      %v3995 = vsel %vm454, %v3992, %v3994
      %v3996 = vrot.slane %v3858, 1
      %v3997 = vrot.slane %v3859, 1
      %v3998 = vsel %vm454, %v3996, %v3997
      %v3999 = vrot.slane %v3860, 1
      %v4000 = vsel %vm454, %v3997, %v3999
      %v4001 = vrot.slane %v3861, 1
      %v4002 = vrot.slane %v3862, 1
      %v4003 = vsel %vm454, %v4001, %v4002
      %v4004 = vrot.slane %v3863, 1
      %v4005 = vsel %vm454, %v4002, %v4004
      %4006 = vrot.lane.b32.xlu0 %v3928, 4
      %v4007 = vpop.permute.xlu0 %4006
      %4008 = vrot.lane.b32.xlu0 %v3930, 4
      %v4009 = vpop.permute.xlu0 %4008
      %4010 = vrot.lane.b32.xlu0 %v3933, 4
      %v4011 = vpop.permute.xlu0 %4010
      %4012 = vrot.lane.b32.xlu0 %v3935, 4
      %v4013 = vpop.permute.xlu0 %4012
      %4014 = vrot.lane.b32.xlu0 %v3938, 4
      %v4015 = vpop.permute.xlu0 %4014
      %4016 = vrot.lane.b32.xlu0 %v3940, 4
      %v4017 = vpop.permute.xlu0 %4016
      %4018 = vrot.lane.b32.xlu0 %v3943, 4
      %v4019 = vpop.permute.xlu0 %4018
      %4020 = vrot.lane.b32.xlu0 %v3945, 4
      %v4021 = vpop.permute.xlu0 %4020
      %4022 = vrot.lane.b32.xlu0 %v3948, 4
      %v4023 = vpop.permute.xlu0 %4022
      %4024 = vrot.lane.b32.xlu0 %v3950, 4
      %v4025 = vpop.permute.xlu0 %4024
      %4026 = vrot.lane.b32.xlu0 %v3953, 4
      %v4027 = vpop.permute.xlu0 %4026
      %4028 = vrot.lane.b32.xlu0 %v3955, 4
      %v4029 = vpop.permute.xlu0 %4028
      %4030 = vrot.lane.b32.xlu0 %v3958, 4
      %v4031 = vpop.permute.xlu0 %4030
      %4032 = vrot.lane.b32.xlu0 %v3960, 4
      %v4033 = vpop.permute.xlu0 %4032
      %4034 = vrot.lane.b32.xlu0 %v3963, 4
      %v4035 = vpop.permute.xlu0 %4034
      %4036 = vrot.lane.b32.xlu0 %v3965, 4
      %v4037 = vpop.permute.xlu0 %4036
      %4038 = vrot.lane.b32.xlu0 %v3968, 4
      %v4039 = vpop.permute.xlu0 %4038
      %4040 = vrot.lane.b32.xlu0 %v3970, 4
      %v4041 = vpop.permute.xlu0 %4040
      %4042 = vrot.lane.b32.xlu0 %v3973, 4
      %v4043 = vpop.permute.xlu0 %4042
      %4044 = vrot.lane.b32.xlu0 %v3975, 4
      %v4045 = vpop.permute.xlu0 %4044
      %4046 = vrot.lane.b32.xlu0 %v3978, 4
      %v4047 = vpop.permute.xlu0 %4046
      %4048 = vrot.lane.b32.xlu0 %v3980, 4
      %v4049 = vpop.permute.xlu0 %4048
      %4050 = vrot.lane.b32.xlu0 %v3983, 4
      %v4051 = vpop.permute.xlu0 %4050
      %4052 = vrot.lane.b32.xlu0 %v3985, 4
      %v4053 = vpop.permute.xlu0 %4052
      %4054 = vrot.lane.b32.xlu0 %v3988, 4
      %v4055 = vpop.permute.xlu0 %4054
      %4056 = vrot.lane.b32.xlu0 %v3990, 4
      %v4057 = vpop.permute.xlu0 %4056
      %4058 = vrot.lane.b32.xlu0 %v3993, 4
      %v4059 = vpop.permute.xlu0 %4058
      %4060 = vrot.lane.b32.xlu0 %v3995, 4
      %v4061 = vpop.permute.xlu0 %4060
      %4062 = vrot.lane.b32.xlu0 %v3998, 4
      %v4063 = vpop.permute.xlu0 %4062
      %4064 = vrot.lane.b32.xlu0 %v4000, 4
      %v4065 = vpop.permute.xlu0 %4064
      %4066 = vrot.lane.b32.xlu0 %v4003, 4
      %v4067 = vpop.permute.xlu0 %4066
      %4068 = vrot.lane.b32.xlu0 %v4005, 4
      %v4069 = vpop.permute.xlu0 %4068
      %v4102 = vrot.slane %v3816, 2
      %v4103 = vrot.slane %v3817, 2
      %v4104 = vsel %vm631, %v4102, %v4103
      %v4105 = vrot.slane %v3818, 2
      %v4106 = vsel %vm631, %v4103, %v4105
      %v4107 = vrot.slane %v3819, 2
      %v4108 = vrot.slane %v3820, 2
      %v4109 = vsel %vm631, %v4107, %v4108
      %v4110 = vrot.slane %v3821, 2
      %v4111 = vsel %vm631, %v4108, %v4110
      %v4112 = vrot.slane %v3822, 2
      %v4113 = vrot.slane %v3823, 2
      %v4114 = vsel %vm631, %v4112, %v4113
      %v4115 = vrot.slane %v3824, 2
      %v4116 = vsel %vm631, %v4113, %v4115
      %v4117 = vrot.slane %v3825, 2
      %v4118 = vrot.slane %v3826, 2
      %v4119 = vsel %vm631, %v4117, %v4118
      %v4120 = vrot.slane %v3827, 2
      %v4121 = vsel %vm631, %v4118, %v4120
      %v4122 = vrot.slane %v3828, 2
      %v4123 = vrot.slane %v3829, 2
      %v4124 = vsel %vm631, %v4122, %v4123
      %v4125 = vrot.slane %v3830, 2
      %v4126 = vsel %vm631, %v4123, %v4125
      %v4127 = vrot.slane %v3831, 2
      %v4128 = vrot.slane %v3832, 2
      %v4129 = vsel %vm631, %v4127, %v4128
      %v4130 = vrot.slane %v3833, 2
      %v4131 = vsel %vm631, %v4128, %v4130
      %v4132 = vrot.slane %v3834, 2
      %v4133 = vrot.slane %v3835, 2
      %v4134 = vsel %vm631, %v4132, %v4133
      %v4135 = vrot.slane %v3836, 2
      %v4136 = vsel %vm631, %v4133, %v4135
      %v4137 = vrot.slane %v3837, 2
      %v4138 = vrot.slane %v3838, 2
      %v4139 = vsel %vm631, %v4137, %v4138
      %v4140 = vrot.slane %v3839, 2
      %v4141 = vsel %vm631, %v4138, %v4140
      %v4142 = vrot.slane %v3840, 2
      %v4143 = vrot.slane %v3841, 2
      %v4144 = vsel %vm631, %v4142, %v4143
      %v4145 = vrot.slane %v3842, 2
      %v4146 = vsel %vm631, %v4143, %v4145
      %v4147 = vrot.slane %v3843, 2
      %v4148 = vrot.slane %v3844, 2
      %v4149 = vsel %vm631, %v4147, %v4148
      %v4150 = vrot.slane %v3845, 2
      %v4151 = vsel %vm631, %v4148, %v4150
      %v4152 = vrot.slane %v3846, 2
      %v4153 = vrot.slane %v3847, 2
      %v4154 = vsel %vm631, %v4152, %v4153
      %v4155 = vrot.slane %v3848, 2
      %v4156 = vsel %vm631, %v4153, %v4155
      %v4157 = vrot.slane %v3849, 2
      %v4158 = vrot.slane %v3850, 2
      %v4159 = vsel %vm631, %v4157, %v4158
      %v4160 = vrot.slane %v3851, 2
      %v4161 = vsel %vm631, %v4158, %v4160
      %v4162 = vrot.slane %v3852, 2
      %v4163 = vrot.slane %v3853, 2
      %v4164 = vsel %vm631, %v4162, %v4163
      %v4165 = vrot.slane %v3854, 2
      %v4166 = vsel %vm631, %v4163, %v4165
      %v4167 = vrot.slane %v3855, 2
      %v4168 = vrot.slane %v3856, 2
      %v4169 = vsel %vm631, %v4167, %v4168
      %v4170 = vrot.slane %v3857, 2
      %v4171 = vsel %vm631, %v4168, %v4170
      %v4172 = vrot.slane %v3858, 2
      %v4173 = vrot.slane %v3859, 2
      %v4174 = vsel %vm631, %v4172, %v4173
      %v4175 = vrot.slane %v3860, 2
      %v4176 = vsel %vm631, %v4173, %v4175
      %v4177 = vrot.slane %v3861, 2
      %v4178 = vrot.slane %v3862, 2
      %v4179 = vsel %vm631, %v4177, %v4178
      %v4180 = vrot.slane %v3863, 2
      %v4181 = vsel %vm631, %v4178, %v4180
      %4182 = vrot.lane.b32.xlu0 %v4104, 8
      %v4183 = vpop.permute.xlu0 %4182
      %4184 = vrot.lane.b32.xlu0 %v4106, 8
      %v4185 = vpop.permute.xlu0 %4184
      %4186 = vrot.lane.b32.xlu0 %v4109, 8
      %v4187 = vpop.permute.xlu0 %4186
      %4188 = vrot.lane.b32.xlu0 %v4111, 8
      %v4189 = vpop.permute.xlu0 %4188
      %4190 = vrot.lane.b32.xlu0 %v4114, 8
      %v4191 = vpop.permute.xlu0 %4190
      %4192 = vrot.lane.b32.xlu0 %v4116, 8
      %v4193 = vpop.permute.xlu0 %4192
      %4194 = vrot.lane.b32.xlu0 %v4119, 8
      %v4195 = vpop.permute.xlu0 %4194
      %4196 = vrot.lane.b32.xlu0 %v4121, 8
      %v4197 = vpop.permute.xlu0 %4196
      %4198 = vrot.lane.b32.xlu0 %v4124, 8
      %v4199 = vpop.permute.xlu0 %4198
      %4200 = vrot.lane.b32.xlu0 %v4126, 8
      %v4201 = vpop.permute.xlu0 %4200
      %4202 = vrot.lane.b32.xlu0 %v4129, 8
      %v4203 = vpop.permute.xlu0 %4202
      %4204 = vrot.lane.b32.xlu0 %v4131, 8
      %v4205 = vpop.permute.xlu0 %4204
      %4206 = vrot.lane.b32.xlu0 %v4134, 8
      %v4207 = vpop.permute.xlu0 %4206
      %4208 = vrot.lane.b32.xlu0 %v4136, 8
      %v4209 = vpop.permute.xlu0 %4208
      %4210 = vrot.lane.b32.xlu0 %v4139, 8
      %v4211 = vpop.permute.xlu0 %4210
      %4212 = vrot.lane.b32.xlu0 %v4141, 8
      %v4213 = vpop.permute.xlu0 %4212
      %4214 = vrot.lane.b32.xlu0 %v4144, 8
      %v4215 = vpop.permute.xlu0 %4214
      %4216 = vrot.lane.b32.xlu0 %v4146, 8
      %v4217 = vpop.permute.xlu0 %4216
      %4218 = vrot.lane.b32.xlu0 %v4149, 8
      %v4219 = vpop.permute.xlu0 %4218
      %4220 = vrot.lane.b32.xlu0 %v4151, 8
      %v4221 = vpop.permute.xlu0 %4220
      %4222 = vrot.lane.b32.xlu0 %v4154, 8
      %v4223 = vpop.permute.xlu0 %4222
      %4224 = vrot.lane.b32.xlu0 %v4156, 8
      %v4225 = vpop.permute.xlu0 %4224
      %4226 = vrot.lane.b32.xlu0 %v4159, 8
      %v4227 = vpop.permute.xlu0 %4226
      %4228 = vrot.lane.b32.xlu0 %v4161, 8
      %v4229 = vpop.permute.xlu0 %4228
      %4230 = vrot.lane.b32.xlu0 %v4164, 8
      %v4231 = vpop.permute.xlu0 %4230
      %4232 = vrot.lane.b32.xlu0 %v4166, 8
      %v4233 = vpop.permute.xlu0 %4232
      %4234 = vrot.lane.b32.xlu0 %v4169, 8
      %v4235 = vpop.permute.xlu0 %4234
      %4236 = vrot.lane.b32.xlu0 %v4171, 8
      %v4237 = vpop.permute.xlu0 %4236
      %4238 = vrot.lane.b32.xlu0 %v4174, 8
      %v4239 = vpop.permute.xlu0 %4238
      %4240 = vrot.lane.b32.xlu0 %v4176, 8
      %v4241 = vpop.permute.xlu0 %4240
      %4242 = vrot.lane.b32.xlu0 %v4179, 8
      %v4243 = vpop.permute.xlu0 %4242
      %4244 = vrot.lane.b32.xlu0 %v4181, 8
      %v4245 = vpop.permute.xlu0 %4244
      %4280 = vrot.lane.b32.xlu0 %v3819, 12
      %v4281 = vpop.permute.xlu0 %4280
      %4282 = vrot.lane.b32.xlu0 %v3820, 12
      %v4283 = vpop.permute.xlu0 %4282
      %4284 = vrot.lane.b32.xlu0 %v3822, 12
      %v4285 = vpop.permute.xlu0 %4284
      %4286 = vrot.lane.b32.xlu0 %v3823, 12
      %v4287 = vpop.permute.xlu0 %4286
      %4288 = vrot.lane.b32.xlu0 %v3825, 12
      %v4289 = vpop.permute.xlu0 %4288
      %4290 = vrot.lane.b32.xlu0 %v3826, 12
      %v4291 = vpop.permute.xlu0 %4290
      %4292 = vrot.lane.b32.xlu0 %v3828, 12
      %v4293 = vpop.permute.xlu0 %4292
      %4294 = vrot.lane.b32.xlu0 %v3829, 12
      %v4295 = vpop.permute.xlu0 %4294
      %4296 = vrot.lane.b32.xlu0 %v3831, 12
      %v4297 = vpop.permute.xlu0 %4296
      %4298 = vrot.lane.b32.xlu0 %v3832, 12
      %v4299 = vpop.permute.xlu0 %4298
      %4300 = vrot.lane.b32.xlu0 %v3834, 12
      %v4301 = vpop.permute.xlu0 %4300
      %4302 = vrot.lane.b32.xlu0 %v3835, 12
      %v4303 = vpop.permute.xlu0 %4302
      %4304 = vrot.lane.b32.xlu0 %v3837, 12
      %v4305 = vpop.permute.xlu0 %4304
      %4306 = vrot.lane.b32.xlu0 %v3838, 12
      %v4307 = vpop.permute.xlu0 %4306
      %4308 = vrot.lane.b32.xlu0 %v3840, 12
      %v4309 = vpop.permute.xlu0 %4308
      %4310 = vrot.lane.b32.xlu0 %v3841, 12
      %v4311 = vpop.permute.xlu0 %4310
      %4312 = vrot.lane.b32.xlu0 %v3843, 12
      %v4313 = vpop.permute.xlu0 %4312
      %4314 = vrot.lane.b32.xlu0 %v3844, 12
      %v4315 = vpop.permute.xlu0 %4314
      %4316 = vrot.lane.b32.xlu0 %v3846, 12
      %v4317 = vpop.permute.xlu0 %4316
      %4318 = vrot.lane.b32.xlu0 %v3847, 12
      %v4319 = vpop.permute.xlu0 %4318
      %4320 = vrot.lane.b32.xlu0 %v3849, 12
      %v4321 = vpop.permute.xlu0 %4320
      %4322 = vrot.lane.b32.xlu0 %v3850, 12
      %v4323 = vpop.permute.xlu0 %4322
      %4324 = vrot.lane.b32.xlu0 %v3852, 12
      %v4325 = vpop.permute.xlu0 %4324
      %4326 = vrot.lane.b32.xlu0 %v3853, 12
      %v4327 = vpop.permute.xlu0 %4326
      %4328 = vrot.lane.b32.xlu0 %v3855, 12
      %v4329 = vpop.permute.xlu0 %4328
      %4330 = vrot.lane.b32.xlu0 %v3856, 12
      %v4331 = vpop.permute.xlu0 %4330
      %4332 = vrot.lane.b32.xlu0 %v3858, 12
      %v4333 = vpop.permute.xlu0 %4332
      %4334 = vrot.lane.b32.xlu0 %v3859, 12
      %v4335 = vpop.permute.xlu0 %4334
      %4336 = vrot.lane.b32.xlu0 %v3861, 12
      %v4337 = vpop.permute.xlu0 %4336
      %4338 = vrot.lane.b32.xlu0 %v3862, 12
      %v4339 = vpop.permute.xlu0 %4338
      %4340 = vrot.lane.b32.xlu0 %v3864, 12
      %v4341 = vpop.permute.xlu0 %4340
      %4342 = vrot.lane.b32.xlu0 %v3865, 12
      %v4343 = vpop.permute.xlu0 %4342
      %v4377 = vrot.slane %v3864, 1
      %v4378 = vrot.slane %v3865, 1
      %v4379 = vsel %vm454, %v4377, %v4378
      %v4380 = vrot.slane %v3866, 1
      %v4381 = vsel %vm454, %v4378, %v4380
      %4382 = vrot.lane.b32.xlu0 %v3933, 16
      %v4383 = vpop.permute.xlu0 %4382
      %4384 = vrot.lane.b32.xlu0 %v3935, 16
      %v4385 = vpop.permute.xlu0 %4384
      %4386 = vrot.lane.b32.xlu0 %v3938, 16
      %v4387 = vpop.permute.xlu0 %4386
      %4388 = vrot.lane.b32.xlu0 %v3940, 16
      %v4389 = vpop.permute.xlu0 %4388
      %4390 = vrot.lane.b32.xlu0 %v3943, 16
      %v4391 = vpop.permute.xlu0 %4390
      %4392 = vrot.lane.b32.xlu0 %v3945, 16
      %v4393 = vpop.permute.xlu0 %4392
      %4394 = vrot.lane.b32.xlu0 %v3948, 16
      %v4395 = vpop.permute.xlu0 %4394
      %4396 = vrot.lane.b32.xlu0 %v3950, 16
      %v4397 = vpop.permute.xlu0 %4396
      %4398 = vrot.lane.b32.xlu0 %v3953, 16
      %v4399 = vpop.permute.xlu0 %4398
      %4400 = vrot.lane.b32.xlu0 %v3955, 16
      %v4401 = vpop.permute.xlu0 %4400
      %4402 = vrot.lane.b32.xlu0 %v3958, 16
      %v4403 = vpop.permute.xlu0 %4402
      %4404 = vrot.lane.b32.xlu0 %v3960, 16
      %v4405 = vpop.permute.xlu0 %4404
      %4406 = vrot.lane.b32.xlu0 %v3963, 16
      %v4407 = vpop.permute.xlu0 %4406
      %4408 = vrot.lane.b32.xlu0 %v3965, 16
      %v4409 = vpop.permute.xlu0 %4408
      %4410 = vrot.lane.b32.xlu0 %v3968, 16
      %v4411 = vpop.permute.xlu0 %4410
      %4412 = vrot.lane.b32.xlu0 %v3970, 16
      %v4413 = vpop.permute.xlu0 %4412
      %4414 = vrot.lane.b32.xlu0 %v3973, 16
      %v4415 = vpop.permute.xlu0 %4414
      %4416 = vrot.lane.b32.xlu0 %v3975, 16
      %v4417 = vpop.permute.xlu0 %4416
      %4418 = vrot.lane.b32.xlu0 %v3978, 16
      %v4419 = vpop.permute.xlu0 %4418
      %4420 = vrot.lane.b32.xlu0 %v3980, 16
      %v4421 = vpop.permute.xlu0 %4420
      %4422 = vrot.lane.b32.xlu0 %v3983, 16
      %v4423 = vpop.permute.xlu0 %4422
      %4424 = vrot.lane.b32.xlu0 %v3985, 16
      %v4425 = vpop.permute.xlu0 %4424
      %4426 = vrot.lane.b32.xlu0 %v3988, 16
      %v4427 = vpop.permute.xlu0 %4426
      %4428 = vrot.lane.b32.xlu0 %v3990, 16
      %v4429 = vpop.permute.xlu0 %4428
      %4430 = vrot.lane.b32.xlu0 %v3993, 16
      %v4431 = vpop.permute.xlu0 %4430
      %4432 = vrot.lane.b32.xlu0 %v3995, 16
      %v4433 = vpop.permute.xlu0 %4432
      %4434 = vrot.lane.b32.xlu0 %v3998, 16
      %v4435 = vpop.permute.xlu0 %4434
      %4436 = vrot.lane.b32.xlu0 %v4000, 16
      %v4437 = vpop.permute.xlu0 %4436
      %4438 = vrot.lane.b32.xlu0 %v4003, 16
      %v4439 = vpop.permute.xlu0 %4438
      %4440 = vrot.lane.b32.xlu0 %v4005, 16
      %v4441 = vpop.permute.xlu0 %4440
      %4442 = vrot.lane.b32.xlu0 %v4379, 16
      %v4443 = vpop.permute.xlu0 %4442
      %4444 = vrot.lane.b32.xlu0 %v4381, 16
      %v4445 = vpop.permute.xlu0 %4444
      %v4478 = vrot.slane %v3864, 2
      %v4479 = vrot.slane %v3865, 2
      %v4480 = vsel %vm631, %v4478, %v4479
      %v4481 = vrot.slane %v3866, 2
      %v4482 = vsel %vm631, %v4479, %v4481
      %4483 = vrot.lane.b32.xlu0 %v4109, 20
      %v4484 = vpop.permute.xlu0 %4483
      %4485 = vrot.lane.b32.xlu0 %v4111, 20
      %v4486 = vpop.permute.xlu0 %4485
      %4487 = vrot.lane.b32.xlu0 %v4114, 20
      %v4488 = vpop.permute.xlu0 %4487
      %4489 = vrot.lane.b32.xlu0 %v4116, 20
      %v4490 = vpop.permute.xlu0 %4489
      %4491 = vrot.lane.b32.xlu0 %v4119, 20
      %v4492 = vpop.permute.xlu0 %4491
      %4493 = vrot.lane.b32.xlu0 %v4121, 20
      %v4494 = vpop.permute.xlu0 %4493
      %4495 = vrot.lane.b32.xlu0 %v4124, 20
      %v4496 = vpop.permute.xlu0 %4495
      %4497 = vrot.lane.b32.xlu0 %v4126, 20
      %v4498 = vpop.permute.xlu0 %4497
      %4499 = vrot.lane.b32.xlu0 %v4129, 20
      %v4500 = vpop.permute.xlu0 %4499
      %4501 = vrot.lane.b32.xlu0 %v4131, 20
      %v4502 = vpop.permute.xlu0 %4501
      %4503 = vrot.lane.b32.xlu0 %v4134, 20
      %v4504 = vpop.permute.xlu0 %4503
      %4505 = vrot.lane.b32.xlu0 %v4136, 20
      %v4506 = vpop.permute.xlu0 %4505
      %4507 = vrot.lane.b32.xlu0 %v4139, 20
      %v4508 = vpop.permute.xlu0 %4507
      %4509 = vrot.lane.b32.xlu0 %v4141, 20
      %v4510 = vpop.permute.xlu0 %4509
      %4511 = vrot.lane.b32.xlu0 %v4144, 20
      %v4512 = vpop.permute.xlu0 %4511
      %4513 = vrot.lane.b32.xlu0 %v4146, 20
      %v4514 = vpop.permute.xlu0 %4513
      %4515 = vrot.lane.b32.xlu0 %v4149, 20
      %v4516 = vpop.permute.xlu0 %4515
      %4517 = vrot.lane.b32.xlu0 %v4151, 20
      %v4518 = vpop.permute.xlu0 %4517
      %4519 = vrot.lane.b32.xlu0 %v4154, 20
      %v4520 = vpop.permute.xlu0 %4519
      %4521 = vrot.lane.b32.xlu0 %v4156, 20
      %v4522 = vpop.permute.xlu0 %4521
      %4523 = vrot.lane.b32.xlu0 %v4159, 20
      %v4524 = vpop.permute.xlu0 %4523
      %4525 = vrot.lane.b32.xlu0 %v4161, 20
      %v4526 = vpop.permute.xlu0 %4525
      %4527 = vrot.lane.b32.xlu0 %v4164, 20
      %v4528 = vpop.permute.xlu0 %4527
      %4529 = vrot.lane.b32.xlu0 %v4166, 20
      %v4530 = vpop.permute.xlu0 %4529
      %4531 = vrot.lane.b32.xlu0 %v4169, 20
      %v4532 = vpop.permute.xlu0 %4531
      %4533 = vrot.lane.b32.xlu0 %v4171, 20
      %v4534 = vpop.permute.xlu0 %4533
      %4535 = vrot.lane.b32.xlu0 %v4174, 20
      %v4536 = vpop.permute.xlu0 %4535
      %4537 = vrot.lane.b32.xlu0 %v4176, 20
      %v4538 = vpop.permute.xlu0 %4537
      %4539 = vrot.lane.b32.xlu0 %v4179, 20
      %v4540 = vpop.permute.xlu0 %4539
      %4541 = vrot.lane.b32.xlu0 %v4181, 20
      %v4542 = vpop.permute.xlu0 %4541
      %4543 = vrot.lane.b32.xlu0 %v4480, 20
      %v4544 = vpop.permute.xlu0 %4543
      %4545 = vrot.lane.b32.xlu0 %v4482, 20
      %v4546 = vpop.permute.xlu0 %4545
      %4581 = vrot.lane.b32.xlu0 %v3822, 24
      %v4582 = vpop.permute.xlu0 %4581
      %4583 = vrot.lane.b32.xlu0 %v3823, 24
      %v4584 = vpop.permute.xlu0 %4583
      %4585 = vrot.lane.b32.xlu0 %v3825, 24
      %v4586 = vpop.permute.xlu0 %4585
      %4587 = vrot.lane.b32.xlu0 %v3826, 24
      %v4588 = vpop.permute.xlu0 %4587
      %4589 = vrot.lane.b32.xlu0 %v3828, 24
      %v4590 = vpop.permute.xlu0 %4589
      %4591 = vrot.lane.b32.xlu0 %v3829, 24
      %v4592 = vpop.permute.xlu0 %4591
      %4593 = vrot.lane.b32.xlu0 %v3831, 24
      %v4594 = vpop.permute.xlu0 %4593
      %4595 = vrot.lane.b32.xlu0 %v3832, 24
      %v4596 = vpop.permute.xlu0 %4595
      %4597 = vrot.lane.b32.xlu0 %v3834, 24
      %v4598 = vpop.permute.xlu0 %4597
      %4599 = vrot.lane.b32.xlu0 %v3835, 24
      %v4600 = vpop.permute.xlu0 %4599
      %4601 = vrot.lane.b32.xlu0 %v3837, 24
      %v4602 = vpop.permute.xlu0 %4601
      %4603 = vrot.lane.b32.xlu0 %v3838, 24
      %v4604 = vpop.permute.xlu0 %4603
      %4605 = vrot.lane.b32.xlu0 %v3840, 24
      %v4606 = vpop.permute.xlu0 %4605
      %4607 = vrot.lane.b32.xlu0 %v3841, 24
      %v4608 = vpop.permute.xlu0 %4607
      %4609 = vrot.lane.b32.xlu0 %v3843, 24
      %v4610 = vpop.permute.xlu0 %4609
      %4611 = vrot.lane.b32.xlu0 %v3844, 24
      %v4612 = vpop.permute.xlu0 %4611
      %4613 = vrot.lane.b32.xlu0 %v3846, 24
      %v4614 = vpop.permute.xlu0 %4613
      %4615 = vrot.lane.b32.xlu0 %v3847, 24
      %v4616 = vpop.permute.xlu0 %4615
      %4617 = vrot.lane.b32.xlu0 %v3849, 24
      %v4618 = vpop.permute.xlu0 %4617
      %4619 = vrot.lane.b32.xlu0 %v3850, 24
      %v4620 = vpop.permute.xlu0 %4619
      %4621 = vrot.lane.b32.xlu0 %v3852, 24
      %v4622 = vpop.permute.xlu0 %4621
      %4623 = vrot.lane.b32.xlu0 %v3853, 24
      %v4624 = vpop.permute.xlu0 %4623
      %4625 = vrot.lane.b32.xlu0 %v3855, 24
      %v4626 = vpop.permute.xlu0 %4625
      %4627 = vrot.lane.b32.xlu0 %v3856, 24
      %v4628 = vpop.permute.xlu0 %4627
      %4629 = vrot.lane.b32.xlu0 %v3858, 24
      %v4630 = vpop.permute.xlu0 %4629
      %4631 = vrot.lane.b32.xlu0 %v3859, 24
      %v4632 = vpop.permute.xlu0 %4631
      %4633 = vrot.lane.b32.xlu0 %v3861, 24
      %v4634 = vpop.permute.xlu0 %4633
      %4635 = vrot.lane.b32.xlu0 %v3862, 24
      %v4636 = vpop.permute.xlu0 %4635
      %4637 = vrot.lane.b32.xlu0 %v3864, 24
      %v4638 = vpop.permute.xlu0 %4637
      %4639 = vrot.lane.b32.xlu0 %v3865, 24
      %v4640 = vpop.permute.xlu0 %4639
      %4641 = vrot.lane.b32.xlu0 %v3867, 24
      %v4642 = vpop.permute.xlu0 %4641
      %4643 = vrot.lane.b32.xlu0 %v3868, 24
      %v4644 = vpop.permute.xlu0 %4643
      %v4678 = vrot.slane %v3867, 1
      %v4679 = vrot.slane %v3868, 1
      %v4680 = vsel %vm454, %v4678, %v4679
      %v4681 = vrot.slane %v3869, 1
      %v4682 = vsel %vm454, %v4679, %v4681
      %4683 = vrot.lane.b32.xlu0 %v3938, 28
      %v4684 = vpop.permute.xlu0 %4683
      %4685 = vrot.lane.b32.xlu0 %v3940, 28
      %v4686 = vpop.permute.xlu0 %4685
      %4687 = vrot.lane.b32.xlu0 %v3943, 28
      %v4688 = vpop.permute.xlu0 %4687
      %4689 = vrot.lane.b32.xlu0 %v3945, 28
      %v4690 = vpop.permute.xlu0 %4689
      %4691 = vrot.lane.b32.xlu0 %v3948, 28
      %v4692 = vpop.permute.xlu0 %4691
      %4693 = vrot.lane.b32.xlu0 %v3950, 28
      %v4694 = vpop.permute.xlu0 %4693
      %4695 = vrot.lane.b32.xlu0 %v3953, 28
      %v4696 = vpop.permute.xlu0 %4695
      %4697 = vrot.lane.b32.xlu0 %v3955, 28
      %v4698 = vpop.permute.xlu0 %4697
      %4699 = vrot.lane.b32.xlu0 %v3958, 28
      %v4700 = vpop.permute.xlu0 %4699
      %4701 = vrot.lane.b32.xlu0 %v3960, 28
      %v4702 = vpop.permute.xlu0 %4701
      %4703 = vrot.lane.b32.xlu0 %v3963, 28
      %v4704 = vpop.permute.xlu0 %4703
      %4705 = vrot.lane.b32.xlu0 %v3965, 28
      %v4706 = vpop.permute.xlu0 %4705
      %4707 = vrot.lane.b32.xlu0 %v3968, 28
      %v4708 = vpop.permute.xlu0 %4707
      %4709 = vrot.lane.b32.xlu0 %v3970, 28
      %v4710 = vpop.permute.xlu0 %4709
      %4711 = vrot.lane.b32.xlu0 %v3973, 28
      %v4712 = vpop.permute.xlu0 %4711
      %4713 = vrot.lane.b32.xlu0 %v3975, 28
      %v4714 = vpop.permute.xlu0 %4713
      %4715 = vrot.lane.b32.xlu0 %v3978, 28
      %v4716 = vpop.permute.xlu0 %4715
      %4717 = vrot.lane.b32.xlu0 %v3980, 28
      %v4718 = vpop.permute.xlu0 %4717
      %4719 = vrot.lane.b32.xlu0 %v3983, 28
      %v4720 = vpop.permute.xlu0 %4719
      %4721 = vrot.lane.b32.xlu0 %v3985, 28
      %v4722 = vpop.permute.xlu0 %4721
      %4723 = vrot.lane.b32.xlu0 %v3988, 28
      %v4724 = vpop.permute.xlu0 %4723
      %4725 = vrot.lane.b32.xlu0 %v3990, 28
      %v4726 = vpop.permute.xlu0 %4725
      %4727 = vrot.lane.b32.xlu0 %v3993, 28
      %v4728 = vpop.permute.xlu0 %4727
      %4729 = vrot.lane.b32.xlu0 %v3995, 28
      %v4730 = vpop.permute.xlu0 %4729
      %4731 = vrot.lane.b32.xlu0 %v3998, 28
      %v4732 = vpop.permute.xlu0 %4731
      %4733 = vrot.lane.b32.xlu0 %v4000, 28
      %v4734 = vpop.permute.xlu0 %4733
      %4735 = vrot.lane.b32.xlu0 %v4003, 28
      %v4736 = vpop.permute.xlu0 %4735
      %4737 = vrot.lane.b32.xlu0 %v4005, 28
      %v4738 = vpop.permute.xlu0 %4737
      %4739 = vrot.lane.b32.xlu0 %v4379, 28
      %v4740 = vpop.permute.xlu0 %4739
      %4741 = vrot.lane.b32.xlu0 %v4381, 28
      %v4742 = vpop.permute.xlu0 %4741
      %4743 = vrot.lane.b32.xlu0 %v4680, 28
      %v4744 = vpop.permute.xlu0 %4743
      %4745 = vrot.lane.b32.xlu0 %v4682, 28
      %v4746 = vpop.permute.xlu0 %4745
      %v4779 = vrot.slane %v3867, 2
      %v4780 = vrot.slane %v3868, 2
      %v4781 = vsel %vm631, %v4779, %v4780
      %v4782 = vrot.slane %v3869, 2
      %v4783 = vsel %vm631, %v4780, %v4782
      %4784 = vrot.lane.b32.xlu0 %v4114, 32
      %v4785 = vpop.permute.xlu0 %4784
      %4786 = vrot.lane.b32.xlu0 %v4116, 32
      %v4787 = vpop.permute.xlu0 %4786
      %4788 = vrot.lane.b32.xlu0 %v4119, 32
      %v4789 = vpop.permute.xlu0 %4788
      %4790 = vrot.lane.b32.xlu0 %v4121, 32
      %v4791 = vpop.permute.xlu0 %4790
      %4792 = vrot.lane.b32.xlu0 %v4124, 32
      %v4793 = vpop.permute.xlu0 %4792
      %4794 = vrot.lane.b32.xlu0 %v4126, 32
      %v4795 = vpop.permute.xlu0 %4794
      %4796 = vrot.lane.b32.xlu0 %v4129, 32
      %v4797 = vpop.permute.xlu0 %4796
      %4798 = vrot.lane.b32.xlu0 %v4131, 32
      %v4799 = vpop.permute.xlu0 %4798
      %4800 = vrot.lane.b32.xlu0 %v4134, 32
      %v4801 = vpop.permute.xlu0 %4800
      %4802 = vrot.lane.b32.xlu0 %v4136, 32
      %v4803 = vpop.permute.xlu0 %4802
      %4804 = vrot.lane.b32.xlu0 %v4139, 32
      %v4805 = vpop.permute.xlu0 %4804
      %4806 = vrot.lane.b32.xlu0 %v4141, 32
      %v4807 = vpop.permute.xlu0 %4806
      %4808 = vrot.lane.b32.xlu0 %v4144, 32
      %v4809 = vpop.permute.xlu0 %4808
      %4810 = vrot.lane.b32.xlu0 %v4146, 32
      %v4811 = vpop.permute.xlu0 %4810
      %4812 = vrot.lane.b32.xlu0 %v4149, 32
      %v4813 = vpop.permute.xlu0 %4812
      %4814 = vrot.lane.b32.xlu0 %v4151, 32
      %v4815 = vpop.permute.xlu0 %4814
      %4816 = vrot.lane.b32.xlu0 %v4154, 32
      %v4817 = vpop.permute.xlu0 %4816
      %4818 = vrot.lane.b32.xlu0 %v4156, 32
      %v4819 = vpop.permute.xlu0 %4818
      %4820 = vrot.lane.b32.xlu0 %v4159, 32
      %v4821 = vpop.permute.xlu0 %4820
      %4822 = vrot.lane.b32.xlu0 %v4161, 32
      %v4823 = vpop.permute.xlu0 %4822
      %4824 = vrot.lane.b32.xlu0 %v4164, 32
      %v4825 = vpop.permute.xlu0 %4824
      %4826 = vrot.lane.b32.xlu0 %v4166, 32
      %v4827 = vpop.permute.xlu0 %4826
      %4828 = vrot.lane.b32.xlu0 %v4169, 32
      %v4829 = vpop.permute.xlu0 %4828
      %4830 = vrot.lane.b32.xlu0 %v4171, 32
      %v4831 = vpop.permute.xlu0 %4830
      %4832 = vrot.lane.b32.xlu0 %v4174, 32
      %v4833 = vpop.permute.xlu0 %4832
      %4834 = vrot.lane.b32.xlu0 %v4176, 32
      %v4835 = vpop.permute.xlu0 %4834
      %4836 = vrot.lane.b32.xlu0 %v4179, 32
      %v4837 = vpop.permute.xlu0 %4836
      %4838 = vrot.lane.b32.xlu0 %v4181, 32
      %v4839 = vpop.permute.xlu0 %4838
      %4840 = vrot.lane.b32.xlu0 %v4480, 32
      %v4841 = vpop.permute.xlu0 %4840
      %4842 = vrot.lane.b32.xlu0 %v4482, 32
      %v4843 = vpop.permute.xlu0 %4842
      %4844 = vrot.lane.b32.xlu0 %v4781, 32
      %v4845 = vpop.permute.xlu0 %4844
      %4846 = vrot.lane.b32.xlu0 %v4783, 32
      %v4847 = vpop.permute.xlu0 %4846
      %v4880 = vsel %vm171, %v3816, %v4007
      %v4881 = vsel %vm171, %v3817, %v4009
      %v4882 = vsel %vm171, %v3819, %v4011
      %v4883 = vsel %vm171, %v3820, %v4013
      %v4884 = vsel %vm171, %v3822, %v4015
      %v4885 = vsel %vm171, %v3823, %v4017
      %v4886 = vsel %vm171, %v3825, %v4019
      %v4887 = vsel %vm171, %v3826, %v4021
      %v4888 = vsel %vm171, %v3828, %v4023
      %v4889 = vsel %vm171, %v3829, %v4025
      %v4890 = vsel %vm171, %v3831, %v4027
      %v4891 = vsel %vm171, %v3832, %v4029
      %v4892 = vsel %vm171, %v3834, %v4031
      %v4893 = vsel %vm171, %v3835, %v4033
      %v4894 = vsel %vm171, %v3837, %v4035
      %v4895 = vsel %vm171, %v3838, %v4037
      %v4896 = vsel %vm171, %v3840, %v4039
      %v4897 = vsel %vm171, %v3841, %v4041
      %v4898 = vsel %vm171, %v3843, %v4043
      %v4899 = vsel %vm171, %v3844, %v4045
      %v4900 = vsel %vm171, %v3846, %v4047
      %v4901 = vsel %vm171, %v3847, %v4049
      %v4902 = vsel %vm171, %v3849, %v4051
      %v4903 = vsel %vm171, %v3850, %v4053
      %v4904 = vsel %vm171, %v3852, %v4055
      %v4905 = vsel %vm171, %v3853, %v4057
      %v4906 = vsel %vm171, %v3855, %v4059
      %v4907 = vsel %vm171, %v3856, %v4061
      %v4908 = vsel %vm171, %v3858, %v4063
      %v4909 = vsel %vm171, %v3859, %v4065
      %v4910 = vsel %vm171, %v3861, %v4067
      %v4911 = vsel %vm171, %v3862, %v4069
      %v4912 = vsel %vm1442, %v4880, %v4183
      %v4913 = vsel %vm1442, %v4881, %v4185
      %v4914 = vsel %vm1442, %v4882, %v4187
      %v4915 = vsel %vm1442, %v4883, %v4189
      %v4916 = vsel %vm1442, %v4884, %v4191
      %v4917 = vsel %vm1442, %v4885, %v4193
      %v4918 = vsel %vm1442, %v4886, %v4195
      %v4919 = vsel %vm1442, %v4887, %v4197
      %v4920 = vsel %vm1442, %v4888, %v4199
      %v4921 = vsel %vm1442, %v4889, %v4201
      %v4922 = vsel %vm1442, %v4890, %v4203
      %v4923 = vsel %vm1442, %v4891, %v4205
      %v4924 = vsel %vm1442, %v4892, %v4207
      %v4925 = vsel %vm1442, %v4893, %v4209
      %v4926 = vsel %vm1442, %v4894, %v4211
      %v4927 = vsel %vm1442, %v4895, %v4213
      %v4928 = vsel %vm1442, %v4896, %v4215
      %v4929 = vsel %vm1442, %v4897, %v4217
      %v4930 = vsel %vm1442, %v4898, %v4219
      %v4931 = vsel %vm1442, %v4899, %v4221
      %v4932 = vsel %vm1442, %v4900, %v4223
      %v4933 = vsel %vm1442, %v4901, %v4225
      %v4934 = vsel %vm1442, %v4902, %v4227
      %v4935 = vsel %vm1442, %v4903, %v4229
      %v4936 = vsel %vm1442, %v4904, %v4231
      %v4937 = vsel %vm1442, %v4905, %v4233
      %v4938 = vsel %vm1442, %v4906, %v4235
      %v4939 = vsel %vm1442, %v4907, %v4237
      %v4940 = vsel %vm1442, %v4908, %v4239
      %v4941 = vsel %vm1442, %v4909, %v4241
      %v4942 = vsel %vm1442, %v4910, %v4243
      %v4943 = vsel %vm1442, %v4911, %v4245
      %v4944 = vsel %vm1475, %v4912, %v4281
      %v4945 = vsel %vm1475, %v4913, %v4283
      %v4946 = vsel %vm1475, %v4914, %v4285
      %v4947 = vsel %vm1475, %v4915, %v4287
      %v4948 = vsel %vm1475, %v4916, %v4289
      %v4949 = vsel %vm1475, %v4917, %v4291
      %v4950 = vsel %vm1475, %v4918, %v4293
      %v4951 = vsel %vm1475, %v4919, %v4295
      %v4952 = vsel %vm1475, %v4920, %v4297
      %v4953 = vsel %vm1475, %v4921, %v4299
      %v4954 = vsel %vm1475, %v4922, %v4301
      %v4955 = vsel %vm1475, %v4923, %v4303
      %v4956 = vsel %vm1475, %v4924, %v4305
      %v4957 = vsel %vm1475, %v4925, %v4307
      %v4958 = vsel %vm1475, %v4926, %v4309
      %v4959 = vsel %vm1475, %v4927, %v4311
      %v4960 = vsel %vm1475, %v4928, %v4313
      %v4961 = vsel %vm1475, %v4929, %v4315
      %v4962 = vsel %vm1475, %v4930, %v4317
      %v4963 = vsel %vm1475, %v4931, %v4319
      %v4964 = vsel %vm1475, %v4932, %v4321
      %v4965 = vsel %vm1475, %v4933, %v4323
      %v4966 = vsel %vm1475, %v4934, %v4325
      %v4967 = vsel %vm1475, %v4935, %v4327
      %v4968 = vsel %vm1475, %v4936, %v4329
      %v4969 = vsel %vm1475, %v4937, %v4331
      %v4970 = vsel %vm1475, %v4938, %v4333
      %v4971 = vsel %vm1475, %v4939, %v4335
      %v4972 = vsel %vm1475, %v4940, %v4337
      %v4973 = vsel %vm1475, %v4941, %v4339
      %v4974 = vsel %vm1475, %v4942, %v4341
      %v4975 = vsel %vm1475, %v4943, %v4343
      %v4976 = vsel %vm1508, %v4944, %v4383
      %v4977 = vsel %vm1508, %v4945, %v4385
      %v4978 = vsel %vm1508, %v4946, %v4387
      %v4979 = vsel %vm1508, %v4947, %v4389
      %v4980 = vsel %vm1508, %v4948, %v4391
      %v4981 = vsel %vm1508, %v4949, %v4393
      %v4982 = vsel %vm1508, %v4950, %v4395
      %v4983 = vsel %vm1508, %v4951, %v4397
      %v4984 = vsel %vm1508, %v4952, %v4399
      %v4985 = vsel %vm1508, %v4953, %v4401
      %v4986 = vsel %vm1508, %v4954, %v4403
      %v4987 = vsel %vm1508, %v4955, %v4405
      %v4988 = vsel %vm1508, %v4956, %v4407
      %v4989 = vsel %vm1508, %v4957, %v4409
      %v4990 = vsel %vm1508, %v4958, %v4411
      %v4991 = vsel %vm1508, %v4959, %v4413
      %v4992 = vsel %vm1508, %v4960, %v4415
      %v4993 = vsel %vm1508, %v4961, %v4417
      %v4994 = vsel %vm1508, %v4962, %v4419
      %v4995 = vsel %vm1508, %v4963, %v4421
      %v4996 = vsel %vm1508, %v4964, %v4423
      %v4997 = vsel %vm1508, %v4965, %v4425
      %v4998 = vsel %vm1508, %v4966, %v4427
      %v4999 = vsel %vm1508, %v4967, %v4429
      %v5000 = vsel %vm1508, %v4968, %v4431
      %v5001 = vsel %vm1508, %v4969, %v4433
      %v5002 = vsel %vm1508, %v4970, %v4435
      %v5003 = vsel %vm1508, %v4971, %v4437
      %v5004 = vsel %vm1508, %v4972, %v4439
      %v5005 = vsel %vm1508, %v4973, %v4441
      %v5006 = vsel %vm1508, %v4974, %v4443
      %v5007 = vsel %vm1508, %v4975, %v4445
      %v5008 = vsel %vm1541, %v4976, %v4484
      %v5009 = vsel %vm1541, %v4977, %v4486
      %v5010 = vsel %vm1541, %v4978, %v4488
      %v5011 = vsel %vm1541, %v4979, %v4490
      %v5012 = vsel %vm1541, %v4980, %v4492
      %v5013 = vsel %vm1541, %v4981, %v4494
      %v5014 = vsel %vm1541, %v4982, %v4496
      %v5015 = vsel %vm1541, %v4983, %v4498
      %v5016 = vsel %vm1541, %v4984, %v4500
      %v5017 = vsel %vm1541, %v4985, %v4502
      %v5018 = vsel %vm1541, %v4986, %v4504
      %v5019 = vsel %vm1541, %v4987, %v4506
      %v5020 = vsel %vm1541, %v4988, %v4508
      %v5021 = vsel %vm1541, %v4989, %v4510
      %v5022 = vsel %vm1541, %v4990, %v4512
      %v5023 = vsel %vm1541, %v4991, %v4514
      %v5024 = vsel %vm1541, %v4992, %v4516
      %v5025 = vsel %vm1541, %v4993, %v4518
      %v5026 = vsel %vm1541, %v4994, %v4520
      %v5027 = vsel %vm1541, %v4995, %v4522
      %v5028 = vsel %vm1541, %v4996, %v4524
      %v5029 = vsel %vm1541, %v4997, %v4526
      %v5030 = vsel %vm1541, %v4998, %v4528
      %v5031 = vsel %vm1541, %v4999, %v4530
      %v5032 = vsel %vm1541, %v5000, %v4532
      %v5033 = vsel %vm1541, %v5001, %v4534
      %v5034 = vsel %vm1541, %v5002, %v4536
      %v5035 = vsel %vm1541, %v5003, %v4538
      %v5036 = vsel %vm1541, %v5004, %v4540
      %v5037 = vsel %vm1541, %v5005, %v4542
      %v5038 = vsel %vm1541, %v5006, %v4544
      %v5039 = vsel %vm1541, %v5007, %v4546
      %v5040 = vsel %vm1574, %v5008, %v4582
      %v5041 = vsel %vm1574, %v5009, %v4584
      %v5042 = vsel %vm1574, %v5010, %v4586
      %v5043 = vsel %vm1574, %v5011, %v4588
      %v5044 = vsel %vm1574, %v5012, %v4590
      %v5045 = vsel %vm1574, %v5013, %v4592
      %v5046 = vsel %vm1574, %v5014, %v4594
      %v5047 = vsel %vm1574, %v5015, %v4596
      %v5048 = vsel %vm1574, %v5016, %v4598
      %v5049 = vsel %vm1574, %v5017, %v4600
      %v5050 = vsel %vm1574, %v5018, %v4602
      %v5051 = vsel %vm1574, %v5019, %v4604
      %v5052 = vsel %vm1574, %v5020, %v4606
      %v5053 = vsel %vm1574, %v5021, %v4608
      %v5054 = vsel %vm1574, %v5022, %v4610
      %v5055 = vsel %vm1574, %v5023, %v4612
      %v5056 = vsel %vm1574, %v5024, %v4614
      %v5057 = vsel %vm1574, %v5025, %v4616
      %v5058 = vsel %vm1574, %v5026, %v4618
      %v5059 = vsel %vm1574, %v5027, %v4620
      %v5060 = vsel %vm1574, %v5028, %v4622
      %v5061 = vsel %vm1574, %v5029, %v4624
      %v5062 = vsel %vm1574, %v5030, %v4626
      %v5063 = vsel %vm1574, %v5031, %v4628
      %v5064 = vsel %vm1574, %v5032, %v4630
      %v5065 = vsel %vm1574, %v5033, %v4632
      %v5066 = vsel %vm1574, %v5034, %v4634
      %v5067 = vsel %vm1574, %v5035, %v4636
      %v5068 = vsel %vm1574, %v5036, %v4638
      %v5069 = vsel %vm1574, %v5037, %v4640
      %v5070 = vsel %vm1574, %v5038, %v4642
      %v5071 = vsel %vm1574, %v5039, %v4644
      %v5072 = vsel %vm1607, %v5040, %v4684
      %v5073 = vsel %vm1607, %v5041, %v4686
      %v5074 = vsel %vm1607, %v5042, %v4688
      %v5075 = vsel %vm1607, %v5043, %v4690
      %v5076 = vsel %vm1607, %v5044, %v4692
      %v5077 = vsel %vm1607, %v5045, %v4694
      %v5078 = vsel %vm1607, %v5046, %v4696
      %v5079 = vsel %vm1607, %v5047, %v4698
      %v5080 = vsel %vm1607, %v5048, %v4700
      %v5081 = vsel %vm1607, %v5049, %v4702
      %v5082 = vsel %vm1607, %v5050, %v4704
      %v5083 = vsel %vm1607, %v5051, %v4706
      %v5084 = vsel %vm1607, %v5052, %v4708
      %v5085 = vsel %vm1607, %v5053, %v4710
      %v5086 = vsel %vm1607, %v5054, %v4712
      %v5087 = vsel %vm1607, %v5055, %v4714
      %v5088 = vsel %vm1607, %v5056, %v4716
      %v5089 = vsel %vm1607, %v5057, %v4718
      %v5090 = vsel %vm1607, %v5058, %v4720
      %v5091 = vsel %vm1607, %v5059, %v4722
      %v5092 = vsel %vm1607, %v5060, %v4724
      %v5093 = vsel %vm1607, %v5061, %v4726
      %v5094 = vsel %vm1607, %v5062, %v4728
      %v5095 = vsel %vm1607, %v5063, %v4730
      %v5096 = vsel %vm1607, %v5064, %v4732
      %v5097 = vsel %vm1607, %v5065, %v4734
      %v5098 = vsel %vm1607, %v5066, %v4736
      %v5099 = vsel %vm1607, %v5067, %v4738
      %v5100 = vsel %vm1607, %v5068, %v4740
      %v5101 = vsel %vm1607, %v5069, %v4742
      %v5102 = vsel %vm1607, %v5070, %v4744
      %v5103 = vsel %vm1607, %v5071, %v4746
      %v5104 = vsel %vm1640, %v5072, %v4785
      %v5105 = vsel %vm1640, %v5073, %v4787
      %v5106 = vsel %vm1640, %v5074, %v4789
      %v5107 = vsel %vm1640, %v5075, %v4791
      %v5108 = vsel %vm1640, %v5076, %v4793
      %v5109 = vsel %vm1640, %v5077, %v4795
      %v5110 = vsel %vm1640, %v5078, %v4797
      %v5111 = vsel %vm1640, %v5079, %v4799
      %v5112 = vsel %vm1640, %v5080, %v4801
      %v5113 = vsel %vm1640, %v5081, %v4803
      %v5114 = vsel %vm1640, %v5082, %v4805
      %v5115 = vsel %vm1640, %v5083, %v4807
      %v5116 = vsel %vm1640, %v5084, %v4809
      %v5117 = vsel %vm1640, %v5085, %v4811
      %v5118 = vsel %vm1640, %v5086, %v4813
      %v5119 = vsel %vm1640, %v5087, %v4815
      %v5120 = vsel %vm1640, %v5088, %v4817
      %v5121 = vsel %vm1640, %v5089, %v4819
      %v5122 = vsel %vm1640, %v5090, %v4821
      %v5123 = vsel %vm1640, %v5091, %v4823
      %v5124 = vsel %vm1640, %v5092, %v4825
      %v5125 = vsel %vm1640, %v5093, %v4827
      %v5126 = vsel %vm1640, %v5094, %v4829
      %v5127 = vsel %vm1640, %v5095, %v4831
      %v5128 = vsel %vm1640, %v5096, %v4833
      %v5129 = vsel %vm1640, %v5097, %v4835
      %v5130 = vsel %vm1640, %v5098, %v4837
      %v5131 = vsel %vm1640, %v5099, %v4839
      %v5132 = vsel %vm1640, %v5100, %v4841
      %v5133 = vsel %vm1640, %v5101, %v4843
      %v5134 = vsel %vm1640, %v5102, %v4845
      %v5135 = vsel %vm1640, %v5103, %v4847
      %v5137 = vlaneseq
      %v5138 = vshrl.u32 %v5137, 7
      %v5139 = vsub.s32 0, %v5138
      %v5140 = vrot.slane %v3877, %v5139
      %v5143 = vsel %vm1679, %v5104, 0
      %v5146 = vsel %vm1679, %v5105, 0
      %v5149 = vsel %vm1679, %v5106, 0
      %v5152 = vsel %vm1679, %v5107, 0
      %v5155 = vsel %vm1679, %v5108, 0
      %v5158 = vsel %vm1679, %v5109, 0
      %v5161 = vsel %vm1679, %v5110, 0
      %v5164 = vsel %vm1679, %v5111, 0
      %v5167 = vsel %vm1679, %v5112, 0
      %v5170 = vsel %vm1679, %v5113, 0
      %v5173 = vsel %vm1679, %v5114, 0
      %v5176 = vsel %vm1679, %v5115, 0
      %v5179 = vsel %vm1679, %v5116, 0
      %v5182 = vsel %vm1679, %v5117, 0
      %v5185 = vsel %vm1679, %v5118, 0
      %v5188 = vsel %vm1679, %v5119, 0
      %v5191 = vsel %vm1679, %v5120, 0
      %v5194 = vsel %vm1679, %v5121, 0
      %v5197 = vsel %vm1679, %v5122, 0
      %v5200 = vsel %vm1679, %v5123, 0
      %v5203 = vsel %vm1679, %v5124, 0
      %v5206 = vsel %vm1679, %v5125, 0
      %v5209 = vsel %vm1679, %v5126, 0
      %v5212 = vsel %vm1679, %v5127, 0
      %v5215 = vsel %vm1679, %v5128, 0
      %v5218 = vsel %vm1679, %v5129, 0
      %v5221 = vsel %vm1679, %v5130, 0
      %v5224 = vsel %vm1679, %v5131, 0
      %v5227 = vsel %vm1679, %v5132, 0
      %v5230 = vsel %vm1679, %v5133, 0
      %v5233 = vsel %vm1679, %v5134, 0
      %v5236 = vsel %vm1679, %v5135, 0
      %v5239 = vsel %vm1776, %v3875, 0
      %5241 = vmatprep.subr.mxu0 0.0
      %5242 = vmatpush1.msra.mxu0 %v3871
      %5243 = vmatprep.subr.mxu0 0.0
      %5244 = vmatpush1.msra.mxu0 %v3872
      %5245 = vmatprep.subr.mxu0 0.0
      %5246 = vmatpush1.msra.mxu0 %v3873
      %5247 = vmatprep.subr.mxu0 0.0
      %5248 = vmatpush1.msra.mxu0 %v3874
      %5249 = vmatprep.subr.mxu0 0.0
      %5250 = vmatpush1.msra.mxu0 %v5239
      %5251 = vmatprep.subr.mxu0 0.0
      %5252 = vmatpush1.msra.mxu0 0.0
      %5253 = vmatprep.subr.mxu0 0.0
      %5254 = vmatpush1.msra.mxu0 0.0
      %5255 = vmatprep.subr.mxu0 0.0
      %5256 = vmatpush1.msra.mxu0 0.0
      %5257 = vmatprep.subr.mxu0 0.0
      %5258 = vmatpush1.msra.mxu0 0.0
      %5259 = vmatprep.subr.mxu0 0.0
      %5260 = vmatpush1.msra.mxu0 0.0
      %5261 = vmatprep.subr.mxu0 0.0
      %5262 = vmatpush1.msra.mxu0 0.0
      %5263 = vmatprep.subr.mxu0 0.0
      %5264 = vmatpush1.msra.mxu0 0.0
      %5265 = vmatprep.subr.mxu0 0.0
      %5266 = vmatpush1.msra.mxu0 0.0
      %5267 = vmatprep.subr.mxu0 0.0
      %5268 = vmatpush1.msra.mxu0 0.0
      %5269 = vmatprep.subr.mxu0 0.0
      %5270 = vmatpush1.msra.mxu0 0.0
      %5271 = vmatprep.subr.mxu0 0.0
      %5272 = vmatpush1.msra.mxu0 0.0
      %5273 = vmatprep.subr.mxu0 0.0
      %5274 = vmatpush1.msra.mxu0 0.0
      %5275 = vmatprep.subr.mxu0 0.0
      %5276 = vmatpush1.msra.mxu0 0.0
      %5277 = vmatprep.subr.mxu0 0.0
      %5278 = vmatpush1.msra.mxu0 0.0
      %5279 = vmatprep.subr.mxu0 0.0
      %5280 = vmatpush1.msra.mxu0 0.0
      %5281 = vmatprep.subr.mxu0 0.0
      %5282 = vmatpush1.msra.mxu0 0.0
      %5283 = vmatprep.subr.mxu0 0.0
      %5284 = vmatpush1.msra.mxu0 0.0
      %5285 = vmatprep.subr.mxu0 0.0
      %5286 = vmatpush1.msra.mxu0 0.0
      %5287 = vmatprep.subr.mxu0 0.0
      %5288 = vmatpush1.msra.mxu0 0.0
      %5289 = vmatprep.subr.mxu0 0.0
      %5290 = vmatpush1.msra.mxu0 0.0
      %5291 = vmatprep.subr.mxu0 0.0
      %5292 = vmatpush1.msra.mxu0 0.0
      %5293 = vmatprep.subr.mxu0 0.0
      %5294 = vmatpush1.msra.mxu0 0.0
      %5295 = vmatprep.subr.mxu0 0.0
      %5296 = vmatpush1.msra.mxu0 0.0
      %5297 = vmatprep.subr.mxu0 0.0
      %5298 = vmatpush1.msra.mxu0 0.0
      %5299 = vmatprep.subr.mxu0 0.0
      %5300 = vmatpush1.msra.mxu0 0.0
      %5301 = vmatprep.subr.mxu0 0.0
      %5302 = vmatpush1.msra.mxu0 0.0
      %5303 = vmatprep.subr.mxu0 0.0
      %5304 = vmatpush1.msra.mxu0 0.0
      %5305 = vmatprep.mubr.f32.mxu0 0.0
      %5306 = vmatmul.mubr.f32.gmra.mrb[0].mxu0 %v5143
      %v5307 = vpop.f32.mrb[0].mxu0
      %v5308 = vadd.f32 %v5140, %v5307
      %v5309 = vpop.f32.mrb[0].mxu0
      %5310 = vmatprep.mubr.f32.mxu0 0.0
      %5311 = vmatmul.mubr.f32.gmra.mrb[0].mxu0 %v5146
      %v5312 = vpop.f32.mrb[0].mxu0
      %v5313 = vadd.f32 %v5140, %v5312
      %v5314 = vpop.f32.mrb[0].mxu0
      %5315 = vmatprep.mubr.f32.mxu0 0.0
      %5316 = vmatmul.mubr.f32.gmra.mrb[0].mxu0 %v5149
      %v5317 = vpop.f32.mrb[0].mxu0
      %v5318 = vadd.f32 %v5140, %v5317
      %v5319 = vpop.f32.mrb[0].mxu0
      %5320 = vmatprep.mubr.f32.mxu0 0.0
      %5321 = vmatmul.mubr.f32.gmra.mrb[0].mxu0 %v5152
      %v5322 = vpop.f32.mrb[0].mxu0
      %v5323 = vadd.f32 %v5140, %v5322
      %v5324 = vpop.f32.mrb[0].mxu0
      %5325 = vmatprep.mubr.f32.mxu0 0.0
      %5326 = vmatmul.mubr.f32.gmra.mrb[0].mxu0 %v5155
      %v5327 = vpop.f32.mrb[0].mxu0
      %v5328 = vadd.f32 %v5140, %v5327
      %v5329 = vpop.f32.mrb[0].mxu0
      %5330 = vmatprep.mubr.f32.mxu0 0.0
      %5331 = vmatmul.mubr.f32.gmra.mrb[0].mxu0 %v5158
      %v5332 = vpop.f32.mrb[0].mxu0
      %v5333 = vadd.f32 %v5140, %v5332
      %v5334 = vpop.f32.mrb[0].mxu0
      %5335 = vmatprep.mubr.f32.mxu0 0.0
      %5336 = vmatmul.mubr.f32.gmra.mrb[0].mxu0 %v5161
      %v5337 = vpop.f32.mrb[0].mxu0
      %v5338 = vadd.f32 %v5140, %v5337
      %v5339 = vpop.f32.mrb[0].mxu0
      %5340 = vmatprep.mubr.f32.mxu0 0.0
      %5341 = vmatmul.mubr.f32.gmra.mrb[0].mxu0 %v5164
      %v5342 = vpop.f32.mrb[0].mxu0
      %v5343 = vadd.f32 %v5140, %v5342
      %v5344 = vpop.f32.mrb[0].mxu0
      %5345 = vmatprep.mubr.f32.mxu0 0.0
      %5346 = vmatmul.mubr.f32.gmra.mrb[0].mxu0 %v5167
      %v5347 = vpop.f32.mrb[0].mxu0
      %v5348 = vadd.f32 %v5140, %v5347
      %v5349 = vpop.f32.mrb[0].mxu0
      %5350 = vmatprep.mubr.f32.mxu0 0.0
      %5351 = vmatmul.mubr.f32.gmra.mrb[0].mxu0 %v5170
      %v5352 = vpop.f32.mrb[0].mxu0
      %v5353 = vadd.f32 %v5140, %v5352
      %v5354 = vpop.f32.mrb[0].mxu0
      %5355 = vmatprep.mubr.f32.mxu0 0.0
      %5356 = vmatmul.mubr.f32.gmra.mrb[0].mxu0 %v5173
      %v5357 = vpop.f32.mrb[0].mxu0
      %v5358 = vadd.f32 %v5140, %v5357
      %v5359 = vpop.f32.mrb[0].mxu0
      %5360 = vmatprep.mubr.f32.mxu0 0.0
      %5361 = vmatmul.mubr.f32.gmra.mrb[0].mxu0 %v5176
      %v5362 = vpop.f32.mrb[0].mxu0
      %v5363 = vadd.f32 %v5140, %v5362
      %v5364 = vpop.f32.mrb[0].mxu0
      %5365 = vmatprep.mubr.f32.mxu0 0.0
      %5366 = vmatmul.mubr.f32.gmra.mrb[0].mxu0 %v5179
      %v5367 = vpop.f32.mrb[0].mxu0
      %v5368 = vadd.f32 %v5140, %v5367
      %v5369 = vpop.f32.mrb[0].mxu0
      %5370 = vmatprep.mubr.f32.mxu0 0.0
      %5371 = vmatmul.mubr.f32.gmra.mrb[0].mxu0 %v5182
      %v5372 = vpop.f32.mrb[0].mxu0
      %v5373 = vadd.f32 %v5140, %v5372
      %v5374 = vpop.f32.mrb[0].mxu0
      %5375 = vmatprep.mubr.f32.mxu0 0.0
      %5376 = vmatmul.mubr.f32.gmra.mrb[0].mxu0 %v5185
      %v5377 = vpop.f32.mrb[0].mxu0
      %v5378 = vadd.f32 %v5140, %v5377
      %v5379 = vpop.f32.mrb[0].mxu0
      %5380 = vmatprep.mubr.f32.mxu0 0.0
      %5381 = vmatmul.mubr.f32.gmra.mrb[0].mxu0 %v5188
      %v5382 = vpop.f32.mrb[0].mxu0
      %v5383 = vadd.f32 %v5140, %v5382
      %v5384 = vpop.f32.mrb[0].mxu0
      %5385 = vmatprep.mubr.f32.mxu0 0.0
      %5386 = vmatmul.mubr.f32.gmra.mrb[0].mxu0 %v5191
      %v5387 = vpop.f32.mrb[0].mxu0
      %v5388 = vadd.f32 %v5140, %v5387
      %v5389 = vpop.f32.mrb[0].mxu0
      %5390 = vmatprep.mubr.f32.mxu0 0.0
      %5391 = vmatmul.mubr.f32.gmra.mrb[0].mxu0 %v5194
      %v5392 = vpop.f32.mrb[0].mxu0
      %v5393 = vadd.f32 %v5140, %v5392
      %v5394 = vpop.f32.mrb[0].mxu0
      %5395 = vmatprep.mubr.f32.mxu0 0.0
      %5396 = vmatmul.mubr.f32.gmra.mrb[0].mxu0 %v5197
      %v5397 = vpop.f32.mrb[0].mxu0
      %v5398 = vadd.f32 %v5140, %v5397
      %v5399 = vpop.f32.mrb[0].mxu0
      %5400 = vmatprep.mubr.f32.mxu0 0.0
      %5401 = vmatmul.mubr.f32.gmra.mrb[0].mxu0 %v5200
      %v5402 = vpop.f32.mrb[0].mxu0
      %v5403 = vadd.f32 %v5140, %v5402
      %v5404 = vpop.f32.mrb[0].mxu0
      %5405 = vmatprep.mubr.f32.mxu0 0.0
      %5406 = vmatmul.mubr.f32.gmra.mrb[0].mxu0 %v5203
      %v5407 = vpop.f32.mrb[0].mxu0
      %v5408 = vadd.f32 %v5140, %v5407
      %v5409 = vpop.f32.mrb[0].mxu0
      %5410 = vmatprep.mubr.f32.mxu0 0.0
      %5411 = vmatmul.mubr.f32.gmra.mrb[0].mxu0 %v5206
      %v5412 = vpop.f32.mrb[0].mxu0
      %v5413 = vadd.f32 %v5140, %v5412
      %v5414 = vpop.f32.mrb[0].mxu0
      %5415 = vmatprep.mubr.f32.mxu0 0.0
      %5416 = vmatmul.mubr.f32.gmra.mrb[0].mxu0 %v5209
      %v5417 = vpop.f32.mrb[0].mxu0
      %v5418 = vadd.f32 %v5140, %v5417
      %v5419 = vpop.f32.mrb[0].mxu0
      %5420 = vmatprep.mubr.f32.mxu0 0.0
      %5421 = vmatmul.mubr.f32.gmra.mrb[0].mxu0 %v5212
      %v5422 = vpop.f32.mrb[0].mxu0
      %v5423 = vadd.f32 %v5140, %v5422
      %v5424 = vpop.f32.mrb[0].mxu0
      %5425 = vmatprep.mubr.f32.mxu0 0.0
      %5426 = vmatmul.mubr.f32.gmra.mrb[0].mxu0 %v5215
      %v5427 = vpop.f32.mrb[0].mxu0
      %v5428 = vadd.f32 %v5140, %v5427
      %v5429 = vpop.f32.mrb[0].mxu0
      %5430 = vmatprep.mubr.f32.mxu0 0.0
      %5431 = vmatmul.mubr.f32.gmra.mrb[0].mxu0 %v5218
      %v5432 = vpop.f32.mrb[0].mxu0
      %v5433 = vadd.f32 %v5140, %v5432
      %v5434 = vpop.f32.mrb[0].mxu0
      %5435 = vmatprep.mubr.f32.mxu0 0.0
      %5436 = vmatmul.mubr.f32.gmra.mrb[0].mxu0 %v5221
      %v5437 = vpop.f32.mrb[0].mxu0
      %v5438 = vadd.f32 %v5140, %v5437
      %v5439 = vpop.f32.mrb[0].mxu0
      %5440 = vmatprep.mubr.f32.mxu0 0.0
      %5441 = vmatmul.mubr.f32.gmra.mrb[0].mxu0 %v5224
      %v5442 = vpop.f32.mrb[0].mxu0
      %v5443 = vadd.f32 %v5140, %v5442
      %v5444 = vpop.f32.mrb[0].mxu0
      %5445 = vmatprep.mubr.f32.mxu0 0.0
      %5446 = vmatmul.mubr.f32.gmra.mrb[0].mxu0 %v5227
      %v5447 = vpop.f32.mrb[0].mxu0
      %v5448 = vadd.f32 %v5140, %v5447
      %v5449 = vpop.f32.mrb[0].mxu0
      %5450 = vmatprep.mubr.f32.mxu0 0.0
      %5451 = vmatmul.mubr.f32.gmra.mrb[0].mxu0 %v5230
      %v5452 = vpop.f32.mrb[0].mxu0
      %v5453 = vadd.f32 %v5140, %v5452
      %v5454 = vpop.f32.mrb[0].mxu0
      %5455 = vmatprep.mubr.f32.mxu0 0.0
      %5456 = vmatmul.mubr.f32.gmra.mrb[0].mxu0 %v5233
      %v5457 = vpop.f32.mrb[0].mxu0
      %v5458 = vadd.f32 %v5140, %v5457
      %v5459 = vpop.f32.mrb[0].mxu0
      %5460 = vmatprep.mubr.f32.mxu0 0.0
      %5461 = vmatmul.mubr.f32.gmra.mrb[0].mxu0 %v5236
      %v5462 = vpop.f32.mrb[0].mxu0
      %v5463 = vadd.f32 %v5140, %v5462
      %v5464 = vpop.f32.mrb[0].mxu0
      %5465 = vdwg.mxu0
      %v5466 = vmax.f32 %v5308, 0.0
      %v5467 = vmax.f32 %v5313, 0.0
      %v5468 = vmax.f32 %v5318, 0.0
      %v5469 = vmax.f32 %v5323, 0.0
      %v5470 = vmax.f32 %v5328, 0.0
      %v5471 = vmax.f32 %v5333, 0.0
      %v5472 = vmax.f32 %v5338, 0.0
      %v5473 = vmax.f32 %v5343, 0.0
      %v5474 = vmax.f32 %v5348, 0.0
      %v5475 = vmax.f32 %v5353, 0.0
      %v5476 = vmax.f32 %v5358, 0.0
      %v5477 = vmax.f32 %v5363, 0.0
      %v5478 = vmax.f32 %v5368, 0.0
      %v5479 = vmax.f32 %v5373, 0.0
      %v5480 = vmax.f32 %v5378, 0.0
      %v5481 = vmax.f32 %v5383, 0.0
      %v5482 = vmax.f32 %v5388, 0.0
      %v5483 = vmax.f32 %v5393, 0.0
      %v5484 = vmax.f32 %v5398, 0.0
      %v5485 = vmax.f32 %v5403, 0.0
      %v5486 = vmax.f32 %v5408, 0.0
      %v5487 = vmax.f32 %v5413, 0.0
      %v5488 = vmax.f32 %v5418, 0.0
      %v5489 = vmax.f32 %v5423, 0.0
      %v5490 = vmax.f32 %v5428, 0.0
      %v5491 = vmax.f32 %v5433, 0.0
      %v5492 = vmax.f32 %v5438, 0.0
      %v5493 = vmax.f32 %v5443, 0.0
      %v5494 = vmax.f32 %v5448, 0.0
      %v5495 = vmax.f32 %v5453, 0.0
      %v5496 = vmax.f32 %v5458, 0.0
      %v5497 = vmax.f32 %v5463, 0.0
      %5498 = vst.msk [vmem:[%s2037 + $0x1] sm:$0xff] %vm171, %v5466
      %5499 = vst.msk [vmem:[%s2037 + $0x9] sm:$0xff] %vm171, %v5467
      %5500 = vst.msk [vmem:[%s2037 + $0x19] sm:$0xff] %vm171, %v5468
      %5501 = vst.msk [vmem:[%s2037 + $0x21] sm:$0xff] %vm171, %v5469
      %5502 = vst.msk [vmem:[%s2037 + $0x31] sm:$0xff] %vm171, %v5470
      %5503 = vst.msk [vmem:[%s2037 + $0x39] sm:$0xff] %vm171, %v5471
      %5504 = vst.msk [vmem:[%s2037 + $0x49] sm:$0xff] %vm171, %v5472
      %5505 = vst.msk [vmem:[%s2037 + $0x51] sm:$0xff] %vm171, %v5473
      %5506 = vst.msk [vmem:[%s2037 + $0x61] sm:$0xff] %vm171, %v5474
      %5507 = vst.msk [vmem:[%s2037 + $0x69] sm:$0xff] %vm171, %v5475
      %5508 = vst.msk [vmem:[%s2037 + $0x79] sm:$0xff] %vm171, %v5476
      %5509 = vst.msk [vmem:[%s2037 + $0x81] sm:$0xff] %vm171, %v5477
      %5510 = vst.msk [vmem:[%s2037 + $0x91] sm:$0xff] %vm171, %v5478
      %5511 = vst.msk [vmem:[%s2037 + $0x99] sm:$0xff] %vm171, %v5479
      %5512 = vst.msk [vmem:[%s2037 + $0xa9] sm:$0xff] %vm171, %v5480
      %5513 = vst.msk [vmem:[%s2037 + $0xb1] sm:$0xff] %vm171, %v5481
      %5514 = vst.msk [vmem:[%s2037 + $0xc1] sm:$0xff] %vm171, %v5482
      %5515 = vst.msk [vmem:[%s2037 + $0xc9] sm:$0xff] %vm171, %v5483
      %5516 = vst.msk [vmem:[%s2037 + $0xd9] sm:$0xff] %vm171, %v5484
      %5517 = vst.msk [vmem:[%s2037 + $0xe1] sm:$0xff] %vm171, %v5485
      %5518 = vst.msk [vmem:[%s2037 + $0xf1] sm:$0xff] %vm171, %v5486
      %5519 = vst.msk [vmem:[%s2037 + $0xf9] sm:$0xff] %vm171, %v5487
      %5520 = vst.msk [vmem:[%s2037 + $0x109] sm:$0xff] %vm171, %v5488
      %5521 = vst.msk [vmem:[%s2037 + $0x111] sm:$0xff] %vm171, %v5489
      %5522 = vst.msk [vmem:[%s2037 + $0x121] sm:$0xff] %vm171, %v5490
      %5523 = vst.msk [vmem:[%s2037 + $0x129] sm:$0xff] %vm171, %v5491
      %5524 = vst.msk [vmem:[%s2037 + $0x139] sm:$0xff] %vm171, %v5492
      %5525 = vst.msk [vmem:[%s2037 + $0x141] sm:$0xff] %vm171, %v5493
      %5526 = vst.msk [vmem:[%s2037 + $0x151] sm:$0xff] %vm171, %v5494
      %5527 = vst.msk [vmem:[%s2037 + $0x159] sm:$0xff] %vm171, %v5495
      %5528 = vst.msk [vmem:[%s2037 + $0x169] sm:$0xff] %vm171, %v5496
      %5529 = vst.msk [vmem:[%s2037 + $0x171] sm:$0xff] %vm171, %v5497
      %v5530 = vld [vmem:[#allocation3] sm:$0xff]
      %v5531 = vld [vmem:[#allocation3 + $0x8] sm:$0xff]
      %v5532 = vld [vmem:[#allocation3 + $0x10] sm:$0x3]
      %v5533 = vld [vmem:[#allocation3 + $0x18] sm:$0xff]
      %v5534 = vld [vmem:[#allocation3 + $0x20] sm:$0xff]
      %v5535 = vld [vmem:[#allocation3 + $0x28] sm:$0x3]
      %v5536 = vld [vmem:[#allocation3 + $0x30] sm:$0xff]
      %v5537 = vld [vmem:[#allocation3 + $0x38] sm:$0xff]
      %v5538 = vld [vmem:[#allocation3 + $0x40] sm:$0x3]
      %v5539 = vld [vmem:[#allocation3 + $0x48] sm:$0xff]
      %v5540 = vld [vmem:[#allocation3 + $0x50] sm:$0xff]
      %v5541 = vld [vmem:[#allocation3 + $0x58] sm:$0x3]
      %v5542 = vld [vmem:[#allocation3 + $0x60] sm:$0xff]
      %v5543 = vld [vmem:[#allocation3 + $0x68] sm:$0xff]
      %v5544 = vld [vmem:[#allocation3 + $0x70] sm:$0x3]
      %v5545 = vld [vmem:[#allocation3 + $0x78] sm:$0xff]
      %v5546 = vld [vmem:[#allocation3 + $0x80] sm:$0xff]
      %v5547 = vld [vmem:[#allocation3 + $0x88] sm:$0x3]
      %v5548 = vld [vmem:[#allocation3 + $0x90] sm:$0xff]
      %v5549 = vld [vmem:[#allocation3 + $0x98] sm:$0xff]
      %v5550 = vld [vmem:[#allocation3 + $0xa0] sm:$0x3]
      %v5551 = vld [vmem:[#allocation3 + $0xa8] sm:$0xff]
      %v5552 = vld [vmem:[#allocation3 + $0xb0] sm:$0xff]
      %v5553 = vld [vmem:[#allocation3 + $0xb8] sm:$0x3]
      %v5554 = vld [vmem:[#allocation3 + $0xc0] sm:$0xff]
      %v5555 = vld [vmem:[#allocation3 + $0xc8] sm:$0xff]
      %v5556 = vld [vmem:[#allocation3 + $0xd0] sm:$0x3]
      %v5557 = vld [vmem:[#allocation3 + $0xd8] sm:$0xff]
      %v5558 = vld [vmem:[#allocation3 + $0xe0] sm:$0xff]
      %v5559 = vld [vmem:[#allocation3 + $0xe8] sm:$0x3]
      %v5560 = vld [vmem:[#allocation3 + $0xf0] sm:$0xff]
      %v5561 = vld [vmem:[#allocation3 + $0xf8] sm:$0xff]
      %v5562 = vld [vmem:[#allocation3 + $0x100] sm:$0x3]
      %v5563 = vld [vmem:[#allocation3 + $0x108] sm:$0xff]
      %v5564 = vld [vmem:[#allocation3 + $0x110] sm:$0xff]
      %v5565 = vld [vmem:[#allocation3 + $0x118] sm:$0x3]
      %v5566 = vld [vmem:[#allocation3 + $0x120] sm:$0xff]
      %v5567 = vld [vmem:[#allocation3 + $0x128] sm:$0xff]
      %v5568 = vld [vmem:[#allocation3 + $0x130] sm:$0x3]
      %v5569 = vld [vmem:[#allocation3 + $0x138] sm:$0xff]
      %v5570 = vld [vmem:[#allocation3 + $0x140] sm:$0xff]
      %v5571 = vld [vmem:[#allocation3 + $0x148] sm:$0x3]
      %v5572 = vld [vmem:[#allocation3 + $0x150] sm:$0xff]
      %v5573 = vld [vmem:[#allocation3 + $0x158] sm:$0xff]
      %v5574 = vld [vmem:[#allocation3 + $0x160] sm:$0x3]
      %v5575 = vld [vmem:[#allocation3 + $0x168] sm:$0xff]
      %v5576 = vld [vmem:[#allocation3 + $0x170] sm:$0xff]
      %v5577 = vld [vmem:[#allocation3 + $0x178] sm:$0x3]
      %v5578 = vld [vmem:[#allocation3 + $0x180] sm:$0xff]
      %v5579 = vld [vmem:[#allocation3 + $0x188] sm:$0xff]
      %v5580 = vld [vmem:[#allocation3 + $0x190] sm:$0x3]
      %v5581 = vld [vmem:[#allocation3 + $0x198] sm:$0xff]
      %v5582 = vld [vmem:[#allocation3 + $0x1a0] sm:$0xff]
      %v5583 = vld [vmem:[#allocation3 + $0x1a8] sm:$0x3]
      %s5584 = scalar_lea.vmem %s1, 120
      %v5585 = vld [vmem:[%s5584] sm:$0xff]
      %v5586 = vld [vmem:[%s5584 + $0x8] sm:$0xff]
      %v5587 = vld [vmem:[%s5584 + $0x10] sm:$0xff]
      %v5588 = vld [vmem:[%s5584 + $0x18] sm:$0xff]
      %v5589 = vld [vmem:[%s5584 + $0x20] sm:$0xf]
      %s5590 = scalar_lea.vmem %s2, 3
      %v5591 = vld [vmem:[%s5590] sm:$0x1]
      %v5640 = vrot.slane %v5530, 1
      %v5641 = vrot.slane %v5531, 1
      %v5642 = vsel %vm454, %v5640, %v5641
      %v5643 = vrot.slane %v5532, 1
      %v5644 = vsel %vm454, %v5641, %v5643
      %v5645 = vrot.slane %v5533, 1
      %v5646 = vrot.slane %v5534, 1
      %v5647 = vsel %vm454, %v5645, %v5646
      %v5648 = vrot.slane %v5535, 1
      %v5649 = vsel %vm454, %v5646, %v5648
      %v5650 = vrot.slane %v5536, 1
      %v5651 = vrot.slane %v5537, 1
      %v5652 = vsel %vm454, %v5650, %v5651
      %v5653 = vrot.slane %v5538, 1
      %v5654 = vsel %vm454, %v5651, %v5653
      %v5655 = vrot.slane %v5539, 1
      %v5656 = vrot.slane %v5540, 1
      %v5657 = vsel %vm454, %v5655, %v5656
      %v5658 = vrot.slane %v5541, 1
      %v5659 = vsel %vm454, %v5656, %v5658
      %v5660 = vrot.slane %v5542, 1
      %v5661 = vrot.slane %v5543, 1
      %v5662 = vsel %vm454, %v5660, %v5661
      %v5663 = vrot.slane %v5544, 1
      %v5664 = vsel %vm454, %v5661, %v5663
      %v5665 = vrot.slane %v5545, 1
      %v5666 = vrot.slane %v5546, 1
      %v5667 = vsel %vm454, %v5665, %v5666
      %v5668 = vrot.slane %v5547, 1
      %v5669 = vsel %vm454, %v5666, %v5668
      %v5670 = vrot.slane %v5548, 1
      %v5671 = vrot.slane %v5549, 1
      %v5672 = vsel %vm454, %v5670, %v5671
      %v5673 = vrot.slane %v5550, 1
      %v5674 = vsel %vm454, %v5671, %v5673
      %v5675 = vrot.slane %v5551, 1
      %v5676 = vrot.slane %v5552, 1
      %v5677 = vsel %vm454, %v5675, %v5676
      %v5678 = vrot.slane %v5553, 1
      %v5679 = vsel %vm454, %v5676, %v5678
      %v5680 = vrot.slane %v5554, 1
      %v5681 = vrot.slane %v5555, 1
      %v5682 = vsel %vm454, %v5680, %v5681
      %v5683 = vrot.slane %v5556, 1
      %v5684 = vsel %vm454, %v5681, %v5683
      %v5685 = vrot.slane %v5557, 1
      %v5686 = vrot.slane %v5558, 1
      %v5687 = vsel %vm454, %v5685, %v5686
      %v5688 = vrot.slane %v5559, 1
      %v5689 = vsel %vm454, %v5686, %v5688
      %v5690 = vrot.slane %v5560, 1
      %v5691 = vrot.slane %v5561, 1
      %v5692 = vsel %vm454, %v5690, %v5691
      %v5693 = vrot.slane %v5562, 1
      %v5694 = vsel %vm454, %v5691, %v5693
      %v5695 = vrot.slane %v5563, 1
      %v5696 = vrot.slane %v5564, 1
      %v5697 = vsel %vm454, %v5695, %v5696
      %v5698 = vrot.slane %v5565, 1
      %v5699 = vsel %vm454, %v5696, %v5698
      %v5700 = vrot.slane %v5566, 1
      %v5701 = vrot.slane %v5567, 1
      %v5702 = vsel %vm454, %v5700, %v5701
      %v5703 = vrot.slane %v5568, 1
      %v5704 = vsel %vm454, %v5701, %v5703
      %v5705 = vrot.slane %v5569, 1
      %v5706 = vrot.slane %v5570, 1
      %v5707 = vsel %vm454, %v5705, %v5706
      %v5708 = vrot.slane %v5571, 1
      %v5709 = vsel %vm454, %v5706, %v5708
      %v5710 = vrot.slane %v5572, 1
      %v5711 = vrot.slane %v5573, 1
      %v5712 = vsel %vm454, %v5710, %v5711
      %v5713 = vrot.slane %v5574, 1
      %v5714 = vsel %vm454, %v5711, %v5713
      %v5715 = vrot.slane %v5575, 1
      %v5716 = vrot.slane %v5576, 1
      %v5717 = vsel %vm454, %v5715, %v5716
      %v5718 = vrot.slane %v5577, 1
      %v5719 = vsel %vm454, %v5716, %v5718
      %5720 = vrot.lane.b32.xlu0 %v5642, 4
      %v5721 = vpop.permute.xlu0 %5720
      %5722 = vrot.lane.b32.xlu0 %v5644, 4
      %v5723 = vpop.permute.xlu0 %5722
      %5724 = vrot.lane.b32.xlu0 %v5647, 4
      %v5725 = vpop.permute.xlu0 %5724
      %5726 = vrot.lane.b32.xlu0 %v5649, 4
      %v5727 = vpop.permute.xlu0 %5726
      %5728 = vrot.lane.b32.xlu0 %v5652, 4
      %v5729 = vpop.permute.xlu0 %5728
      %5730 = vrot.lane.b32.xlu0 %v5654, 4
      %v5731 = vpop.permute.xlu0 %5730
      %5732 = vrot.lane.b32.xlu0 %v5657, 4
      %v5733 = vpop.permute.xlu0 %5732
      %5734 = vrot.lane.b32.xlu0 %v5659, 4
      %v5735 = vpop.permute.xlu0 %5734
      %5736 = vrot.lane.b32.xlu0 %v5662, 4
      %v5737 = vpop.permute.xlu0 %5736
      %5738 = vrot.lane.b32.xlu0 %v5664, 4
      %v5739 = vpop.permute.xlu0 %5738
      %5740 = vrot.lane.b32.xlu0 %v5667, 4
      %v5741 = vpop.permute.xlu0 %5740
      %5742 = vrot.lane.b32.xlu0 %v5669, 4
      %v5743 = vpop.permute.xlu0 %5742
      %5744 = vrot.lane.b32.xlu0 %v5672, 4
      %v5745 = vpop.permute.xlu0 %5744
      %5746 = vrot.lane.b32.xlu0 %v5674, 4
      %v5747 = vpop.permute.xlu0 %5746
      %5748 = vrot.lane.b32.xlu0 %v5677, 4
      %v5749 = vpop.permute.xlu0 %5748
      %5750 = vrot.lane.b32.xlu0 %v5679, 4
      %v5751 = vpop.permute.xlu0 %5750
      %5752 = vrot.lane.b32.xlu0 %v5682, 4
      %v5753 = vpop.permute.xlu0 %5752
      %5754 = vrot.lane.b32.xlu0 %v5684, 4
      %v5755 = vpop.permute.xlu0 %5754
      %5756 = vrot.lane.b32.xlu0 %v5687, 4
      %v5757 = vpop.permute.xlu0 %5756
      %5758 = vrot.lane.b32.xlu0 %v5689, 4
      %v5759 = vpop.permute.xlu0 %5758
      %5760 = vrot.lane.b32.xlu0 %v5692, 4
      %v5761 = vpop.permute.xlu0 %5760
      %5762 = vrot.lane.b32.xlu0 %v5694, 4
      %v5763 = vpop.permute.xlu0 %5762
      %5764 = vrot.lane.b32.xlu0 %v5697, 4
      %v5765 = vpop.permute.xlu0 %5764
      %5766 = vrot.lane.b32.xlu0 %v5699, 4
      %v5767 = vpop.permute.xlu0 %5766
      %5768 = vrot.lane.b32.xlu0 %v5702, 4
      %v5769 = vpop.permute.xlu0 %5768
      %5770 = vrot.lane.b32.xlu0 %v5704, 4
      %v5771 = vpop.permute.xlu0 %5770
      %5772 = vrot.lane.b32.xlu0 %v5707, 4
      %v5773 = vpop.permute.xlu0 %5772
      %5774 = vrot.lane.b32.xlu0 %v5709, 4
      %v5775 = vpop.permute.xlu0 %5774
      %5776 = vrot.lane.b32.xlu0 %v5712, 4
      %v5777 = vpop.permute.xlu0 %5776
      %5778 = vrot.lane.b32.xlu0 %v5714, 4
      %v5779 = vpop.permute.xlu0 %5778
      %5780 = vrot.lane.b32.xlu0 %v5717, 4
      %v5781 = vpop.permute.xlu0 %5780
      %5782 = vrot.lane.b32.xlu0 %v5719, 4
      %v5783 = vpop.permute.xlu0 %5782
      %v5816 = vrot.slane %v5530, 2
      %v5817 = vrot.slane %v5531, 2
      %v5818 = vsel %vm631, %v5816, %v5817
      %v5819 = vrot.slane %v5532, 2
      %v5820 = vsel %vm631, %v5817, %v5819
      %v5821 = vrot.slane %v5533, 2
      %v5822 = vrot.slane %v5534, 2
      %v5823 = vsel %vm631, %v5821, %v5822
      %v5824 = vrot.slane %v5535, 2
      %v5825 = vsel %vm631, %v5822, %v5824
      %v5826 = vrot.slane %v5536, 2
      %v5827 = vrot.slane %v5537, 2
      %v5828 = vsel %vm631, %v5826, %v5827
      %v5829 = vrot.slane %v5538, 2
      %v5830 = vsel %vm631, %v5827, %v5829
      %v5831 = vrot.slane %v5539, 2
      %v5832 = vrot.slane %v5540, 2
      %v5833 = vsel %vm631, %v5831, %v5832
      %v5834 = vrot.slane %v5541, 2
      %v5835 = vsel %vm631, %v5832, %v5834
      %v5836 = vrot.slane %v5542, 2
      %v5837 = vrot.slane %v5543, 2
      %v5838 = vsel %vm631, %v5836, %v5837
      %v5839 = vrot.slane %v5544, 2
      %v5840 = vsel %vm631, %v5837, %v5839
      %v5841 = vrot.slane %v5545, 2
      %v5842 = vrot.slane %v5546, 2
      %v5843 = vsel %vm631, %v5841, %v5842
      %v5844 = vrot.slane %v5547, 2
      %v5845 = vsel %vm631, %v5842, %v5844
      %v5846 = vrot.slane %v5548, 2
      %v5847 = vrot.slane %v5549, 2
      %v5848 = vsel %vm631, %v5846, %v5847
      %v5849 = vrot.slane %v5550, 2
      %v5850 = vsel %vm631, %v5847, %v5849
      %v5851 = vrot.slane %v5551, 2
      %v5852 = vrot.slane %v5552, 2
      %v5853 = vsel %vm631, %v5851, %v5852
      %v5854 = vrot.slane %v5553, 2
      %v5855 = vsel %vm631, %v5852, %v5854
      %v5856 = vrot.slane %v5554, 2
      %v5857 = vrot.slane %v5555, 2
      %v5858 = vsel %vm631, %v5856, %v5857
      %v5859 = vrot.slane %v5556, 2
      %v5860 = vsel %vm631, %v5857, %v5859
      %v5861 = vrot.slane %v5557, 2
      %v5862 = vrot.slane %v5558, 2
      %v5863 = vsel %vm631, %v5861, %v5862
      %v5864 = vrot.slane %v5559, 2
      %v5865 = vsel %vm631, %v5862, %v5864
      %v5866 = vrot.slane %v5560, 2
      %v5867 = vrot.slane %v5561, 2
      %v5868 = vsel %vm631, %v5866, %v5867
      %v5869 = vrot.slane %v5562, 2
      %v5870 = vsel %vm631, %v5867, %v5869
      %v5871 = vrot.slane %v5563, 2
      %v5872 = vrot.slane %v5564, 2
      %v5873 = vsel %vm631, %v5871, %v5872
      %v5874 = vrot.slane %v5565, 2
      %v5875 = vsel %vm631, %v5872, %v5874
      %v5876 = vrot.slane %v5566, 2
      %v5877 = vrot.slane %v5567, 2
      %v5878 = vsel %vm631, %v5876, %v5877
      %v5879 = vrot.slane %v5568, 2
      %v5880 = vsel %vm631, %v5877, %v5879
      %v5881 = vrot.slane %v5569, 2
      %v5882 = vrot.slane %v5570, 2
      %v5883 = vsel %vm631, %v5881, %v5882
      %v5884 = vrot.slane %v5571, 2
      %v5885 = vsel %vm631, %v5882, %v5884
      %v5886 = vrot.slane %v5572, 2
      %v5887 = vrot.slane %v5573, 2
      %v5888 = vsel %vm631, %v5886, %v5887
      %v5889 = vrot.slane %v5574, 2
      %v5890 = vsel %vm631, %v5887, %v5889
      %v5891 = vrot.slane %v5575, 2
      %v5892 = vrot.slane %v5576, 2
      %v5893 = vsel %vm631, %v5891, %v5892
      %v5894 = vrot.slane %v5577, 2
      %v5895 = vsel %vm631, %v5892, %v5894
      %5896 = vrot.lane.b32.xlu0 %v5818, 8
      %v5897 = vpop.permute.xlu0 %5896
      %5898 = vrot.lane.b32.xlu0 %v5820, 8
      %v5899 = vpop.permute.xlu0 %5898
      %5900 = vrot.lane.b32.xlu0 %v5823, 8
      %v5901 = vpop.permute.xlu0 %5900
      %5902 = vrot.lane.b32.xlu0 %v5825, 8
      %v5903 = vpop.permute.xlu0 %5902
      %5904 = vrot.lane.b32.xlu0 %v5828, 8
      %v5905 = vpop.permute.xlu0 %5904
      %5906 = vrot.lane.b32.xlu0 %v5830, 8
      %v5907 = vpop.permute.xlu0 %5906
      %5908 = vrot.lane.b32.xlu0 %v5833, 8
      %v5909 = vpop.permute.xlu0 %5908
      %5910 = vrot.lane.b32.xlu0 %v5835, 8
      %v5911 = vpop.permute.xlu0 %5910
      %5912 = vrot.lane.b32.xlu0 %v5838, 8
      %v5913 = vpop.permute.xlu0 %5912
      %5914 = vrot.lane.b32.xlu0 %v5840, 8
      %v5915 = vpop.permute.xlu0 %5914
      %5916 = vrot.lane.b32.xlu0 %v5843, 8
      %v5917 = vpop.permute.xlu0 %5916
      %5918 = vrot.lane.b32.xlu0 %v5845, 8
      %v5919 = vpop.permute.xlu0 %5918
      %5920 = vrot.lane.b32.xlu0 %v5848, 8
      %v5921 = vpop.permute.xlu0 %5920
      %5922 = vrot.lane.b32.xlu0 %v5850, 8
      %v5923 = vpop.permute.xlu0 %5922
      %5924 = vrot.lane.b32.xlu0 %v5853, 8
      %v5925 = vpop.permute.xlu0 %5924
      %5926 = vrot.lane.b32.xlu0 %v5855, 8
      %v5927 = vpop.permute.xlu0 %5926
      %5928 = vrot.lane.b32.xlu0 %v5858, 8
      %v5929 = vpop.permute.xlu0 %5928
      %5930 = vrot.lane.b32.xlu0 %v5860, 8
      %v5931 = vpop.permute.xlu0 %5930
      %5932 = vrot.lane.b32.xlu0 %v5863, 8
      %v5933 = vpop.permute.xlu0 %5932
      %5934 = vrot.lane.b32.xlu0 %v5865, 8
      %v5935 = vpop.permute.xlu0 %5934
      %5936 = vrot.lane.b32.xlu0 %v5868, 8
      %v5937 = vpop.permute.xlu0 %5936
      %5938 = vrot.lane.b32.xlu0 %v5870, 8
      %v5939 = vpop.permute.xlu0 %5938
      %5940 = vrot.lane.b32.xlu0 %v5873, 8
      %v5941 = vpop.permute.xlu0 %5940
      %5942 = vrot.lane.b32.xlu0 %v5875, 8
      %v5943 = vpop.permute.xlu0 %5942
      %5944 = vrot.lane.b32.xlu0 %v5878, 8
      %v5945 = vpop.permute.xlu0 %5944
      %5946 = vrot.lane.b32.xlu0 %v5880, 8
      %v5947 = vpop.permute.xlu0 %5946
      %5948 = vrot.lane.b32.xlu0 %v5883, 8
      %v5949 = vpop.permute.xlu0 %5948
      %5950 = vrot.lane.b32.xlu0 %v5885, 8
      %v5951 = vpop.permute.xlu0 %5950
      %5952 = vrot.lane.b32.xlu0 %v5888, 8
      %v5953 = vpop.permute.xlu0 %5952
      %5954 = vrot.lane.b32.xlu0 %v5890, 8
      %v5955 = vpop.permute.xlu0 %5954
      %5956 = vrot.lane.b32.xlu0 %v5893, 8
      %v5957 = vpop.permute.xlu0 %5956
      %5958 = vrot.lane.b32.xlu0 %v5895, 8
      %v5959 = vpop.permute.xlu0 %5958
      %5994 = vrot.lane.b32.xlu0 %v5533, 12
      %v5995 = vpop.permute.xlu0 %5994
      %5996 = vrot.lane.b32.xlu0 %v5534, 12
      %v5997 = vpop.permute.xlu0 %5996
      %5998 = vrot.lane.b32.xlu0 %v5536, 12
      %v5999 = vpop.permute.xlu0 %5998
      %6000 = vrot.lane.b32.xlu0 %v5537, 12
      %v6001 = vpop.permute.xlu0 %6000
      %6002 = vrot.lane.b32.xlu0 %v5539, 12
      %v6003 = vpop.permute.xlu0 %6002
      %6004 = vrot.lane.b32.xlu0 %v5540, 12
      %v6005 = vpop.permute.xlu0 %6004
      %6006 = vrot.lane.b32.xlu0 %v5542, 12
      %v6007 = vpop.permute.xlu0 %6006
      %6008 = vrot.lane.b32.xlu0 %v5543, 12
      %v6009 = vpop.permute.xlu0 %6008
      %6010 = vrot.lane.b32.xlu0 %v5545, 12
      %v6011 = vpop.permute.xlu0 %6010
      %6012 = vrot.lane.b32.xlu0 %v5546, 12
      %v6013 = vpop.permute.xlu0 %6012
      %6014 = vrot.lane.b32.xlu0 %v5548, 12
      %v6015 = vpop.permute.xlu0 %6014
      %6016 = vrot.lane.b32.xlu0 %v5549, 12
      %v6017 = vpop.permute.xlu0 %6016
      %6018 = vrot.lane.b32.xlu0 %v5551, 12
      %v6019 = vpop.permute.xlu0 %6018
      %6020 = vrot.lane.b32.xlu0 %v5552, 12
      %v6021 = vpop.permute.xlu0 %6020
      %6022 = vrot.lane.b32.xlu0 %v5554, 12
      %v6023 = vpop.permute.xlu0 %6022
      %6024 = vrot.lane.b32.xlu0 %v5555, 12
      %v6025 = vpop.permute.xlu0 %6024
      %6026 = vrot.lane.b32.xlu0 %v5557, 12
      %v6027 = vpop.permute.xlu0 %6026
      %6028 = vrot.lane.b32.xlu0 %v5558, 12
      %v6029 = vpop.permute.xlu0 %6028
      %6030 = vrot.lane.b32.xlu0 %v5560, 12
      %v6031 = vpop.permute.xlu0 %6030
      %6032 = vrot.lane.b32.xlu0 %v5561, 12
      %v6033 = vpop.permute.xlu0 %6032
      %6034 = vrot.lane.b32.xlu0 %v5563, 12
      %v6035 = vpop.permute.xlu0 %6034
      %6036 = vrot.lane.b32.xlu0 %v5564, 12
      %v6037 = vpop.permute.xlu0 %6036
      %6038 = vrot.lane.b32.xlu0 %v5566, 12
      %v6039 = vpop.permute.xlu0 %6038
      %6040 = vrot.lane.b32.xlu0 %v5567, 12
      %v6041 = vpop.permute.xlu0 %6040
      %6042 = vrot.lane.b32.xlu0 %v5569, 12
      %v6043 = vpop.permute.xlu0 %6042
      %6044 = vrot.lane.b32.xlu0 %v5570, 12
      %v6045 = vpop.permute.xlu0 %6044
      %6046 = vrot.lane.b32.xlu0 %v5572, 12
      %v6047 = vpop.permute.xlu0 %6046
      %6048 = vrot.lane.b32.xlu0 %v5573, 12
      %v6049 = vpop.permute.xlu0 %6048
      %6050 = vrot.lane.b32.xlu0 %v5575, 12
      %v6051 = vpop.permute.xlu0 %6050
      %6052 = vrot.lane.b32.xlu0 %v5576, 12
      %v6053 = vpop.permute.xlu0 %6052
      %6054 = vrot.lane.b32.xlu0 %v5578, 12
      %v6055 = vpop.permute.xlu0 %6054
      %6056 = vrot.lane.b32.xlu0 %v5579, 12
      %v6057 = vpop.permute.xlu0 %6056
      %v6091 = vrot.slane %v5578, 1
      %v6092 = vrot.slane %v5579, 1
      %v6093 = vsel %vm454, %v6091, %v6092
      %v6094 = vrot.slane %v5580, 1
      %v6095 = vsel %vm454, %v6092, %v6094
      %6096 = vrot.lane.b32.xlu0 %v5647, 16
      %v6097 = vpop.permute.xlu0 %6096
      %6098 = vrot.lane.b32.xlu0 %v5649, 16
      %v6099 = vpop.permute.xlu0 %6098
      %6100 = vrot.lane.b32.xlu0 %v5652, 16
      %v6101 = vpop.permute.xlu0 %6100
      %6102 = vrot.lane.b32.xlu0 %v5654, 16
      %v6103 = vpop.permute.xlu0 %6102
      %6104 = vrot.lane.b32.xlu0 %v5657, 16
      %v6105 = vpop.permute.xlu0 %6104
      %6106 = vrot.lane.b32.xlu0 %v5659, 16
      %v6107 = vpop.permute.xlu0 %6106
      %6108 = vrot.lane.b32.xlu0 %v5662, 16
      %v6109 = vpop.permute.xlu0 %6108
      %6110 = vrot.lane.b32.xlu0 %v5664, 16
      %v6111 = vpop.permute.xlu0 %6110
      %6112 = vrot.lane.b32.xlu0 %v5667, 16
      %v6113 = vpop.permute.xlu0 %6112
      %6114 = vrot.lane.b32.xlu0 %v5669, 16
      %v6115 = vpop.permute.xlu0 %6114
      %6116 = vrot.lane.b32.xlu0 %v5672, 16
      %v6117 = vpop.permute.xlu0 %6116
      %6118 = vrot.lane.b32.xlu0 %v5674, 16
      %v6119 = vpop.permute.xlu0 %6118
      %6120 = vrot.lane.b32.xlu0 %v5677, 16
      %v6121 = vpop.permute.xlu0 %6120
      %6122 = vrot.lane.b32.xlu0 %v5679, 16
      %v6123 = vpop.permute.xlu0 %6122
      %6124 = vrot.lane.b32.xlu0 %v5682, 16
      %v6125 = vpop.permute.xlu0 %6124
      %6126 = vrot.lane.b32.xlu0 %v5684, 16
      %v6127 = vpop.permute.xlu0 %6126
      %6128 = vrot.lane.b32.xlu0 %v5687, 16
      %v6129 = vpop.permute.xlu0 %6128
      %6130 = vrot.lane.b32.xlu0 %v5689, 16
      %v6131 = vpop.permute.xlu0 %6130
      %6132 = vrot.lane.b32.xlu0 %v5692, 16
      %v6133 = vpop.permute.xlu0 %6132
      %6134 = vrot.lane.b32.xlu0 %v5694, 16
      %v6135 = vpop.permute.xlu0 %6134
      %6136 = vrot.lane.b32.xlu0 %v5697, 16
      %v6137 = vpop.permute.xlu0 %6136
      %6138 = vrot.lane.b32.xlu0 %v5699, 16
      %v6139 = vpop.permute.xlu0 %6138
      %6140 = vrot.lane.b32.xlu0 %v5702, 16
      %v6141 = vpop.permute.xlu0 %6140
      %6142 = vrot.lane.b32.xlu0 %v5704, 16
      %v6143 = vpop.permute.xlu0 %6142
      %6144 = vrot.lane.b32.xlu0 %v5707, 16
      %v6145 = vpop.permute.xlu0 %6144
      %6146 = vrot.lane.b32.xlu0 %v5709, 16
      %v6147 = vpop.permute.xlu0 %6146
      %6148 = vrot.lane.b32.xlu0 %v5712, 16
      %v6149 = vpop.permute.xlu0 %6148
      %6150 = vrot.lane.b32.xlu0 %v5714, 16
      %v6151 = vpop.permute.xlu0 %6150
      %6152 = vrot.lane.b32.xlu0 %v5717, 16
      %v6153 = vpop.permute.xlu0 %6152
      %6154 = vrot.lane.b32.xlu0 %v5719, 16
      %v6155 = vpop.permute.xlu0 %6154
      %6156 = vrot.lane.b32.xlu0 %v6093, 16
      %v6157 = vpop.permute.xlu0 %6156
      %6158 = vrot.lane.b32.xlu0 %v6095, 16
      %v6159 = vpop.permute.xlu0 %6158
      %v6192 = vrot.slane %v5578, 2
      %v6193 = vrot.slane %v5579, 2
      %v6194 = vsel %vm631, %v6192, %v6193
      %v6195 = vrot.slane %v5580, 2
      %v6196 = vsel %vm631, %v6193, %v6195
      %6197 = vrot.lane.b32.xlu0 %v5823, 20
      %v6198 = vpop.permute.xlu0 %6197
      %6199 = vrot.lane.b32.xlu0 %v5825, 20
      %v6200 = vpop.permute.xlu0 %6199
      %6201 = vrot.lane.b32.xlu0 %v5828, 20
      %v6202 = vpop.permute.xlu0 %6201
      %6203 = vrot.lane.b32.xlu0 %v5830, 20
      %v6204 = vpop.permute.xlu0 %6203
      %6205 = vrot.lane.b32.xlu0 %v5833, 20
      %v6206 = vpop.permute.xlu0 %6205
      %6207 = vrot.lane.b32.xlu0 %v5835, 20
      %v6208 = vpop.permute.xlu0 %6207
      %6209 = vrot.lane.b32.xlu0 %v5838, 20
      %v6210 = vpop.permute.xlu0 %6209
      %6211 = vrot.lane.b32.xlu0 %v5840, 20
      %v6212 = vpop.permute.xlu0 %6211
      %6213 = vrot.lane.b32.xlu0 %v5843, 20
      %v6214 = vpop.permute.xlu0 %6213
      %6215 = vrot.lane.b32.xlu0 %v5845, 20
      %v6216 = vpop.permute.xlu0 %6215
      %6217 = vrot.lane.b32.xlu0 %v5848, 20
      %v6218 = vpop.permute.xlu0 %6217
      %6219 = vrot.lane.b32.xlu0 %v5850, 20
      %v6220 = vpop.permute.xlu0 %6219
      %6221 = vrot.lane.b32.xlu0 %v5853, 20
      %v6222 = vpop.permute.xlu0 %6221
      %6223 = vrot.lane.b32.xlu0 %v5855, 20
      %v6224 = vpop.permute.xlu0 %6223
      %6225 = vrot.lane.b32.xlu0 %v5858, 20
      %v6226 = vpop.permute.xlu0 %6225
      %6227 = vrot.lane.b32.xlu0 %v5860, 20
      %v6228 = vpop.permute.xlu0 %6227
      %6229 = vrot.lane.b32.xlu0 %v5863, 20
      %v6230 = vpop.permute.xlu0 %6229
      %6231 = vrot.lane.b32.xlu0 %v5865, 20
      %v6232 = vpop.permute.xlu0 %6231
      %6233 = vrot.lane.b32.xlu0 %v5868, 20
      %v6234 = vpop.permute.xlu0 %6233
      %6235 = vrot.lane.b32.xlu0 %v5870, 20
      %v6236 = vpop.permute.xlu0 %6235
      %6237 = vrot.lane.b32.xlu0 %v5873, 20
      %v6238 = vpop.permute.xlu0 %6237
      %6239 = vrot.lane.b32.xlu0 %v5875, 20
      %v6240 = vpop.permute.xlu0 %6239
      %6241 = vrot.lane.b32.xlu0 %v5878, 20
      %v6242 = vpop.permute.xlu0 %6241
      %6243 = vrot.lane.b32.xlu0 %v5880, 20
      %v6244 = vpop.permute.xlu0 %6243
      %6245 = vrot.lane.b32.xlu0 %v5883, 20
      %v6246 = vpop.permute.xlu0 %6245
      %6247 = vrot.lane.b32.xlu0 %v5885, 20
      %v6248 = vpop.permute.xlu0 %6247
      %6249 = vrot.lane.b32.xlu0 %v5888, 20
      %v6250 = vpop.permute.xlu0 %6249
      %6251 = vrot.lane.b32.xlu0 %v5890, 20
      %v6252 = vpop.permute.xlu0 %6251
      %6253 = vrot.lane.b32.xlu0 %v5893, 20
      %v6254 = vpop.permute.xlu0 %6253
      %6255 = vrot.lane.b32.xlu0 %v5895, 20
      %v6256 = vpop.permute.xlu0 %6255
      %6257 = vrot.lane.b32.xlu0 %v6194, 20
      %v6258 = vpop.permute.xlu0 %6257
      %6259 = vrot.lane.b32.xlu0 %v6196, 20
      %v6260 = vpop.permute.xlu0 %6259
      %6295 = vrot.lane.b32.xlu0 %v5536, 24
      %v6296 = vpop.permute.xlu0 %6295
      %6297 = vrot.lane.b32.xlu0 %v5537, 24
      %v6298 = vpop.permute.xlu0 %6297
      %6299 = vrot.lane.b32.xlu0 %v5539, 24
      %v6300 = vpop.permute.xlu0 %6299
      %6301 = vrot.lane.b32.xlu0 %v5540, 24
      %v6302 = vpop.permute.xlu0 %6301
      %6303 = vrot.lane.b32.xlu0 %v5542, 24
      %v6304 = vpop.permute.xlu0 %6303
      %6305 = vrot.lane.b32.xlu0 %v5543, 24
      %v6306 = vpop.permute.xlu0 %6305
      %6307 = vrot.lane.b32.xlu0 %v5545, 24
      %v6308 = vpop.permute.xlu0 %6307
      %6309 = vrot.lane.b32.xlu0 %v5546, 24
      %v6310 = vpop.permute.xlu0 %6309
      %6311 = vrot.lane.b32.xlu0 %v5548, 24
      %v6312 = vpop.permute.xlu0 %6311
      %6313 = vrot.lane.b32.xlu0 %v5549, 24
      %v6314 = vpop.permute.xlu0 %6313
      %6315 = vrot.lane.b32.xlu0 %v5551, 24
      %v6316 = vpop.permute.xlu0 %6315
      %6317 = vrot.lane.b32.xlu0 %v5552, 24
      %v6318 = vpop.permute.xlu0 %6317
      %6319 = vrot.lane.b32.xlu0 %v5554, 24
      %v6320 = vpop.permute.xlu0 %6319
      %6321 = vrot.lane.b32.xlu0 %v5555, 24
      %v6322 = vpop.permute.xlu0 %6321
      %6323 = vrot.lane.b32.xlu0 %v5557, 24
      %v6324 = vpop.permute.xlu0 %6323
      %6325 = vrot.lane.b32.xlu0 %v5558, 24
      %v6326 = vpop.permute.xlu0 %6325
      %6327 = vrot.lane.b32.xlu0 %v5560, 24
      %v6328 = vpop.permute.xlu0 %6327
      %6329 = vrot.lane.b32.xlu0 %v5561, 24
      %v6330 = vpop.permute.xlu0 %6329
      %6331 = vrot.lane.b32.xlu0 %v5563, 24
      %v6332 = vpop.permute.xlu0 %6331
      %6333 = vrot.lane.b32.xlu0 %v5564, 24
      %v6334 = vpop.permute.xlu0 %6333
      %6335 = vrot.lane.b32.xlu0 %v5566, 24
      %v6336 = vpop.permute.xlu0 %6335
      %6337 = vrot.lane.b32.xlu0 %v5567, 24
      %v6338 = vpop.permute.xlu0 %6337
      %6339 = vrot.lane.b32.xlu0 %v5569, 24
      %v6340 = vpop.permute.xlu0 %6339
      %6341 = vrot.lane.b32.xlu0 %v5570, 24
      %v6342 = vpop.permute.xlu0 %6341
      %6343 = vrot.lane.b32.xlu0 %v5572, 24
      %v6344 = vpop.permute.xlu0 %6343
      %6345 = vrot.lane.b32.xlu0 %v5573, 24
      %v6346 = vpop.permute.xlu0 %6345
      %6347 = vrot.lane.b32.xlu0 %v5575, 24
      %v6348 = vpop.permute.xlu0 %6347
      %6349 = vrot.lane.b32.xlu0 %v5576, 24
      %v6350 = vpop.permute.xlu0 %6349
      %6351 = vrot.lane.b32.xlu0 %v5578, 24
      %v6352 = vpop.permute.xlu0 %6351
      %6353 = vrot.lane.b32.xlu0 %v5579, 24
      %v6354 = vpop.permute.xlu0 %6353
      %6355 = vrot.lane.b32.xlu0 %v5581, 24
      %v6356 = vpop.permute.xlu0 %6355
      %6357 = vrot.lane.b32.xlu0 %v5582, 24
      %v6358 = vpop.permute.xlu0 %6357
      %v6392 = vrot.slane %v5581, 1
      %v6393 = vrot.slane %v5582, 1
      %v6394 = vsel %vm454, %v6392, %v6393
      %v6395 = vrot.slane %v5583, 1
      %v6396 = vsel %vm454, %v6393, %v6395
      %6397 = vrot.lane.b32.xlu0 %v5652, 28
      %v6398 = vpop.permute.xlu0 %6397
      %6399 = vrot.lane.b32.xlu0 %v5654, 28
      %v6400 = vpop.permute.xlu0 %6399
      %6401 = vrot.lane.b32.xlu0 %v5657, 28
      %v6402 = vpop.permute.xlu0 %6401
      %6403 = vrot.lane.b32.xlu0 %v5659, 28
      %v6404 = vpop.permute.xlu0 %6403
      %6405 = vrot.lane.b32.xlu0 %v5662, 28
      %v6406 = vpop.permute.xlu0 %6405
      %6407 = vrot.lane.b32.xlu0 %v5664, 28
      %v6408 = vpop.permute.xlu0 %6407
      %6409 = vrot.lane.b32.xlu0 %v5667, 28
      %v6410 = vpop.permute.xlu0 %6409
      %6411 = vrot.lane.b32.xlu0 %v5669, 28
      %v6412 = vpop.permute.xlu0 %6411
      %6413 = vrot.lane.b32.xlu0 %v5672, 28
      %v6414 = vpop.permute.xlu0 %6413
      %6415 = vrot.lane.b32.xlu0 %v5674, 28
      %v6416 = vpop.permute.xlu0 %6415
      %6417 = vrot.lane.b32.xlu0 %v5677, 28
      %v6418 = vpop.permute.xlu0 %6417
      %6419 = vrot.lane.b32.xlu0 %v5679, 28
      %v6420 = vpop.permute.xlu0 %6419
      %6421 = vrot.lane.b32.xlu0 %v5682, 28
      %v6422 = vpop.permute.xlu0 %6421
      %6423 = vrot.lane.b32.xlu0 %v5684, 28
      %v6424 = vpop.permute.xlu0 %6423
      %6425 = vrot.lane.b32.xlu0 %v5687, 28
      %v6426 = vpop.permute.xlu0 %6425
      %6427 = vrot.lane.b32.xlu0 %v5689, 28
      %v6428 = vpop.permute.xlu0 %6427
      %6429 = vrot.lane.b32.xlu0 %v5692, 28
      %v6430 = vpop.permute.xlu0 %6429
      %6431 = vrot.lane.b32.xlu0 %v5694, 28
      %v6432 = vpop.permute.xlu0 %6431
      %6433 = vrot.lane.b32.xlu0 %v5697, 28
      %v6434 = vpop.permute.xlu0 %6433
      %6435 = vrot.lane.b32.xlu0 %v5699, 28
      %v6436 = vpop.permute.xlu0 %6435
      %6437 = vrot.lane.b32.xlu0 %v5702, 28
      %v6438 = vpop.permute.xlu0 %6437
      %6439 = vrot.lane.b32.xlu0 %v5704, 28
      %v6440 = vpop.permute.xlu0 %6439
      %6441 = vrot.lane.b32.xlu0 %v5707, 28
      %v6442 = vpop.permute.xlu0 %6441
      %6443 = vrot.lane.b32.xlu0 %v5709, 28
      %v6444 = vpop.permute.xlu0 %6443
      %6445 = vrot.lane.b32.xlu0 %v5712, 28
      %v6446 = vpop.permute.xlu0 %6445
      %6447 = vrot.lane.b32.xlu0 %v5714, 28
      %v6448 = vpop.permute.xlu0 %6447
      %6449 = vrot.lane.b32.xlu0 %v5717, 28
      %v6450 = vpop.permute.xlu0 %6449
      %6451 = vrot.lane.b32.xlu0 %v5719, 28
      %v6452 = vpop.permute.xlu0 %6451
      %6453 = vrot.lane.b32.xlu0 %v6093, 28
      %v6454 = vpop.permute.xlu0 %6453
      %6455 = vrot.lane.b32.xlu0 %v6095, 28
      %v6456 = vpop.permute.xlu0 %6455
      %6457 = vrot.lane.b32.xlu0 %v6394, 28
      %v6458 = vpop.permute.xlu0 %6457
      %6459 = vrot.lane.b32.xlu0 %v6396, 28
      %v6460 = vpop.permute.xlu0 %6459
      %v6493 = vrot.slane %v5581, 2
      %v6494 = vrot.slane %v5582, 2
      %v6495 = vsel %vm631, %v6493, %v6494
      %v6496 = vrot.slane %v5583, 2
      %v6497 = vsel %vm631, %v6494, %v6496
      %6498 = vrot.lane.b32.xlu0 %v5828, 32
      %v6499 = vpop.permute.xlu0 %6498
      %6500 = vrot.lane.b32.xlu0 %v5830, 32
      %v6501 = vpop.permute.xlu0 %6500
      %6502 = vrot.lane.b32.xlu0 %v5833, 32
      %v6503 = vpop.permute.xlu0 %6502
      %6504 = vrot.lane.b32.xlu0 %v5835, 32
      %v6505 = vpop.permute.xlu0 %6504
      %6506 = vrot.lane.b32.xlu0 %v5838, 32
      %v6507 = vpop.permute.xlu0 %6506
      %6508 = vrot.lane.b32.xlu0 %v5840, 32
      %v6509 = vpop.permute.xlu0 %6508
      %6510 = vrot.lane.b32.xlu0 %v5843, 32
      %v6511 = vpop.permute.xlu0 %6510
      %6512 = vrot.lane.b32.xlu0 %v5845, 32
      %v6513 = vpop.permute.xlu0 %6512
      %6514 = vrot.lane.b32.xlu0 %v5848, 32
      %v6515 = vpop.permute.xlu0 %6514
      %6516 = vrot.lane.b32.xlu0 %v5850, 32
      %v6517 = vpop.permute.xlu0 %6516
      %6518 = vrot.lane.b32.xlu0 %v5853, 32
      %v6519 = vpop.permute.xlu0 %6518
      %6520 = vrot.lane.b32.xlu0 %v5855, 32
      %v6521 = vpop.permute.xlu0 %6520
      %6522 = vrot.lane.b32.xlu0 %v5858, 32
      %v6523 = vpop.permute.xlu0 %6522
      %6524 = vrot.lane.b32.xlu0 %v5860, 32
      %v6525 = vpop.permute.xlu0 %6524
      %6526 = vrot.lane.b32.xlu0 %v5863, 32
      %v6527 = vpop.permute.xlu0 %6526
      %6528 = vrot.lane.b32.xlu0 %v5865, 32
      %v6529 = vpop.permute.xlu0 %6528
      %6530 = vrot.lane.b32.xlu0 %v5868, 32
      %v6531 = vpop.permute.xlu0 %6530
      %6532 = vrot.lane.b32.xlu0 %v5870, 32
      %v6533 = vpop.permute.xlu0 %6532
      %6534 = vrot.lane.b32.xlu0 %v5873, 32
      %v6535 = vpop.permute.xlu0 %6534
      %6536 = vrot.lane.b32.xlu0 %v5875, 32
      %v6537 = vpop.permute.xlu0 %6536
      %6538 = vrot.lane.b32.xlu0 %v5878, 32
      %v6539 = vpop.permute.xlu0 %6538
      %6540 = vrot.lane.b32.xlu0 %v5880, 32
      %v6541 = vpop.permute.xlu0 %6540
      %6542 = vrot.lane.b32.xlu0 %v5883, 32
      %v6543 = vpop.permute.xlu0 %6542
      %6544 = vrot.lane.b32.xlu0 %v5885, 32
      %v6545 = vpop.permute.xlu0 %6544
      %6546 = vrot.lane.b32.xlu0 %v5888, 32
      %v6547 = vpop.permute.xlu0 %6546
      %6548 = vrot.lane.b32.xlu0 %v5890, 32
      %v6549 = vpop.permute.xlu0 %6548
      %6550 = vrot.lane.b32.xlu0 %v5893, 32
      %v6551 = vpop.permute.xlu0 %6550
      %6552 = vrot.lane.b32.xlu0 %v5895, 32
      %v6553 = vpop.permute.xlu0 %6552
      %6554 = vrot.lane.b32.xlu0 %v6194, 32
      %v6555 = vpop.permute.xlu0 %6554
      %6556 = vrot.lane.b32.xlu0 %v6196, 32
      %v6557 = vpop.permute.xlu0 %6556
      %6558 = vrot.lane.b32.xlu0 %v6495, 32
      %v6559 = vpop.permute.xlu0 %6558
      %6560 = vrot.lane.b32.xlu0 %v6497, 32
      %v6561 = vpop.permute.xlu0 %6560
      %v6594 = vsel %vm171, %v5530, %v5721
      %v6595 = vsel %vm171, %v5531, %v5723
      %v6596 = vsel %vm171, %v5533, %v5725
      %v6597 = vsel %vm171, %v5534, %v5727
      %v6598 = vsel %vm171, %v5536, %v5729
      %v6599 = vsel %vm171, %v5537, %v5731
      %v6600 = vsel %vm171, %v5539, %v5733
      %v6601 = vsel %vm171, %v5540, %v5735
      %v6602 = vsel %vm171, %v5542, %v5737
      %v6603 = vsel %vm171, %v5543, %v5739
      %v6604 = vsel %vm171, %v5545, %v5741
      %v6605 = vsel %vm171, %v5546, %v5743
      %v6606 = vsel %vm171, %v5548, %v5745
      %v6607 = vsel %vm171, %v5549, %v5747
      %v6608 = vsel %vm171, %v5551, %v5749
      %v6609 = vsel %vm171, %v5552, %v5751
      %v6610 = vsel %vm171, %v5554, %v5753
      %v6611 = vsel %vm171, %v5555, %v5755
      %v6612 = vsel %vm171, %v5557, %v5757
      %v6613 = vsel %vm171, %v5558, %v5759
      %v6614 = vsel %vm171, %v5560, %v5761
      %v6615 = vsel %vm171, %v5561, %v5763
      %v6616 = vsel %vm171, %v5563, %v5765
      %v6617 = vsel %vm171, %v5564, %v5767
      %v6618 = vsel %vm171, %v5566, %v5769
      %v6619 = vsel %vm171, %v5567, %v5771
      %v6620 = vsel %vm171, %v5569, %v5773
      %v6621 = vsel %vm171, %v5570, %v5775
      %v6622 = vsel %vm171, %v5572, %v5777
      %v6623 = vsel %vm171, %v5573, %v5779
      %v6624 = vsel %vm171, %v5575, %v5781
      %v6625 = vsel %vm171, %v5576, %v5783
      %v6626 = vsel %vm1442, %v6594, %v5897
      %v6627 = vsel %vm1442, %v6595, %v5899
      %v6628 = vsel %vm1442, %v6596, %v5901
      %v6629 = vsel %vm1442, %v6597, %v5903
      %v6630 = vsel %vm1442, %v6598, %v5905
      %v6631 = vsel %vm1442, %v6599, %v5907
      %v6632 = vsel %vm1442, %v6600, %v5909
      %v6633 = vsel %vm1442, %v6601, %v5911
      %v6634 = vsel %vm1442, %v6602, %v5913
      %v6635 = vsel %vm1442, %v6603, %v5915
      %v6636 = vsel %vm1442, %v6604, %v5917
      %v6637 = vsel %vm1442, %v6605, %v5919
      %v6638 = vsel %vm1442, %v6606, %v5921
      %v6639 = vsel %vm1442, %v6607, %v5923
      %v6640 = vsel %vm1442, %v6608, %v5925
      %v6641 = vsel %vm1442, %v6609, %v5927
      %v6642 = vsel %vm1442, %v6610, %v5929
      %v6643 = vsel %vm1442, %v6611, %v5931
      %v6644 = vsel %vm1442, %v6612, %v5933
      %v6645 = vsel %vm1442, %v6613, %v5935
      %v6646 = vsel %vm1442, %v6614, %v5937
      %v6647 = vsel %vm1442, %v6615, %v5939
      %v6648 = vsel %vm1442, %v6616, %v5941
      %v6649 = vsel %vm1442, %v6617, %v5943
      %v6650 = vsel %vm1442, %v6618, %v5945
      %v6651 = vsel %vm1442, %v6619, %v5947
      %v6652 = vsel %vm1442, %v6620, %v5949
      %v6653 = vsel %vm1442, %v6621, %v5951
      %v6654 = vsel %vm1442, %v6622, %v5953
      %v6655 = vsel %vm1442, %v6623, %v5955
      %v6656 = vsel %vm1442, %v6624, %v5957
      %v6657 = vsel %vm1442, %v6625, %v5959
      %v6658 = vsel %vm1475, %v6626, %v5995
      %v6659 = vsel %vm1475, %v6627, %v5997
      %v6660 = vsel %vm1475, %v6628, %v5999
      %v6661 = vsel %vm1475, %v6629, %v6001
      %v6662 = vsel %vm1475, %v6630, %v6003
      %v6663 = vsel %vm1475, %v6631, %v6005
      %v6664 = vsel %vm1475, %v6632, %v6007
      %v6665 = vsel %vm1475, %v6633, %v6009
      %v6666 = vsel %vm1475, %v6634, %v6011
      %v6667 = vsel %vm1475, %v6635, %v6013
      %v6668 = vsel %vm1475, %v6636, %v6015
      %v6669 = vsel %vm1475, %v6637, %v6017
      %v6670 = vsel %vm1475, %v6638, %v6019
      %v6671 = vsel %vm1475, %v6639, %v6021
      %v6672 = vsel %vm1475, %v6640, %v6023
      %v6673 = vsel %vm1475, %v6641, %v6025
      %v6674 = vsel %vm1475, %v6642, %v6027
      %v6675 = vsel %vm1475, %v6643, %v6029
      %v6676 = vsel %vm1475, %v6644, %v6031
      %v6677 = vsel %vm1475, %v6645, %v6033
      %v6678 = vsel %vm1475, %v6646, %v6035
      %v6679 = vsel %vm1475, %v6647, %v6037
      %v6680 = vsel %vm1475, %v6648, %v6039
      %v6681 = vsel %vm1475, %v6649, %v6041
      %v6682 = vsel %vm1475, %v6650, %v6043
      %v6683 = vsel %vm1475, %v6651, %v6045
      %v6684 = vsel %vm1475, %v6652, %v6047
      %v6685 = vsel %vm1475, %v6653, %v6049
      %v6686 = vsel %vm1475, %v6654, %v6051
      %v6687 = vsel %vm1475, %v6655, %v6053
      %v6688 = vsel %vm1475, %v6656, %v6055
      %v6689 = vsel %vm1475, %v6657, %v6057
      %v6690 = vsel %vm1508, %v6658, %v6097
      %v6691 = vsel %vm1508, %v6659, %v6099
      %v6692 = vsel %vm1508, %v6660, %v6101
      %v6693 = vsel %vm1508, %v6661, %v6103
      %v6694 = vsel %vm1508, %v6662, %v6105
      %v6695 = vsel %vm1508, %v6663, %v6107
      %v6696 = vsel %vm1508, %v6664, %v6109
      %v6697 = vsel %vm1508, %v6665, %v6111
      %v6698 = vsel %vm1508, %v6666, %v6113
      %v6699 = vsel %vm1508, %v6667, %v6115
      %v6700 = vsel %vm1508, %v6668, %v6117
      %v6701 = vsel %vm1508, %v6669, %v6119
      %v6702 = vsel %vm1508, %v6670, %v6121
      %v6703 = vsel %vm1508, %v6671, %v6123
      %v6704 = vsel %vm1508, %v6672, %v6125
      %v6705 = vsel %vm1508, %v6673, %v6127
      %v6706 = vsel %vm1508, %v6674, %v6129
      %v6707 = vsel %vm1508, %v6675, %v6131
      %v6708 = vsel %vm1508, %v6676, %v6133
      %v6709 = vsel %vm1508, %v6677, %v6135
      %v6710 = vsel %vm1508, %v6678, %v6137
      %v6711 = vsel %vm1508, %v6679, %v6139
      %v6712 = vsel %vm1508, %v6680, %v6141
      %v6713 = vsel %vm1508, %v6681, %v6143
      %v6714 = vsel %vm1508, %v6682, %v6145
      %v6715 = vsel %vm1508, %v6683, %v6147
      %v6716 = vsel %vm1508, %v6684, %v6149
      %v6717 = vsel %vm1508, %v6685, %v6151
      %v6718 = vsel %vm1508, %v6686, %v6153
      %v6719 = vsel %vm1508, %v6687, %v6155
      %v6720 = vsel %vm1508, %v6688, %v6157
      %v6721 = vsel %vm1508, %v6689, %v6159
      %v6722 = vsel %vm1541, %v6690, %v6198
      %v6723 = vsel %vm1541, %v6691, %v6200
      %v6724 = vsel %vm1541, %v6692, %v6202
      %v6725 = vsel %vm1541, %v6693, %v6204
      %v6726 = vsel %vm1541, %v6694, %v6206
      %v6727 = vsel %vm1541, %v6695, %v6208
      %v6728 = vsel %vm1541, %v6696, %v6210
      %v6729 = vsel %vm1541, %v6697, %v6212
      %v6730 = vsel %vm1541, %v6698, %v6214
      %v6731 = vsel %vm1541, %v6699, %v6216
      %v6732 = vsel %vm1541, %v6700, %v6218
      %v6733 = vsel %vm1541, %v6701, %v6220
      %v6734 = vsel %vm1541, %v6702, %v6222
      %v6735 = vsel %vm1541, %v6703, %v6224
      %v6736 = vsel %vm1541, %v6704, %v6226
      %v6737 = vsel %vm1541, %v6705, %v6228
      %v6738 = vsel %vm1541, %v6706, %v6230
      %v6739 = vsel %vm1541, %v6707, %v6232
      %v6740 = vsel %vm1541, %v6708, %v6234
      %v6741 = vsel %vm1541, %v6709, %v6236
      %v6742 = vsel %vm1541, %v6710, %v6238
      %v6743 = vsel %vm1541, %v6711, %v6240
      %v6744 = vsel %vm1541, %v6712, %v6242
      %v6745 = vsel %vm1541, %v6713, %v6244
      %v6746 = vsel %vm1541, %v6714, %v6246
      %v6747 = vsel %vm1541, %v6715, %v6248
      %v6748 = vsel %vm1541, %v6716, %v6250
      %v6749 = vsel %vm1541, %v6717, %v6252
      %v6750 = vsel %vm1541, %v6718, %v6254
      %v6751 = vsel %vm1541, %v6719, %v6256
      %v6752 = vsel %vm1541, %v6720, %v6258
      %v6753 = vsel %vm1541, %v6721, %v6260
      %v6754 = vsel %vm1574, %v6722, %v6296
      %v6755 = vsel %vm1574, %v6723, %v6298
      %v6756 = vsel %vm1574, %v6724, %v6300
      %v6757 = vsel %vm1574, %v6725, %v6302
      %v6758 = vsel %vm1574, %v6726, %v6304
      %v6759 = vsel %vm1574, %v6727, %v6306
      %v6760 = vsel %vm1574, %v6728, %v6308
      %v6761 = vsel %vm1574, %v6729, %v6310
      %v6762 = vsel %vm1574, %v6730, %v6312
      %v6763 = vsel %vm1574, %v6731, %v6314
      %v6764 = vsel %vm1574, %v6732, %v6316
      %v6765 = vsel %vm1574, %v6733, %v6318
      %v6766 = vsel %vm1574, %v6734, %v6320
      %v6767 = vsel %vm1574, %v6735, %v6322
      %v6768 = vsel %vm1574, %v6736, %v6324
      %v6769 = vsel %vm1574, %v6737, %v6326
      %v6770 = vsel %vm1574, %v6738, %v6328
      %v6771 = vsel %vm1574, %v6739, %v6330
      %v6772 = vsel %vm1574, %v6740, %v6332
      %v6773 = vsel %vm1574, %v6741, %v6334
      %v6774 = vsel %vm1574, %v6742, %v6336
      %v6775 = vsel %vm1574, %v6743, %v6338
      %v6776 = vsel %vm1574, %v6744, %v6340
      %v6777 = vsel %vm1574, %v6745, %v6342
      %v6778 = vsel %vm1574, %v6746, %v6344
      %v6779 = vsel %vm1574, %v6747, %v6346
      %v6780 = vsel %vm1574, %v6748, %v6348
      %v6781 = vsel %vm1574, %v6749, %v6350
      %v6782 = vsel %vm1574, %v6750, %v6352
      %v6783 = vsel %vm1574, %v6751, %v6354
      %v6784 = vsel %vm1574, %v6752, %v6356
      %v6785 = vsel %vm1574, %v6753, %v6358
      %v6786 = vsel %vm1607, %v6754, %v6398
      %v6787 = vsel %vm1607, %v6755, %v6400
      %v6788 = vsel %vm1607, %v6756, %v6402
      %v6789 = vsel %vm1607, %v6757, %v6404
      %v6790 = vsel %vm1607, %v6758, %v6406
      %v6791 = vsel %vm1607, %v6759, %v6408
      %v6792 = vsel %vm1607, %v6760, %v6410
      %v6793 = vsel %vm1607, %v6761, %v6412
      %v6794 = vsel %vm1607, %v6762, %v6414
      %v6795 = vsel %vm1607, %v6763, %v6416
      %v6796 = vsel %vm1607, %v6764, %v6418
      %v6797 = vsel %vm1607, %v6765, %v6420
      %v6798 = vsel %vm1607, %v6766, %v6422
      %v6799 = vsel %vm1607, %v6767, %v6424
      %v6800 = vsel %vm1607, %v6768, %v6426
      %v6801 = vsel %vm1607, %v6769, %v6428
      %v6802 = vsel %vm1607, %v6770, %v6430
      %v6803 = vsel %vm1607, %v6771, %v6432
      %v6804 = vsel %vm1607, %v6772, %v6434
      %v6805 = vsel %vm1607, %v6773, %v6436
      %v6806 = vsel %vm1607, %v6774, %v6438
      %v6807 = vsel %vm1607, %v6775, %v6440
      %v6808 = vsel %vm1607, %v6776, %v6442
      %v6809 = vsel %vm1607, %v6777, %v6444
      %v6810 = vsel %vm1607, %v6778, %v6446
      %v6811 = vsel %vm1607, %v6779, %v6448
      %v6812 = vsel %vm1607, %v6780, %v6450
      %v6813 = vsel %vm1607, %v6781, %v6452
      %v6814 = vsel %vm1607, %v6782, %v6454
      %v6815 = vsel %vm1607, %v6783, %v6456
      %v6816 = vsel %vm1607, %v6784, %v6458
      %v6817 = vsel %vm1607, %v6785, %v6460
      %v6818 = vsel %vm1640, %v6786, %v6499
      %v6819 = vsel %vm1640, %v6787, %v6501
      %v6820 = vsel %vm1640, %v6788, %v6503
      %v6821 = vsel %vm1640, %v6789, %v6505
      %v6822 = vsel %vm1640, %v6790, %v6507
      %v6823 = vsel %vm1640, %v6791, %v6509
      %v6824 = vsel %vm1640, %v6792, %v6511
      %v6825 = vsel %vm1640, %v6793, %v6513
      %v6826 = vsel %vm1640, %v6794, %v6515
      %v6827 = vsel %vm1640, %v6795, %v6517
      %v6828 = vsel %vm1640, %v6796, %v6519
      %v6829 = vsel %vm1640, %v6797, %v6521
      %v6830 = vsel %vm1640, %v6798, %v6523
      %v6831 = vsel %vm1640, %v6799, %v6525
      %v6832 = vsel %vm1640, %v6800, %v6527
      %v6833 = vsel %vm1640, %v6801, %v6529
      %v6834 = vsel %vm1640, %v6802, %v6531
      %v6835 = vsel %vm1640, %v6803, %v6533
      %v6836 = vsel %vm1640, %v6804, %v6535
      %v6837 = vsel %vm1640, %v6805, %v6537
      %v6838 = vsel %vm1640, %v6806, %v6539
      %v6839 = vsel %vm1640, %v6807, %v6541
      %v6840 = vsel %vm1640, %v6808, %v6543
      %v6841 = vsel %vm1640, %v6809, %v6545
      %v6842 = vsel %vm1640, %v6810, %v6547
      %v6843 = vsel %vm1640, %v6811, %v6549
      %v6844 = vsel %vm1640, %v6812, %v6551
      %v6845 = vsel %vm1640, %v6813, %v6553
      %v6846 = vsel %vm1640, %v6814, %v6555
      %v6847 = vsel %vm1640, %v6815, %v6557
      %v6848 = vsel %vm1640, %v6816, %v6559
      %v6849 = vsel %vm1640, %v6817, %v6561
      %v6851 = vlaneseq
      %v6852 = vshrl.u32 %v6851, 7
      %v6853 = vsub.s32 0, %v6852
      %v6854 = vrot.slane %v5591, %v6853
      %v6857 = vsel %vm1679, %v6818, 0
      %v6860 = vsel %vm1679, %v6819, 0
      %v6863 = vsel %vm1679, %v6820, 0
      %v6866 = vsel %vm1679, %v6821, 0
      %v6869 = vsel %vm1679, %v6822, 0
      %v6872 = vsel %vm1679, %v6823, 0
      %v6875 = vsel %vm1679, %v6824, 0
      %v6878 = vsel %vm1679, %v6825, 0
      %v6881 = vsel %vm1679, %v6826, 0
      %v6884 = vsel %vm1679, %v6827, 0
      %v6887 = vsel %vm1679, %v6828, 0
      %v6890 = vsel %vm1679, %v6829, 0
      %v6893 = vsel %vm1679, %v6830, 0
      %v6896 = vsel %vm1679, %v6831, 0
      %v6899 = vsel %vm1679, %v6832, 0
      %v6902 = vsel %vm1679, %v6833, 0
      %v6905 = vsel %vm1679, %v6834, 0
      %v6908 = vsel %vm1679, %v6835, 0
      %v6911 = vsel %vm1679, %v6836, 0
      %v6914 = vsel %vm1679, %v6837, 0
      %v6917 = vsel %vm1679, %v6838, 0
      %v6920 = vsel %vm1679, %v6839, 0
      %v6923 = vsel %vm1679, %v6840, 0
      %v6926 = vsel %vm1679, %v6841, 0
      %v6929 = vsel %vm1679, %v6842, 0
      %v6932 = vsel %vm1679, %v6843, 0
      %v6935 = vsel %vm1679, %v6844, 0
      %v6938 = vsel %vm1679, %v6845, 0
      %v6941 = vsel %vm1679, %v6846, 0
      %v6944 = vsel %vm1679, %v6847, 0
      %v6947 = vsel %vm1679, %v6848, 0
      %v6950 = vsel %vm1679, %v6849, 0
      %v6953 = vsel %vm1776, %v5589, 0
      %6955 = vmatprep.subr.mxu0 0.0
      %6956 = vmatpush1.msra.mxu0 %v5585
      %6957 = vmatprep.subr.mxu0 0.0
      %6958 = vmatpush1.msra.mxu0 %v5586
      %6959 = vmatprep.subr.mxu0 0.0
      %6960 = vmatpush1.msra.mxu0 %v5587
      %6961 = vmatprep.subr.mxu0 0.0
      %6962 = vmatpush1.msra.mxu0 %v5588
      %6963 = vmatprep.subr.mxu0 0.0
      %6964 = vmatpush1.msra.mxu0 %v6953
      %6965 = vmatprep.subr.mxu0 0.0
      %6966 = vmatpush1.msra.mxu0 0.0
      %6967 = vmatprep.subr.mxu0 0.0
      %6968 = vmatpush1.msra.mxu0 0.0
      %6969 = vmatprep.subr.mxu0 0.0
      %6970 = vmatpush1.msra.mxu0 0.0
      %6971 = vmatprep.subr.mxu0 0.0
      %6972 = vmatpush1.msra.mxu0 0.0
      %6973 = vmatprep.subr.mxu0 0.0
      %6974 = vmatpush1.msra.mxu0 0.0
      %6975 = vmatprep.subr.mxu0 0.0
      %6976 = vmatpush1.msra.mxu0 0.0
      %6977 = vmatprep.subr.mxu0 0.0
      %6978 = vmatpush1.msra.mxu0 0.0
      %6979 = vmatprep.subr.mxu0 0.0
      %6980 = vmatpush1.msra.mxu0 0.0
      %6981 = vmatprep.subr.mxu0 0.0
      %6982 = vmatpush1.msra.mxu0 0.0
      %6983 = vmatprep.subr.mxu0 0.0
      %6984 = vmatpush1.msra.mxu0 0.0
      %6985 = vmatprep.subr.mxu0 0.0
      %6986 = vmatpush1.msra.mxu0 0.0
      %6987 = vmatprep.subr.mxu0 0.0
      %6988 = vmatpush1.msra.mxu0 0.0
      %6989 = vmatprep.subr.mxu0 0.0
      %6990 = vmatpush1.msra.mxu0 0.0
      %6991 = vmatprep.subr.mxu0 0.0
      %6992 = vmatpush1.msra.mxu0 0.0
      %6993 = vmatprep.subr.mxu0 0.0
      %6994 = vmatpush1.msra.mxu0 0.0
      %6995 = vmatprep.subr.mxu0 0.0
      %6996 = vmatpush1.msra.mxu0 0.0
      %6997 = vmatprep.subr.mxu0 0.0
      %6998 = vmatpush1.msra.mxu0 0.0
      %6999 = vmatprep.subr.mxu0 0.0
      %7000 = vmatpush1.msra.mxu0 0.0
      %7001 = vmatprep.subr.mxu0 0.0
      %7002 = vmatpush1.msra.mxu0 0.0
      %7003 = vmatprep.subr.mxu0 0.0
      %7004 = vmatpush1.msra.mxu0 0.0
      %7005 = vmatprep.subr.mxu0 0.0
      %7006 = vmatpush1.msra.mxu0 0.0
      %7007 = vmatprep.subr.mxu0 0.0
      %7008 = vmatpush1.msra.mxu0 0.0
      %7009 = vmatprep.subr.mxu0 0.0
      %7010 = vmatpush1.msra.mxu0 0.0
      %7011 = vmatprep.subr.mxu0 0.0
      %7012 = vmatpush1.msra.mxu0 0.0
      %7013 = vmatprep.subr.mxu0 0.0
      %7014 = vmatpush1.msra.mxu0 0.0
      %7015 = vmatprep.subr.mxu0 0.0
      %7016 = vmatpush1.msra.mxu0 0.0
      %7017 = vmatprep.subr.mxu0 0.0
      %7018 = vmatpush1.msra.mxu0 0.0
      %7019 = vmatprep.mubr.f32.mxu0 0.0
      %7020 = vmatmul.mubr.f32.gmra.mrb[0].mxu0 %v6857
      %v7021 = vpop.f32.mrb[0].mxu0
      %v7022 = vadd.f32 %v6854, %v7021
      %v7023 = vpop.f32.mrb[0].mxu0
      %7024 = vmatprep.mubr.f32.mxu0 0.0
      %7025 = vmatmul.mubr.f32.gmra.mrb[0].mxu0 %v6860
      %v7026 = vpop.f32.mrb[0].mxu0
      %v7027 = vadd.f32 %v6854, %v7026
      %v7028 = vpop.f32.mrb[0].mxu0
      %7029 = vmatprep.mubr.f32.mxu0 0.0
      %7030 = vmatmul.mubr.f32.gmra.mrb[0].mxu0 %v6863
      %v7031 = vpop.f32.mrb[0].mxu0
      %v7032 = vadd.f32 %v6854, %v7031
      %v7033 = vpop.f32.mrb[0].mxu0
      %7034 = vmatprep.mubr.f32.mxu0 0.0
      %7035 = vmatmul.mubr.f32.gmra.mrb[0].mxu0 %v6866
      %v7036 = vpop.f32.mrb[0].mxu0
      %v7037 = vadd.f32 %v6854, %v7036
      %v7038 = vpop.f32.mrb[0].mxu0
      %7039 = vmatprep.mubr.f32.mxu0 0.0
      %7040 = vmatmul.mubr.f32.gmra.mrb[0].mxu0 %v6869
      %v7041 = vpop.f32.mrb[0].mxu0
      %v7042 = vadd.f32 %v6854, %v7041
      %v7043 = vpop.f32.mrb[0].mxu0
      %7044 = vmatprep.mubr.f32.mxu0 0.0
      %7045 = vmatmul.mubr.f32.gmra.mrb[0].mxu0 %v6872
      %v7046 = vpop.f32.mrb[0].mxu0
      %v7047 = vadd.f32 %v6854, %v7046
      %v7048 = vpop.f32.mrb[0].mxu0
      %7049 = vmatprep.mubr.f32.mxu0 0.0
      %7050 = vmatmul.mubr.f32.gmra.mrb[0].mxu0 %v6875
      %v7051 = vpop.f32.mrb[0].mxu0
      %v7052 = vadd.f32 %v6854, %v7051
      %v7053 = vpop.f32.mrb[0].mxu0
      %7054 = vmatprep.mubr.f32.mxu0 0.0
      %7055 = vmatmul.mubr.f32.gmra.mrb[0].mxu0 %v6878
      %v7056 = vpop.f32.mrb[0].mxu0
      %v7057 = vadd.f32 %v6854, %v7056
      %v7058 = vpop.f32.mrb[0].mxu0
      %7059 = vmatprep.mubr.f32.mxu0 0.0
      %7060 = vmatmul.mubr.f32.gmra.mrb[0].mxu0 %v6881
      %v7061 = vpop.f32.mrb[0].mxu0
      %v7062 = vadd.f32 %v6854, %v7061
      %v7063 = vpop.f32.mrb[0].mxu0
      %7064 = vmatprep.mubr.f32.mxu0 0.0
      %7065 = vmatmul.mubr.f32.gmra.mrb[0].mxu0 %v6884
      %v7066 = vpop.f32.mrb[0].mxu0
      %v7067 = vadd.f32 %v6854, %v7066
      %v7068 = vpop.f32.mrb[0].mxu0
      %7069 = vmatprep.mubr.f32.mxu0 0.0
      %7070 = vmatmul.mubr.f32.gmra.mrb[0].mxu0 %v6887
      %v7071 = vpop.f32.mrb[0].mxu0
      %v7072 = vadd.f32 %v6854, %v7071
      %v7073 = vpop.f32.mrb[0].mxu0
      %7074 = vmatprep.mubr.f32.mxu0 0.0
      %7075 = vmatmul.mubr.f32.gmra.mrb[0].mxu0 %v6890
      %v7076 = vpop.f32.mrb[0].mxu0
      %v7077 = vadd.f32 %v6854, %v7076
      %v7078 = vpop.f32.mrb[0].mxu0
      %7079 = vmatprep.mubr.f32.mxu0 0.0
      %7080 = vmatmul.mubr.f32.gmra.mrb[0].mxu0 %v6893
      %v7081 = vpop.f32.mrb[0].mxu0
      %v7082 = vadd.f32 %v6854, %v7081
      %v7083 = vpop.f32.mrb[0].mxu0
      %7084 = vmatprep.mubr.f32.mxu0 0.0
      %7085 = vmatmul.mubr.f32.gmra.mrb[0].mxu0 %v6896
      %v7086 = vpop.f32.mrb[0].mxu0
      %v7087 = vadd.f32 %v6854, %v7086
      %v7088 = vpop.f32.mrb[0].mxu0
      %7089 = vmatprep.mubr.f32.mxu0 0.0
      %7090 = vmatmul.mubr.f32.gmra.mrb[0].mxu0 %v6899
      %v7091 = vpop.f32.mrb[0].mxu0
      %v7092 = vadd.f32 %v6854, %v7091
      %v7093 = vpop.f32.mrb[0].mxu0
      %7094 = vmatprep.mubr.f32.mxu0 0.0
      %7095 = vmatmul.mubr.f32.gmra.mrb[0].mxu0 %v6902
      %v7096 = vpop.f32.mrb[0].mxu0
      %v7097 = vadd.f32 %v6854, %v7096
      %v7098 = vpop.f32.mrb[0].mxu0
      %7099 = vmatprep.mubr.f32.mxu0 0.0
      %7100 = vmatmul.mubr.f32.gmra.mrb[0].mxu0 %v6905
      %v7101 = vpop.f32.mrb[0].mxu0
      %v7102 = vadd.f32 %v6854, %v7101
      %v7103 = vpop.f32.mrb[0].mxu0
      %7104 = vmatprep.mubr.f32.mxu0 0.0
      %7105 = vmatmul.mubr.f32.gmra.mrb[0].mxu0 %v6908
      %v7106 = vpop.f32.mrb[0].mxu0
      %v7107 = vadd.f32 %v6854, %v7106
      %v7108 = vpop.f32.mrb[0].mxu0
      %7109 = vmatprep.mubr.f32.mxu0 0.0
      %7110 = vmatmul.mubr.f32.gmra.mrb[0].mxu0 %v6911
      %v7111 = vpop.f32.mrb[0].mxu0
      %v7112 = vadd.f32 %v6854, %v7111
      %v7113 = vpop.f32.mrb[0].mxu0
      %7114 = vmatprep.mubr.f32.mxu0 0.0
      %7115 = vmatmul.mubr.f32.gmra.mrb[0].mxu0 %v6914
      %v7116 = vpop.f32.mrb[0].mxu0
      %v7117 = vadd.f32 %v6854, %v7116
      %v7118 = vpop.f32.mrb[0].mxu0
      %7119 = vmatprep.mubr.f32.mxu0 0.0
      %7120 = vmatmul.mubr.f32.gmra.mrb[0].mxu0 %v6917
      %v7121 = vpop.f32.mrb[0].mxu0
      %v7122 = vadd.f32 %v6854, %v7121
      %v7123 = vpop.f32.mrb[0].mxu0
      %7124 = vmatprep.mubr.f32.mxu0 0.0
      %7125 = vmatmul.mubr.f32.gmra.mrb[0].mxu0 %v6920
      %v7126 = vpop.f32.mrb[0].mxu0
      %v7127 = vadd.f32 %v6854, %v7126
      %v7128 = vpop.f32.mrb[0].mxu0
      %7129 = vmatprep.mubr.f32.mxu0 0.0
      %7130 = vmatmul.mubr.f32.gmra.mrb[0].mxu0 %v6923
      %v7131 = vpop.f32.mrb[0].mxu0
      %v7132 = vadd.f32 %v6854, %v7131
      %v7133 = vpop.f32.mrb[0].mxu0
      %7134 = vmatprep.mubr.f32.mxu0 0.0
      %7135 = vmatmul.mubr.f32.gmra.mrb[0].mxu0 %v6926
      %v7136 = vpop.f32.mrb[0].mxu0
      %v7137 = vadd.f32 %v6854, %v7136
      %v7138 = vpop.f32.mrb[0].mxu0
      %7139 = vmatprep.mubr.f32.mxu0 0.0
      %7140 = vmatmul.mubr.f32.gmra.mrb[0].mxu0 %v6929
      %v7141 = vpop.f32.mrb[0].mxu0
      %v7142 = vadd.f32 %v6854, %v7141
      %v7143 = vpop.f32.mrb[0].mxu0
      %7144 = vmatprep.mubr.f32.mxu0 0.0
      %7145 = vmatmul.mubr.f32.gmra.mrb[0].mxu0 %v6932
      %v7146 = vpop.f32.mrb[0].mxu0
      %v7147 = vadd.f32 %v6854, %v7146
      %v7148 = vpop.f32.mrb[0].mxu0
      %7149 = vmatprep.mubr.f32.mxu0 0.0
      %7150 = vmatmul.mubr.f32.gmra.mrb[0].mxu0 %v6935
      %v7151 = vpop.f32.mrb[0].mxu0
      %v7152 = vadd.f32 %v6854, %v7151
      %v7153 = vpop.f32.mrb[0].mxu0
      %7154 = vmatprep.mubr.f32.mxu0 0.0
      %7155 = vmatmul.mubr.f32.gmra.mrb[0].mxu0 %v6938
      %v7156 = vpop.f32.mrb[0].mxu0
      %v7157 = vadd.f32 %v6854, %v7156
      %v7158 = vpop.f32.mrb[0].mxu0
      %7159 = vmatprep.mubr.f32.mxu0 0.0
      %7160 = vmatmul.mubr.f32.gmra.mrb[0].mxu0 %v6941
      %v7161 = vpop.f32.mrb[0].mxu0
      %v7162 = vadd.f32 %v6854, %v7161
      %v7163 = vpop.f32.mrb[0].mxu0
      %7164 = vmatprep.mubr.f32.mxu0 0.0
      %7165 = vmatmul.mubr.f32.gmra.mrb[0].mxu0 %v6944
      %v7166 = vpop.f32.mrb[0].mxu0
      %v7167 = vadd.f32 %v6854, %v7166
      %v7168 = vpop.f32.mrb[0].mxu0
      %7169 = vmatprep.mubr.f32.mxu0 0.0
      %7170 = vmatmul.mubr.f32.gmra.mrb[0].mxu0 %v6947
      %v7171 = vpop.f32.mrb[0].mxu0
      %v7172 = vadd.f32 %v6854, %v7171
      %v7173 = vpop.f32.mrb[0].mxu0
      %7174 = vmatprep.mubr.f32.mxu0 0.0
      %7175 = vmatmul.mubr.f32.gmra.mrb[0].mxu0 %v6950
      %v7176 = vpop.f32.mrb[0].mxu0
      %v7177 = vadd.f32 %v6854, %v7176
      %v7178 = vpop.f32.mrb[0].mxu0
      %7179 = vdwg.mxu0
      %v7212 = vadd.f32 %v7022, %v3933
      %v7213 = vadd.f32 %v7027, %v3935
      %v7214 = vadd.f32 %v7032, %v3938
      %v7215 = vadd.f32 %v7037, %v3940
      %v7216 = vadd.f32 %v7042, %v3943
      %v7217 = vadd.f32 %v7047, %v3945
      %v7218 = vadd.f32 %v7052, %v3948
      %v7219 = vadd.f32 %v7057, %v3950
      %v7220 = vadd.f32 %v7062, %v3953
      %v7221 = vadd.f32 %v7067, %v3955
      %v7222 = vadd.f32 %v7072, %v3958
      %v7223 = vadd.f32 %v7077, %v3960
      %v7224 = vadd.f32 %v7082, %v3963
      %v7225 = vadd.f32 %v7087, %v3965
      %v7226 = vadd.f32 %v7092, %v3968
      %v7227 = vadd.f32 %v7097, %v3970
      %v7228 = vadd.f32 %v7102, %v3973
      %v7229 = vadd.f32 %v7107, %v3975
      %v7230 = vadd.f32 %v7112, %v3978
      %v7231 = vadd.f32 %v7117, %v3980
      %v7232 = vadd.f32 %v7122, %v3983
      %v7233 = vadd.f32 %v7127, %v3985
      %v7234 = vadd.f32 %v7132, %v3988
      %v7235 = vadd.f32 %v7137, %v3990
      %v7236 = vadd.f32 %v7142, %v3993
      %v7237 = vadd.f32 %v7147, %v3995
      %v7238 = vadd.f32 %v7152, %v3998
      %v7239 = vadd.f32 %v7157, %v4000
      %v7240 = vadd.f32 %v7162, %v4003
      %v7241 = vadd.f32 %v7167, %v4005
      %v7242 = vadd.f32 %v7172, %v4379
      %v7243 = vadd.f32 %v7177, %v4381
      %7244 = vst.msk [vmem:[%s313 + $0x1] sm:$0xff] %vm171, %v7212
      %7245 = vst.msk [vmem:[%s313 + $0x9] sm:$0xff] %vm171, %v7213
      %7246 = vst.msk [vmem:[%s313 + $0x19] sm:$0xff] %vm171, %v7214
      %7247 = vst.msk [vmem:[%s313 + $0x21] sm:$0xff] %vm171, %v7215
      %7248 = vst.msk [vmem:[%s313 + $0x31] sm:$0xff] %vm171, %v7216
      %7249 = vst.msk [vmem:[%s313 + $0x39] sm:$0xff] %vm171, %v7217
      %7250 = vst.msk [vmem:[%s313 + $0x49] sm:$0xff] %vm171, %v7218
      %7251 = vst.msk [vmem:[%s313 + $0x51] sm:$0xff] %vm171, %v7219
      %7252 = vst.msk [vmem:[%s313 + $0x61] sm:$0xff] %vm171, %v7220
      %7253 = vst.msk [vmem:[%s313 + $0x69] sm:$0xff] %vm171, %v7221
      %7254 = vst.msk [vmem:[%s313 + $0x79] sm:$0xff] %vm171, %v7222
      %7255 = vst.msk [vmem:[%s313 + $0x81] sm:$0xff] %vm171, %v7223
      %7256 = vst.msk [vmem:[%s313 + $0x91] sm:$0xff] %vm171, %v7224
      %7257 = vst.msk [vmem:[%s313 + $0x99] sm:$0xff] %vm171, %v7225
      %7258 = vst.msk [vmem:[%s313 + $0xa9] sm:$0xff] %vm171, %v7226
      %7259 = vst.msk [vmem:[%s313 + $0xb1] sm:$0xff] %vm171, %v7227
      %7260 = vst.msk [vmem:[%s313 + $0xc1] sm:$0xff] %vm171, %v7228
      %7261 = vst.msk [vmem:[%s313 + $0xc9] sm:$0xff] %vm171, %v7229
      %7262 = vst.msk [vmem:[%s313 + $0xd9] sm:$0xff] %vm171, %v7230
      %7263 = vst.msk [vmem:[%s313 + $0xe1] sm:$0xff] %vm171, %v7231
      %7264 = vst.msk [vmem:[%s313 + $0xf1] sm:$0xff] %vm171, %v7232
      %7265 = vst.msk [vmem:[%s313 + $0xf9] sm:$0xff] %vm171, %v7233
      %7266 = vst.msk [vmem:[%s313 + $0x109] sm:$0xff] %vm171, %v7234
      %7267 = vst.msk [vmem:[%s313 + $0x111] sm:$0xff] %vm171, %v7235
      %7268 = vst.msk [vmem:[%s313 + $0x121] sm:$0xff] %vm171, %v7236
      %7269 = vst.msk [vmem:[%s313 + $0x129] sm:$0xff] %vm171, %v7237
      %7270 = vst.msk [vmem:[%s313 + $0x139] sm:$0xff] %vm171, %v7238
      %7271 = vst.msk [vmem:[%s313 + $0x141] sm:$0xff] %vm171, %v7239
      %7272 = vst.msk [vmem:[%s313 + $0x151] sm:$0xff] %vm171, %v7240
      %7273 = vst.msk [vmem:[%s313 + $0x159] sm:$0xff] %vm171, %v7241
      %7274 = vst.msk [vmem:[%s313 + $0x169] sm:$0xff] %vm171, %v7242
      %7275 = vst.msk [vmem:[%s313 + $0x171] sm:$0xff] %vm171, %v7243
      %v7276 = vld [vmem:[%s313 + $0x1] sm:$0xff]
      %v7277 = vld [vmem:[%s313 + $0x9] sm:$0xff]
      %v7278 = vld [vmem:[%s313 + $0x19] sm:$0xff]
      %v7279 = vld [vmem:[%s313 + $0x21] sm:$0xff]
      %v7280 = vld [vmem:[%s313 + $0x31] sm:$0xff]
      %v7281 = vld [vmem:[%s313 + $0x39] sm:$0xff]
      %v7282 = vld [vmem:[%s313 + $0x49] sm:$0xff]
      %v7283 = vld [vmem:[%s313 + $0x51] sm:$0xff]
      %v7284 = vld [vmem:[%s313 + $0x61] sm:$0xff]
      %v7285 = vld [vmem:[%s313 + $0x69] sm:$0xff]
      %v7286 = vld [vmem:[%s313 + $0x79] sm:$0xff]
      %v7287 = vld [vmem:[%s313 + $0x81] sm:$0xff]
      %v7288 = vld [vmem:[%s313 + $0x91] sm:$0xff]
      %v7289 = vld [vmem:[%s313 + $0x99] sm:$0xff]
      %v7290 = vld [vmem:[%s313 + $0xa9] sm:$0xff]
      %v7291 = vld [vmem:[%s313 + $0xb1] sm:$0xff]
      %v7292 = vld [vmem:[%s313 + $0xc1] sm:$0xff]
      %v7293 = vld [vmem:[%s313 + $0xc9] sm:$0xff]
      %v7294 = vld [vmem:[%s313 + $0xd9] sm:$0xff]
      %v7295 = vld [vmem:[%s313 + $0xe1] sm:$0xff]
      %v7296 = vld [vmem:[%s313 + $0xf1] sm:$0xff]
      %v7297 = vld [vmem:[%s313 + $0xf9] sm:$0xff]
      %v7298 = vld [vmem:[%s313 + $0x109] sm:$0xff]
      %v7299 = vld [vmem:[%s313 + $0x111] sm:$0xff]
      %v7300 = vld [vmem:[%s313 + $0x121] sm:$0xff]
      %v7301 = vld [vmem:[%s313 + $0x129] sm:$0xff]
      %v7302 = vld [vmem:[%s313 + $0x139] sm:$0xff]
      %v7303 = vld [vmem:[%s313 + $0x141] sm:$0xff]
      %v7304 = vld [vmem:[%s313 + $0x151] sm:$0xff]
      %v7305 = vld [vmem:[%s313 + $0x159] sm:$0xff]
      %v7306 = vld [vmem:[%s313 + $0x169] sm:$0xff]
      %v7307 = vld [vmem:[%s313 + $0x171] sm:$0xff]
      %7308 = vst.msk [vmem:[%s170] sm:$0xff] %vm171, %v7276
      %7309 = vst.msk [vmem:[%s170 + $0x8] sm:$0xff] %vm171, %v7277
      %7310 = vst.msk [vmem:[%s170 + $0x10] sm:$0xff] %vm171, %v7278
      %7311 = vst.msk [vmem:[%s170 + $0x18] sm:$0xff] %vm171, %v7279
      %7312 = vst.msk [vmem:[%s170 + $0x20] sm:$0xff] %vm171, %v7280
      %7313 = vst.msk [vmem:[%s170 + $0x28] sm:$0xff] %vm171, %v7281
      %7314 = vst.msk [vmem:[%s170 + $0x30] sm:$0xff] %vm171, %v7282
      %7315 = vst.msk [vmem:[%s170 + $0x38] sm:$0xff] %vm171, %v7283
      %7316 = vst.msk [vmem:[%s170 + $0x40] sm:$0xff] %vm171, %v7284
      %7317 = vst.msk [vmem:[%s170 + $0x48] sm:$0xff] %vm171, %v7285
      %7318 = vst.msk [vmem:[%s170 + $0x50] sm:$0xff] %vm171, %v7286
      %7319 = vst.msk [vmem:[%s170 + $0x58] sm:$0xff] %vm171, %v7287
      %7320 = vst.msk [vmem:[%s170 + $0x60] sm:$0xff] %vm171, %v7288
      %7321 = vst.msk [vmem:[%s170 + $0x68] sm:$0xff] %vm171, %v7289
      %7322 = vst.msk [vmem:[%s170 + $0x70] sm:$0xff] %vm171, %v7290
      %7323 = vst.msk [vmem:[%s170 + $0x78] sm:$0xff] %vm171, %v7291
      %7324 = vst.msk [vmem:[%s170 + $0x80] sm:$0xff] %vm171, %v7292
      %7325 = vst.msk [vmem:[%s170 + $0x88] sm:$0xff] %vm171, %v7293
      %7326 = vst.msk [vmem:[%s170 + $0x90] sm:$0xff] %vm171, %v7294
      %7327 = vst.msk [vmem:[%s170 + $0x98] sm:$0xff] %vm171, %v7295
      %7328 = vst.msk [vmem:[%s170 + $0xa0] sm:$0xff] %vm171, %v7296
      %7329 = vst.msk [vmem:[%s170 + $0xa8] sm:$0xff] %vm171, %v7297
      %7330 = vst.msk [vmem:[%s170 + $0xb0] sm:$0xff] %vm171, %v7298
      %7331 = vst.msk [vmem:[%s170 + $0xb8] sm:$0xff] %vm171, %v7299
      %7332 = vst.msk [vmem:[%s170 + $0xc0] sm:$0xff] %vm171, %v7300
      %7333 = vst.msk [vmem:[%s170 + $0xc8] sm:$0xff] %vm171, %v7301
      %7334 = vst.msk [vmem:[%s170 + $0xd0] sm:$0xff] %vm171, %v7302
      %7335 = vst.msk [vmem:[%s170 + $0xd8] sm:$0xff] %vm171, %v7303
      %7336 = vst.msk [vmem:[%s170 + $0xe0] sm:$0xff] %vm171, %v7304
      %7337 = vst.msk [vmem:[%s170 + $0xe8] sm:$0xff] %vm171, %v7305
      %7338 = vst.msk [vmem:[%s170 + $0xf0] sm:$0xff] %vm171, %v7306
      %7339 = vst.msk [vmem:[%s170 + $0xf8] sm:$0xff] %vm171, %v7307
      %p7340 = scmp.lt.s32.totalorder %s14, 1
      %s7341 = scalar_select %p7340, %s14, 1
      %s7342 = smul.addr %s7341, 32
      %s7343 = smul.addr %s7342, 8
      %s7344 = scalar_lea.vmem %s3, %s7343
      // Predicated region
      $region33: #{twro_eblock.1} parent=31 // pred_check
        %p7345 = pneg %p100
      $region34: #{twro_eblock.1} parent=31 // pred_check_branch
        %7347 = sbr.rel (%p7345) target = $region36
      $region35: #{twro_eblock.1} parent=31 // pred_region
        _
      $region36: #{twro_eblock.1} parent=31 // pred_fallthru
        _
    $region32: #{twro_eblock.1} parent=5 // pred_fallthru
      _
    %p7348 = scmp.le.s32.totalorder 2, %s9
    // Predicated region
    $region37: #{twro_eblock.1} parent=5 // pred_check
      %p7349 = pneg %p7348
    $region38: #{twro_eblock.1} parent=5 // pred_check_branch
      %7351 = sbr.rel (%p7349) target = $region40
    $region39: #{twro_eblock.1} parent=5 // pred_region
      %s7352 = ssub.s32 %s9, 2
      // Predicated region
      $region41: #{twro_eblock.1} parent=39 // pred_check
        %p7353 = pneg %p106
      $region42: #{twro_eblock.1} parent=39 // pred_check_branch
        %7355 = sbr.rel (%p7353) target = $region44
      $region43: #{twro_eblock.1} parent=39 // pred_region
        %p7356 = scmp.lt.s32.totalorder %s15, 1
        %s7357 = scalar_select %p7356, %s15, 1
        %s7358 = smul.addr %s7357, 32
        %s7359 = smul.addr %s7358, 8
        %s7360 = scalar_lea.vmem %s3, %s7359
      $region44: #{twro_eblock.1} parent=39 // pred_fallthru
        _
    $region40: #{twro_eblock.1} parent=5 // pred_fallthru
      _
  $region6: #{twro_eblock.1} parent=0 // loop_footer
    %s13 = sadd.s32 1, %s9
  $region7: #{twro_eblock.1} parent=0 // loop_footer_branch
    %8 = sbr.rel target = $region3
  $region8: #{twro_eblock.1} parent=0 // loop_exit
    _

</llo_original>
